<compile_context>
chip_gen: v5e
topology: v5e:2x2
jax: 0.10.0
libtpu: 0.0.40
codegen_flags: <defaults>
</compile_context>

<pallas_src>
import functools

import jax
import jax.numpy as jnp
from jax import lax
from jax.experimental import pallas as pl
from jax.experimental.pallas import tpu as pltpu

# VGG16 "features" configuration (torchvision.models.vgg16, no batch-norm).
VGG16_CFG = (64, 64, "M", 128, 128, "M", 256, 256, 256, "M",
             512, 512, 512, "M", 512, 512, 512, "M")


@functools.lru_cache(maxsize=None)
def _vmem_limit_bytes():
    try:
        kind = jax.devices()[0].device_kind.lower()
    except Exception:  # pragma: no cover - defensive
        kind = ""
    if "v5" in kind or "v6" in kind:
        return 100 * 1024 * 1024      # 128 MiB physical VMEM
    return 48 * 1024 * 1024           # v7x: 64 MiB physical VMEM (headroom)


def _pick_slab_rows(H, W, pool):
    """Row-slab size: ~256 MXU rows per matmul, divides H, even if pooling."""
    target = min(H, max(2 if pool else 1, 256 // max(W, 1)))
    for R in range(target, 0, -1):
        if H % R == 0 and (not pool or R % 2 == 0):
            return R
    return 2 if pool else 1


# ----------------------- conv 3x3 + ReLU (+ fused 2x2 max-pool) -------------
def _conv3x3_relu_pool_kernel(x_ref, w_ref, b_ref, o_ref, pad_ref, *, R, pool):
    # x_ref:  (1, H, W, Cin)     bf16 (unpadded)
    # w_ref:  (9, Cin, Cout)     bf16, tap order (dy, dx)
    # b_ref:  (1, Cout)          f32
    # o_ref:  (1, Ho, Wo, Cout)  bf16  (Ho,Wo = H/2,W/2 if pool else H,W)
    # pad_ref:(H+2, W+2, Cin)    bf16 VMEM scratch (1-pixel zero halo)
    H, W, Cin = x_ref.shape[1], x_ref.shape[2], x_ref.shape[3]
    Cout = o_ref.shape[3]
    n_slabs = H // R
    Rh, Wo = R // 2, W // 2
    dt = pad_ref.dtype

    # Zero only the 1-pixel halo ring (interior is overwritten every step).
    pad_ref[0:1, :, :] = jnp.zeros((1, W + 2, Cin), dt)
    pad_ref[H + 1:H + 2, :, :] = jnp.zeros((1, W + 2, Cin), dt)
    pad_ref[:, 0:1, :] = jnp.zeros((H + 2, 1, Cin), dt)
    pad_ref[:, W + 1:W + 2, :] = jnp.zeros((H + 2, 1, Cin), dt)
    # Copy the interior (already bf16, no cast, no host-side jnp.pad).
    pad_ref[pl.ds(1, H), pl.ds(1, W), :] = x_ref[0]

    # Cin=3 first layer: one K=27 matmul per slab.  Larger Cin: 9 per-tap
    # matmuls (K=Cin) accumulating in f32 registers - avoids the spill-heavy
    # 9*Cin lane-concat LHS.
    use_concat = (9 * Cin) <= 128

    def slab_body(s, carry):
        h0 = pl.multiple_of(s * R, R)
        if use_concat:
            pieces = [pad_ref[pl.ds(h0 + dy, R), pl.ds(dx, W), :]
                      for dy in range(3) for dx in range(3)]
            lhs = jnp.concatenate(pieces, axis=-1).reshape(R * W, 9 * Cin)
            acc = jnp.dot(lhs, w_ref[...].reshape(9 * Cin, Cout),
                          preferred_element_type=jnp.float32)
        else:
            acc = jnp.zeros((R * W, Cout), jnp.float32)
            for dy in range(3):
                for dx in range(3):
                    lhs = pad_ref[pl.ds(h0 + dy, R), pl.ds(dx, W), :]
                    acc = acc + jnp.dot(lhs.reshape(R * W, Cin),
                                        w_ref[dy * 3 + dx],
                                        preferred_element_type=jnp.float32)
        acc = jnp.maximum(acc + b_ref[...], 0.0)          # bias + ReLU in f32

        if pool:
            # Fused 2x2/stride-2 max-pool on the f32 slab before the store.
            a = acc.reshape(R, Wo, 2, Cout)
            hmax = jnp.max(a, axis=2)                      # (R, Wo, Cout)
            p = jnp.max(hmax.reshape(Rh, 2, Wo, Cout), axis=1)  # (Rh, Wo, Cout)
            r0 = pl.multiple_of(s * Rh, Rh)
            o_ref[0, pl.ds(r0, Rh), :, :] = p.astype(o_ref.dtype)
        else:
            o_ref[0, pl.ds(h0, R), :, :] = (
                acc.reshape(R, W, Cout).astype(o_ref.dtype))
        return carry

    lax.fori_loop(0, n_slabs, slab_body, 0, unroll=(n_slabs <= 4))


def conv3x3_relu_pool(x, w9, b, *, pool):
    # x: (N, H, W, Cin) bf16; w9: (9, Cin, Cout) bf16; b: (1, Cout) f32
    N, H, W, Cin = x.shape
    Cout = w9.shape[-1]
    if pool:
        assert H % 2 == 0 and W % 2 == 0
    R = _pick_slab_rows(H, W, pool)
    Ho, Wo = (H // 2, W // 2) if pool else (H, W)
    kern = functools.partial(_conv3x3_relu_pool_kernel, R=R, pool=pool)
    # Weight / bias index_maps are grid-invariant: fetched once, kept resident
    # across the batch grid.
    return pl.pallas_call(
        kern,
        out_shape=jax.ShapeDtypeStruct((N, Ho, Wo, Cout), jnp.bfloat16),
        grid_spec=pltpu.PrefetchScalarGridSpec(
            num_scalar_prefetch=0,
            grid=(N,),
            in_specs=[
                pl.BlockSpec((1, H, W, Cin), lambda n: (n, 0, 0, 0)),
                pl.BlockSpec((9, Cin, Cout), lambda n: (0, 0, 0)),
                pl.BlockSpec((1, Cout), lambda n: (0, 0)),
            ],
            out_specs=pl.BlockSpec((1, Ho, Wo, Cout), lambda n: (n, 0, 0, 0)),
            scratch_shapes=[pltpu.VMEM((H + 2, W + 2, Cin), jnp.bfloat16)],
        ),
        compiler_params=pltpu.CompilerParams(
            dimension_semantics=("parallel",),
            vmem_limit_bytes=_vmem_limit_bytes(),
        ),
    )(x, w9, b)


# ------------------------------- Linear -------------------------------------
def _linear_kernel(x_ref, w_ref, b_ref, o_ref, acc_ref):
    @pl.when(pl.program_id(1) == 0)
    def _():
        acc_ref[...] = jnp.zeros_like(acc_ref)

    acc_ref[...] += jnp.dot(x_ref[...], w_ref[...],
                            preferred_element_type=jnp.float32)

    @pl.when(pl.program_id(1) == pl.num_programs(1) - 1)
    def _():
        o_ref[...] = acc_ref[...] + b_ref[...]


def linear(x, w_t_pad, b_pad, e_out):
    # x: (N, F) bf16; w_t_pad: (F, Ep) bf16 (pre-transposed/padded at init);
    # b_pad: (1, Ep) f32  ->  (N, e_out) f32
    N, F = x.shape
    Ep = w_t_pad.shape[1]
    Np = max(8, ((N + 7) // 8) * 8)          # M >= 8 MXU rows

    if Ep <= 512:
        TE = Ep
    else:
        TE = next(c for c in (512, 256, 128) if Ep % c == 0)
    TK = F
    for cand in (2048, 1024, 512, 256):
        if F % cand == 0:
            TK = cand
            break

    xp = jnp.pad(x.astype(jnp.bfloat16), ((0, Np - N), (0, 0)))

    out = pl.pallas_call(
        _linear_kernel,
        out_shape=jax.ShapeDtypeStruct((Np, Ep), jnp.float32),
        grid_spec=pltpu.PrefetchScalarGridSpec(
            num_scalar_prefetch=0,
            grid=(Ep // TE, F // TK),
            in_specs=[
                pl.BlockSpec((Np, TK), lambda e, k: (0, k)),
                pl.BlockSpec((TK, TE), lambda e, k: (k, e)),
                pl.BlockSpec((1, TE), lambda e, k: (0, e)),
            ],
            out_specs=pl.BlockSpec((Np, TE), lambda e, k: (0, e)),
            scratch_shapes=[pltpu.VMEM((Np, TE), jnp.float32)],
        ),
        compiler_params=pltpu.CompilerParams(
            dimension_semantics=("parallel", "arbitrary"),
            vmem_limit_bytes=_vmem_limit_bytes(),
        ),
    )(xp, w_t_pad, b_pad)
    return out[:N, :e_out]


# --------------------------- parameters & forward ---------------------------
def init_params(key, in_hw, embed_size):
    convs = []
    cin = 3
    k = key
    for v in VGG16_CFG:
        if v == "M":
            continue
        k, k1 = jax.random.split(k)
        std = (2.0 / (cin * 9)) ** 0.5
        w = jax.random.normal(k1, (v, cin, 3, 3), jnp.float32) * std    # OIHW
        # OIHW -> HWIO -> (9, Cin, Cout), tap order (dy, dx); bf16 for the MXU.
        w9 = jnp.transpose(w, (2, 3, 1, 0)).reshape(9, cin, v).astype(jnp.bfloat16)
        b = jnp.zeros((1, v), jnp.float32)
        convs.append((w9, b))
        cin = v
    feat = 512 * (in_hw // 32) * (in_hw // 32)   # 25088 for canonical 224x224
    k, k1, k2 = jax.random.split(k, 3)
    lw = jax.random.normal(k1, (embed_size, feat), jnp.float32) * (1.0 / feat ** 0.5)
    lb = jax.random.normal(k2, (embed_size,), jnp.float32) * 0.01
    # Pre-transpose / pad / cast the Linear weight ONCE here (weight-BW-bound
    # at small batch; keeps the per-call path free of HBM-size reshuffles).
    Ep = ((embed_size + 127) // 128) * 128
    lw_t = jnp.pad(lw.T, ((0, 0), (0, Ep - embed_size))).astype(jnp.bfloat16)
    lb_p = jnp.pad(lb, (0, Ep - embed_size)).reshape(1, Ep).astype(jnp.float32)
    return {"convs": convs, "linear": (lw_t, lb_p, embed_size)}


def cnn_encoder_forward(x_nchw, params):
    # x_nchw: (N, 3, H, W) float32 (PyTorch layout)
    x = jnp.transpose(x_nchw, (0, 2, 3, 1)).astype(jnp.bfloat16)   # -> NHWC bf16
    ci = 0
    i = 0
    while i < len(VGG16_CFG):
        v = VGG16_CFG[i]
        assert v != "M"
        pool = (i + 1 < len(VGG16_CFG)) and (VGG16_CFG[i + 1] == "M")
        w9, b = params["convs"][ci]
        ci += 1
        x = conv3x3_relu_pool(x, w9, b, pool=pool)   # fused conv+ReLU(+pool)
        i += 2 if pool else 1
    # flatten exactly like PyTorch: NCHW order
    x = jnp.transpose(x, (0, 3, 1, 2)).reshape(x.shape[0], -1)
    lw_t, lb_p, e_out = params["linear"]
    return linear(x, lw_t, lb_p, e_out)


if __name__ == "__main__":
    # TODO(synk): canonical VGG16 input is 224x224 (flatten dim 25088); we use a
    # spatially scaled 32x32 input to keep the demo small, with
    # Linear.in_features = 512*(H//32)*(W//32) consistent with the forward pass.
    N, H, EMBED = 2, 32, 32
    key = jax.random.PRNGKey(0)
    kx, kp = jax.random.split(key)
    x = jax.random.normal(kx, (N, 3, H, H), jnp.float32)
    params = init_params(kp, in_hw=H, embed_size=EMBED)

    out = cnn_encoder_forward(x, params)
    out = jax.block_until_ready(out)
    assert out.shape == (N, EMBED), out.shape
    assert bool(jnp.all(jnp.isfinite(out)))
    print("KERNEL_OK")
</pallas_src>

<mosaic_0001>
module attributes {stable_mosaic.version = 11 : i64} {
  func.func @_conv3x3_relu_pool_kernel(%arg0: i32, %arg1: memref<1x32x32x3xbf16, #tpu.memory_space<vmem>>, %arg2: memref<9x3x64xbf16, #tpu.memory_space<vmem>>, %arg3: memref<1x64xf32, #tpu.memory_space<vmem>>, %arg4: memref<1x32x32x64xbf16, #tpu.memory_space<vmem>>, %arg5: memref<34x34x3xbf16, #tpu.memory_space<vmem>>) attributes {dimension_semantics = [#tpu.dimension_semantics<parallel>], iteration_bounds = array<i64: 2>, scalar_prefetch = 0 : i64, scratch_operands = 1 : i64, tpu.core_type = #tpu.core_type<tc>, window_params = [{transform_indices = @transform_0, window_bounds = array<i64: 1, 32, 32, 3>}, {pipeline_mode = #tpu.pipeline_mode<synchronous>, transform_indices = @transform_1, window_bounds = array<i64: 9, 3, 64>}, {pipeline_mode = #tpu.pipeline_mode<synchronous>, transform_indices = @transform_2, window_bounds = array<i64: 1, 64>}, {transform_indices = @transform_3, window_bounds = array<i64: 1, 32, 32, 64>}]} {
    %cst = arith.constant 0.000000e+00 : bf16
    %0 = vector.broadcast %cst : bf16 to vector<1x34x3xbf16>
    %c0 = arith.constant 0 : index
    %c0_0 = arith.constant 0 : index
    %c0_1 = arith.constant 0 : index
    %1 = vector.load %arg5[%c0, %c0_0, %c0_1] : memref<34x34x3xbf16, #tpu.memory_space<vmem>>, vector<1x34x3xbf16>
    tpu.vector_store %arg5[%c0, %c0_0, %c0_1], %0 {strides = array<i32>} : memref<34x34x3xbf16, #tpu.memory_space<vmem>>, vector<1x34x3xbf16>,
    %cst_2 = arith.constant 0.000000e+00 : bf16
    %2 = vector.broadcast %cst_2 : bf16 to vector<1x34x3xbf16>
    %c33 = arith.constant 33 : index
    %c0_3 = arith.constant 0 : index
    %c0_4 = arith.constant 0 : index
    %3 = vector.load %arg5[%c33, %c0_3, %c0_4] : memref<34x34x3xbf16, #tpu.memory_space<vmem>>, vector<1x34x3xbf16>
    tpu.vector_store %arg5[%c33, %c0_3, %c0_4], %2 {strides = array<i32>} : memref<34x34x3xbf16, #tpu.memory_space<vmem>>, vector<1x34x3xbf16>,
    %cst_5 = arith.constant 0.000000e+00 : bf16
    %4 = vector.broadcast %cst_5 : bf16 to vector<34x1x3xbf16>
    %c0_6 = arith.constant 0 : index
    %c0_7 = arith.constant 0 : index
    %c0_8 = arith.constant 0 : index
    %5 = vector.load %arg5[%c0_6, %c0_7, %c0_8] : memref<34x34x3xbf16, #tpu.memory_space<vmem>>, vector<34x1x3xbf16>
    tpu.vector_store %arg5[%c0_6, %c0_7, %c0_8], %4 {strides = array<i32>} : memref<34x34x3xbf16, #tpu.memory_space<vmem>>, vector<34x1x3xbf16>,
    %cst_9 = arith.constant 0.000000e+00 : bf16
    %6 = vector.broadcast %cst_9 : bf16 to vector<34x1x3xbf16>
    %c0_10 = arith.constant 0 : index
    %c33_11 = arith.constant 33 : index
    %c0_12 = arith.constant 0 : index
    %7 = vector.load %arg5[%c0_10, %c33_11, %c0_12] : memref<34x34x3xbf16, #tpu.memory_space<vmem>>, vector<34x1x3xbf16>
    tpu.vector_store %arg5[%c0_10, %c33_11, %c0_12], %6 {strides = array<i32>} : memref<34x34x3xbf16, #tpu.memory_space<vmem>>, vector<34x1x3xbf16>,
    %c0_13 = arith.constant 0 : index
    %c0_14 = arith.constant 0 : index
    %c0_15 = arith.constant 0 : index
    %c0_16 = arith.constant 0 : index
    %8 = vector.load %arg1[%c0_13, %c0_14, %c0_15, %c0_16] : memref<1x32x32x3xbf16, #tpu.memory_space<vmem>>, vector<1x32x32x3xbf16>
    %9 = vector.shape_cast %8 : vector<1x32x32x3xbf16> to vector<32x32x3xbf16>
    %c1 = arith.constant 1 : index
    %c1_17 = arith.constant 1 : index
    %c0_18 = arith.constant 0 : index
    %10 = vector.load %arg5[%c1, %c1_17, %c0_18] : memref<34x34x3xbf16, #tpu.memory_space<vmem>>, vector<32x32x3xbf16>
    tpu.vector_store %arg5[%c1, %c1_17, %c0_18], %9 {strides = array<i32>} : memref<34x34x3xbf16, #tpu.memory_space<vmem>>, vector<32x32x3xbf16>,
    %c0_i32 = arith.constant 0 : i32
    %c8_i32 = arith.constant 8 : i32
    %11 = arith.muli %c0_i32, %c8_i32 : i32
    %12 = tpu.assume_multiple %11, 8 : i32
    %c0_i32_19 = arith.constant 0 : i32
    %13 = arith.addi %12, %c0_i32_19 : i32
    %14 = arith.index_cast %13 : i32 to index
    %c0_20 = arith.constant 0 : index
    %c0_21 = arith.constant 0 : index
    %15 = vector.load %arg5[%14, %c0_20, %c0_21] : memref<34x34x3xbf16, #tpu.memory_space<vmem>>, vector<8x32x3xbf16>
    %c0_i32_22 = arith.constant 0 : i32
    %16 = arith.addi %12, %c0_i32_22 : i32
    %17 = arith.index_cast %16 : i32 to index
    %c1_23 = arith.constant 1 : index
    %c0_24 = arith.constant 0 : index
    %18 = vector.load %arg5[%17, %c1_23, %c0_24] : memref<34x34x3xbf16, #tpu.memory_space<vmem>>, vector<8x32x3xbf16>
    %c0_i32_25 = arith.constant 0 : i32
    %19 = arith.addi %12, %c0_i32_25 : i32
    %20 = arith.index_cast %19 : i32 to index
    %c2 = arith.constant 2 : index
    %c0_26 = arith.constant 0 : index
    %21 = vector.load %arg5[%20, %c2, %c0_26] : memref<34x34x3xbf16, #tpu.memory_space<vmem>>, vector<8x32x3xbf16>
    %c1_i32 = arith.constant 1 : i32
    %22 = arith.addi %12, %c1_i32 : i32
    %23 = arith.index_cast %22 : i32 to index
    %c0_27 = arith.constant 0 : index
    %c0_28 = arith.constant 0 : index
    %24 = vector.load %arg5[%23, %c0_27, %c0_28] : memref<34x34x3xbf16, #tpu.memory_space<vmem>>, vector<8x32x3xbf16>
    %c1_i32_29 = arith.constant 1 : i32
    %25 = arith.addi %12, %c1_i32_29 : i32
    %26 = arith.index_cast %25 : i32 to index
    %c1_30 = arith.constant 1 : index
    %c0_31 = arith.constant 0 : index
    %27 = vector.load %arg5[%26, %c1_30, %c0_31] : memref<34x34x3xbf16, #tpu.memory_space<vmem>>, vector<8x32x3xbf16>
    %c1_i32_32 = arith.constant 1 : i32
    %28 = arith.addi %12, %c1_i32_32 : i32
    %29 = arith.index_cast %28 : i32 to index
    %c2_33 = arith.constant 2 : index
    %c0_34 = arith.constant 0 : index
    %30 = vector.load %arg5[%29, %c2_33, %c0_34] : memref<34x34x3xbf16, #tpu.memory_space<vmem>>, vector<8x32x3xbf16>
    %c2_i32 = arith.constant 2 : i32
    %31 = arith.addi %12, %c2_i32 : i32
    %32 = arith.index_cast %31 : i32 to index
    %c0_35 = arith.constant 0 : index
    %c0_36 = arith.constant 0 : index
    %33 = vector.load %arg5[%32, %c0_35, %c0_36] : memref<34x34x3xbf16, #tpu.memory_space<vmem>>, vector<8x32x3xbf16>
    %c2_i32_37 = arith.constant 2 : i32
    %34 = arith.addi %12, %c2_i32_37 : i32
    %35 = arith.index_cast %34 : i32 to index
    %c1_38 = arith.constant 1 : index
    %c0_39 = arith.constant 0 : index
    %36 = vector.load %arg5[%35, %c1_38, %c0_39] : memref<34x34x3xbf16, #tpu.memory_space<vmem>>, vector<8x32x3xbf16>
    %c2_i32_40 = arith.constant 2 : i32
    %37 = arith.addi %12, %c2_i32_40 : i32
    %38 = arith.index_cast %37 : i32 to index
    %c2_41 = arith.constant 2 : index
    %c0_42 = arith.constant 0 : index
    %39 = vector.load %arg5[%38, %c2_41, %c0_42] : memref<34x34x3xbf16, #tpu.memory_space<vmem>>, vector<8x32x3xbf16>
    %40 = tpu.concatenate %15, %18, %21, %24, %27, %30, %33, %36, %39 in 2 : vector<8x32x3xbf16>, vector<8x32x3xbf16>, vector<8x32x3xbf16>, vector<8x32x3xbf16>, vector<8x32x3xbf16>, vector<8x32x3xbf16>, vector<8x32x3xbf16>, vector<8x32x3xbf16>, vector<8x32x3xbf16> -> vector<8x32x27xbf16>
    %41 = vector.shape_cast %40 : vector<8x32x27xbf16> to vector<256x27xbf16>
    %c0_43 = arith.constant 0 : index
    %c0_44 = arith.constant 0 : index
    %c0_45 = arith.constant 0 : index
    %42 = vector.load %arg2[%c0_43, %c0_44, %c0_45] : memref<9x3x64xbf16, #tpu.memory_space<vmem>>, vector<9x3x64xbf16>
    %43 = vector.shape_cast %42 : vector<9x3x64xbf16> to vector<27x64xbf16>
    %cst_46 = arith.constant dense<0.000000e+00> : vector<256x64xf32>
    %44 = tpu.matmul %41, %43, %cst_46 {dimension_numbers = #tpu.dot_dimension_numbers<[1], [0], [0], [1], [0, 0, 1, 1], [], []>} : vector<256x27xbf16>, vector<27x64xbf16>, vector<256x64xf32> -> vector<256x64xf32>
    %c0_47 = arith.constant 0 : index
    %c0_48 = arith.constant 0 : index
    %45 = vector.load %arg3[%c0_47, %c0_48] : memref<1x64xf32, #tpu.memory_space<vmem>>, vector<1x64xf32>
    %46 = vector.broadcast %45 : vector<1x64xf32> to vector<256x64xf32>
    %47 = arith.addf %44, %46 : vector<256x64xf32>
    %cst_49 = arith.constant 0.000000e+00 : f32
    %48 = vector.broadcast %cst_49 : f32 to vector<256x64xf32>
    %49 = arith.maximumf %47, %48 : vector<256x64xf32>
    %50 = vector.shape_cast %49 : vector<256x64xf32> to vector<8x32x64xf32>
    %51 = arith.truncf %50 : vector<8x32x64xf32> to vector<8x32x64xbf16>
    %c0_50 = arith.constant 0 : index
    %52 = arith.index_cast %12 : i32 to index
    %c0_51 = arith.constant 0 : index
    %c0_52 = arith.constant 0 : index
    %53 = vector.load %arg4[%c0_50, %52, %c0_51, %c0_52] : memref<1x32x32x64xbf16, #tpu.memory_space<vmem>>, vector<1x8x32x64xbf16>
    %54 = vector.shape_cast %53 : vector<1x8x32x64xbf16> to vector<8x32x64xbf16>
    %55 = vector.shape_cast %51 : vector<8x32x64xbf16> to vector<1x8x32x64xbf16>
    tpu.vector_store %arg4[%c0_50, %52, %c0_51, %c0_52], %55 {strides = array<i32>} : memref<1x32x32x64xbf16, #tpu.memory_space<vmem>>, vector<1x8x32x64xbf16>,
    %c1_i32_53 = arith.constant 1 : i32
    %c8_i32_54 = arith.constant 8 : i32
    %56 = arith.muli %c1_i32_53, %c8_i32_54 : i32
    %57 = tpu.assume_multiple %56, 8 : i32
    %c0_i32_55 = arith.constant 0 : i32
    %58 = arith.addi %57, %c0_i32_55 : i32
    %59 = arith.index_cast %58 : i32 to index
    %c0_56 = arith.constant 0 : index
    %c0_57 = arith.constant 0 : index
    %60 = vector.load %arg5[%59, %c0_56, %c0_57] : memref<34x34x3xbf16, #tpu.memory_space<vmem>>, vector<8x32x3xbf16>
    %c0_i32_58 = arith.constant 0 : i32
    %61 = arith.addi %57, %c0_i32_58 : i32
    %62 = arith.index_cast %61 : i32 to index
    %c1_59 = arith.constant 1 : index
    %c0_60 = arith.constant 0 : index
    %63 = vector.load %arg5[%62, %c1_59, %c0_60] : memref<34x34x3xbf16, #tpu.memory_space<vmem>>, vector<8x32x3xbf16>
    %c0_i32_61 = arith.constant 0 : i32
    %64 = arith.addi %57, %c0_i32_61 : i32
    %65 = arith.index_cast %64 : i32 to index
    %c2_62 = arith.constant 2 : index
    %c0_63 = arith.constant 0 : index
    %66 = vector.load %arg5[%65, %c2_62, %c0_63] : memref<34x34x3xbf16, #tpu.memory_space<vmem>>, vector<8x32x3xbf16>
    %c1_i32_64 = arith.constant 1 : i32
    %67 = arith.addi %57, %c1_i32_64 : i32
    %68 = arith.index_cast %67 : i32 to index
    %c0_65 = arith.constant 0 : index
    %c0_66 = arith.constant 0 : index
    %69 = vector.load %arg5[%68, %c0_65, %c0_66] : memref<34x34x3xbf16, #tpu.memory_space<vmem>>, vector<8x32x3xbf16>
    %c1_i32_67 = arith.constant 1 : i32
    %70 = arith.addi %57, %c1_i32_67 : i32
    %71 = arith.index_cast %70 : i32 to index
    %c1_68 = arith.constant 1 : index
    %c0_69 = arith.constant 0 : index
    %72 = vector.load %arg5[%71, %c1_68, %c0_69] : memref<34x34x3xbf16, #tpu.memory_space<vmem>>, vector<8x32x3xbf16>
    %c1_i32_70 = arith.constant 1 : i32
    %73 = arith.addi %57, %c1_i32_70 : i32
    %74 = arith.index_cast %73 : i32 to index
    %c2_71 = arith.constant 2 : index
    %c0_72 = arith.constant 0 : index
    %75 = vector.load %arg5[%74, %c2_71, %c0_72] : memref<34x34x3xbf16, #tpu.memory_space<vmem>>, vector<8x32x3xbf16>
    %c2_i32_73 = arith.constant 2 : i32
    %76 = arith.addi %57, %c2_i32_73 : i32
    %77 = arith.index_cast %76 : i32 to index
    %c0_74 = arith.constant 0 : index
    %c0_75 = arith.constant 0 : index
    %78 = vector.load %arg5[%77, %c0_74, %c0_75] : memref<34x34x3xbf16, #tpu.memory_space<vmem>>, vector<8x32x3xbf16>
    %c2_i32_76 = arith.constant 2 : i32
    %79 = arith.addi %57, %c2_i32_76 : i32
    %80 = arith.index_cast %79 : i32 to index
    %c1_77 = arith.constant 1 : index
    %c0_78 = arith.constant 0 : index
    %81 = vector.load %arg5[%80, %c1_77, %c0_78] : memref<34x34x3xbf16, #tpu.memory_space<vmem>>, vector<8x32x3xbf16>
    %c2_i32_79 = arith.constant 2 : i32
    %82 = arith.addi %57, %c2_i32_79 : i32
    %83 = arith.index_cast %82 : i32 to index
    %c2_80 = arith.constant 2 : index
    %c0_81 = arith.constant 0 : index
    %84 = vector.load %arg5[%83, %c2_80, %c0_81] : memref<34x34x3xbf16, #tpu.memory_space<vmem>>, vector<8x32x3xbf16>
    %85 = tpu.concatenate %60, %63, %66, %69, %72, %75, %78, %81, %84 in 2 : vector<8x32x3xbf16>, vector<8x32x3xbf16>, vector<8x32x3xbf16>, vector<8x32x3xbf16>, vector<8x32x3xbf16>, vector<8x32x3xbf16>, vector<8x32x3xbf16>, vector<8x32x3xbf16>, vector<8x32x3xbf16> -> vector<8x32x27xbf16>
    %86 = vector.shape_cast %85 : vector<8x32x27xbf16> to vector<256x27xbf16>
    %c0_82 = arith.constant 0 : index
    %c0_83 = arith.constant 0 : index
    %c0_84 = arith.constant 0 : index
    %87 = vector.load %arg2[%c0_82, %c0_83, %c0_84] : memref<9x3x64xbf16, #tpu.memory_space<vmem>>, vector<9x3x64xbf16>
    %88 = vector.shape_cast %87 : vector<9x3x64xbf16> to vector<27x64xbf16>
    %cst_85 = arith.constant dense<0.000000e+00> : vector<256x64xf32>
    %89 = tpu.matmul %86, %88, %cst_85 {dimension_numbers = #tpu.dot_dimension_numbers<[1], [0], [0], [1], [0, 0, 1, 1], [], []>} : vector<256x27xbf16>, vector<27x64xbf16>, vector<256x64xf32> -> vector<256x64xf32>
    %c0_86 = arith.constant 0 : index
    %c0_87 = arith.constant 0 : index
    %90 = vector.load %arg3[%c0_86, %c0_87] : memref<1x64xf32, #tpu.memory_space<vmem>>, vector<1x64xf32>
    %91 = vector.broadcast %90 : vector<1x64xf32> to vector<256x64xf32>
    %92 = arith.addf %89, %91 : vector<256x64xf32>
    %cst_88 = arith.constant 0.000000e+00 : f32
    %93 = vector.broadcast %cst_88 : f32 to vector<256x64xf32>
    %94 = arith.maximumf %92, %93 : vector<256x64xf32>
    %95 = vector.shape_cast %94 : vector<256x64xf32> to vector<8x32x64xf32>
    %96 = arith.truncf %95 : vector<8x32x64xf32> to vector<8x32x64xbf16>
    %c0_89 = arith.constant 0 : index
    %97 = arith.index_cast %57 : i32 to index
    %c0_90 = arith.constant 0 : index
    %c0_91 = arith.constant 0 : index
    %98 = vector.load %arg4[%c0_89, %97, %c0_90, %c0_91] : memref<1x32x32x64xbf16, #tpu.memory_space<vmem>>, vector<1x8x32x64xbf16>
    %99 = vector.shape_cast %98 : vector<1x8x32x64xbf16> to vector<8x32x64xbf16>
    %100 = vector.shape_cast %96 : vector<8x32x64xbf16> to vector<1x8x32x64xbf16>
    tpu.vector_store %arg4[%c0_89, %97, %c0_90, %c0_91], %100 {strides = array<i32>} : memref<1x32x32x64xbf16, #tpu.memory_space<vmem>>, vector<1x8x32x64xbf16>,
    %c2_i32_92 = arith.constant 2 : i32
    %c8_i32_93 = arith.constant 8 : i32
    %101 = arith.muli %c2_i32_92, %c8_i32_93 : i32
    %102 = tpu.assume_multiple %101, 8 : i32
    %c0_i32_94 = arith.constant 0 : i32
    %103 = arith.addi %102, %c0_i32_94 : i32
    %104 = arith.index_cast %103 : i32 to index
    %c0_95 = arith.constant 0 : index
    %c0_96 = arith.constant 0 : index
    %105 = vector.load %arg5[%104, %c0_95, %c0_96] : memref<34x34x3xbf16, #tpu.memory_space<vmem>>, vector<8x32x3xbf16>
    %c0_i32_97 = arith.constant 0 : i32
    %106 = arith.addi %102, %c0_i32_97 : i32
    %107 = arith.index_cast %106 : i32 to index
    %c1_98 = arith.constant 1 : index
    %c0_99 = arith.constant 0 : index
    %108 = vector.load %arg5[%107, %c1_98, %c0_99] : memref<34x34x3xbf16, #tpu.memory_space<vmem>>, vector<8x32x3xbf16>
    %c0_i32_100 = arith.constant 0 : i32
    %109 = arith.addi %102, %c0_i32_100 : i32
    %110 = arith.index_cast %109 : i32 to index
    %c2_101 = arith.constant 2 : index
    %c0_102 = arith.constant 0 : index
    %111 = vector.load %arg5[%110, %c2_101, %c0_102] : memref<34x34x3xbf16, #tpu.memory_space<vmem>>, vector<8x32x3xbf16>
    %c1_i32_103 = arith.constant 1 : i32
    %112 = arith.addi %102, %c1_i32_103 : i32
    %113 = arith.index_cast %112 : i32 to index
    %c0_104 = arith.constant 0 : index
    %c0_105 = arith.constant 0 : index
    %114 = vector.load %arg5[%113, %c0_104, %c0_105] : memref<34x34x3xbf16, #tpu.memory_space<vmem>>, vector<8x32x3xbf16>
    %c1_i32_106 = arith.constant 1 : i32
    %115 = arith.addi %102, %c1_i32_106 : i32
    %116 = arith.index_cast %115 : i32 to index
    %c1_107 = arith.constant 1 : index
    %c0_108 = arith.constant 0 : index
    %117 = vector.load %arg5[%116, %c1_107, %c0_108] : memref<34x34x3xbf16, #tpu.memory_space<vmem>>, vector<8x32x3xbf16>
    %c1_i32_109 = arith.constant 1 : i32
    %118 = arith.addi %102, %c1_i32_109 : i32
    %119 = arith.index_cast %118 : i32 to index
    %c2_110 = arith.constant 2 : index
    %c0_111 = arith.constant 0 : index
    %120 = vector.load %arg5[%119, %c2_110, %c0_111] : memref<34x34x3xbf16, #tpu.memory_space<vmem>>, vector<8x32x3xbf16>
    %c2_i32_112 = arith.constant 2 : i32
    %121 = arith.addi %102, %c2_i32_112 : i32
    %122 = arith.index_cast %121 : i32 to index
    %c0_113 = arith.constant 0 : index
    %c0_114 = arith.constant 0 : index
    %123 = vector.load %arg5[%122, %c0_113, %c0_114] : memref<34x34x3xbf16, #tpu.memory_space<vmem>>, vector<8x32x3xbf16>
    %c2_i32_115 = arith.constant 2 : i32
    %124 = arith.addi %102, %c2_i32_115 : i32
    %125 = arith.index_cast %124 : i32 to index
    %c1_116 = arith.constant 1 : index
    %c0_117 = arith.constant 0 : index
    %126 = vector.load %arg5[%125, %c1_116, %c0_117] : memref<34x34x3xbf16, #tpu.memory_space<vmem>>, vector<8x32x3xbf16>
    %c2_i32_118 = arith.constant 2 : i32
    %127 = arith.addi %102, %c2_i32_118 : i32
    %128 = arith.index_cast %127 : i32 to index
    %c2_119 = arith.constant 2 : index
    %c0_120 = arith.constant 0 : index
    %129 = vector.load %arg5[%128, %c2_119, %c0_120] : memref<34x34x3xbf16, #tpu.memory_space<vmem>>, vector<8x32x3xbf16>
    %130 = tpu.concatenate %105, %108, %111, %114, %117, %120, %123, %126, %129 in 2 : vector<8x32x3xbf16>, vector<8x32x3xbf16>, vector<8x32x3xbf16>, vector<8x32x3xbf16>, vector<8x32x3xbf16>, vector<8x32x3xbf16>, vector<8x32x3xbf16>, vector<8x32x3xbf16>, vector<8x32x3xbf16> -> vector<8x32x27xbf16>
    %131 = vector.shape_cast %130 : vector<8x32x27xbf16> to vector<256x27xbf16>
    %c0_121 = arith.constant 0 : index
    %c0_122 = arith.constant 0 : index
    %c0_123 = arith.constant 0 : index
    %132 = vector.load %arg2[%c0_121, %c0_122, %c0_123] : memref<9x3x64xbf16, #tpu.memory_space<vmem>>, vector<9x3x64xbf16>
    %133 = vector.shape_cast %132 : vector<9x3x64xbf16> to vector<27x64xbf16>
    %cst_124 = arith.constant dense<0.000000e+00> : vector<256x64xf32>
    %134 = tpu.matmul %131, %133, %cst_124 {dimension_numbers = #tpu.dot_dimension_numbers<[1], [0], [0], [1], [0, 0, 1, 1], [], []>} : vector<256x27xbf16>, vector<27x64xbf16>, vector<256x64xf32> -> vector<256x64xf32>
    %c0_125 = arith.constant 0 : index
    %c0_126 = arith.constant 0 : index
    %135 = vector.load %arg3[%c0_125, %c0_126] : memref<1x64xf32, #tpu.memory_space<vmem>>, vector<1x64xf32>
    %136 = vector.broadcast %135 : vector<1x64xf32> to vector<256x64xf32>
    %137 = arith.addf %134, %136 : vector<256x64xf32>
    %cst_127 = arith.constant 0.000000e+00 : f32
    %138 = vector.broadcast %cst_127 : f32 to vector<256x64xf32>
    %139 = arith.maximumf %137, %138 : vector<256x64xf32>
    %140 = vector.shape_cast %139 : vector<256x64xf32> to vector<8x32x64xf32>
    %141 = arith.truncf %140 : vector<8x32x64xf32> to vector<8x32x64xbf16>
    %c0_128 = arith.constant 0 : index
    %142 = arith.index_cast %102 : i32 to index
    %c0_129 = arith.constant 0 : index
    %c0_130 = arith.constant 0 : index
    %143 = vector.load %arg4[%c0_128, %142, %c0_129, %c0_130] : memref<1x32x32x64xbf16, #tpu.memory_space<vmem>>, vector<1x8x32x64xbf16>
    %144 = vector.shape_cast %143 : vector<1x8x32x64xbf16> to vector<8x32x64xbf16>
    %145 = vector.shape_cast %141 : vector<8x32x64xbf16> to vector<1x8x32x64xbf16>
    tpu.vector_store %arg4[%c0_128, %142, %c0_129, %c0_130], %145 {strides = array<i32>} : memref<1x32x32x64xbf16, #tpu.memory_space<vmem>>, vector<1x8x32x64xbf16>,
    %c3_i32 = arith.constant 3 : i32
    %c8_i32_131 = arith.constant 8 : i32
    %146 = arith.muli %c3_i32, %c8_i32_131 : i32
    %147 = tpu.assume_multiple %146, 8 : i32
    %c0_i32_132 = arith.constant 0 : i32
    %148 = arith.addi %147, %c0_i32_132 : i32
    %149 = arith.index_cast %148 : i32 to index
    %c0_133 = arith.constant 0 : index
    %c0_134 = arith.constant 0 : index
    %150 = vector.load %arg5[%149, %c0_133, %c0_134] : memref<34x34x3xbf16, #tpu.memory_space<vmem>>, vector<8x32x3xbf16>
    %c0_i32_135 = arith.constant 0 : i32
    %151 = arith.addi %147, %c0_i32_135 : i32
    %152 = arith.index_cast %151 : i32 to index
    %c1_136 = arith.constant 1 : index
    %c0_137 = arith.constant 0 : index
    %153 = vector.load %arg5[%152, %c1_136, %c0_137] : memref<34x34x3xbf16, #tpu.memory_space<vmem>>, vector<8x32x3xbf16>
    %c0_i32_138 = arith.constant 0 : i32
    %154 = arith.addi %147, %c0_i32_138 : i32
    %155 = arith.index_cast %154 : i32 to index
    %c2_139 = arith.constant 2 : index
    %c0_140 = arith.constant 0 : index
    %156 = vector.load %arg5[%155, %c2_139, %c0_140] : memref<34x34x3xbf16, #tpu.memory_space<vmem>>, vector<8x32x3xbf16>
    %c1_i32_141 = arith.constant 1 : i32
    %157 = arith.addi %147, %c1_i32_141 : i32
    %158 = arith.index_cast %157 : i32 to index
    %c0_142 = arith.constant 0 : index
    %c0_143 = arith.constant 0 : index
    %159 = vector.load %arg5[%158, %c0_142, %c0_143] : memref<34x34x3xbf16, #tpu.memory_space<vmem>>, vector<8x32x3xbf16>
    %c1_i32_144 = arith.constant 1 : i32
    %160 = arith.addi %147, %c1_i32_144 : i32
    %161 = arith.index_cast %160 : i32 to index
    %c1_145 = arith.constant 1 : index
    %c0_146 = arith.constant 0 : index
    %162 = vector.load %arg5[%161, %c1_145, %c0_146] : memref<34x34x3xbf16, #tpu.memory_space<vmem>>, vector<8x32x3xbf16>
    %c1_i32_147 = arith.constant 1 : i32
    %163 = arith.addi %147, %c1_i32_147 : i32
    %164 = arith.index_cast %163 : i32 to index
    %c2_148 = arith.constant 2 : index
    %c0_149 = arith.constant 0 : index
    %165 = vector.load %arg5[%164, %c2_148, %c0_149] : memref<34x34x3xbf16, #tpu.memory_space<vmem>>, vector<8x32x3xbf16>
    %c2_i32_150 = arith.constant 2 : i32
    %166 = arith.addi %147, %c2_i32_150 : i32
    %167 = arith.index_cast %166 : i32 to index
    %c0_151 = arith.constant 0 : index
    %c0_152 = arith.constant 0 : index
    %168 = vector.load %arg5[%167, %c0_151, %c0_152] : memref<34x34x3xbf16, #tpu.memory_space<vmem>>, vector<8x32x3xbf16>
    %c2_i32_153 = arith.constant 2 : i32
    %169 = arith.addi %147, %c2_i32_153 : i32
    %170 = arith.index_cast %169 : i32 to index
    %c1_154 = arith.constant 1 : index
    %c0_155 = arith.constant 0 : index
    %171 = vector.load %arg5[%170, %c1_154, %c0_155] : memref<34x34x3xbf16, #tpu.memory_space<vmem>>, vector<8x32x3xbf16>
    %c2_i32_156 = arith.constant 2 : i32
    %172 = arith.addi %147, %c2_i32_156 : i32
    %173 = arith.index_cast %172 : i32 to index
    %c2_157 = arith.constant 2 : index
    %c0_158 = arith.constant 0 : index
    %174 = vector.load %arg5[%173, %c2_157, %c0_158] : memref<34x34x3xbf16, #tpu.memory_space<vmem>>, vector<8x32x3xbf16>
    %175 = tpu.concatenate %150, %153, %156, %159, %162, %165, %168, %171, %174 in 2 : vector<8x32x3xbf16>, vector<8x32x3xbf16>, vector<8x32x3xbf16>, vector<8x32x3xbf16>, vector<8x32x3xbf16>, vector<8x32x3xbf16>, vector<8x32x3xbf16>, vector<8x32x3xbf16>, vector<8x32x3xbf16> -> vector<8x32x27xbf16>
    %176 = vector.shape_cast %175 : vector<8x32x27xbf16> to vector<256x27xbf16>
    %c0_159 = arith.constant 0 : index
    %c0_160 = arith.constant 0 : index
    %c0_161 = arith.constant 0 : index
    %177 = vector.load %arg2[%c0_159, %c0_160, %c0_161] : memref<9x3x64xbf16, #tpu.memory_space<vmem>>, vector<9x3x64xbf16>
    %178 = vector.shape_cast %177 : vector<9x3x64xbf16> to vector<27x64xbf16>
    %cst_162 = arith.constant dense<0.000000e+00> : vector<256x64xf32>
    %179 = tpu.matmul %176, %178, %cst_162 {dimension_numbers = #tpu.dot_dimension_numbers<[1], [0], [0], [1], [0, 0, 1, 1], [], []>} : vector<256x27xbf16>, vector<27x64xbf16>, vector<256x64xf32> -> vector<256x64xf32>
    %c0_163 = arith.constant 0 : index
    %c0_164 = arith.constant 0 : index
    %180 = vector.load %arg3[%c0_163, %c0_164] : memref<1x64xf32, #tpu.memory_space<vmem>>, vector<1x64xf32>
    %181 = vector.broadcast %180 : vector<1x64xf32> to vector<256x64xf32>
    %182 = arith.addf %179, %181 : vector<256x64xf32>
    %cst_165 = arith.constant 0.000000e+00 : f32
    %183 = vector.broadcast %cst_165 : f32 to vector<256x64xf32>
    %184 = arith.maximumf %182, %183 : vector<256x64xf32>
    %185 = vector.shape_cast %184 : vector<256x64xf32> to vector<8x32x64xf32>
    %186 = arith.truncf %185 : vector<8x32x64xf32> to vector<8x32x64xbf16>
    %c0_166 = arith.constant 0 : index
    %187 = arith.index_cast %147 : i32 to index
    %c0_167 = arith.constant 0 : index
    %c0_168 = arith.constant 0 : index
    %188 = vector.load %arg4[%c0_166, %187, %c0_167, %c0_168] : memref<1x32x32x64xbf16, #tpu.memory_space<vmem>>, vector<1x8x32x64xbf16>
    %189 = vector.shape_cast %188 : vector<1x8x32x64xbf16> to vector<8x32x64xbf16>
    %190 = vector.shape_cast %186 : vector<8x32x64xbf16> to vector<1x8x32x64xbf16>
    tpu.vector_store %arg4[%c0_166, %187, %c0_167, %c0_168], %190 {strides = array<i32>} : memref<1x32x32x64xbf16, #tpu.memory_space<vmem>>, vector<1x8x32x64xbf16>,
    %c4_i32 = arith.constant 4 : i32
    return
  }
  func.func @transform_0(%arg0: i32) -> (i32, i32, i32, i32) {
    %c0_i32 = arith.constant 0 : i32
    %c0_i32_0 = arith.constant 0 : i32
    %c0_i32_1 = arith.constant 0 : i32
    %c0_i32_2 = arith.constant 0 : i32
    return %arg0, %c0_i32, %c0_i32_0, %c0_i32_1 : i32, i32, i32, i32
  }
  func.func @transform_1(%arg0: i32) -> (i32, i32, i32) {
    %c0_i32 = arith.constant 0 : i32
    %c0_i32_0 = arith.constant 0 : i32
    %c0_i32_1 = arith.constant 0 : i32
    %c0_i32_2 = arith.constant 0 : i32
    return %c0_i32, %c0_i32_0, %c0_i32_1 : i32, i32, i32
  }
  func.func @transform_2(%arg0: i32) -> (i32, i32) {
    %c0_i32 = arith.constant 0 : i32
    %c0_i32_0 = arith.constant 0 : i32
    %c0_i32_1 = arith.constant 0 : i32
    return %c0_i32, %c0_i32_0 : i32, i32
  }
  func.func @transform_3(%arg0: i32) -> (i32, i32, i32, i32) {
    %c0_i32 = arith.constant 0 : i32
    %c0_i32_0 = arith.constant 0 : i32
    %c0_i32_1 = arith.constant 0 : i32
    %c0_i32_2 = arith.constant 0 : i32
    return %arg0, %c0_i32, %c0_i32_0, %c0_i32_1 : i32, i32, i32, i32
  }
}

</mosaic_0001>

<llo_original>
// kernel: tpu_custom_call.1
$region0: #{tpu_custom_call.1}
  #allocation0 [shape = 'u32[]', space=smem, size = 0x4, offset = 0x4, fixed_abs, tag = 'smem constant byte address 0x4 - core index']
  #allocation1 [shape = 'u32[72,128]{1,0:T(1,128)}', space=vmem, size = 0x9000, scoped, tag = 'internal scratch']
  #allocation2 [shape = 'bf16[34,34,3]{2,1,0:T(8,128)(2,1)}', space=vmem, size = 0x55000, scoped, tag = 'scratch operand']
  %s0 = inlined_call_operand.vmem [shape: bf16[2,32,32,3], index: 0, kind: input, shape index: {}]
  %s1 = inlined_call_operand.vmem [shape: bf16[9,3,64], index: 1, kind: input, shape index: {}]
  %s2 = inlined_call_operand.vmem [shape: f32[1,64], index: 2, kind: input, shape index: {}]
  %s3 = inlined_call_operand.hbm [shape: bf16[2,32,32,64], index: 3, kind: output, shape index: {}]
  %s4 = sld [smem:[#allocation0]]
  $region45: #{tpu_custom_call.1} parent=0
    _
  %s6 = ssub.s32 1, %s4
  %s7 = scalar_select 0, %s6, %s4
  $region1: #{tpu_custom_call.1} parent=0
    #allocation3 [shape = 'u8[524288]{0}', space=vmem, size = 0x80000, scoped, tag = 'output window, operand 0']
    #allocation4 [shape = 's32[2]{0}', space=sflag, size = 0x8, scoped, tag = 'scoped memory for tpu_custom_call.1']
    %8 = vsyncpa [#allocation4], 0
    %s9 = scalar_lea.sflag [#allocation4], 1
    %10 = vsyncpa %s9, 0
    loop: start=0, step=1, limit=4
    $region2: #{tpu_custom_call.1} parent=1 // loop_pre_header
      _
    $region3: #{tpu_custom_call.1} parent=1 // loop_header
      %s12 = sphi 0, %s16
      %p13 = scmp.ge.s32.totalorder %s12, 4
      %s22 = sphi 0, %s24
      %s25 = sphi 0, %s22
      %s26 = sphi 0, %s25
      %s42 = sphi 0, %s26
      %s46 = sphi 0, %s46
      %s48 = sphi 0, %s46
      %s49 = sphi 0, %s48
      %s63 = sphi 0, %s49
      %s67 = sphi 0, %s67
      %s69 = sphi 0, %s67
      %s70 = sphi 0, %s69
      %s84 = sphi 0, %s70
      %s90 = sphi 0, %s92
      %s93 = sphi 0, %s90
      %s94 = sphi 0, %s93
      %s110 = sphi 0, %s94
    $region4: #{tpu_custom_call.1} parent=1 // loop_header_branch
      %15 = sbr.rel (%p13) target = $region8
    $region5: #{tpu_custom_call.1} parent=1 // loop_body
      %s17 = ssub.s32 %s12, 1
      %s18 = ssub.s32 %s12, 2
      %s19 = sadd.s32 %s12, 1
      %s20 = ssub.s32 %s12, %s19
      %p21 = scmp.eq.s32.totalorder %s20, 0
      %s23 = sadd.s32 %s22, 1
      %s24 = scalar_select %p21, %s22, %s23
      %p27 = pneg %p21
      %p28 = scmp.eq.s32.totalorder %s12, 1
      %p29 = por %p27, %p28
      %p30 = scmp.ne.s32.totalorder %s22, %s25
      %p31 = scmp.eq.s32.totalorder %s12, 0
      %p32 = por %p30, %p31
      %p33 = scmp.ne.s32.totalorder %s22, %s25
      %p34 = scmp.eq.s32.totalorder %s17, 1
      %p35 = por %p33, %p34
      %p36 = scmp.ne.s32.totalorder %s25, %s26
      %p37 = scmp.eq.s32.totalorder %s17, 0
      %p38 = por %p36, %p37
      %p39 = scmp.ne.s32.totalorder %s25, %s26
      %p40 = scmp.eq.s32.totalorder %s18, 1
      %p41 = por %p39, %p40
      %p43 = scmp.ne.s32.totalorder %s26, %s42
      %p44 = scmp.eq.s32.totalorder %s18, 0
      %p45 = por %p43, %p44
      %s47 = sadd.s32 %s46, 1
      %p50 = scmp.eq.s32.totalorder %s12, 1
      %p51 = scmp.ne.s32.totalorder %s46, %s48
      %p52 = scmp.eq.s32.totalorder %s12, 0
      %p53 = por %p51, %p52
      %p54 = scmp.ne.s32.totalorder %s46, %s48
      %p55 = scmp.eq.s32.totalorder %s17, 1
      %p56 = por %p54, %p55
      %p57 = scmp.ne.s32.totalorder %s48, %s49
      %p58 = scmp.eq.s32.totalorder %s17, 0
      %p59 = por %p57, %p58
      %p60 = scmp.ne.s32.totalorder %s48, %s49
      %p61 = scmp.eq.s32.totalorder %s18, 1
      %p62 = por %p60, %p61
      %p64 = scmp.ne.s32.totalorder %s49, %s63
      %p65 = scmp.eq.s32.totalorder %s18, 0
      %p66 = por %p64, %p65
      %s68 = sadd.s32 %s67, 1
      %p71 = scmp.eq.s32.totalorder %s12, 1
      %p72 = scmp.ne.s32.totalorder %s67, %s69
      %p73 = scmp.eq.s32.totalorder %s12, 0
      %p74 = por %p72, %p73
      %p75 = scmp.ne.s32.totalorder %s67, %s69
      %p76 = scmp.eq.s32.totalorder %s17, 1
      %p77 = por %p75, %p76
      %p78 = scmp.ne.s32.totalorder %s69, %s70
      %p79 = scmp.eq.s32.totalorder %s17, 0
      %p80 = por %p78, %p79
      %p81 = scmp.ne.s32.totalorder %s69, %s70
      %p82 = scmp.eq.s32.totalorder %s18, 1
      %p83 = por %p81, %p82
      %p85 = scmp.ne.s32.totalorder %s70, %s84
      %p86 = scmp.eq.s32.totalorder %s18, 0
      %p87 = por %p85, %p86
      %s88 = ssub.s32 %s12, %s19
      %p89 = scmp.eq.s32.totalorder %s88, 0
      %s91 = sadd.s32 %s90, 1
      %s92 = scalar_select %p89, %s90, %s91
      %p95 = pneg %p89
      %p96 = scmp.eq.s32.totalorder %s12, 1
      %p97 = por %p95, %p96
      %p98 = scmp.ne.s32.totalorder %s90, %s93
      %p99 = scmp.eq.s32.totalorder %s12, 0
      %p100 = por %p98, %p99
      %p101 = scmp.ne.s32.totalorder %s90, %s93
      %p102 = scmp.eq.s32.totalorder %s17, 1
      %p103 = por %p101, %p102
      %p104 = scmp.ne.s32.totalorder %s93, %s94
      %p105 = scmp.eq.s32.totalorder %s17, 0
      %p106 = por %p104, %p105
      %p107 = scmp.ne.s32.totalorder %s93, %s94
      %p108 = scmp.eq.s32.totalorder %s18, 1
      %p109 = por %p107, %p108
      %p111 = scmp.ne.s32.totalorder %s94, %s110
      %p112 = scmp.eq.s32.totalorder %s18, 0
      %p113 = por %p111, %p112
      %p114 = scmp.le.s32.totalorder 1, %s12
      %p115 = scmp.lt.s32.totalorder %s12, 3
      %p116 = pnand %p114, %p115
      %p117 = pneg %p116
      // Predicated region
      $region9: #{tpu_custom_call.1} parent=5 // pred_check
        _
      $region10: #{tpu_custom_call.1} parent=5 // pred_check_branch
        %119 = sbr.rel (%p116) target = $region12
      $region11: #{tpu_custom_call.1} parent=5 // pred_region
        %s120 = ssub.s32 %s12, 1
        // Predicated region
        $region13: #{tpu_custom_call.1} parent=11 // pred_check
          %p121 = pneg %p59
        $region14: #{tpu_custom_call.1} parent=11 // pred_check_branch
          %123 = sbr.rel (%p121) target = $region16
        $region15: #{tpu_custom_call.1} parent=11 // pred_region
          _
        $region16: #{tpu_custom_call.1} parent=11 // pred_fallthru
          _
        // Predicated region
        $region17: #{tpu_custom_call.1} parent=11 // pred_check
          %p124 = pneg %p80
        $region18: #{tpu_custom_call.1} parent=11 // pred_check_branch
          %126 = sbr.rel (%p124) target = $region20
        $region19: #{tpu_custom_call.1} parent=11 // pred_region
          _
        $region20: #{tpu_custom_call.1} parent=11 // pred_fallthru
          _
      $region12: #{tpu_custom_call.1} parent=5 // pred_fallthru
        _
      %p127 = scmp.lt.s32.totalorder %s12, 2
      // Predicated region
      $region21: #{tpu_custom_call.1} parent=5 // pred_check
        %p128 = pneg %p127
      $region22: #{tpu_custom_call.1} parent=5 // pred_check_branch
        %130 = sbr.rel (%p128) target = $region24
      $region23: #{tpu_custom_call.1} parent=5 // pred_region
        // Predicated region
        $region25: #{tpu_custom_call.1} parent=23 // pred_check
          %p131 = pneg %p32
        $region26: #{tpu_custom_call.1} parent=23 // pred_check_branch
          %133 = sbr.rel (%p131) target = $region28
        $region27: #{tpu_custom_call.1} parent=23 // pred_region
          %p134 = scmp.lt.s32.totalorder %s12, 1
          %s135 = scalar_select %p134, %s12, 1
          %s136 = smul.addr %s135, 128
          %s137 = smul.addr %s136, 4
          %s138 = scalar_lea.vmem %s0, %s137
        $region28: #{tpu_custom_call.1} parent=23 // pred_fallthru
          _
      $region24: #{tpu_custom_call.1} parent=5 // pred_fallthru
        _
      %p139 = scmp.le.s32.totalorder 1, %s12
      %p140 = scmp.lt.s32.totalorder %s12, 3
      %p141 = pnand %p139, %p140
      %p142 = pneg %p141
      // Predicated region
      $region29: #{tpu_custom_call.1} parent=5 // pred_check
        _
      $region30: #{tpu_custom_call.1} parent=5 // pred_check_branch
        %144 = sbr.rel (%p141) target = $region32
      $region31: #{tpu_custom_call.1} parent=5 // pred_region
        %s145 = ssub.s32 %s12, 1
        %p146 = scmp.lt.s32.totalorder %s17, 1
        %s147 = scalar_select %p146, %s17, 1
        %s148 = smul.addr %s147, 128
        %s149 = smul.addr %s148, 4
        %s150 = scalar_lea.vmem %s0, %s149
        %p151 = pneg %p38
        %p152 = pneg %p35
        %p153 = pneg %p59
        %p154 = pneg %p56
        %p155 = pneg %p80
        %p156 = pneg %p77
        %p157 = pneg %p106
        %p158 = pneg %p103
        %s159 = sand.u32 %s93, 1
        %s160 = scalar_lea.sflag [#allocation4], %s159
        %s161 = sand.u32 %s93, 1
        %s162 = smul.addr %s161, 512
        %s163 = scalar_lea.vmem [#allocation3], %s162
        %p164 = scmp.lt.s32.totalorder %s17, 1
        %s165 = scalar_select %p164, %s17, 1
        %s166 = smul.addr %s165, 128
        %s167 = smul.addr %s166, 4
        %s168 = scalar_lea.vmem %s0, %s167
        %vm170 = vcmask 19456
        %171 = vst.msk [vmem:[#allocation2] sm:$0xf] %vm170, 0
        %172 = vst.msk [vmem:[#allocation2 + $0x4] sm:$0xf] %vm170, 0
        %173 = vst.msk [vmem:[#allocation2 + $0x8] sm:$0xf] %vm170, 0
        %174 = vst.msk [vmem:[#allocation2 + $0xc] sm:$0xf] %vm170, 0
        %vm175 = vcmask 16384
        %176 = vst.msk [vmem:[#allocation2 + $0x10] sm:$0x1] %vm175, 0
        %s177 = scalar_lea.vmem [#allocation2], 660
        %178 = vst.msk [vmem:[%s177] sm:$0xf] %vm170, 0
        %179 = vst.msk [vmem:[%s177 + $0x4] sm:$0xf] %vm170, 0
        %180 = vst.msk [vmem:[%s177 + $0x8] sm:$0xf] %vm170, 0
        %181 = vst.msk [vmem:[%s177 + $0xc] sm:$0xf] %vm170, 0
        %182 = vst.msk [vmem:[%s177 + $0x10] sm:$0x1] %vm175, 0
        %vm183 = vcmask 16384
        %vm184 = vsmask.f32 256
        %vm185 = vmand %vm183, %vm184
        %v186 = vld [vmem:[#allocation2] sm:$0x1]
        %v187 = vsel %vm185, 0, %v186
        %188 = vst [vmem:[#allocation2] sm:$0x1] %v187
        %v189 = vld [vmem:[#allocation2 + $0x14] sm:$0x1]
        %v190 = vsel %vm185, 0, %v189
        %191 = vst [vmem:[#allocation2 + $0x14] sm:$0x1] %v190
        %v192 = vld [vmem:[#allocation2 + $0x28] sm:$0x1]
        %v193 = vsel %vm185, 0, %v192
        %194 = vst [vmem:[#allocation2 + $0x28] sm:$0x1] %v193
        %v195 = vld [vmem:[#allocation2 + $0x3c] sm:$0x1]
        %v196 = vsel %vm185, 0, %v195
        %197 = vst [vmem:[#allocation2 + $0x3c] sm:$0x1] %v196
        %v198 = vld [vmem:[#allocation2 + $0x50] sm:$0x1]
        %v199 = vsel %vm185, 0, %v198
        %200 = vst [vmem:[#allocation2 + $0x50] sm:$0x1] %v199
        %v201 = vld [vmem:[#allocation2 + $0x64] sm:$0x1]
        %v202 = vsel %vm185, 0, %v201
        %203 = vst [vmem:[#allocation2 + $0x64] sm:$0x1] %v202
        %v204 = vld [vmem:[#allocation2 + $0x78] sm:$0x1]
        %v205 = vsel %vm185, 0, %v204
        %206 = vst [vmem:[#allocation2 + $0x78] sm:$0x1] %v205
        %v207 = vld [vmem:[#allocation2 + $0x8c] sm:$0x1]
        %v208 = vsel %vm185, 0, %v207
        %209 = vst [vmem:[#allocation2 + $0x8c] sm:$0x1] %v208
        %v210 = vld [vmem:[#allocation2 + $0xa0] sm:$0x1]
        %v211 = vsel %vm185, 0, %v210
        %212 = vst [vmem:[#allocation2 + $0xa0] sm:$0x1] %v211
        %v213 = vld [vmem:[#allocation2 + $0xb4] sm:$0x1]
        %v214 = vsel %vm185, 0, %v213
        %215 = vst [vmem:[#allocation2 + $0xb4] sm:$0x1] %v214
        %v216 = vld [vmem:[#allocation2 + $0xc8] sm:$0x1]
        %v217 = vsel %vm185, 0, %v216
        %218 = vst [vmem:[#allocation2 + $0xc8] sm:$0x1] %v217
        %v219 = vld [vmem:[#allocation2 + $0xdc] sm:$0x1]
        %v220 = vsel %vm185, 0, %v219
        %221 = vst [vmem:[#allocation2 + $0xdc] sm:$0x1] %v220
        %v222 = vld [vmem:[#allocation2 + $0xf0] sm:$0x1]
        %v223 = vsel %vm185, 0, %v222
        %224 = vst [vmem:[#allocation2 + $0xf0] sm:$0x1] %v223
        %v225 = vld [vmem:[#allocation2 + $0x104] sm:$0x1]
        %v226 = vsel %vm185, 0, %v225
        %227 = vst [vmem:[#allocation2 + $0x104] sm:$0x1] %v226
        %v228 = vld [vmem:[#allocation2 + $0x118] sm:$0x1]
        %v229 = vsel %vm185, 0, %v228
        %230 = vst [vmem:[#allocation2 + $0x118] sm:$0x1] %v229
        %v231 = vld [vmem:[#allocation2 + $0x12c] sm:$0x1]
        %v232 = vsel %vm185, 0, %v231
        %233 = vst [vmem:[#allocation2 + $0x12c] sm:$0x1] %v232
        %v234 = vld [vmem:[#allocation2 + $0x140] sm:$0x1]
        %v235 = vsel %vm185, 0, %v234
        %236 = vst [vmem:[#allocation2 + $0x140] sm:$0x1] %v235
        %v237 = vld [vmem:[#allocation2 + $0x154] sm:$0x1]
        %v238 = vsel %vm185, 0, %v237
        %239 = vst [vmem:[#allocation2 + $0x154] sm:$0x1] %v238
        %v240 = vld [vmem:[#allocation2 + $0x168] sm:$0x1]
        %v241 = vsel %vm185, 0, %v240
        %242 = vst [vmem:[#allocation2 + $0x168] sm:$0x1] %v241
        %v243 = vld [vmem:[#allocation2 + $0x17c] sm:$0x1]
        %v244 = vsel %vm185, 0, %v243
        %245 = vst [vmem:[#allocation2 + $0x17c] sm:$0x1] %v244
        %v246 = vld [vmem:[#allocation2 + $0x190] sm:$0x1]
        %v247 = vsel %vm185, 0, %v246
        %248 = vst [vmem:[#allocation2 + $0x190] sm:$0x1] %v247
        %v249 = vld [vmem:[#allocation2 + $0x1a4] sm:$0x1]
        %v250 = vsel %vm185, 0, %v249
        %251 = vst [vmem:[#allocation2 + $0x1a4] sm:$0x1] %v250
        %v252 = vld [vmem:[#allocation2 + $0x1b8] sm:$0x1]
        %v253 = vsel %vm185, 0, %v252
        %254 = vst [vmem:[#allocation2 + $0x1b8] sm:$0x1] %v253
        %v255 = vld [vmem:[#allocation2 + $0x1cc] sm:$0x1]
        %v256 = vsel %vm185, 0, %v255
        %257 = vst [vmem:[#allocation2 + $0x1cc] sm:$0x1] %v256
        %v258 = vld [vmem:[#allocation2 + $0x1e0] sm:$0x1]
        %v259 = vsel %vm185, 0, %v258
        %260 = vst [vmem:[#allocation2 + $0x1e0] sm:$0x1] %v259
        %v261 = vld [vmem:[#allocation2 + $0x1f4] sm:$0x1]
        %v262 = vsel %vm185, 0, %v261
        %263 = vst [vmem:[#allocation2 + $0x1f4] sm:$0x1] %v262
        %v264 = vld [vmem:[#allocation2 + $0x208] sm:$0x1]
        %v265 = vsel %vm185, 0, %v264
        %266 = vst [vmem:[#allocation2 + $0x208] sm:$0x1] %v265
        %v267 = vld [vmem:[#allocation2 + $0x21c] sm:$0x1]
        %v268 = vsel %vm185, 0, %v267
        %269 = vst [vmem:[#allocation2 + $0x21c] sm:$0x1] %v268
        %v270 = vld [vmem:[#allocation2 + $0x230] sm:$0x1]
        %v271 = vsel %vm185, 0, %v270
        %272 = vst [vmem:[#allocation2 + $0x230] sm:$0x1] %v271
        %v273 = vld [vmem:[#allocation2 + $0x244] sm:$0x1]
        %v274 = vsel %vm185, 0, %v273
        %275 = vst [vmem:[#allocation2 + $0x244] sm:$0x1] %v274
        %v276 = vld [vmem:[#allocation2 + $0x258] sm:$0x1]
        %v277 = vsel %vm185, 0, %v276
        %278 = vst [vmem:[#allocation2 + $0x258] sm:$0x1] %v277
        %v279 = vld [vmem:[#allocation2 + $0x26c] sm:$0x1]
        %v280 = vsel %vm185, 0, %v279
        %281 = vst [vmem:[#allocation2 + $0x26c] sm:$0x1] %v280
        %v282 = vld [vmem:[#allocation2 + $0x280] sm:$0x1]
        %v283 = vsel %vm185, 0, %v282
        %284 = vst [vmem:[#allocation2 + $0x280] sm:$0x1] %v283
        %v285 = vld [vmem:[#allocation2 + $0x294] sm:$0x1]
        %v286 = vsel %vm185, 0, %v285
        %287 = vst [vmem:[#allocation2 + $0x294] sm:$0x1] %v286
        %vm288 = vsmask.f32 7938
        %vm289 = vmand %vm183, %vm288
        %v290 = vld [vmem:[#allocation2 + $0x10] sm:$0x1]
        %v291 = vsel %vm289, 0, %v290
        %292 = vst [vmem:[#allocation2 + $0x10] sm:$0x1] %v291
        %v293 = vld [vmem:[#allocation2 + $0x24] sm:$0x1]
        %v294 = vsel %vm289, 0, %v293
        %295 = vst [vmem:[#allocation2 + $0x24] sm:$0x1] %v294
        %v296 = vld [vmem:[#allocation2 + $0x38] sm:$0x1]
        %v297 = vsel %vm289, 0, %v296
        %298 = vst [vmem:[#allocation2 + $0x38] sm:$0x1] %v297
        %v299 = vld [vmem:[#allocation2 + $0x4c] sm:$0x1]
        %v300 = vsel %vm289, 0, %v299
        %301 = vst [vmem:[#allocation2 + $0x4c] sm:$0x1] %v300
        %v302 = vld [vmem:[#allocation2 + $0x60] sm:$0x1]
        %v303 = vsel %vm289, 0, %v302
        %304 = vst [vmem:[#allocation2 + $0x60] sm:$0x1] %v303
        %v305 = vld [vmem:[#allocation2 + $0x74] sm:$0x1]
        %v306 = vsel %vm289, 0, %v305
        %307 = vst [vmem:[#allocation2 + $0x74] sm:$0x1] %v306
        %v308 = vld [vmem:[#allocation2 + $0x88] sm:$0x1]
        %v309 = vsel %vm289, 0, %v308
        %310 = vst [vmem:[#allocation2 + $0x88] sm:$0x1] %v309
        %v311 = vld [vmem:[#allocation2 + $0x9c] sm:$0x1]
        %v312 = vsel %vm289, 0, %v311
        %313 = vst [vmem:[#allocation2 + $0x9c] sm:$0x1] %v312
        %v314 = vld [vmem:[#allocation2 + $0xb0] sm:$0x1]
        %v315 = vsel %vm289, 0, %v314
        %316 = vst [vmem:[#allocation2 + $0xb0] sm:$0x1] %v315
        %v317 = vld [vmem:[#allocation2 + $0xc4] sm:$0x1]
        %v318 = vsel %vm289, 0, %v317
        %319 = vst [vmem:[#allocation2 + $0xc4] sm:$0x1] %v318
        %v320 = vld [vmem:[#allocation2 + $0xd8] sm:$0x1]
        %v321 = vsel %vm289, 0, %v320
        %322 = vst [vmem:[#allocation2 + $0xd8] sm:$0x1] %v321
        %v323 = vld [vmem:[#allocation2 + $0xec] sm:$0x1]
        %v324 = vsel %vm289, 0, %v323
        %325 = vst [vmem:[#allocation2 + $0xec] sm:$0x1] %v324
        %v326 = vld [vmem:[#allocation2 + $0x100] sm:$0x1]
        %v327 = vsel %vm289, 0, %v326
        %328 = vst [vmem:[#allocation2 + $0x100] sm:$0x1] %v327
        %v329 = vld [vmem:[#allocation2 + $0x114] sm:$0x1]
        %v330 = vsel %vm289, 0, %v329
        %331 = vst [vmem:[#allocation2 + $0x114] sm:$0x1] %v330
        %v332 = vld [vmem:[#allocation2 + $0x128] sm:$0x1]
        %v333 = vsel %vm289, 0, %v332
        %334 = vst [vmem:[#allocation2 + $0x128] sm:$0x1] %v333
        %v335 = vld [vmem:[#allocation2 + $0x13c] sm:$0x1]
        %v336 = vsel %vm289, 0, %v335
        %337 = vst [vmem:[#allocation2 + $0x13c] sm:$0x1] %v336
        %v338 = vld [vmem:[#allocation2 + $0x150] sm:$0x1]
        %v339 = vsel %vm289, 0, %v338
        %340 = vst [vmem:[#allocation2 + $0x150] sm:$0x1] %v339
        %v341 = vld [vmem:[#allocation2 + $0x164] sm:$0x1]
        %v342 = vsel %vm289, 0, %v341
        %343 = vst [vmem:[#allocation2 + $0x164] sm:$0x1] %v342
        %v344 = vld [vmem:[#allocation2 + $0x178] sm:$0x1]
        %v345 = vsel %vm289, 0, %v344
        %346 = vst [vmem:[#allocation2 + $0x178] sm:$0x1] %v345
        %v347 = vld [vmem:[#allocation2 + $0x18c] sm:$0x1]
        %v348 = vsel %vm289, 0, %v347
        %349 = vst [vmem:[#allocation2 + $0x18c] sm:$0x1] %v348
        %v350 = vld [vmem:[#allocation2 + $0x1a0] sm:$0x1]
        %v351 = vsel %vm289, 0, %v350
        %352 = vst [vmem:[#allocation2 + $0x1a0] sm:$0x1] %v351
        %v353 = vld [vmem:[#allocation2 + $0x1b4] sm:$0x1]
        %v354 = vsel %vm289, 0, %v353
        %355 = vst [vmem:[#allocation2 + $0x1b4] sm:$0x1] %v354
        %v356 = vld [vmem:[#allocation2 + $0x1c8] sm:$0x1]
        %v357 = vsel %vm289, 0, %v356
        %358 = vst [vmem:[#allocation2 + $0x1c8] sm:$0x1] %v357
        %v359 = vld [vmem:[#allocation2 + $0x1dc] sm:$0x1]
        %v360 = vsel %vm289, 0, %v359
        %361 = vst [vmem:[#allocation2 + $0x1dc] sm:$0x1] %v360
        %v362 = vld [vmem:[#allocation2 + $0x1f0] sm:$0x1]
        %v363 = vsel %vm289, 0, %v362
        %364 = vst [vmem:[#allocation2 + $0x1f0] sm:$0x1] %v363
        %v365 = vld [vmem:[#allocation2 + $0x204] sm:$0x1]
        %v366 = vsel %vm289, 0, %v365
        %367 = vst [vmem:[#allocation2 + $0x204] sm:$0x1] %v366
        %v368 = vld [vmem:[#allocation2 + $0x218] sm:$0x1]
        %v369 = vsel %vm289, 0, %v368
        %370 = vst [vmem:[#allocation2 + $0x218] sm:$0x1] %v369
        %v371 = vld [vmem:[#allocation2 + $0x22c] sm:$0x1]
        %v372 = vsel %vm289, 0, %v371
        %373 = vst [vmem:[#allocation2 + $0x22c] sm:$0x1] %v372
        %v374 = vld [vmem:[#allocation2 + $0x240] sm:$0x1]
        %v375 = vsel %vm289, 0, %v374
        %376 = vst [vmem:[#allocation2 + $0x240] sm:$0x1] %v375
        %v377 = vld [vmem:[#allocation2 + $0x254] sm:$0x1]
        %v378 = vsel %vm289, 0, %v377
        %379 = vst [vmem:[#allocation2 + $0x254] sm:$0x1] %v378
        %v380 = vld [vmem:[#allocation2 + $0x268] sm:$0x1]
        %v381 = vsel %vm289, 0, %v380
        %382 = vst [vmem:[#allocation2 + $0x268] sm:$0x1] %v381
        %v383 = vld [vmem:[#allocation2 + $0x27c] sm:$0x1]
        %v384 = vsel %vm289, 0, %v383
        %385 = vst [vmem:[#allocation2 + $0x27c] sm:$0x1] %v384
        %v386 = vld [vmem:[#allocation2 + $0x290] sm:$0x1]
        %v387 = vsel %vm289, 0, %v386
        %388 = vst [vmem:[#allocation2 + $0x290] sm:$0x1] %v387
        %v389 = vld [vmem:[#allocation2 + $0x2a4] sm:$0x1]
        %v390 = vsel %vm289, 0, %v389
        %391 = vst [vmem:[#allocation2 + $0x2a4] sm:$0x1] %v390
        %v392 = vld [vmem:[%s168] sm:$0xf]
        %v393 = vld [vmem:[%s168 + $0x4] sm:$0xf]
        %v394 = vld [vmem:[%s168 + $0x8] sm:$0xf]
        %v395 = vld [vmem:[%s168 + $0xc] sm:$0xf]
        %v396 = vld [vmem:[%s168 + $0x10] sm:$0xf]
        %v397 = vld [vmem:[%s168 + $0x14] sm:$0xf]
        %v398 = vld [vmem:[%s168 + $0x18] sm:$0xf]
        %v399 = vld [vmem:[%s168 + $0x1c] sm:$0xf]
        %v400 = vld [vmem:[%s168 + $0x20] sm:$0xf]
        %v401 = vld [vmem:[%s168 + $0x24] sm:$0xf]
        %v402 = vld [vmem:[%s168 + $0x28] sm:$0xf]
        %v403 = vld [vmem:[%s168 + $0x2c] sm:$0xf]
        %v404 = vld [vmem:[%s168 + $0x30] sm:$0xf]
        %v405 = vld [vmem:[%s168 + $0x34] sm:$0xf]
        %v406 = vld [vmem:[%s168 + $0x38] sm:$0xf]
        %v407 = vld [vmem:[%s168 + $0x3c] sm:$0xf]
        %v408 = vld [vmem:[%s168 + $0x40] sm:$0xf]
        %v409 = vld [vmem:[%s168 + $0x44] sm:$0xf]
        %v410 = vld [vmem:[%s168 + $0x48] sm:$0xf]
        %v411 = vld [vmem:[%s168 + $0x4c] sm:$0xf]
        %v412 = vld [vmem:[%s168 + $0x50] sm:$0xf]
        %v413 = vld [vmem:[%s168 + $0x54] sm:$0xf]
        %v414 = vld [vmem:[%s168 + $0x58] sm:$0xf]
        %v415 = vld [vmem:[%s168 + $0x5c] sm:$0xf]
        %v416 = vld [vmem:[%s168 + $0x60] sm:$0xf]
        %v417 = vld [vmem:[%s168 + $0x64] sm:$0xf]
        %v418 = vld [vmem:[%s168 + $0x68] sm:$0xf]
        %v419 = vld [vmem:[%s168 + $0x6c] sm:$0xf]
        %v420 = vld [vmem:[%s168 + $0x70] sm:$0xf]
        %v421 = vld [vmem:[%s168 + $0x74] sm:$0xf]
        %v422 = vld [vmem:[%s168 + $0x78] sm:$0xf]
        %v423 = vld [vmem:[%s168 + $0x7c] sm:$0xf]
        %v424 = vld [vmem:[%s168 + $0x80] sm:$0xf]
        %v425 = vld [vmem:[%s168 + $0x84] sm:$0xf]
        %v426 = vld [vmem:[%s168 + $0x88] sm:$0xf]
        %v427 = vld [vmem:[%s168 + $0x8c] sm:$0xf]
        %v428 = vld [vmem:[%s168 + $0x90] sm:$0xf]
        %v429 = vld [vmem:[%s168 + $0x94] sm:$0xf]
        %v430 = vld [vmem:[%s168 + $0x98] sm:$0xf]
        %v431 = vld [vmem:[%s168 + $0x9c] sm:$0xf]
        %v432 = vld [vmem:[%s168 + $0xa0] sm:$0xf]
        %v433 = vld [vmem:[%s168 + $0xa4] sm:$0xf]
        %v434 = vld [vmem:[%s168 + $0xa8] sm:$0xf]
        %v435 = vld [vmem:[%s168 + $0xac] sm:$0xf]
        %v436 = vld [vmem:[%s168 + $0xb0] sm:$0xf]
        %v437 = vld [vmem:[%s168 + $0xb4] sm:$0xf]
        %v438 = vld [vmem:[%s168 + $0xb8] sm:$0xf]
        %v439 = vld [vmem:[%s168 + $0xbc] sm:$0xf]
        %v440 = vld [vmem:[%s168 + $0xc0] sm:$0xf]
        %v441 = vld [vmem:[%s168 + $0xc4] sm:$0xf]
        %v442 = vld [vmem:[%s168 + $0xc8] sm:$0xf]
        %v443 = vld [vmem:[%s168 + $0xcc] sm:$0xf]
        %v444 = vld [vmem:[%s168 + $0xd0] sm:$0xf]
        %v445 = vld [vmem:[%s168 + $0xd4] sm:$0xf]
        %v446 = vld [vmem:[%s168 + $0xd8] sm:$0xf]
        %v447 = vld [vmem:[%s168 + $0xdc] sm:$0xf]
        %v448 = vld [vmem:[%s168 + $0xe0] sm:$0xf]
        %v449 = vld [vmem:[%s168 + $0xe4] sm:$0xf]
        %v450 = vld [vmem:[%s168 + $0xe8] sm:$0xf]
        %v451 = vld [vmem:[%s168 + $0xec] sm:$0xf]
        %v452 = vld [vmem:[%s168 + $0xf0] sm:$0xf]
        %v453 = vld [vmem:[%s168 + $0xf4] sm:$0xf]
        %v454 = vld [vmem:[%s168 + $0xf8] sm:$0xf]
        %v455 = vld [vmem:[%s168 + $0xfc] sm:$0xf]
        %v456 = vld [vmem:[%s168 + $0x100] sm:$0xf]
        %v457 = vld [vmem:[%s168 + $0x104] sm:$0xf]
        %v458 = vld [vmem:[%s168 + $0x108] sm:$0xf]
        %v459 = vld [vmem:[%s168 + $0x10c] sm:$0xf]
        %v460 = vld [vmem:[%s168 + $0x110] sm:$0xf]
        %v461 = vld [vmem:[%s168 + $0x114] sm:$0xf]
        %v462 = vld [vmem:[%s168 + $0x118] sm:$0xf]
        %v463 = vld [vmem:[%s168 + $0x11c] sm:$0xf]
        %v464 = vld [vmem:[%s168 + $0x120] sm:$0xf]
        %v465 = vld [vmem:[%s168 + $0x124] sm:$0xf]
        %v466 = vld [vmem:[%s168 + $0x128] sm:$0xf]
        %v467 = vld [vmem:[%s168 + $0x12c] sm:$0xf]
        %v468 = vld [vmem:[%s168 + $0x130] sm:$0xf]
        %v469 = vld [vmem:[%s168 + $0x134] sm:$0xf]
        %v470 = vld [vmem:[%s168 + $0x138] sm:$0xf]
        %v471 = vld [vmem:[%s168 + $0x13c] sm:$0xf]
        %v472 = vld [vmem:[%s168 + $0x140] sm:$0xf]
        %v473 = vld [vmem:[%s168 + $0x144] sm:$0xf]
        %v474 = vld [vmem:[%s168 + $0x148] sm:$0xf]
        %v475 = vld [vmem:[%s168 + $0x14c] sm:$0xf]
        %v476 = vld [vmem:[%s168 + $0x150] sm:$0xf]
        %v477 = vld [vmem:[%s168 + $0x154] sm:$0xf]
        %v478 = vld [vmem:[%s168 + $0x158] sm:$0xf]
        %v479 = vld [vmem:[%s168 + $0x15c] sm:$0xf]
        %v480 = vld [vmem:[%s168 + $0x160] sm:$0xf]
        %v481 = vld [vmem:[%s168 + $0x164] sm:$0xf]
        %v482 = vld [vmem:[%s168 + $0x168] sm:$0xf]
        %v483 = vld [vmem:[%s168 + $0x16c] sm:$0xf]
        %v484 = vld [vmem:[%s168 + $0x170] sm:$0xf]
        %v485 = vld [vmem:[%s168 + $0x174] sm:$0xf]
        %v486 = vld [vmem:[%s168 + $0x178] sm:$0xf]
        %v487 = vld [vmem:[%s168 + $0x17c] sm:$0xf]
        %v488 = vld [vmem:[%s168 + $0x180] sm:$0xf]
        %v489 = vld [vmem:[%s168 + $0x184] sm:$0xf]
        %v490 = vld [vmem:[%s168 + $0x188] sm:$0xf]
        %v491 = vld [vmem:[%s168 + $0x18c] sm:$0xf]
        %v492 = vld [vmem:[%s168 + $0x190] sm:$0xf]
        %v493 = vld [vmem:[%s168 + $0x194] sm:$0xf]
        %v494 = vld [vmem:[%s168 + $0x198] sm:$0xf]
        %v495 = vld [vmem:[%s168 + $0x19c] sm:$0xf]
        %v496 = vld [vmem:[%s168 + $0x1a0] sm:$0xf]
        %v497 = vld [vmem:[%s168 + $0x1a4] sm:$0xf]
        %v498 = vld [vmem:[%s168 + $0x1a8] sm:$0xf]
        %v499 = vld [vmem:[%s168 + $0x1ac] sm:$0xf]
        %v500 = vld [vmem:[%s168 + $0x1b0] sm:$0xf]
        %v501 = vld [vmem:[%s168 + $0x1b4] sm:$0xf]
        %v502 = vld [vmem:[%s168 + $0x1b8] sm:$0xf]
        %v503 = vld [vmem:[%s168 + $0x1bc] sm:$0xf]
        %v504 = vld [vmem:[%s168 + $0x1c0] sm:$0xf]
        %v505 = vld [vmem:[%s168 + $0x1c4] sm:$0xf]
        %v506 = vld [vmem:[%s168 + $0x1c8] sm:$0xf]
        %v507 = vld [vmem:[%s168 + $0x1cc] sm:$0xf]
        %v508 = vld [vmem:[%s168 + $0x1d0] sm:$0xf]
        %v509 = vld [vmem:[%s168 + $0x1d4] sm:$0xf]
        %v510 = vld [vmem:[%s168 + $0x1d8] sm:$0xf]
        %v511 = vld [vmem:[%s168 + $0x1dc] sm:$0xf]
        %v512 = vld [vmem:[%s168 + $0x1e0] sm:$0xf]
        %v513 = vld [vmem:[%s168 + $0x1e4] sm:$0xf]
        %v514 = vld [vmem:[%s168 + $0x1e8] sm:$0xf]
        %v515 = vld [vmem:[%s168 + $0x1ec] sm:$0xf]
        %v516 = vld [vmem:[%s168 + $0x1f0] sm:$0xf]
        %v517 = vld [vmem:[%s168 + $0x1f4] sm:$0xf]
        %v518 = vld [vmem:[%s168 + $0x1f8] sm:$0xf]
        %v519 = vld [vmem:[%s168 + $0x1fc] sm:$0xf]
        %vm520 = vsmask.f32 4368
        %vm521 = vmor %vm184, %vm520
        %v523 = vshrl.u32 %v392, 16
        %v525 = vrot.slane %v523, 7
        %v526 = vshll.u32 %v392, 16
        %v528 = vor.u32 %v525, %v526
        %v529 = vrot.slane %v525, 4
        %v531 = vshrl.u32 %v393, 16
        %v533 = vrot.slane %v531, 7
        %v534 = vshll.u32 %v393, 16
        %v536 = vor.u32 %v533, %v534
        %v537 = vsel %vm521, %v529, %v536
        %v538 = vrot.slane %v533, 4
        %v540 = vshrl.u32 %v394, 16
        %v542 = vrot.slane %v540, 7
        %v543 = vshll.u32 %v394, 16
        %v545 = vor.u32 %v542, %v543
        %v546 = vsel %vm521, %v538, %v545
        %v547 = vrot.slane %v542, 4
        %v549 = vshrl.u32 %v395, 16
        %v551 = vrot.slane %v549, 7
        %v552 = vshll.u32 %v395, 16
        %v554 = vor.u32 %v551, %v552
        %v555 = vsel %vm521, %v547, %v554
        %v556 = vrot.slane %v551, 4
        %v558 = vshrl.u32 %v396, 16
        %v560 = vrot.slane %v558, 7
        %v561 = vshll.u32 %v396, 16
        %v563 = vor.u32 %v560, %v561
        %v564 = vrot.slane %v560, 4
        %v566 = vshrl.u32 %v397, 16
        %v568 = vrot.slane %v566, 7
        %v569 = vshll.u32 %v397, 16
        %v571 = vor.u32 %v568, %v569
        %v572 = vsel %vm521, %v564, %v571
        %v573 = vrot.slane %v568, 4
        %v575 = vshrl.u32 %v398, 16
        %v577 = vrot.slane %v575, 7
        %v578 = vshll.u32 %v398, 16
        %v580 = vor.u32 %v577, %v578
        %v581 = vsel %vm521, %v573, %v580
        %v582 = vrot.slane %v577, 4
        %v584 = vshrl.u32 %v399, 16
        %v586 = vrot.slane %v584, 7
        %v587 = vshll.u32 %v399, 16
        %v589 = vor.u32 %v586, %v587
        %v590 = vsel %vm521, %v582, %v589
        %v591 = vrot.slane %v586, 4
        %v593 = vshrl.u32 %v400, 16
        %v595 = vrot.slane %v593, 7
        %v596 = vshll.u32 %v400, 16
        %v598 = vor.u32 %v595, %v596
        %v599 = vrot.slane %v595, 4
        %v601 = vshrl.u32 %v401, 16
        %v603 = vrot.slane %v601, 7
        %v604 = vshll.u32 %v401, 16
        %v606 = vor.u32 %v603, %v604
        %v607 = vsel %vm521, %v599, %v606
        %v608 = vrot.slane %v603, 4
        %v610 = vshrl.u32 %v402, 16
        %v612 = vrot.slane %v610, 7
        %v613 = vshll.u32 %v402, 16
        %v615 = vor.u32 %v612, %v613
        %v616 = vsel %vm521, %v608, %v615
        %v617 = vrot.slane %v612, 4
        %v619 = vshrl.u32 %v403, 16
        %v621 = vrot.slane %v619, 7
        %v622 = vshll.u32 %v403, 16
        %v624 = vor.u32 %v621, %v622
        %v625 = vsel %vm521, %v617, %v624
        %v626 = vrot.slane %v621, 4
        %v628 = vshrl.u32 %v404, 16
        %v630 = vrot.slane %v628, 7
        %v631 = vshll.u32 %v404, 16
        %v633 = vor.u32 %v630, %v631
        %v634 = vrot.slane %v630, 4
        %v636 = vshrl.u32 %v405, 16
        %v638 = vrot.slane %v636, 7
        %v639 = vshll.u32 %v405, 16
        %v641 = vor.u32 %v638, %v639
        %v642 = vsel %vm521, %v634, %v641
        %v643 = vrot.slane %v638, 4
        %v645 = vshrl.u32 %v406, 16
        %v647 = vrot.slane %v645, 7
        %v648 = vshll.u32 %v406, 16
        %v650 = vor.u32 %v647, %v648
        %v651 = vsel %vm521, %v643, %v650
        %v652 = vrot.slane %v647, 4
        %v654 = vshrl.u32 %v407, 16
        %v656 = vrot.slane %v654, 7
        %v657 = vshll.u32 %v407, 16
        %v659 = vor.u32 %v656, %v657
        %v660 = vsel %vm521, %v652, %v659
        %v661 = vrot.slane %v656, 4
        %v663 = vshrl.u32 %v408, 16
        %v665 = vrot.slane %v663, 7
        %v666 = vshll.u32 %v408, 16
        %v668 = vor.u32 %v665, %v666
        %v669 = vrot.slane %v665, 4
        %v671 = vshrl.u32 %v409, 16
        %v673 = vrot.slane %v671, 7
        %v674 = vshll.u32 %v409, 16
        %v676 = vor.u32 %v673, %v674
        %v677 = vsel %vm521, %v669, %v676
        %v678 = vrot.slane %v673, 4
        %v680 = vshrl.u32 %v410, 16
        %v682 = vrot.slane %v680, 7
        %v683 = vshll.u32 %v410, 16
        %v685 = vor.u32 %v682, %v683
        %v686 = vsel %vm521, %v678, %v685
        %v687 = vrot.slane %v682, 4
        %v689 = vshrl.u32 %v411, 16
        %v691 = vrot.slane %v689, 7
        %v692 = vshll.u32 %v411, 16
        %v694 = vor.u32 %v691, %v692
        %v695 = vsel %vm521, %v687, %v694
        %v696 = vrot.slane %v691, 4
        %v698 = vshrl.u32 %v412, 16
        %v700 = vrot.slane %v698, 7
        %v701 = vshll.u32 %v412, 16
        %v703 = vor.u32 %v700, %v701
        %v704 = vrot.slane %v700, 4
        %v706 = vshrl.u32 %v413, 16
        %v708 = vrot.slane %v706, 7
        %v709 = vshll.u32 %v413, 16
        %v711 = vor.u32 %v708, %v709
        %v712 = vsel %vm521, %v704, %v711
        %v713 = vrot.slane %v708, 4
        %v715 = vshrl.u32 %v414, 16
        %v717 = vrot.slane %v715, 7
        %v718 = vshll.u32 %v414, 16
        %v720 = vor.u32 %v717, %v718
        %v721 = vsel %vm521, %v713, %v720
        %v722 = vrot.slane %v717, 4
        %v724 = vshrl.u32 %v415, 16
        %v726 = vrot.slane %v724, 7
        %v727 = vshll.u32 %v415, 16
        %v729 = vor.u32 %v726, %v727
        %v730 = vsel %vm521, %v722, %v729
        %v731 = vrot.slane %v726, 4
        %v733 = vshrl.u32 %v416, 16
        %v735 = vrot.slane %v733, 7
        %v736 = vshll.u32 %v416, 16
        %v738 = vor.u32 %v735, %v736
        %v739 = vrot.slane %v735, 4
        %v741 = vshrl.u32 %v417, 16
        %v743 = vrot.slane %v741, 7
        %v744 = vshll.u32 %v417, 16
        %v746 = vor.u32 %v743, %v744
        %v747 = vsel %vm521, %v739, %v746
        %v748 = vrot.slane %v743, 4
        %v750 = vshrl.u32 %v418, 16
        %v752 = vrot.slane %v750, 7
        %v753 = vshll.u32 %v418, 16
        %v755 = vor.u32 %v752, %v753
        %v756 = vsel %vm521, %v748, %v755
        %v757 = vrot.slane %v752, 4
        %v759 = vshrl.u32 %v419, 16
        %v761 = vrot.slane %v759, 7
        %v762 = vshll.u32 %v419, 16
        %v764 = vor.u32 %v761, %v762
        %v765 = vsel %vm521, %v757, %v764
        %v766 = vrot.slane %v761, 4
        %v768 = vshrl.u32 %v420, 16
        %v770 = vrot.slane %v768, 7
        %v771 = vshll.u32 %v420, 16
        %v773 = vor.u32 %v770, %v771
        %v774 = vrot.slane %v770, 4
        %v776 = vshrl.u32 %v421, 16
        %v778 = vrot.slane %v776, 7
        %v779 = vshll.u32 %v421, 16
        %v781 = vor.u32 %v778, %v779
        %v782 = vsel %vm521, %v774, %v781
        %v783 = vrot.slane %v778, 4
        %v785 = vshrl.u32 %v422, 16
        %v787 = vrot.slane %v785, 7
        %v788 = vshll.u32 %v422, 16
        %v790 = vor.u32 %v787, %v788
        %v791 = vsel %vm521, %v783, %v790
        %v792 = vrot.slane %v787, 4
        %v794 = vshrl.u32 %v423, 16
        %v796 = vrot.slane %v794, 7
        %v797 = vshll.u32 %v423, 16
        %v799 = vor.u32 %v796, %v797
        %v800 = vsel %vm521, %v792, %v799
        %v801 = vrot.slane %v796, 4
        %v803 = vshrl.u32 %v424, 16
        %v805 = vrot.slane %v803, 7
        %v806 = vshll.u32 %v424, 16
        %v808 = vor.u32 %v805, %v806
        %v809 = vrot.slane %v805, 4
        %v811 = vshrl.u32 %v425, 16
        %v813 = vrot.slane %v811, 7
        %v814 = vshll.u32 %v425, 16
        %v816 = vor.u32 %v813, %v814
        %v817 = vsel %vm521, %v809, %v816
        %v818 = vrot.slane %v813, 4
        %v820 = vshrl.u32 %v426, 16
        %v822 = vrot.slane %v820, 7
        %v823 = vshll.u32 %v426, 16
        %v825 = vor.u32 %v822, %v823
        %v826 = vsel %vm521, %v818, %v825
        %v827 = vrot.slane %v822, 4
        %v829 = vshrl.u32 %v427, 16
        %v831 = vrot.slane %v829, 7
        %v832 = vshll.u32 %v427, 16
        %v834 = vor.u32 %v831, %v832
        %v835 = vsel %vm521, %v827, %v834
        %v836 = vrot.slane %v831, 4
        %v838 = vshrl.u32 %v428, 16
        %v840 = vrot.slane %v838, 7
        %v841 = vshll.u32 %v428, 16
        %v843 = vor.u32 %v840, %v841
        %v844 = vrot.slane %v840, 4
        %v846 = vshrl.u32 %v429, 16
        %v848 = vrot.slane %v846, 7
        %v849 = vshll.u32 %v429, 16
        %v851 = vor.u32 %v848, %v849
        %v852 = vsel %vm521, %v844, %v851
        %v853 = vrot.slane %v848, 4
        %v855 = vshrl.u32 %v430, 16
        %v857 = vrot.slane %v855, 7
        %v858 = vshll.u32 %v430, 16
        %v860 = vor.u32 %v857, %v858
        %v861 = vsel %vm521, %v853, %v860
        %v862 = vrot.slane %v857, 4
        %v864 = vshrl.u32 %v431, 16
        %v866 = vrot.slane %v864, 7
        %v867 = vshll.u32 %v431, 16
        %v869 = vor.u32 %v866, %v867
        %v870 = vsel %vm521, %v862, %v869
        %v871 = vrot.slane %v866, 4
        %v873 = vshrl.u32 %v432, 16
        %v875 = vrot.slane %v873, 7
        %v876 = vshll.u32 %v432, 16
        %v878 = vor.u32 %v875, %v876
        %v879 = vrot.slane %v875, 4
        %v881 = vshrl.u32 %v433, 16
        %v883 = vrot.slane %v881, 7
        %v884 = vshll.u32 %v433, 16
        %v886 = vor.u32 %v883, %v884
        %v887 = vsel %vm521, %v879, %v886
        %v888 = vrot.slane %v883, 4
        %v890 = vshrl.u32 %v434, 16
        %v892 = vrot.slane %v890, 7
        %v893 = vshll.u32 %v434, 16
        %v895 = vor.u32 %v892, %v893
        %v896 = vsel %vm521, %v888, %v895
        %v897 = vrot.slane %v892, 4
        %v899 = vshrl.u32 %v435, 16
        %v901 = vrot.slane %v899, 7
        %v902 = vshll.u32 %v435, 16
        %v904 = vor.u32 %v901, %v902
        %v905 = vsel %vm521, %v897, %v904
        %v906 = vrot.slane %v901, 4
        %v908 = vshrl.u32 %v436, 16
        %v910 = vrot.slane %v908, 7
        %v911 = vshll.u32 %v436, 16
        %v913 = vor.u32 %v910, %v911
        %v914 = vrot.slane %v910, 4
        %v916 = vshrl.u32 %v437, 16
        %v918 = vrot.slane %v916, 7
        %v919 = vshll.u32 %v437, 16
        %v921 = vor.u32 %v918, %v919
        %v922 = vsel %vm521, %v914, %v921
        %v923 = vrot.slane %v918, 4
        %v925 = vshrl.u32 %v438, 16
        %v927 = vrot.slane %v925, 7
        %v928 = vshll.u32 %v438, 16
        %v930 = vor.u32 %v927, %v928
        %v931 = vsel %vm521, %v923, %v930
        %v932 = vrot.slane %v927, 4
        %v934 = vshrl.u32 %v439, 16
        %v936 = vrot.slane %v934, 7
        %v937 = vshll.u32 %v439, 16
        %v939 = vor.u32 %v936, %v937
        %v940 = vsel %vm521, %v932, %v939
        %v941 = vrot.slane %v936, 4
        %v943 = vshrl.u32 %v440, 16
        %v945 = vrot.slane %v943, 7
        %v946 = vshll.u32 %v440, 16
        %v948 = vor.u32 %v945, %v946
        %v949 = vrot.slane %v945, 4
        %v951 = vshrl.u32 %v441, 16
        %v953 = vrot.slane %v951, 7
        %v954 = vshll.u32 %v441, 16
        %v956 = vor.u32 %v953, %v954
        %v957 = vsel %vm521, %v949, %v956
        %v958 = vrot.slane %v953, 4
        %v960 = vshrl.u32 %v442, 16
        %v962 = vrot.slane %v960, 7
        %v963 = vshll.u32 %v442, 16
        %v965 = vor.u32 %v962, %v963
        %v966 = vsel %vm521, %v958, %v965
        %v967 = vrot.slane %v962, 4
        %v969 = vshrl.u32 %v443, 16
        %v971 = vrot.slane %v969, 7
        %v972 = vshll.u32 %v443, 16
        %v974 = vor.u32 %v971, %v972
        %v975 = vsel %vm521, %v967, %v974
        %v976 = vrot.slane %v971, 4
        %v978 = vshrl.u32 %v444, 16
        %v980 = vrot.slane %v978, 7
        %v981 = vshll.u32 %v444, 16
        %v983 = vor.u32 %v980, %v981
        %v984 = vrot.slane %v980, 4
        %v986 = vshrl.u32 %v445, 16
        %v988 = vrot.slane %v986, 7
        %v989 = vshll.u32 %v445, 16
        %v991 = vor.u32 %v988, %v989
        %v992 = vsel %vm521, %v984, %v991
        %v993 = vrot.slane %v988, 4
        %v995 = vshrl.u32 %v446, 16
        %v997 = vrot.slane %v995, 7
        %v998 = vshll.u32 %v446, 16
        %v1000 = vor.u32 %v997, %v998
        %v1001 = vsel %vm521, %v993, %v1000
        %v1002 = vrot.slane %v997, 4
        %v1004 = vshrl.u32 %v447, 16
        %v1006 = vrot.slane %v1004, 7
        %v1007 = vshll.u32 %v447, 16
        %v1009 = vor.u32 %v1006, %v1007
        %v1010 = vsel %vm521, %v1002, %v1009
        %v1011 = vrot.slane %v1006, 4
        %v1013 = vshrl.u32 %v448, 16
        %v1015 = vrot.slane %v1013, 7
        %v1016 = vshll.u32 %v448, 16
        %v1018 = vor.u32 %v1015, %v1016
        %v1019 = vrot.slane %v1015, 4
        %v1021 = vshrl.u32 %v449, 16
        %v1023 = vrot.slane %v1021, 7
        %v1024 = vshll.u32 %v449, 16
        %v1026 = vor.u32 %v1023, %v1024
        %v1027 = vsel %vm521, %v1019, %v1026
        %v1028 = vrot.slane %v1023, 4
        %v1030 = vshrl.u32 %v450, 16
        %v1032 = vrot.slane %v1030, 7
        %v1033 = vshll.u32 %v450, 16
        %v1035 = vor.u32 %v1032, %v1033
        %v1036 = vsel %vm521, %v1028, %v1035
        %v1037 = vrot.slane %v1032, 4
        %v1039 = vshrl.u32 %v451, 16
        %v1041 = vrot.slane %v1039, 7
        %v1042 = vshll.u32 %v451, 16
        %v1044 = vor.u32 %v1041, %v1042
        %v1045 = vsel %vm521, %v1037, %v1044
        %v1046 = vrot.slane %v1041, 4
        %v1048 = vshrl.u32 %v452, 16
        %v1050 = vrot.slane %v1048, 7
        %v1051 = vshll.u32 %v452, 16
        %v1053 = vor.u32 %v1050, %v1051
        %v1054 = vrot.slane %v1050, 4
        %v1056 = vshrl.u32 %v453, 16
        %v1058 = vrot.slane %v1056, 7
        %v1059 = vshll.u32 %v453, 16
        %v1061 = vor.u32 %v1058, %v1059
        %v1062 = vsel %vm521, %v1054, %v1061
        %v1063 = vrot.slane %v1058, 4
        %v1065 = vshrl.u32 %v454, 16
        %v1067 = vrot.slane %v1065, 7
        %v1068 = vshll.u32 %v454, 16
        %v1070 = vor.u32 %v1067, %v1068
        %v1071 = vsel %vm521, %v1063, %v1070
        %v1072 = vrot.slane %v1067, 4
        %v1074 = vshrl.u32 %v455, 16
        %v1076 = vrot.slane %v1074, 7
        %v1077 = vshll.u32 %v455, 16
        %v1079 = vor.u32 %v1076, %v1077
        %v1080 = vsel %vm521, %v1072, %v1079
        %v1081 = vrot.slane %v1076, 4
        %v1083 = vshrl.u32 %v456, 16
        %v1085 = vrot.slane %v1083, 7
        %v1086 = vshll.u32 %v456, 16
        %v1088 = vor.u32 %v1085, %v1086
        %v1089 = vrot.slane %v1085, 4
        %v1091 = vshrl.u32 %v457, 16
        %v1093 = vrot.slane %v1091, 7
        %v1094 = vshll.u32 %v457, 16
        %v1096 = vor.u32 %v1093, %v1094
        %v1097 = vsel %vm521, %v1089, %v1096
        %v1098 = vrot.slane %v1093, 4
        %v1100 = vshrl.u32 %v458, 16
        %v1102 = vrot.slane %v1100, 7
        %v1103 = vshll.u32 %v458, 16
        %v1105 = vor.u32 %v1102, %v1103
        %v1106 = vsel %vm521, %v1098, %v1105
        %v1107 = vrot.slane %v1102, 4
        %v1109 = vshrl.u32 %v459, 16
        %v1111 = vrot.slane %v1109, 7
        %v1112 = vshll.u32 %v459, 16
        %v1114 = vor.u32 %v1111, %v1112
        %v1115 = vsel %vm521, %v1107, %v1114
        %v1116 = vrot.slane %v1111, 4
        %v1118 = vshrl.u32 %v460, 16
        %v1120 = vrot.slane %v1118, 7
        %v1121 = vshll.u32 %v460, 16
        %v1123 = vor.u32 %v1120, %v1121
        %v1124 = vrot.slane %v1120, 4
        %v1126 = vshrl.u32 %v461, 16
        %v1128 = vrot.slane %v1126, 7
        %v1129 = vshll.u32 %v461, 16
        %v1131 = vor.u32 %v1128, %v1129
        %v1132 = vsel %vm521, %v1124, %v1131
        %v1133 = vrot.slane %v1128, 4
        %v1135 = vshrl.u32 %v462, 16
        %v1137 = vrot.slane %v1135, 7
        %v1138 = vshll.u32 %v462, 16
        %v1140 = vor.u32 %v1137, %v1138
        %v1141 = vsel %vm521, %v1133, %v1140
        %v1142 = vrot.slane %v1137, 4
        %v1144 = vshrl.u32 %v463, 16
        %v1146 = vrot.slane %v1144, 7
        %v1147 = vshll.u32 %v463, 16
        %v1149 = vor.u32 %v1146, %v1147
        %v1150 = vsel %vm521, %v1142, %v1149
        %v1151 = vrot.slane %v1146, 4
        %v1153 = vshrl.u32 %v464, 16
        %v1155 = vrot.slane %v1153, 7
        %v1156 = vshll.u32 %v464, 16
        %v1158 = vor.u32 %v1155, %v1156
        %v1159 = vrot.slane %v1155, 4
        %v1161 = vshrl.u32 %v465, 16
        %v1163 = vrot.slane %v1161, 7
        %v1164 = vshll.u32 %v465, 16
        %v1166 = vor.u32 %v1163, %v1164
        %v1167 = vsel %vm521, %v1159, %v1166
        %v1168 = vrot.slane %v1163, 4
        %v1170 = vshrl.u32 %v466, 16
        %v1172 = vrot.slane %v1170, 7
        %v1173 = vshll.u32 %v466, 16
        %v1175 = vor.u32 %v1172, %v1173
        %v1176 = vsel %vm521, %v1168, %v1175
        %v1177 = vrot.slane %v1172, 4
        %v1179 = vshrl.u32 %v467, 16
        %v1181 = vrot.slane %v1179, 7
        %v1182 = vshll.u32 %v467, 16
        %v1184 = vor.u32 %v1181, %v1182
        %v1185 = vsel %vm521, %v1177, %v1184
        %v1186 = vrot.slane %v1181, 4
        %v1188 = vshrl.u32 %v468, 16
        %v1190 = vrot.slane %v1188, 7
        %v1191 = vshll.u32 %v468, 16
        %v1193 = vor.u32 %v1190, %v1191
        %v1194 = vrot.slane %v1190, 4
        %v1196 = vshrl.u32 %v469, 16
        %v1198 = vrot.slane %v1196, 7
        %v1199 = vshll.u32 %v469, 16
        %v1201 = vor.u32 %v1198, %v1199
        %v1202 = vsel %vm521, %v1194, %v1201
        %v1203 = vrot.slane %v1198, 4
        %v1205 = vshrl.u32 %v470, 16
        %v1207 = vrot.slane %v1205, 7
        %v1208 = vshll.u32 %v470, 16
        %v1210 = vor.u32 %v1207, %v1208
        %v1211 = vsel %vm521, %v1203, %v1210
        %v1212 = vrot.slane %v1207, 4
        %v1214 = vshrl.u32 %v471, 16
        %v1216 = vrot.slane %v1214, 7
        %v1217 = vshll.u32 %v471, 16
        %v1219 = vor.u32 %v1216, %v1217
        %v1220 = vsel %vm521, %v1212, %v1219
        %v1221 = vrot.slane %v1216, 4
        %v1223 = vshrl.u32 %v472, 16
        %v1225 = vrot.slane %v1223, 7
        %v1226 = vshll.u32 %v472, 16
        %v1228 = vor.u32 %v1225, %v1226
        %v1229 = vrot.slane %v1225, 4
        %v1231 = vshrl.u32 %v473, 16
        %v1233 = vrot.slane %v1231, 7
        %v1234 = vshll.u32 %v473, 16
        %v1236 = vor.u32 %v1233, %v1234
        %v1237 = vsel %vm521, %v1229, %v1236
        %v1238 = vrot.slane %v1233, 4
        %v1240 = vshrl.u32 %v474, 16
        %v1242 = vrot.slane %v1240, 7
        %v1243 = vshll.u32 %v474, 16
        %v1245 = vor.u32 %v1242, %v1243
        %v1246 = vsel %vm521, %v1238, %v1245
        %v1247 = vrot.slane %v1242, 4
        %v1249 = vshrl.u32 %v475, 16
        %v1251 = vrot.slane %v1249, 7
        %v1252 = vshll.u32 %v475, 16
        %v1254 = vor.u32 %v1251, %v1252
        %v1255 = vsel %vm521, %v1247, %v1254
        %v1256 = vrot.slane %v1251, 4
        %v1258 = vshrl.u32 %v476, 16
        %v1260 = vrot.slane %v1258, 7
        %v1261 = vshll.u32 %v476, 16
        %v1263 = vor.u32 %v1260, %v1261
        %v1264 = vrot.slane %v1260, 4
        %v1266 = vshrl.u32 %v477, 16
        %v1268 = vrot.slane %v1266, 7
        %v1269 = vshll.u32 %v477, 16
        %v1271 = vor.u32 %v1268, %v1269
        %v1272 = vsel %vm521, %v1264, %v1271
        %v1273 = vrot.slane %v1268, 4
        %v1275 = vshrl.u32 %v478, 16
        %v1277 = vrot.slane %v1275, 7
        %v1278 = vshll.u32 %v478, 16
        %v1280 = vor.u32 %v1277, %v1278
        %v1281 = vsel %vm521, %v1273, %v1280
        %v1282 = vrot.slane %v1277, 4
        %v1284 = vshrl.u32 %v479, 16
        %v1286 = vrot.slane %v1284, 7
        %v1287 = vshll.u32 %v479, 16
        %v1289 = vor.u32 %v1286, %v1287
        %v1290 = vsel %vm521, %v1282, %v1289
        %v1291 = vrot.slane %v1286, 4
        %v1293 = vshrl.u32 %v480, 16
        %v1295 = vrot.slane %v1293, 7
        %v1296 = vshll.u32 %v480, 16
        %v1298 = vor.u32 %v1295, %v1296
        %v1299 = vrot.slane %v1295, 4
        %v1301 = vshrl.u32 %v481, 16
        %v1303 = vrot.slane %v1301, 7
        %v1304 = vshll.u32 %v481, 16
        %v1306 = vor.u32 %v1303, %v1304
        %v1307 = vsel %vm521, %v1299, %v1306
        %v1308 = vrot.slane %v1303, 4
        %v1310 = vshrl.u32 %v482, 16
        %v1312 = vrot.slane %v1310, 7
        %v1313 = vshll.u32 %v482, 16
        %v1315 = vor.u32 %v1312, %v1313
        %v1316 = vsel %vm521, %v1308, %v1315
        %v1317 = vrot.slane %v1312, 4
        %v1319 = vshrl.u32 %v483, 16
        %v1321 = vrot.slane %v1319, 7
        %v1322 = vshll.u32 %v483, 16
        %v1324 = vor.u32 %v1321, %v1322
        %v1325 = vsel %vm521, %v1317, %v1324
        %v1326 = vrot.slane %v1321, 4
        %v1328 = vshrl.u32 %v484, 16
        %v1330 = vrot.slane %v1328, 7
        %v1331 = vshll.u32 %v484, 16
        %v1333 = vor.u32 %v1330, %v1331
        %v1334 = vrot.slane %v1330, 4
        %v1336 = vshrl.u32 %v485, 16
        %v1338 = vrot.slane %v1336, 7
        %v1339 = vshll.u32 %v485, 16
        %v1341 = vor.u32 %v1338, %v1339
        %v1342 = vsel %vm521, %v1334, %v1341
        %v1343 = vrot.slane %v1338, 4
        %v1345 = vshrl.u32 %v486, 16
        %v1347 = vrot.slane %v1345, 7
        %v1348 = vshll.u32 %v486, 16
        %v1350 = vor.u32 %v1347, %v1348
        %v1351 = vsel %vm521, %v1343, %v1350
        %v1352 = vrot.slane %v1347, 4
        %v1354 = vshrl.u32 %v487, 16
        %v1356 = vrot.slane %v1354, 7
        %v1357 = vshll.u32 %v487, 16
        %v1359 = vor.u32 %v1356, %v1357
        %v1360 = vsel %vm521, %v1352, %v1359
        %v1361 = vrot.slane %v1356, 4
        %v1363 = vshrl.u32 %v488, 16
        %v1365 = vrot.slane %v1363, 7
        %v1366 = vshll.u32 %v488, 16
        %v1368 = vor.u32 %v1365, %v1366
        %v1369 = vrot.slane %v1365, 4
        %v1371 = vshrl.u32 %v489, 16
        %v1373 = vrot.slane %v1371, 7
        %v1374 = vshll.u32 %v489, 16
        %v1376 = vor.u32 %v1373, %v1374
        %v1377 = vsel %vm521, %v1369, %v1376
        %v1378 = vrot.slane %v1373, 4
        %v1380 = vshrl.u32 %v490, 16
        %v1382 = vrot.slane %v1380, 7
        %v1383 = vshll.u32 %v490, 16
        %v1385 = vor.u32 %v1382, %v1383
        %v1386 = vsel %vm521, %v1378, %v1385
        %v1387 = vrot.slane %v1382, 4
        %v1389 = vshrl.u32 %v491, 16
        %v1391 = vrot.slane %v1389, 7
        %v1392 = vshll.u32 %v491, 16
        %v1394 = vor.u32 %v1391, %v1392
        %v1395 = vsel %vm521, %v1387, %v1394
        %v1396 = vrot.slane %v1391, 4
        %v1398 = vshrl.u32 %v492, 16
        %v1400 = vrot.slane %v1398, 7
        %v1401 = vshll.u32 %v492, 16
        %v1403 = vor.u32 %v1400, %v1401
        %v1404 = vrot.slane %v1400, 4
        %v1406 = vshrl.u32 %v493, 16
        %v1408 = vrot.slane %v1406, 7
        %v1409 = vshll.u32 %v493, 16
        %v1411 = vor.u32 %v1408, %v1409
        %v1412 = vsel %vm521, %v1404, %v1411
        %v1413 = vrot.slane %v1408, 4
        %v1415 = vshrl.u32 %v494, 16
        %v1417 = vrot.slane %v1415, 7
        %v1418 = vshll.u32 %v494, 16
        %v1420 = vor.u32 %v1417, %v1418
        %v1421 = vsel %vm521, %v1413, %v1420
        %v1422 = vrot.slane %v1417, 4
        %v1424 = vshrl.u32 %v495, 16
        %v1426 = vrot.slane %v1424, 7
        %v1427 = vshll.u32 %v495, 16
        %v1429 = vor.u32 %v1426, %v1427
        %v1430 = vsel %vm521, %v1422, %v1429
        %v1431 = vrot.slane %v1426, 4
        %v1433 = vshrl.u32 %v496, 16
        %v1435 = vrot.slane %v1433, 7
        %v1436 = vshll.u32 %v496, 16
        %v1438 = vor.u32 %v1435, %v1436
        %v1439 = vrot.slane %v1435, 4
        %v1441 = vshrl.u32 %v497, 16
        %v1443 = vrot.slane %v1441, 7
        %v1444 = vshll.u32 %v497, 16
        %v1446 = vor.u32 %v1443, %v1444
        %v1447 = vsel %vm521, %v1439, %v1446
        %v1448 = vrot.slane %v1443, 4
        %v1450 = vshrl.u32 %v498, 16
        %v1452 = vrot.slane %v1450, 7
        %v1453 = vshll.u32 %v498, 16
        %v1455 = vor.u32 %v1452, %v1453
        %v1456 = vsel %vm521, %v1448, %v1455
        %v1457 = vrot.slane %v1452, 4
        %v1459 = vshrl.u32 %v499, 16
        %v1461 = vrot.slane %v1459, 7
        %v1462 = vshll.u32 %v499, 16
        %v1464 = vor.u32 %v1461, %v1462
        %v1465 = vsel %vm521, %v1457, %v1464
        %v1466 = vrot.slane %v1461, 4
        %v1468 = vshrl.u32 %v500, 16
        %v1470 = vrot.slane %v1468, 7
        %v1471 = vshll.u32 %v500, 16
        %v1473 = vor.u32 %v1470, %v1471
        %v1474 = vrot.slane %v1470, 4
        %v1476 = vshrl.u32 %v501, 16
        %v1478 = vrot.slane %v1476, 7
        %v1479 = vshll.u32 %v501, 16
        %v1481 = vor.u32 %v1478, %v1479
        %v1482 = vsel %vm521, %v1474, %v1481
        %v1483 = vrot.slane %v1478, 4
        %v1485 = vshrl.u32 %v502, 16
        %v1487 = vrot.slane %v1485, 7
        %v1488 = vshll.u32 %v502, 16
        %v1490 = vor.u32 %v1487, %v1488
        %v1491 = vsel %vm521, %v1483, %v1490
        %v1492 = vrot.slane %v1487, 4
        %v1494 = vshrl.u32 %v503, 16
        %v1496 = vrot.slane %v1494, 7
        %v1497 = vshll.u32 %v503, 16
        %v1499 = vor.u32 %v1496, %v1497
        %v1500 = vsel %vm521, %v1492, %v1499
        %v1501 = vrot.slane %v1496, 4
        %v1503 = vshrl.u32 %v504, 16
        %v1505 = vrot.slane %v1503, 7
        %v1506 = vshll.u32 %v504, 16
        %v1508 = vor.u32 %v1505, %v1506
        %v1509 = vrot.slane %v1505, 4
        %v1511 = vshrl.u32 %v505, 16
        %v1513 = vrot.slane %v1511, 7
        %v1514 = vshll.u32 %v505, 16
        %v1516 = vor.u32 %v1513, %v1514
        %v1517 = vsel %vm521, %v1509, %v1516
        %v1518 = vrot.slane %v1513, 4
        %v1520 = vshrl.u32 %v506, 16
        %v1522 = vrot.slane %v1520, 7
        %v1523 = vshll.u32 %v506, 16
        %v1525 = vor.u32 %v1522, %v1523
        %v1526 = vsel %vm521, %v1518, %v1525
        %v1527 = vrot.slane %v1522, 4
        %v1529 = vshrl.u32 %v507, 16
        %v1531 = vrot.slane %v1529, 7
        %v1532 = vshll.u32 %v507, 16
        %v1534 = vor.u32 %v1531, %v1532
        %v1535 = vsel %vm521, %v1527, %v1534
        %v1536 = vrot.slane %v1531, 4
        %v1538 = vshrl.u32 %v508, 16
        %v1540 = vrot.slane %v1538, 7
        %v1541 = vshll.u32 %v508, 16
        %v1543 = vor.u32 %v1540, %v1541
        %v1544 = vrot.slane %v1540, 4
        %v1546 = vshrl.u32 %v509, 16
        %v1548 = vrot.slane %v1546, 7
        %v1549 = vshll.u32 %v509, 16
        %v1551 = vor.u32 %v1548, %v1549
        %v1552 = vsel %vm521, %v1544, %v1551
        %v1553 = vrot.slane %v1548, 4
        %v1555 = vshrl.u32 %v510, 16
        %v1557 = vrot.slane %v1555, 7
        %v1558 = vshll.u32 %v510, 16
        %v1560 = vor.u32 %v1557, %v1558
        %v1561 = vsel %vm521, %v1553, %v1560
        %v1562 = vrot.slane %v1557, 4
        %v1564 = vshrl.u32 %v511, 16
        %v1566 = vrot.slane %v1564, 7
        %v1567 = vshll.u32 %v511, 16
        %v1569 = vor.u32 %v1566, %v1567
        %v1570 = vsel %vm521, %v1562, %v1569
        %v1571 = vrot.slane %v1566, 4
        %v1573 = vshrl.u32 %v512, 16
        %v1575 = vrot.slane %v1573, 7
        %v1576 = vshll.u32 %v512, 16
        %v1578 = vor.u32 %v1575, %v1576
        %v1579 = vrot.slane %v1575, 4
        %v1581 = vshrl.u32 %v513, 16
        %v1583 = vrot.slane %v1581, 7
        %v1584 = vshll.u32 %v513, 16
        %v1586 = vor.u32 %v1583, %v1584
        %v1587 = vsel %vm521, %v1579, %v1586
        %v1588 = vrot.slane %v1583, 4
        %v1590 = vshrl.u32 %v514, 16
        %v1592 = vrot.slane %v1590, 7
        %v1593 = vshll.u32 %v514, 16
        %v1595 = vor.u32 %v1592, %v1593
        %v1596 = vsel %vm521, %v1588, %v1595
        %v1597 = vrot.slane %v1592, 4
        %v1599 = vshrl.u32 %v515, 16
        %v1601 = vrot.slane %v1599, 7
        %v1602 = vshll.u32 %v515, 16
        %v1604 = vor.u32 %v1601, %v1602
        %v1605 = vsel %vm521, %v1597, %v1604
        %v1606 = vrot.slane %v1601, 4
        %v1608 = vshrl.u32 %v516, 16
        %v1610 = vrot.slane %v1608, 7
        %v1611 = vshll.u32 %v516, 16
        %v1613 = vor.u32 %v1610, %v1611
        %v1614 = vrot.slane %v1610, 4
        %v1616 = vshrl.u32 %v517, 16
        %v1618 = vrot.slane %v1616, 7
        %v1619 = vshll.u32 %v517, 16
        %v1621 = vor.u32 %v1618, %v1619
        %v1622 = vsel %vm521, %v1614, %v1621
        %v1623 = vrot.slane %v1618, 4
        %v1625 = vshrl.u32 %v518, 16
        %v1627 = vrot.slane %v1625, 7
        %v1628 = vshll.u32 %v518, 16
        %v1630 = vor.u32 %v1627, %v1628
        %v1631 = vsel %vm521, %v1623, %v1630
        %v1632 = vrot.slane %v1627, 4
        %v1634 = vshrl.u32 %v519, 16
        %v1636 = vrot.slane %v1634, 7
        %v1637 = vshll.u32 %v519, 16
        %v1639 = vor.u32 %v1636, %v1637
        %v1640 = vsel %vm521, %v1632, %v1639
        %v1641 = vrot.slane %v1636, 4
        %s1802 = scalar_lea.vmem [#allocation2], 20
        %vm1803 = vcmask 19456
        %vm1804 = vmand %vm1803, %vm288
        %v1805 = vld [vmem:[%s1802] sm:$0xf]
        %v1806 = vsel %vm1804, %v528, %v1805
        %1807 = vst [vmem:[%s1802] sm:$0xf] %v1806
        %1808 = vst.msk [vmem:[%s1802 + $0x4] sm:$0xf] %vm170, %v537
        %1809 = vst.msk [vmem:[%s1802 + $0x8] sm:$0xf] %vm170, %v546
        %1810 = vst.msk [vmem:[%s1802 + $0xc] sm:$0xf] %vm170, %v555
        %v1811 = vld [vmem:[%s1802 + $0x10] sm:$0x1]
        %v1812 = vsel %vm185, %v556, %v1811
        %1813 = vst [vmem:[%s1802 + $0x10] sm:$0x1] %v1812
        %v1814 = vld [vmem:[%s1802 + $0x14] sm:$0xf]
        %v1815 = vsel %vm1804, %v563, %v1814
        %1816 = vst [vmem:[%s1802 + $0x14] sm:$0xf] %v1815
        %1817 = vst.msk [vmem:[%s1802 + $0x18] sm:$0xf] %vm170, %v572
        %1818 = vst.msk [vmem:[%s1802 + $0x1c] sm:$0xf] %vm170, %v581
        %1819 = vst.msk [vmem:[%s1802 + $0x20] sm:$0xf] %vm170, %v590
        %v1820 = vld [vmem:[%s1802 + $0x24] sm:$0x1]
        %v1821 = vsel %vm185, %v591, %v1820
        %1822 = vst [vmem:[%s1802 + $0x24] sm:$0x1] %v1821
        %v1823 = vld [vmem:[%s1802 + $0x28] sm:$0xf]
        %v1824 = vsel %vm1804, %v598, %v1823
        %1825 = vst [vmem:[%s1802 + $0x28] sm:$0xf] %v1824
        %1826 = vst.msk [vmem:[%s1802 + $0x2c] sm:$0xf] %vm170, %v607
        %1827 = vst.msk [vmem:[%s1802 + $0x30] sm:$0xf] %vm170, %v616
        %1828 = vst.msk [vmem:[%s1802 + $0x34] sm:$0xf] %vm170, %v625
        %v1829 = vld [vmem:[%s1802 + $0x38] sm:$0x1]
        %v1830 = vsel %vm185, %v626, %v1829
        %1831 = vst [vmem:[%s1802 + $0x38] sm:$0x1] %v1830
        %v1832 = vld [vmem:[%s1802 + $0x3c] sm:$0xf]
        %v1833 = vsel %vm1804, %v633, %v1832
        %1834 = vst [vmem:[%s1802 + $0x3c] sm:$0xf] %v1833
        %1835 = vst.msk [vmem:[%s1802 + $0x40] sm:$0xf] %vm170, %v642
        %1836 = vst.msk [vmem:[%s1802 + $0x44] sm:$0xf] %vm170, %v651
        %1837 = vst.msk [vmem:[%s1802 + $0x48] sm:$0xf] %vm170, %v660
        %v1838 = vld [vmem:[%s1802 + $0x4c] sm:$0x1]
        %v1839 = vsel %vm185, %v661, %v1838
        %1840 = vst [vmem:[%s1802 + $0x4c] sm:$0x1] %v1839
        %v1841 = vld [vmem:[%s1802 + $0x50] sm:$0xf]
        %v1842 = vsel %vm1804, %v668, %v1841
        %1843 = vst [vmem:[%s1802 + $0x50] sm:$0xf] %v1842
        %1844 = vst.msk [vmem:[%s1802 + $0x54] sm:$0xf] %vm170, %v677
        %1845 = vst.msk [vmem:[%s1802 + $0x58] sm:$0xf] %vm170, %v686
        %1846 = vst.msk [vmem:[%s1802 + $0x5c] sm:$0xf] %vm170, %v695
        %v1847 = vld [vmem:[%s1802 + $0x60] sm:$0x1]
        %v1848 = vsel %vm185, %v696, %v1847
        %1849 = vst [vmem:[%s1802 + $0x60] sm:$0x1] %v1848
        %v1850 = vld [vmem:[%s1802 + $0x64] sm:$0xf]
        %v1851 = vsel %vm1804, %v703, %v1850
        %1852 = vst [vmem:[%s1802 + $0x64] sm:$0xf] %v1851
        %1853 = vst.msk [vmem:[%s1802 + $0x68] sm:$0xf] %vm170, %v712
        %1854 = vst.msk [vmem:[%s1802 + $0x6c] sm:$0xf] %vm170, %v721
        %1855 = vst.msk [vmem:[%s1802 + $0x70] sm:$0xf] %vm170, %v730
        %v1856 = vld [vmem:[%s1802 + $0x74] sm:$0x1]
        %v1857 = vsel %vm185, %v731, %v1856
        %1858 = vst [vmem:[%s1802 + $0x74] sm:$0x1] %v1857
        %v1859 = vld [vmem:[%s1802 + $0x78] sm:$0xf]
        %v1860 = vsel %vm1804, %v738, %v1859
        %1861 = vst [vmem:[%s1802 + $0x78] sm:$0xf] %v1860
        %1862 = vst.msk [vmem:[%s1802 + $0x7c] sm:$0xf] %vm170, %v747
        %1863 = vst.msk [vmem:[%s1802 + $0x80] sm:$0xf] %vm170, %v756
        %1864 = vst.msk [vmem:[%s1802 + $0x84] sm:$0xf] %vm170, %v765
        %v1865 = vld [vmem:[%s1802 + $0x88] sm:$0x1]
        %v1866 = vsel %vm185, %v766, %v1865
        %1867 = vst [vmem:[%s1802 + $0x88] sm:$0x1] %v1866
        %v1868 = vld [vmem:[%s1802 + $0x8c] sm:$0xf]
        %v1869 = vsel %vm1804, %v773, %v1868
        %1870 = vst [vmem:[%s1802 + $0x8c] sm:$0xf] %v1869
        %1871 = vst.msk [vmem:[%s1802 + $0x90] sm:$0xf] %vm170, %v782
        %1872 = vst.msk [vmem:[%s1802 + $0x94] sm:$0xf] %vm170, %v791
        %1873 = vst.msk [vmem:[%s1802 + $0x98] sm:$0xf] %vm170, %v800
        %v1874 = vld [vmem:[%s1802 + $0x9c] sm:$0x1]
        %v1875 = vsel %vm185, %v801, %v1874
        %1876 = vst [vmem:[%s1802 + $0x9c] sm:$0x1] %v1875
        %v1877 = vld [vmem:[%s1802 + $0xa0] sm:$0xf]
        %v1878 = vsel %vm1804, %v808, %v1877
        %1879 = vst [vmem:[%s1802 + $0xa0] sm:$0xf] %v1878
        %1880 = vst.msk [vmem:[%s1802 + $0xa4] sm:$0xf] %vm170, %v817
        %1881 = vst.msk [vmem:[%s1802 + $0xa8] sm:$0xf] %vm170, %v826
        %1882 = vst.msk [vmem:[%s1802 + $0xac] sm:$0xf] %vm170, %v835
        %v1883 = vld [vmem:[%s1802 + $0xb0] sm:$0x1]
        %v1884 = vsel %vm185, %v836, %v1883
        %1885 = vst [vmem:[%s1802 + $0xb0] sm:$0x1] %v1884
        %v1886 = vld [vmem:[%s1802 + $0xb4] sm:$0xf]
        %v1887 = vsel %vm1804, %v843, %v1886
        %1888 = vst [vmem:[%s1802 + $0xb4] sm:$0xf] %v1887
        %1889 = vst.msk [vmem:[%s1802 + $0xb8] sm:$0xf] %vm170, %v852
        %1890 = vst.msk [vmem:[%s1802 + $0xbc] sm:$0xf] %vm170, %v861
        %1891 = vst.msk [vmem:[%s1802 + $0xc0] sm:$0xf] %vm170, %v870
        %v1892 = vld [vmem:[%s1802 + $0xc4] sm:$0x1]
        %v1893 = vsel %vm185, %v871, %v1892
        %1894 = vst [vmem:[%s1802 + $0xc4] sm:$0x1] %v1893
        %v1895 = vld [vmem:[%s1802 + $0xc8] sm:$0xf]
        %v1896 = vsel %vm1804, %v878, %v1895
        %1897 = vst [vmem:[%s1802 + $0xc8] sm:$0xf] %v1896
        %1898 = vst.msk [vmem:[%s1802 + $0xcc] sm:$0xf] %vm170, %v887
        %1899 = vst.msk [vmem:[%s1802 + $0xd0] sm:$0xf] %vm170, %v896
        %1900 = vst.msk [vmem:[%s1802 + $0xd4] sm:$0xf] %vm170, %v905
        %v1901 = vld [vmem:[%s1802 + $0xd8] sm:$0x1]
        %v1902 = vsel %vm185, %v906, %v1901
        %1903 = vst [vmem:[%s1802 + $0xd8] sm:$0x1] %v1902
        %v1904 = vld [vmem:[%s1802 + $0xdc] sm:$0xf]
        %v1905 = vsel %vm1804, %v913, %v1904
        %1906 = vst [vmem:[%s1802 + $0xdc] sm:$0xf] %v1905
        %1907 = vst.msk [vmem:[%s1802 + $0xe0] sm:$0xf] %vm170, %v922
        %1908 = vst.msk [vmem:[%s1802 + $0xe4] sm:$0xf] %vm170, %v931
        %1909 = vst.msk [vmem:[%s1802 + $0xe8] sm:$0xf] %vm170, %v940
        %v1910 = vld [vmem:[%s1802 + $0xec] sm:$0x1]
        %v1911 = vsel %vm185, %v941, %v1910
        %1912 = vst [vmem:[%s1802 + $0xec] sm:$0x1] %v1911
        %v1913 = vld [vmem:[%s1802 + $0xf0] sm:$0xf]
        %v1914 = vsel %vm1804, %v948, %v1913
        %1915 = vst [vmem:[%s1802 + $0xf0] sm:$0xf] %v1914
        %1916 = vst.msk [vmem:[%s1802 + $0xf4] sm:$0xf] %vm170, %v957
        %1917 = vst.msk [vmem:[%s1802 + $0xf8] sm:$0xf] %vm170, %v966
        %1918 = vst.msk [vmem:[%s1802 + $0xfc] sm:$0xf] %vm170, %v975
        %v1919 = vld [vmem:[%s1802 + $0x100] sm:$0x1]
        %v1920 = vsel %vm185, %v976, %v1919
        %1921 = vst [vmem:[%s1802 + $0x100] sm:$0x1] %v1920
        %v1922 = vld [vmem:[%s1802 + $0x104] sm:$0xf]
        %v1923 = vsel %vm1804, %v983, %v1922
        %1924 = vst [vmem:[%s1802 + $0x104] sm:$0xf] %v1923
        %1925 = vst.msk [vmem:[%s1802 + $0x108] sm:$0xf] %vm170, %v992
        %1926 = vst.msk [vmem:[%s1802 + $0x10c] sm:$0xf] %vm170, %v1001
        %1927 = vst.msk [vmem:[%s1802 + $0x110] sm:$0xf] %vm170, %v1010
        %v1928 = vld [vmem:[%s1802 + $0x114] sm:$0x1]
        %v1929 = vsel %vm185, %v1011, %v1928
        %1930 = vst [vmem:[%s1802 + $0x114] sm:$0x1] %v1929
        %v1931 = vld [vmem:[%s1802 + $0x118] sm:$0xf]
        %v1932 = vsel %vm1804, %v1018, %v1931
        %1933 = vst [vmem:[%s1802 + $0x118] sm:$0xf] %v1932
        %1934 = vst.msk [vmem:[%s1802 + $0x11c] sm:$0xf] %vm170, %v1027
        %1935 = vst.msk [vmem:[%s1802 + $0x120] sm:$0xf] %vm170, %v1036
        %1936 = vst.msk [vmem:[%s1802 + $0x124] sm:$0xf] %vm170, %v1045
        %v1937 = vld [vmem:[%s1802 + $0x128] sm:$0x1]
        %v1938 = vsel %vm185, %v1046, %v1937
        %1939 = vst [vmem:[%s1802 + $0x128] sm:$0x1] %v1938
        %v1940 = vld [vmem:[%s1802 + $0x12c] sm:$0xf]
        %v1941 = vsel %vm1804, %v1053, %v1940
        %1942 = vst [vmem:[%s1802 + $0x12c] sm:$0xf] %v1941
        %1943 = vst.msk [vmem:[%s1802 + $0x130] sm:$0xf] %vm170, %v1062
        %1944 = vst.msk [vmem:[%s1802 + $0x134] sm:$0xf] %vm170, %v1071
        %1945 = vst.msk [vmem:[%s1802 + $0x138] sm:$0xf] %vm170, %v1080
        %v1946 = vld [vmem:[%s1802 + $0x13c] sm:$0x1]
        %v1947 = vsel %vm185, %v1081, %v1946
        %1948 = vst [vmem:[%s1802 + $0x13c] sm:$0x1] %v1947
        %v1949 = vld [vmem:[%s1802 + $0x140] sm:$0xf]
        %v1950 = vsel %vm1804, %v1088, %v1949
        %1951 = vst [vmem:[%s1802 + $0x140] sm:$0xf] %v1950
        %1952 = vst.msk [vmem:[%s1802 + $0x144] sm:$0xf] %vm170, %v1097
        %1953 = vst.msk [vmem:[%s1802 + $0x148] sm:$0xf] %vm170, %v1106
        %1954 = vst.msk [vmem:[%s1802 + $0x14c] sm:$0xf] %vm170, %v1115
        %v1955 = vld [vmem:[%s1802 + $0x150] sm:$0x1]
        %v1956 = vsel %vm185, %v1116, %v1955
        %1957 = vst [vmem:[%s1802 + $0x150] sm:$0x1] %v1956
        %v1958 = vld [vmem:[%s1802 + $0x154] sm:$0xf]
        %v1959 = vsel %vm1804, %v1123, %v1958
        %1960 = vst [vmem:[%s1802 + $0x154] sm:$0xf] %v1959
        %1961 = vst.msk [vmem:[%s1802 + $0x158] sm:$0xf] %vm170, %v1132
        %1962 = vst.msk [vmem:[%s1802 + $0x15c] sm:$0xf] %vm170, %v1141
        %1963 = vst.msk [vmem:[%s1802 + $0x160] sm:$0xf] %vm170, %v1150
        %v1964 = vld [vmem:[%s1802 + $0x164] sm:$0x1]
        %v1965 = vsel %vm185, %v1151, %v1964
        %1966 = vst [vmem:[%s1802 + $0x164] sm:$0x1] %v1965
        %v1967 = vld [vmem:[%s1802 + $0x168] sm:$0xf]
        %v1968 = vsel %vm1804, %v1158, %v1967
        %1969 = vst [vmem:[%s1802 + $0x168] sm:$0xf] %v1968
        %1970 = vst.msk [vmem:[%s1802 + $0x16c] sm:$0xf] %vm170, %v1167
        %1971 = vst.msk [vmem:[%s1802 + $0x170] sm:$0xf] %vm170, %v1176
        %1972 = vst.msk [vmem:[%s1802 + $0x174] sm:$0xf] %vm170, %v1185
        %v1973 = vld [vmem:[%s1802 + $0x178] sm:$0x1]
        %v1974 = vsel %vm185, %v1186, %v1973
        %1975 = vst [vmem:[%s1802 + $0x178] sm:$0x1] %v1974
        %v1976 = vld [vmem:[%s1802 + $0x17c] sm:$0xf]
        %v1977 = vsel %vm1804, %v1193, %v1976
        %1978 = vst [vmem:[%s1802 + $0x17c] sm:$0xf] %v1977
        %1979 = vst.msk [vmem:[%s1802 + $0x180] sm:$0xf] %vm170, %v1202
        %1980 = vst.msk [vmem:[%s1802 + $0x184] sm:$0xf] %vm170, %v1211
        %1981 = vst.msk [vmem:[%s1802 + $0x188] sm:$0xf] %vm170, %v1220
        %v1982 = vld [vmem:[%s1802 + $0x18c] sm:$0x1]
        %v1983 = vsel %vm185, %v1221, %v1982
        %1984 = vst [vmem:[%s1802 + $0x18c] sm:$0x1] %v1983
        %v1985 = vld [vmem:[%s1802 + $0x190] sm:$0xf]
        %v1986 = vsel %vm1804, %v1228, %v1985
        %1987 = vst [vmem:[%s1802 + $0x190] sm:$0xf] %v1986
        %1988 = vst.msk [vmem:[%s1802 + $0x194] sm:$0xf] %vm170, %v1237
        %1989 = vst.msk [vmem:[%s1802 + $0x198] sm:$0xf] %vm170, %v1246
        %1990 = vst.msk [vmem:[%s1802 + $0x19c] sm:$0xf] %vm170, %v1255
        %v1991 = vld [vmem:[%s1802 + $0x1a0] sm:$0x1]
        %v1992 = vsel %vm185, %v1256, %v1991
        %1993 = vst [vmem:[%s1802 + $0x1a0] sm:$0x1] %v1992
        %v1994 = vld [vmem:[%s1802 + $0x1a4] sm:$0xf]
        %v1995 = vsel %vm1804, %v1263, %v1994
        %1996 = vst [vmem:[%s1802 + $0x1a4] sm:$0xf] %v1995
        %1997 = vst.msk [vmem:[%s1802 + $0x1a8] sm:$0xf] %vm170, %v1272
        %1998 = vst.msk [vmem:[%s1802 + $0x1ac] sm:$0xf] %vm170, %v1281
        %1999 = vst.msk [vmem:[%s1802 + $0x1b0] sm:$0xf] %vm170, %v1290
        %v2000 = vld [vmem:[%s1802 + $0x1b4] sm:$0x1]
        %v2001 = vsel %vm185, %v1291, %v2000
        %2002 = vst [vmem:[%s1802 + $0x1b4] sm:$0x1] %v2001
        %v2003 = vld [vmem:[%s1802 + $0x1b8] sm:$0xf]
        %v2004 = vsel %vm1804, %v1298, %v2003
        %2005 = vst [vmem:[%s1802 + $0x1b8] sm:$0xf] %v2004
        %2006 = vst.msk [vmem:[%s1802 + $0x1bc] sm:$0xf] %vm170, %v1307
        %2007 = vst.msk [vmem:[%s1802 + $0x1c0] sm:$0xf] %vm170, %v1316
        %2008 = vst.msk [vmem:[%s1802 + $0x1c4] sm:$0xf] %vm170, %v1325
        %v2009 = vld [vmem:[%s1802 + $0x1c8] sm:$0x1]
        %v2010 = vsel %vm185, %v1326, %v2009
        %2011 = vst [vmem:[%s1802 + $0x1c8] sm:$0x1] %v2010
        %v2012 = vld [vmem:[%s1802 + $0x1cc] sm:$0xf]
        %v2013 = vsel %vm1804, %v1333, %v2012
        %2014 = vst [vmem:[%s1802 + $0x1cc] sm:$0xf] %v2013
        %2015 = vst.msk [vmem:[%s1802 + $0x1d0] sm:$0xf] %vm170, %v1342
        %2016 = vst.msk [vmem:[%s1802 + $0x1d4] sm:$0xf] %vm170, %v1351
        %2017 = vst.msk [vmem:[%s1802 + $0x1d8] sm:$0xf] %vm170, %v1360
        %v2018 = vld [vmem:[%s1802 + $0x1dc] sm:$0x1]
        %v2019 = vsel %vm185, %v1361, %v2018
        %2020 = vst [vmem:[%s1802 + $0x1dc] sm:$0x1] %v2019
        %v2021 = vld [vmem:[%s1802 + $0x1e0] sm:$0xf]
        %v2022 = vsel %vm1804, %v1368, %v2021
        %2023 = vst [vmem:[%s1802 + $0x1e0] sm:$0xf] %v2022
        %2024 = vst.msk [vmem:[%s1802 + $0x1e4] sm:$0xf] %vm170, %v1377
        %2025 = vst.msk [vmem:[%s1802 + $0x1e8] sm:$0xf] %vm170, %v1386
        %2026 = vst.msk [vmem:[%s1802 + $0x1ec] sm:$0xf] %vm170, %v1395
        %v2027 = vld [vmem:[%s1802 + $0x1f0] sm:$0x1]
        %v2028 = vsel %vm185, %v1396, %v2027
        %2029 = vst [vmem:[%s1802 + $0x1f0] sm:$0x1] %v2028
        %v2030 = vld [vmem:[%s1802 + $0x1f4] sm:$0xf]
        %v2031 = vsel %vm1804, %v1403, %v2030
        %2032 = vst [vmem:[%s1802 + $0x1f4] sm:$0xf] %v2031
        %2033 = vst.msk [vmem:[%s1802 + $0x1f8] sm:$0xf] %vm170, %v1412
        %2034 = vst.msk [vmem:[%s1802 + $0x1fc] sm:$0xf] %vm170, %v1421
        %2035 = vst.msk [vmem:[%s1802 + $0x200] sm:$0xf] %vm170, %v1430
        %v2036 = vld [vmem:[%s1802 + $0x204] sm:$0x1]
        %v2037 = vsel %vm185, %v1431, %v2036
        %2038 = vst [vmem:[%s1802 + $0x204] sm:$0x1] %v2037
        %v2039 = vld [vmem:[%s1802 + $0x208] sm:$0xf]
        %v2040 = vsel %vm1804, %v1438, %v2039
        %2041 = vst [vmem:[%s1802 + $0x208] sm:$0xf] %v2040
        %2042 = vst.msk [vmem:[%s1802 + $0x20c] sm:$0xf] %vm170, %v1447
        %2043 = vst.msk [vmem:[%s1802 + $0x210] sm:$0xf] %vm170, %v1456
        %2044 = vst.msk [vmem:[%s1802 + $0x214] sm:$0xf] %vm170, %v1465
        %v2045 = vld [vmem:[%s1802 + $0x218] sm:$0x1]
        %v2046 = vsel %vm185, %v1466, %v2045
        %2047 = vst [vmem:[%s1802 + $0x218] sm:$0x1] %v2046
        %v2048 = vld [vmem:[%s1802 + $0x21c] sm:$0xf]
        %v2049 = vsel %vm1804, %v1473, %v2048
        %2050 = vst [vmem:[%s1802 + $0x21c] sm:$0xf] %v2049
        %2051 = vst.msk [vmem:[%s1802 + $0x220] sm:$0xf] %vm170, %v1482
        %2052 = vst.msk [vmem:[%s1802 + $0x224] sm:$0xf] %vm170, %v1491
        %2053 = vst.msk [vmem:[%s1802 + $0x228] sm:$0xf] %vm170, %v1500
        %v2054 = vld [vmem:[%s1802 + $0x22c] sm:$0x1]
        %v2055 = vsel %vm185, %v1501, %v2054
        %2056 = vst [vmem:[%s1802 + $0x22c] sm:$0x1] %v2055
        %v2057 = vld [vmem:[%s1802 + $0x230] sm:$0xf]
        %v2058 = vsel %vm1804, %v1508, %v2057
        %2059 = vst [vmem:[%s1802 + $0x230] sm:$0xf] %v2058
        %2060 = vst.msk [vmem:[%s1802 + $0x234] sm:$0xf] %vm170, %v1517
        %2061 = vst.msk [vmem:[%s1802 + $0x238] sm:$0xf] %vm170, %v1526
        %2062 = vst.msk [vmem:[%s1802 + $0x23c] sm:$0xf] %vm170, %v1535
        %v2063 = vld [vmem:[%s1802 + $0x240] sm:$0x1]
        %v2064 = vsel %vm185, %v1536, %v2063
        %2065 = vst [vmem:[%s1802 + $0x240] sm:$0x1] %v2064
        %v2066 = vld [vmem:[%s1802 + $0x244] sm:$0xf]
        %v2067 = vsel %vm1804, %v1543, %v2066
        %2068 = vst [vmem:[%s1802 + $0x244] sm:$0xf] %v2067
        %2069 = vst.msk [vmem:[%s1802 + $0x248] sm:$0xf] %vm170, %v1552
        %2070 = vst.msk [vmem:[%s1802 + $0x24c] sm:$0xf] %vm170, %v1561
        %2071 = vst.msk [vmem:[%s1802 + $0x250] sm:$0xf] %vm170, %v1570
        %v2072 = vld [vmem:[%s1802 + $0x254] sm:$0x1]
        %v2073 = vsel %vm185, %v1571, %v2072
        %2074 = vst [vmem:[%s1802 + $0x254] sm:$0x1] %v2073
        %v2075 = vld [vmem:[%s1802 + $0x258] sm:$0xf]
        %v2076 = vsel %vm1804, %v1578, %v2075
        %2077 = vst [vmem:[%s1802 + $0x258] sm:$0xf] %v2076
        %2078 = vst.msk [vmem:[%s1802 + $0x25c] sm:$0xf] %vm170, %v1587
        %2079 = vst.msk [vmem:[%s1802 + $0x260] sm:$0xf] %vm170, %v1596
        %2080 = vst.msk [vmem:[%s1802 + $0x264] sm:$0xf] %vm170, %v1605
        %v2081 = vld [vmem:[%s1802 + $0x268] sm:$0x1]
        %v2082 = vsel %vm185, %v1606, %v2081
        %2083 = vst [vmem:[%s1802 + $0x268] sm:$0x1] %v2082
        %v2084 = vld [vmem:[%s1802 + $0x26c] sm:$0xf]
        %v2085 = vsel %vm1804, %v1613, %v2084
        %2086 = vst [vmem:[%s1802 + $0x26c] sm:$0xf] %v2085
        %2087 = vst.msk [vmem:[%s1802 + $0x270] sm:$0xf] %vm170, %v1622
        %2088 = vst.msk [vmem:[%s1802 + $0x274] sm:$0xf] %vm170, %v1631
        %2089 = vst.msk [vmem:[%s1802 + $0x278] sm:$0xf] %vm170, %v1640
        %v2090 = vld [vmem:[%s1802 + $0x27c] sm:$0x1]
        %v2091 = vsel %vm185, %v1641, %v2090
        %2092 = vst [vmem:[%s1802 + $0x27c] sm:$0x1] %v2091
        %s2093 = smul.u32 0, 5
        %s2094 = smul.addr %s2093, 4
        %s2095 = scalar_lea.vmem [#allocation2], %s2094
        %v2096 = vld [vmem:[%s2095] sm:$0xf]
        %v2097 = vld [vmem:[%s2095 + $0x4] sm:$0xf]
        %v2098 = vld [vmem:[%s2095 + $0x8] sm:$0xf]
        %v2099 = vld [vmem:[%s2095 + $0xc] sm:$0xf]
        %v2100 = vld [vmem:[%s2095 + $0x14] sm:$0xf]
        %v2101 = vld [vmem:[%s2095 + $0x18] sm:$0xf]
        %v2102 = vld [vmem:[%s2095 + $0x1c] sm:$0xf]
        %v2103 = vld [vmem:[%s2095 + $0x20] sm:$0xf]
        %v2104 = vld [vmem:[%s2095 + $0x28] sm:$0xf]
        %v2105 = vld [vmem:[%s2095 + $0x2c] sm:$0xf]
        %v2106 = vld [vmem:[%s2095 + $0x30] sm:$0xf]
        %v2107 = vld [vmem:[%s2095 + $0x34] sm:$0xf]
        %v2108 = vld [vmem:[%s2095 + $0x3c] sm:$0xf]
        %v2109 = vld [vmem:[%s2095 + $0x40] sm:$0xf]
        %v2110 = vld [vmem:[%s2095 + $0x44] sm:$0xf]
        %v2111 = vld [vmem:[%s2095 + $0x48] sm:$0xf]
        %v2112 = vld [vmem:[%s2095 + $0x50] sm:$0xf]
        %v2113 = vld [vmem:[%s2095 + $0x54] sm:$0xf]
        %v2114 = vld [vmem:[%s2095 + $0x58] sm:$0xf]
        %v2115 = vld [vmem:[%s2095 + $0x5c] sm:$0xf]
        %v2116 = vld [vmem:[%s2095 + $0x64] sm:$0xf]
        %v2117 = vld [vmem:[%s2095 + $0x68] sm:$0xf]
        %v2118 = vld [vmem:[%s2095 + $0x6c] sm:$0xf]
        %v2119 = vld [vmem:[%s2095 + $0x70] sm:$0xf]
        %v2120 = vld [vmem:[%s2095 + $0x78] sm:$0xf]
        %v2121 = vld [vmem:[%s2095 + $0x7c] sm:$0xf]
        %v2122 = vld [vmem:[%s2095 + $0x80] sm:$0xf]
        %v2123 = vld [vmem:[%s2095 + $0x84] sm:$0xf]
        %v2124 = vld [vmem:[%s2095 + $0x8c] sm:$0xf]
        %v2125 = vld [vmem:[%s2095 + $0x90] sm:$0xf]
        %v2126 = vld [vmem:[%s2095 + $0x94] sm:$0xf]
        %v2127 = vld [vmem:[%s2095 + $0x98] sm:$0xf]
        %v2128 = vld [vmem:[%s2095 + $0x10] sm:$0x1]
        %v2129 = vld [vmem:[%s2095 + $0x24] sm:$0x1]
        %v2130 = vld [vmem:[%s2095 + $0x38] sm:$0x1]
        %v2131 = vld [vmem:[%s2095 + $0x4c] sm:$0x1]
        %v2132 = vld [vmem:[%s2095 + $0x60] sm:$0x1]
        %v2133 = vld [vmem:[%s2095 + $0x74] sm:$0x1]
        %v2134 = vld [vmem:[%s2095 + $0x88] sm:$0x1]
        %v2135 = vld [vmem:[%s2095 + $0x9c] sm:$0x1]
        %v2136 = vld [vmem:[%s2095] sm:$0xe]
        %v2137 = vld [vmem:[%s2095 + $0x14] sm:$0xe]
        %v2138 = vld [vmem:[%s2095 + $0x28] sm:$0xe]
        %v2139 = vld [vmem:[%s2095 + $0x3c] sm:$0xe]
        %v2140 = vld [vmem:[%s2095 + $0x50] sm:$0xe]
        %v2141 = vld [vmem:[%s2095 + $0x64] sm:$0xe]
        %v2142 = vld [vmem:[%s2095 + $0x78] sm:$0xe]
        %v2143 = vld [vmem:[%s2095 + $0x8c] sm:$0xe]
        %s2144 = sadd.s32 0, 1
        %s2145 = smul.u32 %s2144, 5
        %s2146 = smul.addr %s2145, 4
        %s2147 = scalar_lea.vmem [#allocation2], %s2146
        %v2148 = vld [vmem:[%s2147] sm:$0xf]
        %v2149 = vld [vmem:[%s2147 + $0x4] sm:$0xf]
        %v2150 = vld [vmem:[%s2147 + $0x8] sm:$0xf]
        %v2151 = vld [vmem:[%s2147 + $0xc] sm:$0xf]
        %v2152 = vld [vmem:[%s2147 + $0x14] sm:$0xf]
        %v2153 = vld [vmem:[%s2147 + $0x18] sm:$0xf]
        %v2154 = vld [vmem:[%s2147 + $0x1c] sm:$0xf]
        %v2155 = vld [vmem:[%s2147 + $0x20] sm:$0xf]
        %v2156 = vld [vmem:[%s2147 + $0x28] sm:$0xf]
        %v2157 = vld [vmem:[%s2147 + $0x2c] sm:$0xf]
        %v2158 = vld [vmem:[%s2147 + $0x30] sm:$0xf]
        %v2159 = vld [vmem:[%s2147 + $0x34] sm:$0xf]
        %v2160 = vld [vmem:[%s2147 + $0x3c] sm:$0xf]
        %v2161 = vld [vmem:[%s2147 + $0x40] sm:$0xf]
        %v2162 = vld [vmem:[%s2147 + $0x44] sm:$0xf]
        %v2163 = vld [vmem:[%s2147 + $0x48] sm:$0xf]
        %v2164 = vld [vmem:[%s2147 + $0x50] sm:$0xf]
        %v2165 = vld [vmem:[%s2147 + $0x54] sm:$0xf]
        %v2166 = vld [vmem:[%s2147 + $0x58] sm:$0xf]
        %v2167 = vld [vmem:[%s2147 + $0x5c] sm:$0xf]
        %v2168 = vld [vmem:[%s2147 + $0x64] sm:$0xf]
        %v2169 = vld [vmem:[%s2147 + $0x68] sm:$0xf]
        %v2170 = vld [vmem:[%s2147 + $0x6c] sm:$0xf]
        %v2171 = vld [vmem:[%s2147 + $0x70] sm:$0xf]
        %v2172 = vld [vmem:[%s2147 + $0x78] sm:$0xf]
        %v2173 = vld [vmem:[%s2147 + $0x7c] sm:$0xf]
        %v2174 = vld [vmem:[%s2147 + $0x80] sm:$0xf]
        %v2175 = vld [vmem:[%s2147 + $0x84] sm:$0xf]
        %v2176 = vld [vmem:[%s2147 + $0x8c] sm:$0xf]
        %v2177 = vld [vmem:[%s2147 + $0x90] sm:$0xf]
        %v2178 = vld [vmem:[%s2147 + $0x94] sm:$0xf]
        %v2179 = vld [vmem:[%s2147 + $0x98] sm:$0xf]
        %v2180 = vld [vmem:[%s2147 + $0x10] sm:$0x1]
        %v2181 = vld [vmem:[%s2147 + $0x24] sm:$0x1]
        %v2182 = vld [vmem:[%s2147 + $0x38] sm:$0x1]
        %v2183 = vld [vmem:[%s2147 + $0x4c] sm:$0x1]
        %v2184 = vld [vmem:[%s2147 + $0x60] sm:$0x1]
        %v2185 = vld [vmem:[%s2147 + $0x74] sm:$0x1]
        %v2186 = vld [vmem:[%s2147 + $0x88] sm:$0x1]
        %v2187 = vld [vmem:[%s2147 + $0x9c] sm:$0x1]
        %v2188 = vld [vmem:[%s2147] sm:$0xe]
        %v2189 = vld [vmem:[%s2147 + $0x14] sm:$0xe]
        %v2190 = vld [vmem:[%s2147 + $0x28] sm:$0xe]
        %v2191 = vld [vmem:[%s2147 + $0x3c] sm:$0xe]
        %v2192 = vld [vmem:[%s2147 + $0x50] sm:$0xe]
        %v2193 = vld [vmem:[%s2147 + $0x64] sm:$0xe]
        %v2194 = vld [vmem:[%s2147 + $0x78] sm:$0xe]
        %v2195 = vld [vmem:[%s2147 + $0x8c] sm:$0xe]
        %s2196 = sadd.s32 0, 2
        %s2197 = smul.u32 %s2196, 5
        %s2198 = smul.addr %s2197, 4
        %s2199 = scalar_lea.vmem [#allocation2], %s2198
        %v2200 = vld [vmem:[%s2199] sm:$0xf]
        %v2201 = vld [vmem:[%s2199 + $0x4] sm:$0xf]
        %v2202 = vld [vmem:[%s2199 + $0x8] sm:$0xf]
        %v2203 = vld [vmem:[%s2199 + $0xc] sm:$0xf]
        %v2204 = vld [vmem:[%s2199 + $0x14] sm:$0xf]
        %v2205 = vld [vmem:[%s2199 + $0x18] sm:$0xf]
        %v2206 = vld [vmem:[%s2199 + $0x1c] sm:$0xf]
        %v2207 = vld [vmem:[%s2199 + $0x20] sm:$0xf]
        %v2208 = vld [vmem:[%s2199 + $0x28] sm:$0xf]
        %v2209 = vld [vmem:[%s2199 + $0x2c] sm:$0xf]
        %v2210 = vld [vmem:[%s2199 + $0x30] sm:$0xf]
        %v2211 = vld [vmem:[%s2199 + $0x34] sm:$0xf]
        %v2212 = vld [vmem:[%s2199 + $0x3c] sm:$0xf]
        %v2213 = vld [vmem:[%s2199 + $0x40] sm:$0xf]
        %v2214 = vld [vmem:[%s2199 + $0x44] sm:$0xf]
        %v2215 = vld [vmem:[%s2199 + $0x48] sm:$0xf]
        %v2216 = vld [vmem:[%s2199 + $0x50] sm:$0xf]
        %v2217 = vld [vmem:[%s2199 + $0x54] sm:$0xf]
        %v2218 = vld [vmem:[%s2199 + $0x58] sm:$0xf]
        %v2219 = vld [vmem:[%s2199 + $0x5c] sm:$0xf]
        %v2220 = vld [vmem:[%s2199 + $0x64] sm:$0xf]
        %v2221 = vld [vmem:[%s2199 + $0x68] sm:$0xf]
        %v2222 = vld [vmem:[%s2199 + $0x6c] sm:$0xf]
        %v2223 = vld [vmem:[%s2199 + $0x70] sm:$0xf]
        %v2224 = vld [vmem:[%s2199 + $0x78] sm:$0xf]
        %v2225 = vld [vmem:[%s2199 + $0x7c] sm:$0xf]
        %v2226 = vld [vmem:[%s2199 + $0x80] sm:$0xf]
        %v2227 = vld [vmem:[%s2199 + $0x84] sm:$0xf]
        %v2228 = vld [vmem:[%s2199 + $0x8c] sm:$0xf]
        %v2229 = vld [vmem:[%s2199 + $0x90] sm:$0xf]
        %v2230 = vld [vmem:[%s2199 + $0x94] sm:$0xf]
        %v2231 = vld [vmem:[%s2199 + $0x98] sm:$0xf]
        %v2232 = vld [vmem:[%s2199 + $0x10] sm:$0x1]
        %v2233 = vld [vmem:[%s2199 + $0x24] sm:$0x1]
        %v2234 = vld [vmem:[%s2199 + $0x38] sm:$0x1]
        %v2235 = vld [vmem:[%s2199 + $0x4c] sm:$0x1]
        %v2236 = vld [vmem:[%s2199 + $0x60] sm:$0x1]
        %v2237 = vld [vmem:[%s2199 + $0x74] sm:$0x1]
        %v2238 = vld [vmem:[%s2199 + $0x88] sm:$0x1]
        %v2239 = vld [vmem:[%s2199 + $0x9c] sm:$0x1]
        %v2240 = vld [vmem:[%s2199] sm:$0xe]
        %v2241 = vld [vmem:[%s2199 + $0x14] sm:$0xe]
        %v2242 = vld [vmem:[%s2199 + $0x28] sm:$0xe]
        %v2243 = vld [vmem:[%s2199 + $0x3c] sm:$0xe]
        %v2244 = vld [vmem:[%s2199 + $0x50] sm:$0xe]
        %v2245 = vld [vmem:[%s2199 + $0x64] sm:$0xe]
        %v2246 = vld [vmem:[%s2199 + $0x78] sm:$0xe]
        %v2247 = vld [vmem:[%s2199 + $0x8c] sm:$0xe]
        %v2280 = vunpack.c.l.b16 %v2096
        %v2281 = vunpack.c.l.b16 %v2097
        %v2282 = vunpack.c.l.b16 %v2098
        %v2283 = vunpack.c.l.b16 %v2099
        %v2284 = vunpack.c.l.b16 %v2100
        %v2285 = vunpack.c.l.b16 %v2101
        %v2286 = vunpack.c.l.b16 %v2102
        %v2287 = vunpack.c.l.b16 %v2103
        %v2288 = vunpack.c.l.b16 %v2104
        %v2289 = vunpack.c.l.b16 %v2105
        %v2290 = vunpack.c.l.b16 %v2106
        %v2291 = vunpack.c.l.b16 %v2107
        %v2292 = vunpack.c.l.b16 %v2108
        %v2293 = vunpack.c.l.b16 %v2109
        %v2294 = vunpack.c.l.b16 %v2110
        %v2295 = vunpack.c.l.b16 %v2111
        %v2296 = vunpack.c.l.b16 %v2112
        %v2297 = vunpack.c.l.b16 %v2113
        %v2298 = vunpack.c.l.b16 %v2114
        %v2299 = vunpack.c.l.b16 %v2115
        %v2300 = vunpack.c.l.b16 %v2116
        %v2301 = vunpack.c.l.b16 %v2117
        %v2302 = vunpack.c.l.b16 %v2118
        %v2303 = vunpack.c.l.b16 %v2119
        %v2304 = vunpack.c.l.b16 %v2120
        %v2305 = vunpack.c.l.b16 %v2121
        %v2306 = vunpack.c.l.b16 %v2122
        %v2307 = vunpack.c.l.b16 %v2123
        %v2308 = vunpack.c.l.b16 %v2124
        %v2309 = vunpack.c.l.b16 %v2125
        %v2310 = vunpack.c.l.b16 %v2126
        %v2311 = vunpack.c.l.b16 %v2127
        %v2312 = vpack.c.b16 %v2281, %v2280
        %v2313 = vpack.c.b16 %v2283, %v2282
        %v2314 = vpack.c.b16 %v2285, %v2284
        %v2315 = vpack.c.b16 %v2287, %v2286
        %v2316 = vpack.c.b16 %v2289, %v2288
        %v2317 = vpack.c.b16 %v2291, %v2290
        %v2318 = vpack.c.b16 %v2293, %v2292
        %v2319 = vpack.c.b16 %v2295, %v2294
        %v2320 = vpack.c.b16 %v2297, %v2296
        %v2321 = vpack.c.b16 %v2299, %v2298
        %v2322 = vpack.c.b16 %v2301, %v2300
        %v2323 = vpack.c.b16 %v2303, %v2302
        %v2324 = vpack.c.b16 %v2305, %v2304
        %v2325 = vpack.c.b16 %v2307, %v2306
        %v2326 = vpack.c.b16 %v2309, %v2308
        %v2327 = vpack.c.b16 %v2311, %v2310
        %v2336 = vunpack.c.l.b16 %v2128
        %v2337 = vunpack.c.l.b16 %v2129
        %v2338 = vunpack.c.l.b16 %v2130
        %v2339 = vunpack.c.l.b16 %v2131
        %v2340 = vunpack.c.l.b16 %v2132
        %v2341 = vunpack.c.l.b16 %v2133
        %v2342 = vunpack.c.l.b16 %v2134
        %v2343 = vunpack.c.l.b16 %v2135
        %v2344 = vpack.c.b16 %v2336, %v2336
        %v2345 = vpack.c.b16 %v2337, %v2337
        %v2346 = vpack.c.b16 %v2338, %v2338
        %v2347 = vpack.c.b16 %v2339, %v2339
        %v2348 = vpack.c.b16 %v2340, %v2340
        %v2349 = vpack.c.b16 %v2341, %v2341
        %v2350 = vpack.c.b16 %v2342, %v2342
        %v2351 = vpack.c.b16 %v2343, %v2343
        %vm2352 = vsmask.f32 7424
        %v2354 = vshrl.u32 %v2312, 16
        %v2356 = vshll.u32 %v2312, 16
        %v2358 = vrot.slane %v2356, 1
        %v2359 = vor.u32 %v2354, %v2358
        %v2361 = vshll.u32 %v2313, 16
        %v2363 = vrot.slane %v2361, 1
        %v2364 = vsel %vm2352, %v2359, %v2363
        %v2365 = vshrl.u32 %v2313, 16
        %v2367 = vor.u32 %v2365, %v2363
        %v2369 = vshll.u32 %v2344, 16
        %v2371 = vrot.slane %v2369, 1
        %v2372 = vsel %vm2352, %v2367, %v2371
        %v2374 = vshrl.u32 %v2314, 16
        %v2376 = vshll.u32 %v2314, 16
        %v2378 = vrot.slane %v2376, 1
        %v2379 = vor.u32 %v2374, %v2378
        %v2381 = vshll.u32 %v2315, 16
        %v2383 = vrot.slane %v2381, 1
        %v2384 = vsel %vm2352, %v2379, %v2383
        %v2385 = vshrl.u32 %v2315, 16
        %v2387 = vor.u32 %v2385, %v2383
        %v2389 = vshll.u32 %v2345, 16
        %v2391 = vrot.slane %v2389, 1
        %v2392 = vsel %vm2352, %v2387, %v2391
        %v2394 = vshrl.u32 %v2316, 16
        %v2396 = vshll.u32 %v2316, 16
        %v2398 = vrot.slane %v2396, 1
        %v2399 = vor.u32 %v2394, %v2398
        %v2401 = vshll.u32 %v2317, 16
        %v2403 = vrot.slane %v2401, 1
        %v2404 = vsel %vm2352, %v2399, %v2403
        %v2405 = vshrl.u32 %v2317, 16
        %v2407 = vor.u32 %v2405, %v2403
        %v2409 = vshll.u32 %v2346, 16
        %v2411 = vrot.slane %v2409, 1
        %v2412 = vsel %vm2352, %v2407, %v2411
        %v2414 = vshrl.u32 %v2318, 16
        %v2416 = vshll.u32 %v2318, 16
        %v2418 = vrot.slane %v2416, 1
        %v2419 = vor.u32 %v2414, %v2418
        %v2421 = vshll.u32 %v2319, 16
        %v2423 = vrot.slane %v2421, 1
        %v2424 = vsel %vm2352, %v2419, %v2423
        %v2425 = vshrl.u32 %v2319, 16
        %v2427 = vor.u32 %v2425, %v2423
        %v2429 = vshll.u32 %v2347, 16
        %v2431 = vrot.slane %v2429, 1
        %v2432 = vsel %vm2352, %v2427, %v2431
        %v2434 = vshrl.u32 %v2320, 16
        %v2436 = vshll.u32 %v2320, 16
        %v2438 = vrot.slane %v2436, 1
        %v2439 = vor.u32 %v2434, %v2438
        %v2441 = vshll.u32 %v2321, 16
        %v2443 = vrot.slane %v2441, 1
        %v2444 = vsel %vm2352, %v2439, %v2443
        %v2445 = vshrl.u32 %v2321, 16
        %v2447 = vor.u32 %v2445, %v2443
        %v2449 = vshll.u32 %v2348, 16
        %v2451 = vrot.slane %v2449, 1
        %v2452 = vsel %vm2352, %v2447, %v2451
        %v2454 = vshrl.u32 %v2322, 16
        %v2456 = vshll.u32 %v2322, 16
        %v2458 = vrot.slane %v2456, 1
        %v2459 = vor.u32 %v2454, %v2458
        %v2461 = vshll.u32 %v2323, 16
        %v2463 = vrot.slane %v2461, 1
        %v2464 = vsel %vm2352, %v2459, %v2463
        %v2465 = vshrl.u32 %v2323, 16
        %v2467 = vor.u32 %v2465, %v2463
        %v2469 = vshll.u32 %v2349, 16
        %v2471 = vrot.slane %v2469, 1
        %v2472 = vsel %vm2352, %v2467, %v2471
        %v2474 = vshrl.u32 %v2324, 16
        %v2476 = vshll.u32 %v2324, 16
        %v2478 = vrot.slane %v2476, 1
        %v2479 = vor.u32 %v2474, %v2478
        %v2481 = vshll.u32 %v2325, 16
        %v2483 = vrot.slane %v2481, 1
        %v2484 = vsel %vm2352, %v2479, %v2483
        %v2485 = vshrl.u32 %v2325, 16
        %v2487 = vor.u32 %v2485, %v2483
        %v2489 = vshll.u32 %v2350, 16
        %v2491 = vrot.slane %v2489, 1
        %v2492 = vsel %vm2352, %v2487, %v2491
        %v2494 = vshrl.u32 %v2326, 16
        %v2496 = vshll.u32 %v2326, 16
        %v2498 = vrot.slane %v2496, 1
        %v2499 = vor.u32 %v2494, %v2498
        %v2501 = vshll.u32 %v2327, 16
        %v2503 = vrot.slane %v2501, 1
        %v2504 = vsel %vm2352, %v2499, %v2503
        %v2505 = vshrl.u32 %v2327, 16
        %v2507 = vor.u32 %v2505, %v2503
        %v2509 = vshll.u32 %v2351, 16
        %v2511 = vrot.slane %v2509, 1
        %v2512 = vsel %vm2352, %v2507, %v2511
        %2513 = vrot.lane.b32.xlu0 %v2364, 3
        %v2514 = vpop.permute.xlu0 %2513
        %2515 = vrot.lane.b32.xlu0 %v2372, 3
        %v2516 = vpop.permute.xlu0 %2515
        %2517 = vrot.lane.b32.xlu0 %v2384, 3
        %v2518 = vpop.permute.xlu0 %2517
        %2519 = vrot.lane.b32.xlu0 %v2392, 3
        %v2520 = vpop.permute.xlu0 %2519
        %2521 = vrot.lane.b32.xlu0 %v2404, 3
        %v2522 = vpop.permute.xlu0 %2521
        %2523 = vrot.lane.b32.xlu0 %v2412, 3
        %v2524 = vpop.permute.xlu0 %2523
        %2525 = vrot.lane.b32.xlu0 %v2424, 3
        %v2526 = vpop.permute.xlu0 %2525
        %2527 = vrot.lane.b32.xlu0 %v2432, 3
        %v2528 = vpop.permute.xlu0 %2527
        %2529 = vrot.lane.b32.xlu0 %v2444, 3
        %v2530 = vpop.permute.xlu0 %2529
        %2531 = vrot.lane.b32.xlu0 %v2452, 3
        %v2532 = vpop.permute.xlu0 %2531
        %2533 = vrot.lane.b32.xlu0 %v2464, 3
        %v2534 = vpop.permute.xlu0 %2533
        %2535 = vrot.lane.b32.xlu0 %v2472, 3
        %v2536 = vpop.permute.xlu0 %2535
        %2537 = vrot.lane.b32.xlu0 %v2484, 3
        %v2538 = vpop.permute.xlu0 %2537
        %2539 = vrot.lane.b32.xlu0 %v2492, 3
        %v2540 = vpop.permute.xlu0 %2539
        %2541 = vrot.lane.b32.xlu0 %v2504, 3
        %v2542 = vpop.permute.xlu0 %2541
        %2543 = vrot.lane.b32.xlu0 %v2512, 3
        %v2544 = vpop.permute.xlu0 %2543
        %v2553 = vunpack.c.l.b16 %v2136
        %v2554 = vunpack.c.l.b16 %v2137
        %v2555 = vunpack.c.l.b16 %v2138
        %v2556 = vunpack.c.l.b16 %v2139
        %v2557 = vunpack.c.l.b16 %v2140
        %v2558 = vunpack.c.l.b16 %v2141
        %v2559 = vunpack.c.l.b16 %v2142
        %v2560 = vunpack.c.l.b16 %v2143
        %v2561 = vpack.c.b16 %v2281, %v2553
        %v2562 = vpack.c.b16 %v2285, %v2554
        %v2563 = vpack.c.b16 %v2289, %v2555
        %v2564 = vpack.c.b16 %v2293, %v2556
        %v2565 = vpack.c.b16 %v2297, %v2557
        %v2566 = vpack.c.b16 %v2301, %v2558
        %v2567 = vpack.c.b16 %v2305, %v2559
        %v2568 = vpack.c.b16 %v2309, %v2560
        %vm2569 = vcmask 1046528
        %v2570 = vrot.slane %v2561, 1
        %v2571 = vrot.slane %v2313, 1
        %v2572 = vsel %vm2569, %v2570, %v2571
        %v2573 = vrot.slane %v2344, 1
        %v2574 = vsel %vm2569, %v2571, %v2573
        %v2575 = vrot.slane %v2562, 1
        %v2576 = vrot.slane %v2315, 1
        %v2577 = vsel %vm2569, %v2575, %v2576
        %v2578 = vrot.slane %v2345, 1
        %v2579 = vsel %vm2569, %v2576, %v2578
        %v2580 = vrot.slane %v2563, 1
        %v2581 = vrot.slane %v2317, 1
        %v2582 = vsel %vm2569, %v2580, %v2581
        %v2583 = vrot.slane %v2346, 1
        %v2584 = vsel %vm2569, %v2581, %v2583
        %v2585 = vrot.slane %v2564, 1
        %v2586 = vrot.slane %v2319, 1
        %v2587 = vsel %vm2569, %v2585, %v2586
        %v2588 = vrot.slane %v2347, 1
        %v2589 = vsel %vm2569, %v2586, %v2588
        %v2590 = vrot.slane %v2565, 1
        %v2591 = vrot.slane %v2321, 1
        %v2592 = vsel %vm2569, %v2590, %v2591
        %v2593 = vrot.slane %v2348, 1
        %v2594 = vsel %vm2569, %v2591, %v2593
        %v2595 = vrot.slane %v2566, 1
        %v2596 = vrot.slane %v2323, 1
        %v2597 = vsel %vm2569, %v2595, %v2596
        %v2598 = vrot.slane %v2349, 1
        %v2599 = vsel %vm2569, %v2596, %v2598
        %v2600 = vrot.slane %v2567, 1
        %v2601 = vrot.slane %v2325, 1
        %v2602 = vsel %vm2569, %v2600, %v2601
        %v2603 = vrot.slane %v2350, 1
        %v2604 = vsel %vm2569, %v2601, %v2603
        %v2605 = vrot.slane %v2568, 1
        %v2606 = vrot.slane %v2327, 1
        %v2607 = vsel %vm2569, %v2605, %v2606
        %v2608 = vrot.slane %v2351, 1
        %v2609 = vsel %vm2569, %v2606, %v2608
        %2610 = vrot.lane.b32.xlu0 %v2572, 6
        %v2611 = vpop.permute.xlu0 %2610
        %2612 = vrot.lane.b32.xlu0 %v2574, 6
        %v2613 = vpop.permute.xlu0 %2612
        %2614 = vrot.lane.b32.xlu0 %v2577, 6
        %v2615 = vpop.permute.xlu0 %2614
        %2616 = vrot.lane.b32.xlu0 %v2579, 6
        %v2617 = vpop.permute.xlu0 %2616
        %2618 = vrot.lane.b32.xlu0 %v2582, 6
        %v2619 = vpop.permute.xlu0 %2618
        %2620 = vrot.lane.b32.xlu0 %v2584, 6
        %v2621 = vpop.permute.xlu0 %2620
        %2622 = vrot.lane.b32.xlu0 %v2587, 6
        %v2623 = vpop.permute.xlu0 %2622
        %2624 = vrot.lane.b32.xlu0 %v2589, 6
        %v2625 = vpop.permute.xlu0 %2624
        %2626 = vrot.lane.b32.xlu0 %v2592, 6
        %v2627 = vpop.permute.xlu0 %2626
        %2628 = vrot.lane.b32.xlu0 %v2594, 6
        %v2629 = vpop.permute.xlu0 %2628
        %2630 = vrot.lane.b32.xlu0 %v2597, 6
        %v2631 = vpop.permute.xlu0 %2630
        %2632 = vrot.lane.b32.xlu0 %v2599, 6
        %v2633 = vpop.permute.xlu0 %2632
        %2634 = vrot.lane.b32.xlu0 %v2602, 6
        %v2635 = vpop.permute.xlu0 %2634
        %2636 = vrot.lane.b32.xlu0 %v2604, 6
        %v2637 = vpop.permute.xlu0 %2636
        %2638 = vrot.lane.b32.xlu0 %v2607, 6
        %v2639 = vpop.permute.xlu0 %2638
        %2640 = vrot.lane.b32.xlu0 %v2609, 6
        %v2641 = vpop.permute.xlu0 %2640
        %v2674 = vunpack.c.l.b16 %v2148
        %v2675 = vunpack.c.l.b16 %v2149
        %v2676 = vunpack.c.l.b16 %v2150
        %v2677 = vunpack.c.l.b16 %v2151
        %v2678 = vunpack.c.l.b16 %v2152
        %v2679 = vunpack.c.l.b16 %v2153
        %v2680 = vunpack.c.l.b16 %v2154
        %v2681 = vunpack.c.l.b16 %v2155
        %v2682 = vunpack.c.l.b16 %v2156
        %v2683 = vunpack.c.l.b16 %v2157
        %v2684 = vunpack.c.l.b16 %v2158
        %v2685 = vunpack.c.l.b16 %v2159
        %v2686 = vunpack.c.l.b16 %v2160
        %v2687 = vunpack.c.l.b16 %v2161
        %v2688 = vunpack.c.l.b16 %v2162
        %v2689 = vunpack.c.l.b16 %v2163
        %v2690 = vunpack.c.l.b16 %v2164
        %v2691 = vunpack.c.l.b16 %v2165
        %v2692 = vunpack.c.l.b16 %v2166
        %v2693 = vunpack.c.l.b16 %v2167
        %v2694 = vunpack.c.l.b16 %v2168
        %v2695 = vunpack.c.l.b16 %v2169
        %v2696 = vunpack.c.l.b16 %v2170
        %v2697 = vunpack.c.l.b16 %v2171
        %v2698 = vunpack.c.l.b16 %v2172
        %v2699 = vunpack.c.l.b16 %v2173
        %v2700 = vunpack.c.l.b16 %v2174
        %v2701 = vunpack.c.l.b16 %v2175
        %v2702 = vunpack.c.l.b16 %v2176
        %v2703 = vunpack.c.l.b16 %v2177
        %v2704 = vunpack.c.l.b16 %v2178
        %v2705 = vunpack.c.l.b16 %v2179
        %v2706 = vpack.c.b16 %v2675, %v2674
        %v2707 = vpack.c.b16 %v2677, %v2676
        %v2708 = vpack.c.b16 %v2679, %v2678
        %v2709 = vpack.c.b16 %v2681, %v2680
        %v2710 = vpack.c.b16 %v2683, %v2682
        %v2711 = vpack.c.b16 %v2685, %v2684
        %v2712 = vpack.c.b16 %v2687, %v2686
        %v2713 = vpack.c.b16 %v2689, %v2688
        %v2714 = vpack.c.b16 %v2691, %v2690
        %v2715 = vpack.c.b16 %v2693, %v2692
        %v2716 = vpack.c.b16 %v2695, %v2694
        %v2717 = vpack.c.b16 %v2697, %v2696
        %v2718 = vpack.c.b16 %v2699, %v2698
        %v2719 = vpack.c.b16 %v2701, %v2700
        %v2720 = vpack.c.b16 %v2703, %v2702
        %v2721 = vpack.c.b16 %v2705, %v2704
        %2722 = vrot.lane.b32.xlu0 %v2706, 9
        %v2723 = vpop.permute.xlu0 %2722
        %2724 = vrot.lane.b32.xlu0 %v2707, 9
        %v2725 = vpop.permute.xlu0 %2724
        %2726 = vrot.lane.b32.xlu0 %v2708, 9
        %v2727 = vpop.permute.xlu0 %2726
        %2728 = vrot.lane.b32.xlu0 %v2709, 9
        %v2729 = vpop.permute.xlu0 %2728
        %2730 = vrot.lane.b32.xlu0 %v2710, 9
        %v2731 = vpop.permute.xlu0 %2730
        %2732 = vrot.lane.b32.xlu0 %v2711, 9
        %v2733 = vpop.permute.xlu0 %2732
        %2734 = vrot.lane.b32.xlu0 %v2712, 9
        %v2735 = vpop.permute.xlu0 %2734
        %2736 = vrot.lane.b32.xlu0 %v2713, 9
        %v2737 = vpop.permute.xlu0 %2736
        %2738 = vrot.lane.b32.xlu0 %v2714, 9
        %v2739 = vpop.permute.xlu0 %2738
        %2740 = vrot.lane.b32.xlu0 %v2715, 9
        %v2741 = vpop.permute.xlu0 %2740
        %2742 = vrot.lane.b32.xlu0 %v2716, 9
        %v2743 = vpop.permute.xlu0 %2742
        %2744 = vrot.lane.b32.xlu0 %v2717, 9
        %v2745 = vpop.permute.xlu0 %2744
        %2746 = vrot.lane.b32.xlu0 %v2718, 9
        %v2747 = vpop.permute.xlu0 %2746
        %2748 = vrot.lane.b32.xlu0 %v2719, 9
        %v2749 = vpop.permute.xlu0 %2748
        %2750 = vrot.lane.b32.xlu0 %v2720, 9
        %v2751 = vpop.permute.xlu0 %2750
        %2752 = vrot.lane.b32.xlu0 %v2721, 9
        %v2753 = vpop.permute.xlu0 %2752
        %v2762 = vunpack.c.l.b16 %v2180
        %v2763 = vunpack.c.l.b16 %v2181
        %v2764 = vunpack.c.l.b16 %v2182
        %v2765 = vunpack.c.l.b16 %v2183
        %v2766 = vunpack.c.l.b16 %v2184
        %v2767 = vunpack.c.l.b16 %v2185
        %v2768 = vunpack.c.l.b16 %v2186
        %v2769 = vunpack.c.l.b16 %v2187
        %v2770 = vpack.c.b16 %v2762, %v2762
        %v2771 = vpack.c.b16 %v2763, %v2763
        %v2772 = vpack.c.b16 %v2764, %v2764
        %v2773 = vpack.c.b16 %v2765, %v2765
        %v2774 = vpack.c.b16 %v2766, %v2766
        %v2775 = vpack.c.b16 %v2767, %v2767
        %v2776 = vpack.c.b16 %v2768, %v2768
        %v2777 = vpack.c.b16 %v2769, %v2769
        %v2779 = vshrl.u32 %v2706, 16
        %v2781 = vshll.u32 %v2706, 16
        %v2783 = vrot.slane %v2781, 1
        %v2784 = vor.u32 %v2779, %v2783
        %v2786 = vshll.u32 %v2707, 16
        %v2788 = vrot.slane %v2786, 1
        %v2789 = vsel %vm2352, %v2784, %v2788
        %v2790 = vshrl.u32 %v2707, 16
        %v2792 = vor.u32 %v2790, %v2788
        %v2794 = vshll.u32 %v2770, 16
        %v2796 = vrot.slane %v2794, 1
        %v2797 = vsel %vm2352, %v2792, %v2796
        %v2799 = vshrl.u32 %v2708, 16
        %v2801 = vshll.u32 %v2708, 16
        %v2803 = vrot.slane %v2801, 1
        %v2804 = vor.u32 %v2799, %v2803
        %v2806 = vshll.u32 %v2709, 16
        %v2808 = vrot.slane %v2806, 1
        %v2809 = vsel %vm2352, %v2804, %v2808
        %v2810 = vshrl.u32 %v2709, 16
        %v2812 = vor.u32 %v2810, %v2808
        %v2814 = vshll.u32 %v2771, 16
        %v2816 = vrot.slane %v2814, 1
        %v2817 = vsel %vm2352, %v2812, %v2816
        %v2819 = vshrl.u32 %v2710, 16
        %v2821 = vshll.u32 %v2710, 16
        %v2823 = vrot.slane %v2821, 1
        %v2824 = vor.u32 %v2819, %v2823
        %v2826 = vshll.u32 %v2711, 16
        %v2828 = vrot.slane %v2826, 1
        %v2829 = vsel %vm2352, %v2824, %v2828
        %v2830 = vshrl.u32 %v2711, 16
        %v2832 = vor.u32 %v2830, %v2828
        %v2834 = vshll.u32 %v2772, 16
        %v2836 = vrot.slane %v2834, 1
        %v2837 = vsel %vm2352, %v2832, %v2836
        %v2839 = vshrl.u32 %v2712, 16
        %v2841 = vshll.u32 %v2712, 16
        %v2843 = vrot.slane %v2841, 1
        %v2844 = vor.u32 %v2839, %v2843
        %v2846 = vshll.u32 %v2713, 16
        %v2848 = vrot.slane %v2846, 1
        %v2849 = vsel %vm2352, %v2844, %v2848
        %v2850 = vshrl.u32 %v2713, 16
        %v2852 = vor.u32 %v2850, %v2848
        %v2854 = vshll.u32 %v2773, 16
        %v2856 = vrot.slane %v2854, 1
        %v2857 = vsel %vm2352, %v2852, %v2856
        %v2859 = vshrl.u32 %v2714, 16
        %v2861 = vshll.u32 %v2714, 16
        %v2863 = vrot.slane %v2861, 1
        %v2864 = vor.u32 %v2859, %v2863
        %v2866 = vshll.u32 %v2715, 16
        %v2868 = vrot.slane %v2866, 1
        %v2869 = vsel %vm2352, %v2864, %v2868
        %v2870 = vshrl.u32 %v2715, 16
        %v2872 = vor.u32 %v2870, %v2868
        %v2874 = vshll.u32 %v2774, 16
        %v2876 = vrot.slane %v2874, 1
        %v2877 = vsel %vm2352, %v2872, %v2876
        %v2879 = vshrl.u32 %v2716, 16
        %v2881 = vshll.u32 %v2716, 16
        %v2883 = vrot.slane %v2881, 1
        %v2884 = vor.u32 %v2879, %v2883
        %v2886 = vshll.u32 %v2717, 16
        %v2888 = vrot.slane %v2886, 1
        %v2889 = vsel %vm2352, %v2884, %v2888
        %v2890 = vshrl.u32 %v2717, 16
        %v2892 = vor.u32 %v2890, %v2888
        %v2894 = vshll.u32 %v2775, 16
        %v2896 = vrot.slane %v2894, 1
        %v2897 = vsel %vm2352, %v2892, %v2896
        %v2899 = vshrl.u32 %v2718, 16
        %v2901 = vshll.u32 %v2718, 16
        %v2903 = vrot.slane %v2901, 1
        %v2904 = vor.u32 %v2899, %v2903
        %v2906 = vshll.u32 %v2719, 16
        %v2908 = vrot.slane %v2906, 1
        %v2909 = vsel %vm2352, %v2904, %v2908
        %v2910 = vshrl.u32 %v2719, 16
        %v2912 = vor.u32 %v2910, %v2908
        %v2914 = vshll.u32 %v2776, 16
        %v2916 = vrot.slane %v2914, 1
        %v2917 = vsel %vm2352, %v2912, %v2916
        %v2919 = vshrl.u32 %v2720, 16
        %v2921 = vshll.u32 %v2720, 16
        %v2923 = vrot.slane %v2921, 1
        %v2924 = vor.u32 %v2919, %v2923
        %v2926 = vshll.u32 %v2721, 16
        %v2928 = vrot.slane %v2926, 1
        %v2929 = vsel %vm2352, %v2924, %v2928
        %v2930 = vshrl.u32 %v2721, 16
        %v2932 = vor.u32 %v2930, %v2928
        %v2934 = vshll.u32 %v2777, 16
        %v2936 = vrot.slane %v2934, 1
        %v2937 = vsel %vm2352, %v2932, %v2936
        %2938 = vrot.lane.b32.xlu0 %v2789, 12
        %v2939 = vpop.permute.xlu0 %2938
        %2940 = vrot.lane.b32.xlu0 %v2797, 12
        %v2941 = vpop.permute.xlu0 %2940
        %2942 = vrot.lane.b32.xlu0 %v2809, 12
        %v2943 = vpop.permute.xlu0 %2942
        %2944 = vrot.lane.b32.xlu0 %v2817, 12
        %v2945 = vpop.permute.xlu0 %2944
        %2946 = vrot.lane.b32.xlu0 %v2829, 12
        %v2947 = vpop.permute.xlu0 %2946
        %2948 = vrot.lane.b32.xlu0 %v2837, 12
        %v2949 = vpop.permute.xlu0 %2948
        %2950 = vrot.lane.b32.xlu0 %v2849, 12
        %v2951 = vpop.permute.xlu0 %2950
        %2952 = vrot.lane.b32.xlu0 %v2857, 12
        %v2953 = vpop.permute.xlu0 %2952
        %2954 = vrot.lane.b32.xlu0 %v2869, 12
        %v2955 = vpop.permute.xlu0 %2954
        %2956 = vrot.lane.b32.xlu0 %v2877, 12
        %v2957 = vpop.permute.xlu0 %2956
        %2958 = vrot.lane.b32.xlu0 %v2889, 12
        %v2959 = vpop.permute.xlu0 %2958
        %2960 = vrot.lane.b32.xlu0 %v2897, 12
        %v2961 = vpop.permute.xlu0 %2960
        %2962 = vrot.lane.b32.xlu0 %v2909, 12
        %v2963 = vpop.permute.xlu0 %2962
        %2964 = vrot.lane.b32.xlu0 %v2917, 12
        %v2965 = vpop.permute.xlu0 %2964
        %2966 = vrot.lane.b32.xlu0 %v2929, 12
        %v2967 = vpop.permute.xlu0 %2966
        %2968 = vrot.lane.b32.xlu0 %v2937, 12
        %v2969 = vpop.permute.xlu0 %2968
        %v2978 = vunpack.c.l.b16 %v2188
        %v2979 = vunpack.c.l.b16 %v2189
        %v2980 = vunpack.c.l.b16 %v2190
        %v2981 = vunpack.c.l.b16 %v2191
        %v2982 = vunpack.c.l.b16 %v2192
        %v2983 = vunpack.c.l.b16 %v2193
        %v2984 = vunpack.c.l.b16 %v2194
        %v2985 = vunpack.c.l.b16 %v2195
        %v2986 = vpack.c.b16 %v2675, %v2978
        %v2987 = vpack.c.b16 %v2679, %v2979
        %v2988 = vpack.c.b16 %v2683, %v2980
        %v2989 = vpack.c.b16 %v2687, %v2981
        %v2990 = vpack.c.b16 %v2691, %v2982
        %v2991 = vpack.c.b16 %v2695, %v2983
        %v2992 = vpack.c.b16 %v2699, %v2984
        %v2993 = vpack.c.b16 %v2703, %v2985
        %v2994 = vrot.slane %v2986, 1
        %v2995 = vrot.slane %v2707, 1
        %v2996 = vsel %vm2569, %v2994, %v2995
        %v2997 = vrot.slane %v2770, 1
        %v2998 = vsel %vm2569, %v2995, %v2997
        %v2999 = vrot.slane %v2987, 1
        %v3000 = vrot.slane %v2709, 1
        %v3001 = vsel %vm2569, %v2999, %v3000
        %v3002 = vrot.slane %v2771, 1
        %v3003 = vsel %vm2569, %v3000, %v3002
        %v3004 = vrot.slane %v2988, 1
        %v3005 = vrot.slane %v2711, 1
        %v3006 = vsel %vm2569, %v3004, %v3005
        %v3007 = vrot.slane %v2772, 1
        %v3008 = vsel %vm2569, %v3005, %v3007
        %v3009 = vrot.slane %v2989, 1
        %v3010 = vrot.slane %v2713, 1
        %v3011 = vsel %vm2569, %v3009, %v3010
        %v3012 = vrot.slane %v2773, 1
        %v3013 = vsel %vm2569, %v3010, %v3012
        %v3014 = vrot.slane %v2990, 1
        %v3015 = vrot.slane %v2715, 1
        %v3016 = vsel %vm2569, %v3014, %v3015
        %v3017 = vrot.slane %v2774, 1
        %v3018 = vsel %vm2569, %v3015, %v3017
        %v3019 = vrot.slane %v2991, 1
        %v3020 = vrot.slane %v2717, 1
        %v3021 = vsel %vm2569, %v3019, %v3020
        %v3022 = vrot.slane %v2775, 1
        %v3023 = vsel %vm2569, %v3020, %v3022
        %v3024 = vrot.slane %v2992, 1
        %v3025 = vrot.slane %v2719, 1
        %v3026 = vsel %vm2569, %v3024, %v3025
        %v3027 = vrot.slane %v2776, 1
        %v3028 = vsel %vm2569, %v3025, %v3027
        %v3029 = vrot.slane %v2993, 1
        %v3030 = vrot.slane %v2721, 1
        %v3031 = vsel %vm2569, %v3029, %v3030
        %v3032 = vrot.slane %v2777, 1
        %v3033 = vsel %vm2569, %v3030, %v3032
        %3034 = vrot.lane.b32.xlu0 %v2996, 15
        %v3035 = vpop.permute.xlu0 %3034
        %3036 = vrot.lane.b32.xlu0 %v2998, 15
        %v3037 = vpop.permute.xlu0 %3036
        %3038 = vrot.lane.b32.xlu0 %v3001, 15
        %v3039 = vpop.permute.xlu0 %3038
        %3040 = vrot.lane.b32.xlu0 %v3003, 15
        %v3041 = vpop.permute.xlu0 %3040
        %3042 = vrot.lane.b32.xlu0 %v3006, 15
        %v3043 = vpop.permute.xlu0 %3042
        %3044 = vrot.lane.b32.xlu0 %v3008, 15
        %v3045 = vpop.permute.xlu0 %3044
        %3046 = vrot.lane.b32.xlu0 %v3011, 15
        %v3047 = vpop.permute.xlu0 %3046
        %3048 = vrot.lane.b32.xlu0 %v3013, 15
        %v3049 = vpop.permute.xlu0 %3048
        %3050 = vrot.lane.b32.xlu0 %v3016, 15
        %v3051 = vpop.permute.xlu0 %3050
        %3052 = vrot.lane.b32.xlu0 %v3018, 15
        %v3053 = vpop.permute.xlu0 %3052
        %3054 = vrot.lane.b32.xlu0 %v3021, 15
        %v3055 = vpop.permute.xlu0 %3054
        %3056 = vrot.lane.b32.xlu0 %v3023, 15
        %v3057 = vpop.permute.xlu0 %3056
        %3058 = vrot.lane.b32.xlu0 %v3026, 15
        %v3059 = vpop.permute.xlu0 %3058
        %3060 = vrot.lane.b32.xlu0 %v3028, 15
        %v3061 = vpop.permute.xlu0 %3060
        %3062 = vrot.lane.b32.xlu0 %v3031, 15
        %v3063 = vpop.permute.xlu0 %3062
        %3064 = vrot.lane.b32.xlu0 %v3033, 15
        %v3065 = vpop.permute.xlu0 %3064
        %v3098 = vunpack.c.l.b16 %v2200
        %v3099 = vunpack.c.l.b16 %v2201
        %v3100 = vunpack.c.l.b16 %v2202
        %v3101 = vunpack.c.l.b16 %v2203
        %v3102 = vunpack.c.l.b16 %v2204
        %v3103 = vunpack.c.l.b16 %v2205
        %v3104 = vunpack.c.l.b16 %v2206
        %v3105 = vunpack.c.l.b16 %v2207
        %v3106 = vunpack.c.l.b16 %v2208
        %v3107 = vunpack.c.l.b16 %v2209
        %v3108 = vunpack.c.l.b16 %v2210
        %v3109 = vunpack.c.l.b16 %v2211
        %v3110 = vunpack.c.l.b16 %v2212
        %v3111 = vunpack.c.l.b16 %v2213
        %v3112 = vunpack.c.l.b16 %v2214
        %v3113 = vunpack.c.l.b16 %v2215
        %v3114 = vunpack.c.l.b16 %v2216
        %v3115 = vunpack.c.l.b16 %v2217
        %v3116 = vunpack.c.l.b16 %v2218
        %v3117 = vunpack.c.l.b16 %v2219
        %v3118 = vunpack.c.l.b16 %v2220
        %v3119 = vunpack.c.l.b16 %v2221
        %v3120 = vunpack.c.l.b16 %v2222
        %v3121 = vunpack.c.l.b16 %v2223
        %v3122 = vunpack.c.l.b16 %v2224
        %v3123 = vunpack.c.l.b16 %v2225
        %v3124 = vunpack.c.l.b16 %v2226
        %v3125 = vunpack.c.l.b16 %v2227
        %v3126 = vunpack.c.l.b16 %v2228
        %v3127 = vunpack.c.l.b16 %v2229
        %v3128 = vunpack.c.l.b16 %v2230
        %v3129 = vunpack.c.l.b16 %v2231
        %v3130 = vpack.c.b16 %v3099, %v3098
        %v3131 = vpack.c.b16 %v3101, %v3100
        %v3132 = vpack.c.b16 %v3103, %v3102
        %v3133 = vpack.c.b16 %v3105, %v3104
        %v3134 = vpack.c.b16 %v3107, %v3106
        %v3135 = vpack.c.b16 %v3109, %v3108
        %v3136 = vpack.c.b16 %v3111, %v3110
        %v3137 = vpack.c.b16 %v3113, %v3112
        %v3138 = vpack.c.b16 %v3115, %v3114
        %v3139 = vpack.c.b16 %v3117, %v3116
        %v3140 = vpack.c.b16 %v3119, %v3118
        %v3141 = vpack.c.b16 %v3121, %v3120
        %v3142 = vpack.c.b16 %v3123, %v3122
        %v3143 = vpack.c.b16 %v3125, %v3124
        %v3144 = vpack.c.b16 %v3127, %v3126
        %v3145 = vpack.c.b16 %v3129, %v3128
        %3146 = vrot.lane.b32.xlu0 %v3130, 18
        %v3147 = vpop.permute.xlu0 %3146
        %3148 = vrot.lane.b32.xlu0 %v3131, 18
        %v3149 = vpop.permute.xlu0 %3148
        %3150 = vrot.lane.b32.xlu0 %v3132, 18
        %v3151 = vpop.permute.xlu0 %3150
        %3152 = vrot.lane.b32.xlu0 %v3133, 18
        %v3153 = vpop.permute.xlu0 %3152
        %3154 = vrot.lane.b32.xlu0 %v3134, 18
        %v3155 = vpop.permute.xlu0 %3154
        %3156 = vrot.lane.b32.xlu0 %v3135, 18
        %v3157 = vpop.permute.xlu0 %3156
        %3158 = vrot.lane.b32.xlu0 %v3136, 18
        %v3159 = vpop.permute.xlu0 %3158
        %3160 = vrot.lane.b32.xlu0 %v3137, 18
        %v3161 = vpop.permute.xlu0 %3160
        %3162 = vrot.lane.b32.xlu0 %v3138, 18
        %v3163 = vpop.permute.xlu0 %3162
        %3164 = vrot.lane.b32.xlu0 %v3139, 18
        %v3165 = vpop.permute.xlu0 %3164
        %3166 = vrot.lane.b32.xlu0 %v3140, 18
        %v3167 = vpop.permute.xlu0 %3166
        %3168 = vrot.lane.b32.xlu0 %v3141, 18
        %v3169 = vpop.permute.xlu0 %3168
        %3170 = vrot.lane.b32.xlu0 %v3142, 18
        %v3171 = vpop.permute.xlu0 %3170
        %3172 = vrot.lane.b32.xlu0 %v3143, 18
        %v3173 = vpop.permute.xlu0 %3172
        %3174 = vrot.lane.b32.xlu0 %v3144, 18
        %v3175 = vpop.permute.xlu0 %3174
        %3176 = vrot.lane.b32.xlu0 %v3145, 18
        %v3177 = vpop.permute.xlu0 %3176
        %v3186 = vunpack.c.l.b16 %v2232
        %v3187 = vunpack.c.l.b16 %v2233
        %v3188 = vunpack.c.l.b16 %v2234
        %v3189 = vunpack.c.l.b16 %v2235
        %v3190 = vunpack.c.l.b16 %v2236
        %v3191 = vunpack.c.l.b16 %v2237
        %v3192 = vunpack.c.l.b16 %v2238
        %v3193 = vunpack.c.l.b16 %v2239
        %v3194 = vpack.c.b16 %v3186, %v3186
        %v3195 = vpack.c.b16 %v3187, %v3187
        %v3196 = vpack.c.b16 %v3188, %v3188
        %v3197 = vpack.c.b16 %v3189, %v3189
        %v3198 = vpack.c.b16 %v3190, %v3190
        %v3199 = vpack.c.b16 %v3191, %v3191
        %v3200 = vpack.c.b16 %v3192, %v3192
        %v3201 = vpack.c.b16 %v3193, %v3193
        %v3203 = vshrl.u32 %v3130, 16
        %v3205 = vshll.u32 %v3130, 16
        %v3207 = vrot.slane %v3205, 1
        %v3208 = vor.u32 %v3203, %v3207
        %v3210 = vshll.u32 %v3131, 16
        %v3212 = vrot.slane %v3210, 1
        %v3213 = vsel %vm2352, %v3208, %v3212
        %v3214 = vshrl.u32 %v3131, 16
        %v3216 = vor.u32 %v3214, %v3212
        %v3218 = vshll.u32 %v3194, 16
        %v3220 = vrot.slane %v3218, 1
        %v3221 = vsel %vm2352, %v3216, %v3220
        %v3223 = vshrl.u32 %v3132, 16
        %v3225 = vshll.u32 %v3132, 16
        %v3227 = vrot.slane %v3225, 1
        %v3228 = vor.u32 %v3223, %v3227
        %v3230 = vshll.u32 %v3133, 16
        %v3232 = vrot.slane %v3230, 1
        %v3233 = vsel %vm2352, %v3228, %v3232
        %v3234 = vshrl.u32 %v3133, 16
        %v3236 = vor.u32 %v3234, %v3232
        %v3238 = vshll.u32 %v3195, 16
        %v3240 = vrot.slane %v3238, 1
        %v3241 = vsel %vm2352, %v3236, %v3240
        %v3243 = vshrl.u32 %v3134, 16
        %v3245 = vshll.u32 %v3134, 16
        %v3247 = vrot.slane %v3245, 1
        %v3248 = vor.u32 %v3243, %v3247
        %v3250 = vshll.u32 %v3135, 16
        %v3252 = vrot.slane %v3250, 1
        %v3253 = vsel %vm2352, %v3248, %v3252
        %v3254 = vshrl.u32 %v3135, 16
        %v3256 = vor.u32 %v3254, %v3252
        %v3258 = vshll.u32 %v3196, 16
        %v3260 = vrot.slane %v3258, 1
        %v3261 = vsel %vm2352, %v3256, %v3260
        %v3263 = vshrl.u32 %v3136, 16
        %v3265 = vshll.u32 %v3136, 16
        %v3267 = vrot.slane %v3265, 1
        %v3268 = vor.u32 %v3263, %v3267
        %v3270 = vshll.u32 %v3137, 16
        %v3272 = vrot.slane %v3270, 1
        %v3273 = vsel %vm2352, %v3268, %v3272
        %v3274 = vshrl.u32 %v3137, 16
        %v3276 = vor.u32 %v3274, %v3272
        %v3278 = vshll.u32 %v3197, 16
        %v3280 = vrot.slane %v3278, 1
        %v3281 = vsel %vm2352, %v3276, %v3280
        %v3283 = vshrl.u32 %v3138, 16
        %v3285 = vshll.u32 %v3138, 16
        %v3287 = vrot.slane %v3285, 1
        %v3288 = vor.u32 %v3283, %v3287
        %v3290 = vshll.u32 %v3139, 16
        %v3292 = vrot.slane %v3290, 1
        %v3293 = vsel %vm2352, %v3288, %v3292
        %v3294 = vshrl.u32 %v3139, 16
        %v3296 = vor.u32 %v3294, %v3292
        %v3298 = vshll.u32 %v3198, 16
        %v3300 = vrot.slane %v3298, 1
        %v3301 = vsel %vm2352, %v3296, %v3300
        %v3303 = vshrl.u32 %v3140, 16
        %v3305 = vshll.u32 %v3140, 16
        %v3307 = vrot.slane %v3305, 1
        %v3308 = vor.u32 %v3303, %v3307
        %v3310 = vshll.u32 %v3141, 16
        %v3312 = vrot.slane %v3310, 1
        %v3313 = vsel %vm2352, %v3308, %v3312
        %v3314 = vshrl.u32 %v3141, 16
        %v3316 = vor.u32 %v3314, %v3312
        %v3318 = vshll.u32 %v3199, 16
        %v3320 = vrot.slane %v3318, 1
        %v3321 = vsel %vm2352, %v3316, %v3320
        %v3323 = vshrl.u32 %v3142, 16
        %v3325 = vshll.u32 %v3142, 16
        %v3327 = vrot.slane %v3325, 1
        %v3328 = vor.u32 %v3323, %v3327
        %v3330 = vshll.u32 %v3143, 16
        %v3332 = vrot.slane %v3330, 1
        %v3333 = vsel %vm2352, %v3328, %v3332
        %v3334 = vshrl.u32 %v3143, 16
        %v3336 = vor.u32 %v3334, %v3332
        %v3338 = vshll.u32 %v3200, 16
        %v3340 = vrot.slane %v3338, 1
        %v3341 = vsel %vm2352, %v3336, %v3340
        %v3343 = vshrl.u32 %v3144, 16
        %v3345 = vshll.u32 %v3144, 16
        %v3347 = vrot.slane %v3345, 1
        %v3348 = vor.u32 %v3343, %v3347
        %v3350 = vshll.u32 %v3145, 16
        %v3352 = vrot.slane %v3350, 1
        %v3353 = vsel %vm2352, %v3348, %v3352
        %v3354 = vshrl.u32 %v3145, 16
        %v3356 = vor.u32 %v3354, %v3352
        %v3358 = vshll.u32 %v3201, 16
        %v3360 = vrot.slane %v3358, 1
        %v3361 = vsel %vm2352, %v3356, %v3360
        %3362 = vrot.lane.b32.xlu0 %v3213, 21
        %v3363 = vpop.permute.xlu0 %3362
        %3364 = vrot.lane.b32.xlu0 %v3221, 21
        %v3365 = vpop.permute.xlu0 %3364
        %3366 = vrot.lane.b32.xlu0 %v3233, 21
        %v3367 = vpop.permute.xlu0 %3366
        %3368 = vrot.lane.b32.xlu0 %v3241, 21
        %v3369 = vpop.permute.xlu0 %3368
        %3370 = vrot.lane.b32.xlu0 %v3253, 21
        %v3371 = vpop.permute.xlu0 %3370
        %3372 = vrot.lane.b32.xlu0 %v3261, 21
        %v3373 = vpop.permute.xlu0 %3372
        %3374 = vrot.lane.b32.xlu0 %v3273, 21
        %v3375 = vpop.permute.xlu0 %3374
        %3376 = vrot.lane.b32.xlu0 %v3281, 21
        %v3377 = vpop.permute.xlu0 %3376
        %3378 = vrot.lane.b32.xlu0 %v3293, 21
        %v3379 = vpop.permute.xlu0 %3378
        %3380 = vrot.lane.b32.xlu0 %v3301, 21
        %v3381 = vpop.permute.xlu0 %3380
        %3382 = vrot.lane.b32.xlu0 %v3313, 21
        %v3383 = vpop.permute.xlu0 %3382
        %3384 = vrot.lane.b32.xlu0 %v3321, 21
        %v3385 = vpop.permute.xlu0 %3384
        %3386 = vrot.lane.b32.xlu0 %v3333, 21
        %v3387 = vpop.permute.xlu0 %3386
        %3388 = vrot.lane.b32.xlu0 %v3341, 21
        %v3389 = vpop.permute.xlu0 %3388
        %3390 = vrot.lane.b32.xlu0 %v3353, 21
        %v3391 = vpop.permute.xlu0 %3390
        %3392 = vrot.lane.b32.xlu0 %v3361, 21
        %v3393 = vpop.permute.xlu0 %3392
        %v3402 = vunpack.c.l.b16 %v2240
        %v3403 = vunpack.c.l.b16 %v2241
        %v3404 = vunpack.c.l.b16 %v2242
        %v3405 = vunpack.c.l.b16 %v2243
        %v3406 = vunpack.c.l.b16 %v2244
        %v3407 = vunpack.c.l.b16 %v2245
        %v3408 = vunpack.c.l.b16 %v2246
        %v3409 = vunpack.c.l.b16 %v2247
        %v3410 = vpack.c.b16 %v3099, %v3402
        %v3411 = vpack.c.b16 %v3103, %v3403
        %v3412 = vpack.c.b16 %v3107, %v3404
        %v3413 = vpack.c.b16 %v3111, %v3405
        %v3414 = vpack.c.b16 %v3115, %v3406
        %v3415 = vpack.c.b16 %v3119, %v3407
        %v3416 = vpack.c.b16 %v3123, %v3408
        %v3417 = vpack.c.b16 %v3127, %v3409
        %v3418 = vrot.slane %v3410, 1
        %v3419 = vrot.slane %v3131, 1
        %v3420 = vsel %vm2569, %v3418, %v3419
        %v3421 = vrot.slane %v3194, 1
        %v3422 = vsel %vm2569, %v3419, %v3421
        %v3423 = vrot.slane %v3411, 1
        %v3424 = vrot.slane %v3133, 1
        %v3425 = vsel %vm2569, %v3423, %v3424
        %v3426 = vrot.slane %v3195, 1
        %v3427 = vsel %vm2569, %v3424, %v3426
        %v3428 = vrot.slane %v3412, 1
        %v3429 = vrot.slane %v3135, 1
        %v3430 = vsel %vm2569, %v3428, %v3429
        %v3431 = vrot.slane %v3196, 1
        %v3432 = vsel %vm2569, %v3429, %v3431
        %v3433 = vrot.slane %v3413, 1
        %v3434 = vrot.slane %v3137, 1
        %v3435 = vsel %vm2569, %v3433, %v3434
        %v3436 = vrot.slane %v3197, 1
        %v3437 = vsel %vm2569, %v3434, %v3436
        %v3438 = vrot.slane %v3414, 1
        %v3439 = vrot.slane %v3139, 1
        %v3440 = vsel %vm2569, %v3438, %v3439
        %v3441 = vrot.slane %v3198, 1
        %v3442 = vsel %vm2569, %v3439, %v3441
        %v3443 = vrot.slane %v3415, 1
        %v3444 = vrot.slane %v3141, 1
        %v3445 = vsel %vm2569, %v3443, %v3444
        %v3446 = vrot.slane %v3199, 1
        %v3447 = vsel %vm2569, %v3444, %v3446
        %v3448 = vrot.slane %v3416, 1
        %v3449 = vrot.slane %v3143, 1
        %v3450 = vsel %vm2569, %v3448, %v3449
        %v3451 = vrot.slane %v3200, 1
        %v3452 = vsel %vm2569, %v3449, %v3451
        %v3453 = vrot.slane %v3417, 1
        %v3454 = vrot.slane %v3145, 1
        %v3455 = vsel %vm2569, %v3453, %v3454
        %v3456 = vrot.slane %v3201, 1
        %v3457 = vsel %vm2569, %v3454, %v3456
        %3458 = vrot.lane.b32.xlu0 %v3420, 24
        %v3459 = vpop.permute.xlu0 %3458
        %3460 = vrot.lane.b32.xlu0 %v3422, 24
        %v3461 = vpop.permute.xlu0 %3460
        %3462 = vrot.lane.b32.xlu0 %v3425, 24
        %v3463 = vpop.permute.xlu0 %3462
        %3464 = vrot.lane.b32.xlu0 %v3427, 24
        %v3465 = vpop.permute.xlu0 %3464
        %3466 = vrot.lane.b32.xlu0 %v3430, 24
        %v3467 = vpop.permute.xlu0 %3466
        %3468 = vrot.lane.b32.xlu0 %v3432, 24
        %v3469 = vpop.permute.xlu0 %3468
        %3470 = vrot.lane.b32.xlu0 %v3435, 24
        %v3471 = vpop.permute.xlu0 %3470
        %3472 = vrot.lane.b32.xlu0 %v3437, 24
        %v3473 = vpop.permute.xlu0 %3472
        %3474 = vrot.lane.b32.xlu0 %v3440, 24
        %v3475 = vpop.permute.xlu0 %3474
        %3476 = vrot.lane.b32.xlu0 %v3442, 24
        %v3477 = vpop.permute.xlu0 %3476
        %3478 = vrot.lane.b32.xlu0 %v3445, 24
        %v3479 = vpop.permute.xlu0 %3478
        %3480 = vrot.lane.b32.xlu0 %v3447, 24
        %v3481 = vpop.permute.xlu0 %3480
        %3482 = vrot.lane.b32.xlu0 %v3450, 24
        %v3483 = vpop.permute.xlu0 %3482
        %3484 = vrot.lane.b32.xlu0 %v3452, 24
        %v3485 = vpop.permute.xlu0 %3484
        %3486 = vrot.lane.b32.xlu0 %v3455, 24
        %v3487 = vpop.permute.xlu0 %3486
        %3488 = vrot.lane.b32.xlu0 %v3457, 24
        %v3489 = vpop.permute.xlu0 %3488
        %vm3490 = vcmask 23552
        %v3492 = vsel %vm3490, %v2312, %v2514
        %v3494 = vsel %vm3490, %v2313, %v2516
        %v3496 = vsel %vm3490, %v2314, %v2518
        %v3498 = vsel %vm3490, %v2315, %v2520
        %v3500 = vsel %vm3490, %v2316, %v2522
        %v3502 = vsel %vm3490, %v2317, %v2524
        %v3504 = vsel %vm3490, %v2318, %v2526
        %v3506 = vsel %vm3490, %v2319, %v2528
        %v3508 = vsel %vm3490, %v2320, %v2530
        %v3510 = vsel %vm3490, %v2321, %v2532
        %v3512 = vsel %vm3490, %v2322, %v2534
        %v3514 = vsel %vm3490, %v2323, %v2536
        %v3516 = vsel %vm3490, %v2324, %v2538
        %v3518 = vsel %vm3490, %v2325, %v2540
        %v3520 = vsel %vm3490, %v2326, %v2542
        %v3522 = vsel %vm3490, %v2327, %v2544
        %vm3523 = vcmask 48128
        %v3525 = vsel %vm3523, %v3492, %v2611
        %v3527 = vsel %vm3523, %v3494, %v2613
        %v3529 = vsel %vm3523, %v3496, %v2615
        %v3531 = vsel %vm3523, %v3498, %v2617
        %v3533 = vsel %vm3523, %v3500, %v2619
        %v3535 = vsel %vm3523, %v3502, %v2621
        %v3537 = vsel %vm3523, %v3504, %v2623
        %v3539 = vsel %vm3523, %v3506, %v2625
        %v3541 = vsel %vm3523, %v3508, %v2627
        %v3543 = vsel %vm3523, %v3510, %v2629
        %v3545 = vsel %vm3523, %v3512, %v2631
        %v3547 = vsel %vm3523, %v3514, %v2633
        %v3549 = vsel %vm3523, %v3516, %v2635
        %v3551 = vsel %vm3523, %v3518, %v2637
        %v3553 = vsel %vm3523, %v3520, %v2639
        %v3555 = vsel %vm3523, %v3522, %v2641
        %vm3556 = vcmask 72704
        %v3558 = vsel %vm3556, %v3525, %v2723
        %v3560 = vsel %vm3556, %v3527, %v2725
        %v3562 = vsel %vm3556, %v3529, %v2727
        %v3564 = vsel %vm3556, %v3531, %v2729
        %v3566 = vsel %vm3556, %v3533, %v2731
        %v3568 = vsel %vm3556, %v3535, %v2733
        %v3570 = vsel %vm3556, %v3537, %v2735
        %v3572 = vsel %vm3556, %v3539, %v2737
        %v3574 = vsel %vm3556, %v3541, %v2739
        %v3576 = vsel %vm3556, %v3543, %v2741
        %v3578 = vsel %vm3556, %v3545, %v2743
        %v3580 = vsel %vm3556, %v3547, %v2745
        %v3582 = vsel %vm3556, %v3549, %v2747
        %v3584 = vsel %vm3556, %v3551, %v2749
        %v3586 = vsel %vm3556, %v3553, %v2751
        %v3588 = vsel %vm3556, %v3555, %v2753
        %vm3589 = vcmask 97280
        %v3591 = vsel %vm3589, %v3558, %v2939
        %v3593 = vsel %vm3589, %v3560, %v2941
        %v3595 = vsel %vm3589, %v3562, %v2943
        %v3597 = vsel %vm3589, %v3564, %v2945
        %v3599 = vsel %vm3589, %v3566, %v2947
        %v3601 = vsel %vm3589, %v3568, %v2949
        %v3603 = vsel %vm3589, %v3570, %v2951
        %v3605 = vsel %vm3589, %v3572, %v2953
        %v3607 = vsel %vm3589, %v3574, %v2955
        %v3609 = vsel %vm3589, %v3576, %v2957
        %v3611 = vsel %vm3589, %v3578, %v2959
        %v3613 = vsel %vm3589, %v3580, %v2961
        %v3615 = vsel %vm3589, %v3582, %v2963
        %v3617 = vsel %vm3589, %v3584, %v2965
        %v3619 = vsel %vm3589, %v3586, %v2967
        %v3621 = vsel %vm3589, %v3588, %v2969
        %vm3622 = vcmask 121856
        %v3624 = vsel %vm3622, %v3591, %v3035
        %v3626 = vsel %vm3622, %v3593, %v3037
        %v3628 = vsel %vm3622, %v3595, %v3039
        %v3630 = vsel %vm3622, %v3597, %v3041
        %v3632 = vsel %vm3622, %v3599, %v3043
        %v3634 = vsel %vm3622, %v3601, %v3045
        %v3636 = vsel %vm3622, %v3603, %v3047
        %v3638 = vsel %vm3622, %v3605, %v3049
        %v3640 = vsel %vm3622, %v3607, %v3051
        %v3642 = vsel %vm3622, %v3609, %v3053
        %v3644 = vsel %vm3622, %v3611, %v3055
        %v3646 = vsel %vm3622, %v3613, %v3057
        %v3648 = vsel %vm3622, %v3615, %v3059
        %v3650 = vsel %vm3622, %v3617, %v3061
        %v3652 = vsel %vm3622, %v3619, %v3063
        %v3654 = vsel %vm3622, %v3621, %v3065
        %vm3655 = vcmask 146432
        %v3657 = vsel %vm3655, %v3624, %v3147
        %v3659 = vsel %vm3655, %v3626, %v3149
        %v3661 = vsel %vm3655, %v3628, %v3151
        %v3663 = vsel %vm3655, %v3630, %v3153
        %v3665 = vsel %vm3655, %v3632, %v3155
        %v3667 = vsel %vm3655, %v3634, %v3157
        %v3669 = vsel %vm3655, %v3636, %v3159
        %v3671 = vsel %vm3655, %v3638, %v3161
        %v3673 = vsel %vm3655, %v3640, %v3163
        %v3675 = vsel %vm3655, %v3642, %v3165
        %v3677 = vsel %vm3655, %v3644, %v3167
        %v3679 = vsel %vm3655, %v3646, %v3169
        %v3681 = vsel %vm3655, %v3648, %v3171
        %v3683 = vsel %vm3655, %v3650, %v3173
        %v3685 = vsel %vm3655, %v3652, %v3175
        %v3687 = vsel %vm3655, %v3654, %v3177
        %vm3688 = vcmask 171008
        %v3690 = vsel %vm3688, %v3657, %v3363
        %v3692 = vsel %vm3688, %v3659, %v3365
        %v3694 = vsel %vm3688, %v3661, %v3367
        %v3696 = vsel %vm3688, %v3663, %v3369
        %v3698 = vsel %vm3688, %v3665, %v3371
        %v3700 = vsel %vm3688, %v3667, %v3373
        %v3702 = vsel %vm3688, %v3669, %v3375
        %v3704 = vsel %vm3688, %v3671, %v3377
        %v3706 = vsel %vm3688, %v3673, %v3379
        %v3708 = vsel %vm3688, %v3675, %v3381
        %v3710 = vsel %vm3688, %v3677, %v3383
        %v3712 = vsel %vm3688, %v3679, %v3385
        %v3714 = vsel %vm3688, %v3681, %v3387
        %v3716 = vsel %vm3688, %v3683, %v3389
        %v3718 = vsel %vm3688, %v3685, %v3391
        %v3720 = vsel %vm3688, %v3687, %v3393
        %vm3721 = vcmask 195584
        %v3723 = vsel %vm3721, %v3690, %v3459
        %v3725 = vsel %vm3721, %v3692, %v3461
        %v3727 = vsel %vm3721, %v3694, %v3463
        %v3729 = vsel %vm3721, %v3696, %v3465
        %v3731 = vsel %vm3721, %v3698, %v3467
        %v3733 = vsel %vm3721, %v3700, %v3469
        %v3735 = vsel %vm3721, %v3702, %v3471
        %v3737 = vsel %vm3721, %v3704, %v3473
        %v3739 = vsel %vm3721, %v3706, %v3475
        %v3741 = vsel %vm3721, %v3708, %v3477
        %v3743 = vsel %vm3721, %v3710, %v3479
        %v3745 = vsel %vm3721, %v3712, %v3481
        %v3747 = vsel %vm3721, %v3714, %v3483
        %v3749 = vsel %vm3721, %v3716, %v3485
        %v3751 = vsel %vm3721, %v3718, %v3487
        %v3753 = vsel %vm3721, %v3720, %v3489
        %v3754 = vld [vmem:[%s1] sm:$0x3]
        %v3755 = vld [vmem:[%s1 + $0x2] sm:$0x3]
        %v3756 = vld [vmem:[%s1 + $0x4] sm:$0x3]
        %v3757 = vld [vmem:[%s1 + $0x6] sm:$0x3]
        %v3758 = vld [vmem:[%s1 + $0x8] sm:$0x3]
        %v3759 = vld [vmem:[%s1 + $0xa] sm:$0x3]
        %v3760 = vld [vmem:[%s1 + $0xc] sm:$0x3]
        %v3761 = vld [vmem:[%s1 + $0xe] sm:$0x3]
        %v3762 = vld [vmem:[%s1 + $0x10] sm:$0x3]
        %v3772 = vrot.slane %v3754, 1
        %v3773 = vrot.slane %v3754, 2
        %v3774 = vrot.slane %v3754, 3
        %v3775 = vrot.slane %v3755, 1
        %v3776 = vrot.slane %v3755, 2
        %v3777 = vrot.slane %v3755, 3
        %v3778 = vrot.slane %v3756, 1
        %v3779 = vrot.slane %v3756, 2
        %v3780 = vrot.slane %v3756, 3
        %v3781 = vrot.slane %v3757, 1
        %v3782 = vrot.slane %v3757, 2
        %v3783 = vrot.slane %v3757, 3
        %v3784 = vrot.slane %v3758, 1
        %v3785 = vrot.slane %v3758, 2
        %v3786 = vrot.slane %v3758, 3
        %v3787 = vrot.slane %v3759, 1
        %v3788 = vrot.slane %v3759, 2
        %v3789 = vrot.slane %v3759, 3
        %v3790 = vrot.slane %v3760, 1
        %v3791 = vrot.slane %v3760, 2
        %v3792 = vrot.slane %v3760, 3
        %v3793 = vrot.slane %v3761, 1
        %v3794 = vrot.slane %v3761, 2
        %v3795 = vrot.slane %v3761, 3
        %v3796 = vrot.slane %v3762, 1
        %v3797 = vrot.slane %v3762, 2
        %v3798 = vrot.slane %v3762, 3
        %vm3799 = vcmask 1040384
        %v3802 = vsel %vm3799, %v3754, %v3772
        %vm3803 = vcmask 1042434
        %v3806 = vsel %vm3803, %v3773, %v3774
        %vm3807 = vcmask 1041408
        %v3808 = vsel %vm3807, %v3802, %v3806
        %vm3810 = vcmask 1041409
        %v3811 = vsel %vm3810, %v3754, %v3772
        %vm3812 = vcmask 1043459
        %v3813 = vsel %vm3812, %v3773, %v3774
        %vm3814 = vcmask 1042433
        %v3815 = vsel %vm3814, %v3811, %v3813
        %v3817 = vrot.slane %v3815, 1
        %v3820 = vsel %vm3799, %v3755, %v3775
        %v3823 = vsel %vm3803, %v3776, %v3777
        %v3824 = vsel %vm3807, %v3820, %v3823
        %v3826 = vsel %vm3810, %v3755, %v3775
        %v3827 = vsel %vm3812, %v3776, %v3777
        %v3828 = vsel %vm3814, %v3826, %v3827
        %v3830 = vrot.slane %v3828, 1
        %v3833 = vsel %vm3799, %v3756, %v3778
        %v3836 = vsel %vm3803, %v3779, %v3780
        %v3837 = vsel %vm3807, %v3833, %v3836
        %v3839 = vsel %vm3810, %v3756, %v3778
        %v3840 = vsel %vm3812, %v3779, %v3780
        %v3841 = vsel %vm3814, %v3839, %v3840
        %v3843 = vrot.slane %v3841, 1
        %v3846 = vsel %vm3799, %v3757, %v3781
        %v3849 = vsel %vm3803, %v3782, %v3783
        %v3850 = vsel %vm3807, %v3846, %v3849
        %v3852 = vsel %vm3810, %v3757, %v3781
        %v3853 = vsel %vm3812, %v3782, %v3783
        %v3854 = vsel %vm3814, %v3852, %v3853
        %v3856 = vrot.slane %v3854, 1
        %v3859 = vsel %vm3799, %v3758, %v3784
        %v3862 = vsel %vm3803, %v3785, %v3786
        %v3863 = vsel %vm3807, %v3859, %v3862
        %v3865 = vsel %vm3810, %v3758, %v3784
        %v3866 = vsel %vm3812, %v3785, %v3786
        %v3867 = vsel %vm3814, %v3865, %v3866
        %v3869 = vrot.slane %v3867, 1
        %v3872 = vsel %vm3799, %v3759, %v3787
        %v3875 = vsel %vm3803, %v3788, %v3789
        %v3876 = vsel %vm3807, %v3872, %v3875
        %v3878 = vsel %vm3810, %v3759, %v3787
        %v3879 = vsel %vm3812, %v3788, %v3789
        %v3880 = vsel %vm3814, %v3878, %v3879
        %v3882 = vrot.slane %v3880, 1
        %v3885 = vsel %vm3799, %v3760, %v3790
        %v3888 = vsel %vm3803, %v3791, %v3792
        %v3889 = vsel %vm3807, %v3885, %v3888
        %v3891 = vsel %vm3810, %v3760, %v3790
        %v3892 = vsel %vm3812, %v3791, %v3792
        %v3893 = vsel %vm3814, %v3891, %v3892
        %v3895 = vrot.slane %v3893, 1
        %v3898 = vsel %vm3799, %v3761, %v3793
        %v3901 = vsel %vm3803, %v3794, %v3795
        %v3902 = vsel %vm3807, %v3898, %v3901
        %v3904 = vsel %vm3810, %v3761, %v3793
        %v3905 = vsel %vm3812, %v3794, %v3795
        %v3906 = vsel %vm3814, %v3904, %v3905
        %v3908 = vrot.slane %v3906, 1
        %v3911 = vsel %vm3799, %v3762, %v3796
        %v3914 = vsel %vm3803, %v3797, %v3798
        %v3915 = vsel %vm3807, %v3911, %v3914
        %v3917 = vsel %vm3810, %v3762, %v3796
        %v3918 = vsel %vm3812, %v3797, %v3798
        %v3919 = vsel %vm3814, %v3917, %v3918
        %v3921 = vrot.slane %v3919, 1
        %v3922 = vunpack.i.l.s16 %v3808
        %v3923 = vunpack.i.h.s16 %v3808
        %v3924 = vunpack.i.l.s16 %v3817
        %v3925 = vunpack.i.l.s16 %v3824
        %v3926 = vunpack.i.h.s16 %v3824
        %v3927 = vunpack.i.l.s16 %v3830
        %v3928 = vunpack.i.l.s16 %v3837
        %v3929 = vunpack.i.h.s16 %v3837
        %v3930 = vunpack.i.l.s16 %v3843
        %v3931 = vunpack.i.l.s16 %v3850
        %v3932 = vunpack.i.h.s16 %v3850
        %v3933 = vunpack.i.l.s16 %v3856
        %v3934 = vunpack.i.l.s16 %v3863
        %v3935 = vunpack.i.h.s16 %v3863
        %v3936 = vunpack.i.l.s16 %v3869
        %v3937 = vunpack.i.l.s16 %v3876
        %v3938 = vunpack.i.h.s16 %v3876
        %v3939 = vunpack.i.l.s16 %v3882
        %v3940 = vunpack.i.l.s16 %v3889
        %v3941 = vunpack.i.h.s16 %v3889
        %v3942 = vunpack.i.l.s16 %v3895
        %v3943 = vunpack.i.l.s16 %v3902
        %v3944 = vunpack.i.h.s16 %v3902
        %v3945 = vunpack.i.l.s16 %v3908
        %v3946 = vunpack.i.l.s16 %v3915
        %v3947 = vunpack.i.h.s16 %v3915
        %v3948 = vunpack.i.l.s16 %v3921
        %v3949 = vld [vmem:[%s2] sm:$0x1]
        %v3951 = vperm.slane %v3949, 0
        %v3953 = vpack.i.b16 %v3923, %v3922
        %v3954 = vpack.i.b16 %v3925, %v3924
        %v3955 = vpack.i.b16 %v3927, %v3926
        %v3956 = vpack.i.b16 %v3929, %v3928
        %v3957 = vpack.i.b16 %v3931, %v3930
        %v3958 = vpack.i.b16 %v3933, %v3932
        %v3959 = vpack.i.b16 %v3935, %v3934
        %v3960 = vpack.i.b16 %v3937, %v3936
        %v3961 = vpack.i.b16 %v3939, %v3938
        %v3962 = vpack.i.b16 %v3941, %v3940
        %v3963 = vpack.i.b16 %v3943, %v3942
        %v3964 = vpack.i.b16 %v3945, %v3944
        %v3965 = vpack.i.b16 %v3947, %v3946
        %3968 = vst [vmem:[#allocation1] ss:$9 sm:$0xff] %v3953
        %s3970 = scalar_lea.vmem [#allocation1], 1
        %3971 = vst [vmem:[%s3970] ss:$9 sm:$0xff] %v3954
        %s3973 = scalar_lea.vmem [#allocation1], 2
        %3974 = vst [vmem:[%s3973] ss:$9 sm:$0xff] %v3955
        %s3976 = scalar_lea.vmem [#allocation1], 3
        %3977 = vst [vmem:[%s3976] ss:$9 sm:$0xff] %v3956
        %s3979 = scalar_lea.vmem [#allocation1], 4
        %3980 = vst [vmem:[%s3979] ss:$9 sm:$0xff] %v3957
        %s3982 = scalar_lea.vmem [#allocation1], 5
        %3983 = vst [vmem:[%s3982] ss:$9 sm:$0xff] %v3958
        %s3985 = scalar_lea.vmem [#allocation1], 6
        %3986 = vst [vmem:[%s3985] ss:$9 sm:$0xff] %v3959
        %s3988 = scalar_lea.vmem [#allocation1], 7
        %3989 = vst [vmem:[%s3988] ss:$9 sm:$0xff] %v3960
        %v3990 = vld [vmem:[#allocation1] sm:$0xff]
        %3992 = vst [vmem:[#allocation1] ss:$9 sm:$0xff] %v3961
        %3994 = vst [vmem:[%s3970] ss:$9 sm:$0xff] %v3962
        %3996 = vst [vmem:[%s3973] ss:$9 sm:$0xff] %v3963
        %3998 = vst [vmem:[%s3976] ss:$9 sm:$0xff] %v3964
        %4000 = vst [vmem:[%s3979] ss:$9 sm:$0xff] %v3965
        %4002 = vst [vmem:[%s3982] ss:$9 sm:$0xff] %v3948
        %v4003 = vld [vmem:[#allocation1] sm:$0xff]
        %vm4005 = vcmask 220160
        %v4006 = vsel %vm4005, %v3723, 0
        %v4008 = vsel %vm4005, %v3725, 0
        %v4010 = vsel %vm4005, %v3727, 0
        %v4012 = vsel %vm4005, %v3729, 0
        %v4014 = vsel %vm4005, %v3731, 0
        %v4016 = vsel %vm4005, %v3733, 0
        %v4018 = vsel %vm4005, %v3735, 0
        %v4020 = vsel %vm4005, %v3737, 0
        %v4022 = vsel %vm4005, %v3739, 0
        %v4024 = vsel %vm4005, %v3741, 0
        %v4026 = vsel %vm4005, %v3743, 0
        %v4028 = vsel %vm4005, %v3745, 0
        %v4030 = vsel %vm4005, %v3747, 0
        %v4032 = vsel %vm4005, %v3749, 0
        %v4034 = vsel %vm4005, %v3751, 0
        %v4036 = vsel %vm4005, %v3753, 0
        %vm4038 = vcmask 1044480
        %vm4039 = vcmask 1045504
        %v4040 = vsel %vm4038, 4294967295, 65535
        %v4041 = vsel %vm4039, %v4040, 0
        %v4042 = vand.u32 %v4003, %v4041
        %4044 = vmatpush.bf16.msra.mxu0 0
        %4045 = vmatpush.bf16.msra.mxu0 0
        %4046 = vmatpush.bf16.msra.mxu0 0
        %4047 = vmatpush.bf16.msra.mxu0 0
        %4048 = vmatpush.bf16.msra.mxu0 0
        %4049 = vmatpush.bf16.msra.mxu0 0
        %4050 = vmatpush.bf16.msra.mxu0 %v4042
        %4051 = vmatpush.bf16.msra.mxu0 %v3990
        %4052 = vmatmul.bf16.gmra.mxu0 %v4006
        %v4053 = vpop.f32.mrf.mxu0
        %v4054 = vadd.f32 %v3951, %v4053
        %v4055 = vpop.f32.mrf.mxu0
        %v4056 = vadd.f32 %v3951, %v4055
        %4057 = vmatmul.bf16.gmra.mxu0 %v4008
        %v4058 = vpop.f32.mrf.mxu0
        %v4059 = vadd.f32 %v3951, %v4058
        %v4060 = vpop.f32.mrf.mxu0
        %v4061 = vadd.f32 %v3951, %v4060
        %4062 = vmatmul.bf16.gmra.mxu0 %v4010
        %v4063 = vpop.f32.mrf.mxu0
        %v4064 = vadd.f32 %v3951, %v4063
        %v4065 = vpop.f32.mrf.mxu0
        %v4066 = vadd.f32 %v3951, %v4065
        %4067 = vmatmul.bf16.gmra.mxu0 %v4012
        %v4068 = vpop.f32.mrf.mxu0
        %v4069 = vadd.f32 %v3951, %v4068
        %v4070 = vpop.f32.mrf.mxu0
        %v4071 = vadd.f32 %v3951, %v4070
        %4072 = vmatmul.bf16.gmra.mxu0 %v4014
        %v4073 = vpop.f32.mrf.mxu0
        %v4074 = vadd.f32 %v3951, %v4073
        %v4075 = vpop.f32.mrf.mxu0
        %v4076 = vadd.f32 %v3951, %v4075
        %4077 = vmatmul.bf16.gmra.mxu0 %v4016
        %v4078 = vpop.f32.mrf.mxu0
        %v4079 = vadd.f32 %v3951, %v4078
        %v4080 = vpop.f32.mrf.mxu0
        %v4081 = vadd.f32 %v3951, %v4080
        %4082 = vmatmul.bf16.gmra.mxu0 %v4018
        %v4083 = vpop.f32.mrf.mxu0
        %v4084 = vadd.f32 %v3951, %v4083
        %v4085 = vpop.f32.mrf.mxu0
        %v4086 = vadd.f32 %v3951, %v4085
        %4087 = vmatmul.bf16.gmra.mxu0 %v4020
        %v4088 = vpop.f32.mrf.mxu0
        %v4089 = vadd.f32 %v3951, %v4088
        %v4090 = vpop.f32.mrf.mxu0
        %v4091 = vadd.f32 %v3951, %v4090
        %4092 = vmatmul.bf16.gmra.mxu0 %v4022
        %v4093 = vpop.f32.mrf.mxu0
        %v4094 = vadd.f32 %v3951, %v4093
        %v4095 = vpop.f32.mrf.mxu0
        %v4096 = vadd.f32 %v3951, %v4095
        %4097 = vmatmul.bf16.gmra.mxu0 %v4024
        %v4098 = vpop.f32.mrf.mxu0
        %v4099 = vadd.f32 %v3951, %v4098
        %v4100 = vpop.f32.mrf.mxu0
        %v4101 = vadd.f32 %v3951, %v4100
        %4102 = vmatmul.bf16.gmra.mxu0 %v4026
        %v4103 = vpop.f32.mrf.mxu0
        %v4104 = vadd.f32 %v3951, %v4103
        %v4105 = vpop.f32.mrf.mxu0
        %v4106 = vadd.f32 %v3951, %v4105
        %4107 = vmatmul.bf16.gmra.mxu0 %v4028
        %v4108 = vpop.f32.mrf.mxu0
        %v4109 = vadd.f32 %v3951, %v4108
        %v4110 = vpop.f32.mrf.mxu0
        %v4111 = vadd.f32 %v3951, %v4110
        %4112 = vmatmul.bf16.gmra.mxu0 %v4030
        %v4113 = vpop.f32.mrf.mxu0
        %v4114 = vadd.f32 %v3951, %v4113
        %v4115 = vpop.f32.mrf.mxu0
        %v4116 = vadd.f32 %v3951, %v4115
        %4117 = vmatmul.bf16.gmra.mxu0 %v4032
        %v4118 = vpop.f32.mrf.mxu0
        %v4119 = vadd.f32 %v3951, %v4118
        %v4120 = vpop.f32.mrf.mxu0
        %v4121 = vadd.f32 %v3951, %v4120
        %4122 = vmatmul.bf16.gmra.mxu0 %v4034
        %v4123 = vpop.f32.mrf.mxu0
        %v4124 = vadd.f32 %v3951, %v4123
        %v4125 = vpop.f32.mrf.mxu0
        %v4126 = vadd.f32 %v3951, %v4125
        %4127 = vmatmul.bf16.gmra.mxu0 %v4036
        %v4128 = vpop.f32.mrf.mxu0
        %v4129 = vadd.f32 %v3951, %v4128
        %v4130 = vpop.f32.mrf.mxu0
        %v4131 = vadd.f32 %v3951, %v4130
        %4132 = vdwg.mxu0
        %v4133 = vmax.f32 %v4054, 0.0
        %v4134 = vmax.f32 %v4056, 0.0
        %v4135 = vmax.f32 %v4059, 0.0
        %v4136 = vmax.f32 %v4061, 0.0
        %v4137 = vmax.f32 %v4064, 0.0
        %v4138 = vmax.f32 %v4066, 0.0
        %v4139 = vmax.f32 %v4069, 0.0
        %v4140 = vmax.f32 %v4071, 0.0
        %v4141 = vmax.f32 %v4074, 0.0
        %v4142 = vmax.f32 %v4076, 0.0
        %v4143 = vmax.f32 %v4079, 0.0
        %v4144 = vmax.f32 %v4081, 0.0
        %v4145 = vmax.f32 %v4084, 0.0
        %v4146 = vmax.f32 %v4086, 0.0
        %v4147 = vmax.f32 %v4089, 0.0
        %v4148 = vmax.f32 %v4091, 0.0
        %v4149 = vmax.f32 %v4094, 0.0
        %v4150 = vmax.f32 %v4096, 0.0
        %v4151 = vmax.f32 %v4099, 0.0
        %v4152 = vmax.f32 %v4101, 0.0
        %v4153 = vmax.f32 %v4104, 0.0
        %v4154 = vmax.f32 %v4106, 0.0
        %v4155 = vmax.f32 %v4109, 0.0
        %v4156 = vmax.f32 %v4111, 0.0
        %v4157 = vmax.f32 %v4114, 0.0
        %v4158 = vmax.f32 %v4116, 0.0
        %v4159 = vmax.f32 %v4119, 0.0
        %v4160 = vmax.f32 %v4121, 0.0
        %v4161 = vmax.f32 %v4124, 0.0
        %v4162 = vmax.f32 %v4126, 0.0
        %v4163 = vmax.f32 %v4129, 0.0
        %v4164 = vmax.f32 %v4131, 0.0
        %v4165 = vpack.c.bf16 %v4133, %v4133
        %v4166 = vpack.c.bf16 %v4134, %v4134
        %v4167 = vpack.c.bf16 %v4135, %v4135
        %v4168 = vpack.c.bf16 %v4136, %v4136
        %v4169 = vpack.c.bf16 %v4137, %v4137
        %v4170 = vpack.c.bf16 %v4138, %v4138
        %v4171 = vpack.c.bf16 %v4139, %v4139
        %v4172 = vpack.c.bf16 %v4140, %v4140
        %v4173 = vpack.c.bf16 %v4141, %v4141
        %v4174 = vpack.c.bf16 %v4142, %v4142
        %v4175 = vpack.c.bf16 %v4143, %v4143
        %v4176 = vpack.c.bf16 %v4144, %v4144
        %v4177 = vpack.c.bf16 %v4145, %v4145
        %v4178 = vpack.c.bf16 %v4146, %v4146
        %v4179 = vpack.c.bf16 %v4147, %v4147
        %v4180 = vpack.c.bf16 %v4148, %v4148
        %v4181 = vpack.c.bf16 %v4149, %v4149
        %v4182 = vpack.c.bf16 %v4150, %v4150
        %v4183 = vpack.c.bf16 %v4151, %v4151
        %v4184 = vpack.c.bf16 %v4152, %v4152
        %v4185 = vpack.c.bf16 %v4153, %v4153
        %v4186 = vpack.c.bf16 %v4154, %v4154
        %v4187 = vpack.c.bf16 %v4155, %v4155
        %v4188 = vpack.c.bf16 %v4156, %v4156
        %v4189 = vpack.c.bf16 %v4157, %v4157
        %v4190 = vpack.c.bf16 %v4158, %v4158
        %v4191 = vpack.c.bf16 %v4159, %v4159
        %v4192 = vpack.c.bf16 %v4160, %v4160
        %v4193 = vpack.c.bf16 %v4161, %v4161
        %v4194 = vpack.c.bf16 %v4162, %v4162
        %v4195 = vpack.c.bf16 %v4163, %v4163
        %v4196 = vpack.c.bf16 %v4164, %v4164
        %s4197 = smul.u32 0, 4
        %s4198 = smul.addr %s4197, 4
        %s4199 = scalar_lea.vmem %s163, %s4198 [#allocation3]
        %vm4200 = vcmask 519168
        %4201 = vst.msk [vmem:[%s4199] sm:$0xf] %vm4200, %v4165
        %4202 = vst.msk [vmem:[%s4199 + $0x4] sm:$0xf] %vm4200, %v4166
        %4203 = vst.msk [vmem:[%s4199 + $0x8] sm:$0xf] %vm4200, %v4167
        %4204 = vst.msk [vmem:[%s4199 + $0xc] sm:$0xf] %vm4200, %v4168
        %4205 = vst.msk [vmem:[%s4199 + $0x10] sm:$0xf] %vm4200, %v4169
        %4206 = vst.msk [vmem:[%s4199 + $0x14] sm:$0xf] %vm4200, %v4170
        %4207 = vst.msk [vmem:[%s4199 + $0x18] sm:$0xf] %vm4200, %v4171
        %4208 = vst.msk [vmem:[%s4199 + $0x1c] sm:$0xf] %vm4200, %v4172
        %4209 = vst.msk [vmem:[%s4199 + $0x20] sm:$0xf] %vm4200, %v4173
        %4210 = vst.msk [vmem:[%s4199 + $0x24] sm:$0xf] %vm4200, %v4174
        %4211 = vst.msk [vmem:[%s4199 + $0x28] sm:$0xf] %vm4200, %v4175
        %4212 = vst.msk [vmem:[%s4199 + $0x2c] sm:$0xf] %vm4200, %v4176
        %4213 = vst.msk [vmem:[%s4199 + $0x30] sm:$0xf] %vm4200, %v4177
        %4214 = vst.msk [vmem:[%s4199 + $0x34] sm:$0xf] %vm4200, %v4178
        %4215 = vst.msk [vmem:[%s4199 + $0x38] sm:$0xf] %vm4200, %v4179
        %4216 = vst.msk [vmem:[%s4199 + $0x3c] sm:$0xf] %vm4200, %v4180
        %4217 = vst.msk [vmem:[%s4199 + $0x40] sm:$0xf] %vm4200, %v4181
        %4218 = vst.msk [vmem:[%s4199 + $0x44] sm:$0xf] %vm4200, %v4182
        %4219 = vst.msk [vmem:[%s4199 + $0x48] sm:$0xf] %vm4200, %v4183
        %4220 = vst.msk [vmem:[%s4199 + $0x4c] sm:$0xf] %vm4200, %v4184
        %4221 = vst.msk [vmem:[%s4199 + $0x50] sm:$0xf] %vm4200, %v4185
        %4222 = vst.msk [vmem:[%s4199 + $0x54] sm:$0xf] %vm4200, %v4186
        %4223 = vst.msk [vmem:[%s4199 + $0x58] sm:$0xf] %vm4200, %v4187
        %4224 = vst.msk [vmem:[%s4199 + $0x5c] sm:$0xf] %vm4200, %v4188
        %4225 = vst.msk [vmem:[%s4199 + $0x60] sm:$0xf] %vm4200, %v4189
        %4226 = vst.msk [vmem:[%s4199 + $0x64] sm:$0xf] %vm4200, %v4190
        %4227 = vst.msk [vmem:[%s4199 + $0x68] sm:$0xf] %vm4200, %v4191
        %4228 = vst.msk [vmem:[%s4199 + $0x6c] sm:$0xf] %vm4200, %v4192
        %4229 = vst.msk [vmem:[%s4199 + $0x70] sm:$0xf] %vm4200, %v4193
        %4230 = vst.msk [vmem:[%s4199 + $0x74] sm:$0xf] %vm4200, %v4194
        %4231 = vst.msk [vmem:[%s4199 + $0x78] sm:$0xf] %vm4200, %v4195
        %4232 = vst.msk [vmem:[%s4199 + $0x7c] sm:$0xf] %vm4200, %v4196
        %s4233 = smul.u32 8, 5
        %s4234 = smul.addr %s4233, 4
        %s4235 = scalar_lea.vmem [#allocation2], %s4234
        %v4236 = vld [vmem:[%s4235] sm:$0xf]
        %v4237 = vld [vmem:[%s4235 + $0x4] sm:$0xf]
        %v4238 = vld [vmem:[%s4235 + $0x8] sm:$0xf]
        %v4239 = vld [vmem:[%s4235 + $0xc] sm:$0xf]
        %v4240 = vld [vmem:[%s4235 + $0x14] sm:$0xf]
        %v4241 = vld [vmem:[%s4235 + $0x18] sm:$0xf]
        %v4242 = vld [vmem:[%s4235 + $0x1c] sm:$0xf]
        %v4243 = vld [vmem:[%s4235 + $0x20] sm:$0xf]
        %v4244 = vld [vmem:[%s4235 + $0x28] sm:$0xf]
        %v4245 = vld [vmem:[%s4235 + $0x2c] sm:$0xf]
        %v4246 = vld [vmem:[%s4235 + $0x30] sm:$0xf]
        %v4247 = vld [vmem:[%s4235 + $0x34] sm:$0xf]
        %v4248 = vld [vmem:[%s4235 + $0x3c] sm:$0xf]
        %v4249 = vld [vmem:[%s4235 + $0x40] sm:$0xf]
        %v4250 = vld [vmem:[%s4235 + $0x44] sm:$0xf]
        %v4251 = vld [vmem:[%s4235 + $0x48] sm:$0xf]
        %v4252 = vld [vmem:[%s4235 + $0x50] sm:$0xf]
        %v4253 = vld [vmem:[%s4235 + $0x54] sm:$0xf]
        %v4254 = vld [vmem:[%s4235 + $0x58] sm:$0xf]
        %v4255 = vld [vmem:[%s4235 + $0x5c] sm:$0xf]
        %v4256 = vld [vmem:[%s4235 + $0x64] sm:$0xf]
        %v4257 = vld [vmem:[%s4235 + $0x68] sm:$0xf]
        %v4258 = vld [vmem:[%s4235 + $0x6c] sm:$0xf]
        %v4259 = vld [vmem:[%s4235 + $0x70] sm:$0xf]
        %v4260 = vld [vmem:[%s4235 + $0x78] sm:$0xf]
        %v4261 = vld [vmem:[%s4235 + $0x7c] sm:$0xf]
        %v4262 = vld [vmem:[%s4235 + $0x80] sm:$0xf]
        %v4263 = vld [vmem:[%s4235 + $0x84] sm:$0xf]
        %v4264 = vld [vmem:[%s4235 + $0x8c] sm:$0xf]
        %v4265 = vld [vmem:[%s4235 + $0x90] sm:$0xf]
        %v4266 = vld [vmem:[%s4235 + $0x94] sm:$0xf]
        %v4267 = vld [vmem:[%s4235 + $0x98] sm:$0xf]
        %v4268 = vld [vmem:[%s4235 + $0x10] sm:$0x1]
        %v4269 = vld [vmem:[%s4235 + $0x24] sm:$0x1]
        %v4270 = vld [vmem:[%s4235 + $0x38] sm:$0x1]
        %v4271 = vld [vmem:[%s4235 + $0x4c] sm:$0x1]
        %v4272 = vld [vmem:[%s4235 + $0x60] sm:$0x1]
        %v4273 = vld [vmem:[%s4235 + $0x74] sm:$0x1]
        %v4274 = vld [vmem:[%s4235 + $0x88] sm:$0x1]
        %v4275 = vld [vmem:[%s4235 + $0x9c] sm:$0x1]
        %v4276 = vld [vmem:[%s4235] sm:$0xe]
        %v4277 = vld [vmem:[%s4235 + $0x14] sm:$0xe]
        %v4278 = vld [vmem:[%s4235 + $0x28] sm:$0xe]
        %v4279 = vld [vmem:[%s4235 + $0x3c] sm:$0xe]
        %v4280 = vld [vmem:[%s4235 + $0x50] sm:$0xe]
        %v4281 = vld [vmem:[%s4235 + $0x64] sm:$0xe]
        %v4282 = vld [vmem:[%s4235 + $0x78] sm:$0xe]
        %v4283 = vld [vmem:[%s4235 + $0x8c] sm:$0xe]
        %s4284 = sadd.s32 8, 1
        %s4285 = smul.u32 %s4284, 5
        %s4286 = smul.addr %s4285, 4
        %s4287 = scalar_lea.vmem [#allocation2], %s4286
        %v4288 = vld [vmem:[%s4287] sm:$0xf]
        %v4289 = vld [vmem:[%s4287 + $0x4] sm:$0xf]
        %v4290 = vld [vmem:[%s4287 + $0x8] sm:$0xf]
        %v4291 = vld [vmem:[%s4287 + $0xc] sm:$0xf]
        %v4292 = vld [vmem:[%s4287 + $0x14] sm:$0xf]
        %v4293 = vld [vmem:[%s4287 + $0x18] sm:$0xf]
        %v4294 = vld [vmem:[%s4287 + $0x1c] sm:$0xf]
        %v4295 = vld [vmem:[%s4287 + $0x20] sm:$0xf]
        %v4296 = vld [vmem:[%s4287 + $0x28] sm:$0xf]
        %v4297 = vld [vmem:[%s4287 + $0x2c] sm:$0xf]
        %v4298 = vld [vmem:[%s4287 + $0x30] sm:$0xf]
        %v4299 = vld [vmem:[%s4287 + $0x34] sm:$0xf]
        %v4300 = vld [vmem:[%s4287 + $0x3c] sm:$0xf]
        %v4301 = vld [vmem:[%s4287 + $0x40] sm:$0xf]
        %v4302 = vld [vmem:[%s4287 + $0x44] sm:$0xf]
        %v4303 = vld [vmem:[%s4287 + $0x48] sm:$0xf]
        %v4304 = vld [vmem:[%s4287 + $0x50] sm:$0xf]
        %v4305 = vld [vmem:[%s4287 + $0x54] sm:$0xf]
        %v4306 = vld [vmem:[%s4287 + $0x58] sm:$0xf]
        %v4307 = vld [vmem:[%s4287 + $0x5c] sm:$0xf]
        %v4308 = vld [vmem:[%s4287 + $0x64] sm:$0xf]
        %v4309 = vld [vmem:[%s4287 + $0x68] sm:$0xf]
        %v4310 = vld [vmem:[%s4287 + $0x6c] sm:$0xf]
        %v4311 = vld [vmem:[%s4287 + $0x70] sm:$0xf]
        %v4312 = vld [vmem:[%s4287 + $0x78] sm:$0xf]
        %v4313 = vld [vmem:[%s4287 + $0x7c] sm:$0xf]
        %v4314 = vld [vmem:[%s4287 + $0x80] sm:$0xf]
        %v4315 = vld [vmem:[%s4287 + $0x84] sm:$0xf]
        %v4316 = vld [vmem:[%s4287 + $0x8c] sm:$0xf]
        %v4317 = vld [vmem:[%s4287 + $0x90] sm:$0xf]
        %v4318 = vld [vmem:[%s4287 + $0x94] sm:$0xf]
        %v4319 = vld [vmem:[%s4287 + $0x98] sm:$0xf]
        %v4320 = vld [vmem:[%s4287 + $0x10] sm:$0x1]
        %v4321 = vld [vmem:[%s4287 + $0x24] sm:$0x1]
        %v4322 = vld [vmem:[%s4287 + $0x38] sm:$0x1]
        %v4323 = vld [vmem:[%s4287 + $0x4c] sm:$0x1]
        %v4324 = vld [vmem:[%s4287 + $0x60] sm:$0x1]
        %v4325 = vld [vmem:[%s4287 + $0x74] sm:$0x1]
        %v4326 = vld [vmem:[%s4287 + $0x88] sm:$0x1]
        %v4327 = vld [vmem:[%s4287 + $0x9c] sm:$0x1]
        %v4328 = vld [vmem:[%s4287] sm:$0xe]
        %v4329 = vld [vmem:[%s4287 + $0x14] sm:$0xe]
        %v4330 = vld [vmem:[%s4287 + $0x28] sm:$0xe]
        %v4331 = vld [vmem:[%s4287 + $0x3c] sm:$0xe]
        %v4332 = vld [vmem:[%s4287 + $0x50] sm:$0xe]
        %v4333 = vld [vmem:[%s4287 + $0x64] sm:$0xe]
        %v4334 = vld [vmem:[%s4287 + $0x78] sm:$0xe]
        %v4335 = vld [vmem:[%s4287 + $0x8c] sm:$0xe]
        %s4336 = sadd.s32 8, 2
        %s4337 = smul.u32 %s4336, 5
        %s4338 = smul.addr %s4337, 4
        %s4339 = scalar_lea.vmem [#allocation2], %s4338
        %v4340 = vld [vmem:[%s4339] sm:$0xf]
        %v4341 = vld [vmem:[%s4339 + $0x4] sm:$0xf]
        %v4342 = vld [vmem:[%s4339 + $0x8] sm:$0xf]
        %v4343 = vld [vmem:[%s4339 + $0xc] sm:$0xf]
        %v4344 = vld [vmem:[%s4339 + $0x14] sm:$0xf]
        %v4345 = vld [vmem:[%s4339 + $0x18] sm:$0xf]
        %v4346 = vld [vmem:[%s4339 + $0x1c] sm:$0xf]
        %v4347 = vld [vmem:[%s4339 + $0x20] sm:$0xf]
        %v4348 = vld [vmem:[%s4339 + $0x28] sm:$0xf]
        %v4349 = vld [vmem:[%s4339 + $0x2c] sm:$0xf]
        %v4350 = vld [vmem:[%s4339 + $0x30] sm:$0xf]
        %v4351 = vld [vmem:[%s4339 + $0x34] sm:$0xf]
        %v4352 = vld [vmem:[%s4339 + $0x3c] sm:$0xf]
        %v4353 = vld [vmem:[%s4339 + $0x40] sm:$0xf]
        %v4354 = vld [vmem:[%s4339 + $0x44] sm:$0xf]
        %v4355 = vld [vmem:[%s4339 + $0x48] sm:$0xf]
        %v4356 = vld [vmem:[%s4339 + $0x50] sm:$0xf]
        %v4357 = vld [vmem:[%s4339 + $0x54] sm:$0xf]
        %v4358 = vld [vmem:[%s4339 + $0x58] sm:$0xf]
        %v4359 = vld [vmem:[%s4339 + $0x5c] sm:$0xf]
        %v4360 = vld [vmem:[%s4339 + $0x64] sm:$0xf]
        %v4361 = vld [vmem:[%s4339 + $0x68] sm:$0xf]
        %v4362 = vld [vmem:[%s4339 + $0x6c] sm:$0xf]
        %v4363 = vld [vmem:[%s4339 + $0x70] sm:$0xf]
        %v4364 = vld [vmem:[%s4339 + $0x78] sm:$0xf]
        %v4365 = vld [vmem:[%s4339 + $0x7c] sm:$0xf]
        %v4366 = vld [vmem:[%s4339 + $0x80] sm:$0xf]
        %v4367 = vld [vmem:[%s4339 + $0x84] sm:$0xf]
        %v4368 = vld [vmem:[%s4339 + $0x8c] sm:$0xf]
        %v4369 = vld [vmem:[%s4339 + $0x90] sm:$0xf]
        %v4370 = vld [vmem:[%s4339 + $0x94] sm:$0xf]
        %v4371 = vld [vmem:[%s4339 + $0x98] sm:$0xf]
        %v4372 = vld [vmem:[%s4339 + $0x10] sm:$0x1]
        %v4373 = vld [vmem:[%s4339 + $0x24] sm:$0x1]
        %v4374 = vld [vmem:[%s4339 + $0x38] sm:$0x1]
        %v4375 = vld [vmem:[%s4339 + $0x4c] sm:$0x1]
        %v4376 = vld [vmem:[%s4339 + $0x60] sm:$0x1]
        %v4377 = vld [vmem:[%s4339 + $0x74] sm:$0x1]
        %v4378 = vld [vmem:[%s4339 + $0x88] sm:$0x1]
        %v4379 = vld [vmem:[%s4339 + $0x9c] sm:$0x1]
        %v4380 = vld [vmem:[%s4339] sm:$0xe]
        %v4381 = vld [vmem:[%s4339 + $0x14] sm:$0xe]
        %v4382 = vld [vmem:[%s4339 + $0x28] sm:$0xe]
        %v4383 = vld [vmem:[%s4339 + $0x3c] sm:$0xe]
        %v4384 = vld [vmem:[%s4339 + $0x50] sm:$0xe]
        %v4385 = vld [vmem:[%s4339 + $0x64] sm:$0xe]
        %v4386 = vld [vmem:[%s4339 + $0x78] sm:$0xe]
        %v4387 = vld [vmem:[%s4339 + $0x8c] sm:$0xe]
        %v4420 = vunpack.c.l.b16 %v4236
        %v4421 = vunpack.c.l.b16 %v4237
        %v4422 = vunpack.c.l.b16 %v4238
        %v4423 = vunpack.c.l.b16 %v4239
        %v4424 = vunpack.c.l.b16 %v4240
        %v4425 = vunpack.c.l.b16 %v4241
        %v4426 = vunpack.c.l.b16 %v4242
        %v4427 = vunpack.c.l.b16 %v4243
        %v4428 = vunpack.c.l.b16 %v4244
        %v4429 = vunpack.c.l.b16 %v4245
        %v4430 = vunpack.c.l.b16 %v4246
        %v4431 = vunpack.c.l.b16 %v4247
        %v4432 = vunpack.c.l.b16 %v4248
        %v4433 = vunpack.c.l.b16 %v4249
        %v4434 = vunpack.c.l.b16 %v4250
        %v4435 = vunpack.c.l.b16 %v4251
        %v4436 = vunpack.c.l.b16 %v4252
        %v4437 = vunpack.c.l.b16 %v4253
        %v4438 = vunpack.c.l.b16 %v4254
        %v4439 = vunpack.c.l.b16 %v4255
        %v4440 = vunpack.c.l.b16 %v4256
        %v4441 = vunpack.c.l.b16 %v4257
        %v4442 = vunpack.c.l.b16 %v4258
        %v4443 = vunpack.c.l.b16 %v4259
        %v4444 = vunpack.c.l.b16 %v4260
        %v4445 = vunpack.c.l.b16 %v4261
        %v4446 = vunpack.c.l.b16 %v4262
        %v4447 = vunpack.c.l.b16 %v4263
        %v4448 = vunpack.c.l.b16 %v4264
        %v4449 = vunpack.c.l.b16 %v4265
        %v4450 = vunpack.c.l.b16 %v4266
        %v4451 = vunpack.c.l.b16 %v4267
        %v4452 = vpack.c.b16 %v4421, %v4420
        %v4453 = vpack.c.b16 %v4423, %v4422
        %v4454 = vpack.c.b16 %v4425, %v4424
        %v4455 = vpack.c.b16 %v4427, %v4426
        %v4456 = vpack.c.b16 %v4429, %v4428
        %v4457 = vpack.c.b16 %v4431, %v4430
        %v4458 = vpack.c.b16 %v4433, %v4432
        %v4459 = vpack.c.b16 %v4435, %v4434
        %v4460 = vpack.c.b16 %v4437, %v4436
        %v4461 = vpack.c.b16 %v4439, %v4438
        %v4462 = vpack.c.b16 %v4441, %v4440
        %v4463 = vpack.c.b16 %v4443, %v4442
        %v4464 = vpack.c.b16 %v4445, %v4444
        %v4465 = vpack.c.b16 %v4447, %v4446
        %v4466 = vpack.c.b16 %v4449, %v4448
        %v4467 = vpack.c.b16 %v4451, %v4450
        %v4476 = vunpack.c.l.b16 %v4268
        %v4477 = vunpack.c.l.b16 %v4269
        %v4478 = vunpack.c.l.b16 %v4270
        %v4479 = vunpack.c.l.b16 %v4271
        %v4480 = vunpack.c.l.b16 %v4272
        %v4481 = vunpack.c.l.b16 %v4273
        %v4482 = vunpack.c.l.b16 %v4274
        %v4483 = vunpack.c.l.b16 %v4275
        %v4484 = vpack.c.b16 %v4476, %v4476
        %v4485 = vpack.c.b16 %v4477, %v4477
        %v4486 = vpack.c.b16 %v4478, %v4478
        %v4487 = vpack.c.b16 %v4479, %v4479
        %v4488 = vpack.c.b16 %v4480, %v4480
        %v4489 = vpack.c.b16 %v4481, %v4481
        %v4490 = vpack.c.b16 %v4482, %v4482
        %v4491 = vpack.c.b16 %v4483, %v4483
        %v4493 = vshrl.u32 %v4452, 16
        %v4495 = vshll.u32 %v4452, 16
        %v4497 = vrot.slane %v4495, 1
        %v4498 = vor.u32 %v4493, %v4497
        %v4500 = vshll.u32 %v4453, 16
        %v4502 = vrot.slane %v4500, 1
        %v4503 = vsel %vm2352, %v4498, %v4502
        %v4504 = vshrl.u32 %v4453, 16
        %v4506 = vor.u32 %v4504, %v4502
        %v4508 = vshll.u32 %v4484, 16
        %v4510 = vrot.slane %v4508, 1
        %v4511 = vsel %vm2352, %v4506, %v4510
        %v4513 = vshrl.u32 %v4454, 16
        %v4515 = vshll.u32 %v4454, 16
        %v4517 = vrot.slane %v4515, 1
        %v4518 = vor.u32 %v4513, %v4517
        %v4520 = vshll.u32 %v4455, 16
        %v4522 = vrot.slane %v4520, 1
        %v4523 = vsel %vm2352, %v4518, %v4522
        %v4524 = vshrl.u32 %v4455, 16
        %v4526 = vor.u32 %v4524, %v4522
        %v4528 = vshll.u32 %v4485, 16
        %v4530 = vrot.slane %v4528, 1
        %v4531 = vsel %vm2352, %v4526, %v4530
        %v4533 = vshrl.u32 %v4456, 16
        %v4535 = vshll.u32 %v4456, 16
        %v4537 = vrot.slane %v4535, 1
        %v4538 = vor.u32 %v4533, %v4537
        %v4540 = vshll.u32 %v4457, 16
        %v4542 = vrot.slane %v4540, 1
        %v4543 = vsel %vm2352, %v4538, %v4542
        %v4544 = vshrl.u32 %v4457, 16
        %v4546 = vor.u32 %v4544, %v4542
        %v4548 = vshll.u32 %v4486, 16
        %v4550 = vrot.slane %v4548, 1
        %v4551 = vsel %vm2352, %v4546, %v4550
        %v4553 = vshrl.u32 %v4458, 16
        %v4555 = vshll.u32 %v4458, 16
        %v4557 = vrot.slane %v4555, 1
        %v4558 = vor.u32 %v4553, %v4557
        %v4560 = vshll.u32 %v4459, 16
        %v4562 = vrot.slane %v4560, 1
        %v4563 = vsel %vm2352, %v4558, %v4562
        %v4564 = vshrl.u32 %v4459, 16
        %v4566 = vor.u32 %v4564, %v4562
        %v4568 = vshll.u32 %v4487, 16
        %v4570 = vrot.slane %v4568, 1
        %v4571 = vsel %vm2352, %v4566, %v4570
        %v4573 = vshrl.u32 %v4460, 16
        %v4575 = vshll.u32 %v4460, 16
        %v4577 = vrot.slane %v4575, 1
        %v4578 = vor.u32 %v4573, %v4577
        %v4580 = vshll.u32 %v4461, 16
        %v4582 = vrot.slane %v4580, 1
        %v4583 = vsel %vm2352, %v4578, %v4582
        %v4584 = vshrl.u32 %v4461, 16
        %v4586 = vor.u32 %v4584, %v4582
        %v4588 = vshll.u32 %v4488, 16
        %v4590 = vrot.slane %v4588, 1
        %v4591 = vsel %vm2352, %v4586, %v4590
        %v4593 = vshrl.u32 %v4462, 16
        %v4595 = vshll.u32 %v4462, 16
        %v4597 = vrot.slane %v4595, 1
        %v4598 = vor.u32 %v4593, %v4597
        %v4600 = vshll.u32 %v4463, 16
        %v4602 = vrot.slane %v4600, 1
        %v4603 = vsel %vm2352, %v4598, %v4602
        %v4604 = vshrl.u32 %v4463, 16
        %v4606 = vor.u32 %v4604, %v4602
        %v4608 = vshll.u32 %v4489, 16
        %v4610 = vrot.slane %v4608, 1
        %v4611 = vsel %vm2352, %v4606, %v4610
        %v4613 = vshrl.u32 %v4464, 16
        %v4615 = vshll.u32 %v4464, 16
        %v4617 = vrot.slane %v4615, 1
        %v4618 = vor.u32 %v4613, %v4617
        %v4620 = vshll.u32 %v4465, 16
        %v4622 = vrot.slane %v4620, 1
        %v4623 = vsel %vm2352, %v4618, %v4622
        %v4624 = vshrl.u32 %v4465, 16
        %v4626 = vor.u32 %v4624, %v4622
        %v4628 = vshll.u32 %v4490, 16
        %v4630 = vrot.slane %v4628, 1
        %v4631 = vsel %vm2352, %v4626, %v4630
        %v4633 = vshrl.u32 %v4466, 16
        %v4635 = vshll.u32 %v4466, 16
        %v4637 = vrot.slane %v4635, 1
        %v4638 = vor.u32 %v4633, %v4637
        %v4640 = vshll.u32 %v4467, 16
        %v4642 = vrot.slane %v4640, 1
        %v4643 = vsel %vm2352, %v4638, %v4642
        %v4644 = vshrl.u32 %v4467, 16
        %v4646 = vor.u32 %v4644, %v4642
        %v4648 = vshll.u32 %v4491, 16
        %v4650 = vrot.slane %v4648, 1
        %v4651 = vsel %vm2352, %v4646, %v4650
        %4652 = vrot.lane.b32.xlu0 %v4503, 3
        %v4653 = vpop.permute.xlu0 %4652
        %4654 = vrot.lane.b32.xlu0 %v4511, 3
        %v4655 = vpop.permute.xlu0 %4654
        %4656 = vrot.lane.b32.xlu0 %v4523, 3
        %v4657 = vpop.permute.xlu0 %4656
        %4658 = vrot.lane.b32.xlu0 %v4531, 3
        %v4659 = vpop.permute.xlu0 %4658
        %4660 = vrot.lane.b32.xlu0 %v4543, 3
        %v4661 = vpop.permute.xlu0 %4660
        %4662 = vrot.lane.b32.xlu0 %v4551, 3
        %v4663 = vpop.permute.xlu0 %4662
        %4664 = vrot.lane.b32.xlu0 %v4563, 3
        %v4665 = vpop.permute.xlu0 %4664
        %4666 = vrot.lane.b32.xlu0 %v4571, 3
        %v4667 = vpop.permute.xlu0 %4666
        %4668 = vrot.lane.b32.xlu0 %v4583, 3
        %v4669 = vpop.permute.xlu0 %4668
        %4670 = vrot.lane.b32.xlu0 %v4591, 3
        %v4671 = vpop.permute.xlu0 %4670
        %4672 = vrot.lane.b32.xlu0 %v4603, 3
        %v4673 = vpop.permute.xlu0 %4672
        %4674 = vrot.lane.b32.xlu0 %v4611, 3
        %v4675 = vpop.permute.xlu0 %4674
        %4676 = vrot.lane.b32.xlu0 %v4623, 3
        %v4677 = vpop.permute.xlu0 %4676
        %4678 = vrot.lane.b32.xlu0 %v4631, 3
        %v4679 = vpop.permute.xlu0 %4678
        %4680 = vrot.lane.b32.xlu0 %v4643, 3
        %v4681 = vpop.permute.xlu0 %4680
        %4682 = vrot.lane.b32.xlu0 %v4651, 3
        %v4683 = vpop.permute.xlu0 %4682
        %v4692 = vunpack.c.l.b16 %v4276
        %v4693 = vunpack.c.l.b16 %v4277
        %v4694 = vunpack.c.l.b16 %v4278
        %v4695 = vunpack.c.l.b16 %v4279
        %v4696 = vunpack.c.l.b16 %v4280
        %v4697 = vunpack.c.l.b16 %v4281
        %v4698 = vunpack.c.l.b16 %v4282
        %v4699 = vunpack.c.l.b16 %v4283
        %v4700 = vpack.c.b16 %v4421, %v4692
        %v4701 = vpack.c.b16 %v4425, %v4693
        %v4702 = vpack.c.b16 %v4429, %v4694
        %v4703 = vpack.c.b16 %v4433, %v4695
        %v4704 = vpack.c.b16 %v4437, %v4696
        %v4705 = vpack.c.b16 %v4441, %v4697
        %v4706 = vpack.c.b16 %v4445, %v4698
        %v4707 = vpack.c.b16 %v4449, %v4699
        %v4708 = vrot.slane %v4700, 1
        %v4709 = vrot.slane %v4453, 1
        %v4710 = vsel %vm2569, %v4708, %v4709
        %v4711 = vrot.slane %v4484, 1
        %v4712 = vsel %vm2569, %v4709, %v4711
        %v4713 = vrot.slane %v4701, 1
        %v4714 = vrot.slane %v4455, 1
        %v4715 = vsel %vm2569, %v4713, %v4714
        %v4716 = vrot.slane %v4485, 1
        %v4717 = vsel %vm2569, %v4714, %v4716
        %v4718 = vrot.slane %v4702, 1
        %v4719 = vrot.slane %v4457, 1
        %v4720 = vsel %vm2569, %v4718, %v4719
        %v4721 = vrot.slane %v4486, 1
        %v4722 = vsel %vm2569, %v4719, %v4721
        %v4723 = vrot.slane %v4703, 1
        %v4724 = vrot.slane %v4459, 1
        %v4725 = vsel %vm2569, %v4723, %v4724
        %v4726 = vrot.slane %v4487, 1
        %v4727 = vsel %vm2569, %v4724, %v4726
        %v4728 = vrot.slane %v4704, 1
        %v4729 = vrot.slane %v4461, 1
        %v4730 = vsel %vm2569, %v4728, %v4729
        %v4731 = vrot.slane %v4488, 1
        %v4732 = vsel %vm2569, %v4729, %v4731
        %v4733 = vrot.slane %v4705, 1
        %v4734 = vrot.slane %v4463, 1
        %v4735 = vsel %vm2569, %v4733, %v4734
        %v4736 = vrot.slane %v4489, 1
        %v4737 = vsel %vm2569, %v4734, %v4736
        %v4738 = vrot.slane %v4706, 1
        %v4739 = vrot.slane %v4465, 1
        %v4740 = vsel %vm2569, %v4738, %v4739
        %v4741 = vrot.slane %v4490, 1
        %v4742 = vsel %vm2569, %v4739, %v4741
        %v4743 = vrot.slane %v4707, 1
        %v4744 = vrot.slane %v4467, 1
        %v4745 = vsel %vm2569, %v4743, %v4744
        %v4746 = vrot.slane %v4491, 1
        %v4747 = vsel %vm2569, %v4744, %v4746
        %4748 = vrot.lane.b32.xlu0 %v4710, 6
        %v4749 = vpop.permute.xlu0 %4748
        %4750 = vrot.lane.b32.xlu0 %v4712, 6
        %v4751 = vpop.permute.xlu0 %4750
        %4752 = vrot.lane.b32.xlu0 %v4715, 6
        %v4753 = vpop.permute.xlu0 %4752
        %4754 = vrot.lane.b32.xlu0 %v4717, 6
        %v4755 = vpop.permute.xlu0 %4754
        %4756 = vrot.lane.b32.xlu0 %v4720, 6
        %v4757 = vpop.permute.xlu0 %4756
        %4758 = vrot.lane.b32.xlu0 %v4722, 6
        %v4759 = vpop.permute.xlu0 %4758
        %4760 = vrot.lane.b32.xlu0 %v4725, 6
        %v4761 = vpop.permute.xlu0 %4760
        %4762 = vrot.lane.b32.xlu0 %v4727, 6
        %v4763 = vpop.permute.xlu0 %4762
        %4764 = vrot.lane.b32.xlu0 %v4730, 6
        %v4765 = vpop.permute.xlu0 %4764
        %4766 = vrot.lane.b32.xlu0 %v4732, 6
        %v4767 = vpop.permute.xlu0 %4766
        %4768 = vrot.lane.b32.xlu0 %v4735, 6
        %v4769 = vpop.permute.xlu0 %4768
        %4770 = vrot.lane.b32.xlu0 %v4737, 6
        %v4771 = vpop.permute.xlu0 %4770
        %4772 = vrot.lane.b32.xlu0 %v4740, 6
        %v4773 = vpop.permute.xlu0 %4772
        %4774 = vrot.lane.b32.xlu0 %v4742, 6
        %v4775 = vpop.permute.xlu0 %4774
        %4776 = vrot.lane.b32.xlu0 %v4745, 6
        %v4777 = vpop.permute.xlu0 %4776
        %4778 = vrot.lane.b32.xlu0 %v4747, 6
        %v4779 = vpop.permute.xlu0 %4778
        %v4812 = vunpack.c.l.b16 %v4288
        %v4813 = vunpack.c.l.b16 %v4289
        %v4814 = vunpack.c.l.b16 %v4290
        %v4815 = vunpack.c.l.b16 %v4291
        %v4816 = vunpack.c.l.b16 %v4292
        %v4817 = vunpack.c.l.b16 %v4293
        %v4818 = vunpack.c.l.b16 %v4294
        %v4819 = vunpack.c.l.b16 %v4295
        %v4820 = vunpack.c.l.b16 %v4296
        %v4821 = vunpack.c.l.b16 %v4297
        %v4822 = vunpack.c.l.b16 %v4298
        %v4823 = vunpack.c.l.b16 %v4299
        %v4824 = vunpack.c.l.b16 %v4300
        %v4825 = vunpack.c.l.b16 %v4301
        %v4826 = vunpack.c.l.b16 %v4302
        %v4827 = vunpack.c.l.b16 %v4303
        %v4828 = vunpack.c.l.b16 %v4304
        %v4829 = vunpack.c.l.b16 %v4305
        %v4830 = vunpack.c.l.b16 %v4306
        %v4831 = vunpack.c.l.b16 %v4307
        %v4832 = vunpack.c.l.b16 %v4308
        %v4833 = vunpack.c.l.b16 %v4309
        %v4834 = vunpack.c.l.b16 %v4310
        %v4835 = vunpack.c.l.b16 %v4311
        %v4836 = vunpack.c.l.b16 %v4312
        %v4837 = vunpack.c.l.b16 %v4313
        %v4838 = vunpack.c.l.b16 %v4314
        %v4839 = vunpack.c.l.b16 %v4315
        %v4840 = vunpack.c.l.b16 %v4316
        %v4841 = vunpack.c.l.b16 %v4317
        %v4842 = vunpack.c.l.b16 %v4318
        %v4843 = vunpack.c.l.b16 %v4319
        %v4844 = vpack.c.b16 %v4813, %v4812
        %v4845 = vpack.c.b16 %v4815, %v4814
        %v4846 = vpack.c.b16 %v4817, %v4816
        %v4847 = vpack.c.b16 %v4819, %v4818
        %v4848 = vpack.c.b16 %v4821, %v4820
        %v4849 = vpack.c.b16 %v4823, %v4822
        %v4850 = vpack.c.b16 %v4825, %v4824
        %v4851 = vpack.c.b16 %v4827, %v4826
        %v4852 = vpack.c.b16 %v4829, %v4828
        %v4853 = vpack.c.b16 %v4831, %v4830
        %v4854 = vpack.c.b16 %v4833, %v4832
        %v4855 = vpack.c.b16 %v4835, %v4834
        %v4856 = vpack.c.b16 %v4837, %v4836
        %v4857 = vpack.c.b16 %v4839, %v4838
        %v4858 = vpack.c.b16 %v4841, %v4840
        %v4859 = vpack.c.b16 %v4843, %v4842
        %4860 = vrot.lane.b32.xlu0 %v4844, 9
        %v4861 = vpop.permute.xlu0 %4860
        %4862 = vrot.lane.b32.xlu0 %v4845, 9
        %v4863 = vpop.permute.xlu0 %4862
        %4864 = vrot.lane.b32.xlu0 %v4846, 9
        %v4865 = vpop.permute.xlu0 %4864
        %4866 = vrot.lane.b32.xlu0 %v4847, 9
        %v4867 = vpop.permute.xlu0 %4866
        %4868 = vrot.lane.b32.xlu0 %v4848, 9
        %v4869 = vpop.permute.xlu0 %4868
        %4870 = vrot.lane.b32.xlu0 %v4849, 9
        %v4871 = vpop.permute.xlu0 %4870
        %4872 = vrot.lane.b32.xlu0 %v4850, 9
        %v4873 = vpop.permute.xlu0 %4872
        %4874 = vrot.lane.b32.xlu0 %v4851, 9
        %v4875 = vpop.permute.xlu0 %4874
        %4876 = vrot.lane.b32.xlu0 %v4852, 9
        %v4877 = vpop.permute.xlu0 %4876
        %4878 = vrot.lane.b32.xlu0 %v4853, 9
        %v4879 = vpop.permute.xlu0 %4878
        %4880 = vrot.lane.b32.xlu0 %v4854, 9
        %v4881 = vpop.permute.xlu0 %4880
        %4882 = vrot.lane.b32.xlu0 %v4855, 9
        %v4883 = vpop.permute.xlu0 %4882
        %4884 = vrot.lane.b32.xlu0 %v4856, 9
        %v4885 = vpop.permute.xlu0 %4884
        %4886 = vrot.lane.b32.xlu0 %v4857, 9
        %v4887 = vpop.permute.xlu0 %4886
        %4888 = vrot.lane.b32.xlu0 %v4858, 9
        %v4889 = vpop.permute.xlu0 %4888
        %4890 = vrot.lane.b32.xlu0 %v4859, 9
        %v4891 = vpop.permute.xlu0 %4890
        %v4900 = vunpack.c.l.b16 %v4320
        %v4901 = vunpack.c.l.b16 %v4321
        %v4902 = vunpack.c.l.b16 %v4322
        %v4903 = vunpack.c.l.b16 %v4323
        %v4904 = vunpack.c.l.b16 %v4324
        %v4905 = vunpack.c.l.b16 %v4325
        %v4906 = vunpack.c.l.b16 %v4326
        %v4907 = vunpack.c.l.b16 %v4327
        %v4908 = vpack.c.b16 %v4900, %v4900
        %v4909 = vpack.c.b16 %v4901, %v4901
        %v4910 = vpack.c.b16 %v4902, %v4902
        %v4911 = vpack.c.b16 %v4903, %v4903
        %v4912 = vpack.c.b16 %v4904, %v4904
        %v4913 = vpack.c.b16 %v4905, %v4905
        %v4914 = vpack.c.b16 %v4906, %v4906
        %v4915 = vpack.c.b16 %v4907, %v4907
        %v4917 = vshrl.u32 %v4844, 16
        %v4919 = vshll.u32 %v4844, 16
        %v4921 = vrot.slane %v4919, 1
        %v4922 = vor.u32 %v4917, %v4921
        %v4924 = vshll.u32 %v4845, 16
        %v4926 = vrot.slane %v4924, 1
        %v4927 = vsel %vm2352, %v4922, %v4926
        %v4928 = vshrl.u32 %v4845, 16
        %v4930 = vor.u32 %v4928, %v4926
        %v4932 = vshll.u32 %v4908, 16
        %v4934 = vrot.slane %v4932, 1
        %v4935 = vsel %vm2352, %v4930, %v4934
        %v4937 = vshrl.u32 %v4846, 16
        %v4939 = vshll.u32 %v4846, 16
        %v4941 = vrot.slane %v4939, 1
        %v4942 = vor.u32 %v4937, %v4941
        %v4944 = vshll.u32 %v4847, 16
        %v4946 = vrot.slane %v4944, 1
        %v4947 = vsel %vm2352, %v4942, %v4946
        %v4948 = vshrl.u32 %v4847, 16
        %v4950 = vor.u32 %v4948, %v4946
        %v4952 = vshll.u32 %v4909, 16
        %v4954 = vrot.slane %v4952, 1
        %v4955 = vsel %vm2352, %v4950, %v4954
        %v4957 = vshrl.u32 %v4848, 16
        %v4959 = vshll.u32 %v4848, 16
        %v4961 = vrot.slane %v4959, 1
        %v4962 = vor.u32 %v4957, %v4961
        %v4964 = vshll.u32 %v4849, 16
        %v4966 = vrot.slane %v4964, 1
        %v4967 = vsel %vm2352, %v4962, %v4966
        %v4968 = vshrl.u32 %v4849, 16
        %v4970 = vor.u32 %v4968, %v4966
        %v4972 = vshll.u32 %v4910, 16
        %v4974 = vrot.slane %v4972, 1
        %v4975 = vsel %vm2352, %v4970, %v4974
        %v4977 = vshrl.u32 %v4850, 16
        %v4979 = vshll.u32 %v4850, 16
        %v4981 = vrot.slane %v4979, 1
        %v4982 = vor.u32 %v4977, %v4981
        %v4984 = vshll.u32 %v4851, 16
        %v4986 = vrot.slane %v4984, 1
        %v4987 = vsel %vm2352, %v4982, %v4986
        %v4988 = vshrl.u32 %v4851, 16
        %v4990 = vor.u32 %v4988, %v4986
        %v4992 = vshll.u32 %v4911, 16
        %v4994 = vrot.slane %v4992, 1
        %v4995 = vsel %vm2352, %v4990, %v4994
        %v4997 = vshrl.u32 %v4852, 16
        %v4999 = vshll.u32 %v4852, 16
        %v5001 = vrot.slane %v4999, 1
        %v5002 = vor.u32 %v4997, %v5001
        %v5004 = vshll.u32 %v4853, 16
        %v5006 = vrot.slane %v5004, 1
        %v5007 = vsel %vm2352, %v5002, %v5006
        %v5008 = vshrl.u32 %v4853, 16
        %v5010 = vor.u32 %v5008, %v5006
        %v5012 = vshll.u32 %v4912, 16
        %v5014 = vrot.slane %v5012, 1
        %v5015 = vsel %vm2352, %v5010, %v5014
        %v5017 = vshrl.u32 %v4854, 16
        %v5019 = vshll.u32 %v4854, 16
        %v5021 = vrot.slane %v5019, 1
        %v5022 = vor.u32 %v5017, %v5021
        %v5024 = vshll.u32 %v4855, 16
        %v5026 = vrot.slane %v5024, 1
        %v5027 = vsel %vm2352, %v5022, %v5026
        %v5028 = vshrl.u32 %v4855, 16
        %v5030 = vor.u32 %v5028, %v5026
        %v5032 = vshll.u32 %v4913, 16
        %v5034 = vrot.slane %v5032, 1
        %v5035 = vsel %vm2352, %v5030, %v5034
        %v5037 = vshrl.u32 %v4856, 16
        %v5039 = vshll.u32 %v4856, 16
        %v5041 = vrot.slane %v5039, 1
        %v5042 = vor.u32 %v5037, %v5041
        %v5044 = vshll.u32 %v4857, 16
        %v5046 = vrot.slane %v5044, 1
        %v5047 = vsel %vm2352, %v5042, %v5046
        %v5048 = vshrl.u32 %v4857, 16
        %v5050 = vor.u32 %v5048, %v5046
        %v5052 = vshll.u32 %v4914, 16
        %v5054 = vrot.slane %v5052, 1
        %v5055 = vsel %vm2352, %v5050, %v5054
        %v5057 = vshrl.u32 %v4858, 16
        %v5059 = vshll.u32 %v4858, 16
        %v5061 = vrot.slane %v5059, 1
        %v5062 = vor.u32 %v5057, %v5061
        %v5064 = vshll.u32 %v4859, 16
        %v5066 = vrot.slane %v5064, 1
        %v5067 = vsel %vm2352, %v5062, %v5066
        %v5068 = vshrl.u32 %v4859, 16
        %v5070 = vor.u32 %v5068, %v5066
        %v5072 = vshll.u32 %v4915, 16
        %v5074 = vrot.slane %v5072, 1
        %v5075 = vsel %vm2352, %v5070, %v5074
        %5076 = vrot.lane.b32.xlu0 %v4927, 12
        %v5077 = vpop.permute.xlu0 %5076
        %5078 = vrot.lane.b32.xlu0 %v4935, 12
        %v5079 = vpop.permute.xlu0 %5078
        %5080 = vrot.lane.b32.xlu0 %v4947, 12
        %v5081 = vpop.permute.xlu0 %5080
        %5082 = vrot.lane.b32.xlu0 %v4955, 12
        %v5083 = vpop.permute.xlu0 %5082
        %5084 = vrot.lane.b32.xlu0 %v4967, 12
        %v5085 = vpop.permute.xlu0 %5084
        %5086 = vrot.lane.b32.xlu0 %v4975, 12
        %v5087 = vpop.permute.xlu0 %5086
        %5088 = vrot.lane.b32.xlu0 %v4987, 12
        %v5089 = vpop.permute.xlu0 %5088
        %5090 = vrot.lane.b32.xlu0 %v4995, 12
        %v5091 = vpop.permute.xlu0 %5090
        %5092 = vrot.lane.b32.xlu0 %v5007, 12
        %v5093 = vpop.permute.xlu0 %5092
        %5094 = vrot.lane.b32.xlu0 %v5015, 12
        %v5095 = vpop.permute.xlu0 %5094
        %5096 = vrot.lane.b32.xlu0 %v5027, 12
        %v5097 = vpop.permute.xlu0 %5096
        %5098 = vrot.lane.b32.xlu0 %v5035, 12
        %v5099 = vpop.permute.xlu0 %5098
        %5100 = vrot.lane.b32.xlu0 %v5047, 12
        %v5101 = vpop.permute.xlu0 %5100
        %5102 = vrot.lane.b32.xlu0 %v5055, 12
        %v5103 = vpop.permute.xlu0 %5102
        %5104 = vrot.lane.b32.xlu0 %v5067, 12
        %v5105 = vpop.permute.xlu0 %5104
        %5106 = vrot.lane.b32.xlu0 %v5075, 12
        %v5107 = vpop.permute.xlu0 %5106
        %v5116 = vunpack.c.l.b16 %v4328
        %v5117 = vunpack.c.l.b16 %v4329
        %v5118 = vunpack.c.l.b16 %v4330
        %v5119 = vunpack.c.l.b16 %v4331
        %v5120 = vunpack.c.l.b16 %v4332
        %v5121 = vunpack.c.l.b16 %v4333
        %v5122 = vunpack.c.l.b16 %v4334
        %v5123 = vunpack.c.l.b16 %v4335
        %v5124 = vpack.c.b16 %v4813, %v5116
        %v5125 = vpack.c.b16 %v4817, %v5117
        %v5126 = vpack.c.b16 %v4821, %v5118
        %v5127 = vpack.c.b16 %v4825, %v5119
        %v5128 = vpack.c.b16 %v4829, %v5120
        %v5129 = vpack.c.b16 %v4833, %v5121
        %v5130 = vpack.c.b16 %v4837, %v5122
        %v5131 = vpack.c.b16 %v4841, %v5123
        %v5132 = vrot.slane %v5124, 1
        %v5133 = vrot.slane %v4845, 1
        %v5134 = vsel %vm2569, %v5132, %v5133
        %v5135 = vrot.slane %v4908, 1
        %v5136 = vsel %vm2569, %v5133, %v5135
        %v5137 = vrot.slane %v5125, 1
        %v5138 = vrot.slane %v4847, 1
        %v5139 = vsel %vm2569, %v5137, %v5138
        %v5140 = vrot.slane %v4909, 1
        %v5141 = vsel %vm2569, %v5138, %v5140
        %v5142 = vrot.slane %v5126, 1
        %v5143 = vrot.slane %v4849, 1
        %v5144 = vsel %vm2569, %v5142, %v5143
        %v5145 = vrot.slane %v4910, 1
        %v5146 = vsel %vm2569, %v5143, %v5145
        %v5147 = vrot.slane %v5127, 1
        %v5148 = vrot.slane %v4851, 1
        %v5149 = vsel %vm2569, %v5147, %v5148
        %v5150 = vrot.slane %v4911, 1
        %v5151 = vsel %vm2569, %v5148, %v5150
        %v5152 = vrot.slane %v5128, 1
        %v5153 = vrot.slane %v4853, 1
        %v5154 = vsel %vm2569, %v5152, %v5153
        %v5155 = vrot.slane %v4912, 1
        %v5156 = vsel %vm2569, %v5153, %v5155
        %v5157 = vrot.slane %v5129, 1
        %v5158 = vrot.slane %v4855, 1
        %v5159 = vsel %vm2569, %v5157, %v5158
        %v5160 = vrot.slane %v4913, 1
        %v5161 = vsel %vm2569, %v5158, %v5160
        %v5162 = vrot.slane %v5130, 1
        %v5163 = vrot.slane %v4857, 1
        %v5164 = vsel %vm2569, %v5162, %v5163
        %v5165 = vrot.slane %v4914, 1
        %v5166 = vsel %vm2569, %v5163, %v5165
        %v5167 = vrot.slane %v5131, 1
        %v5168 = vrot.slane %v4859, 1
        %v5169 = vsel %vm2569, %v5167, %v5168
        %v5170 = vrot.slane %v4915, 1
        %v5171 = vsel %vm2569, %v5168, %v5170
        %5172 = vrot.lane.b32.xlu0 %v5134, 15
        %v5173 = vpop.permute.xlu0 %5172
        %5174 = vrot.lane.b32.xlu0 %v5136, 15
        %v5175 = vpop.permute.xlu0 %5174
        %5176 = vrot.lane.b32.xlu0 %v5139, 15
        %v5177 = vpop.permute.xlu0 %5176
        %5178 = vrot.lane.b32.xlu0 %v5141, 15
        %v5179 = vpop.permute.xlu0 %5178
        %5180 = vrot.lane.b32.xlu0 %v5144, 15
        %v5181 = vpop.permute.xlu0 %5180
        %5182 = vrot.lane.b32.xlu0 %v5146, 15
        %v5183 = vpop.permute.xlu0 %5182
        %5184 = vrot.lane.b32.xlu0 %v5149, 15
        %v5185 = vpop.permute.xlu0 %5184
        %5186 = vrot.lane.b32.xlu0 %v5151, 15
        %v5187 = vpop.permute.xlu0 %5186
        %5188 = vrot.lane.b32.xlu0 %v5154, 15
        %v5189 = vpop.permute.xlu0 %5188
        %5190 = vrot.lane.b32.xlu0 %v5156, 15
        %v5191 = vpop.permute.xlu0 %5190
        %5192 = vrot.lane.b32.xlu0 %v5159, 15
        %v5193 = vpop.permute.xlu0 %5192
        %5194 = vrot.lane.b32.xlu0 %v5161, 15
        %v5195 = vpop.permute.xlu0 %5194
        %5196 = vrot.lane.b32.xlu0 %v5164, 15
        %v5197 = vpop.permute.xlu0 %5196
        %5198 = vrot.lane.b32.xlu0 %v5166, 15
        %v5199 = vpop.permute.xlu0 %5198
        %5200 = vrot.lane.b32.xlu0 %v5169, 15
        %v5201 = vpop.permute.xlu0 %5200
        %5202 = vrot.lane.b32.xlu0 %v5171, 15
        %v5203 = vpop.permute.xlu0 %5202
        %v5236 = vunpack.c.l.b16 %v4340
        %v5237 = vunpack.c.l.b16 %v4341
        %v5238 = vunpack.c.l.b16 %v4342
        %v5239 = vunpack.c.l.b16 %v4343
        %v5240 = vunpack.c.l.b16 %v4344
        %v5241 = vunpack.c.l.b16 %v4345
        %v5242 = vunpack.c.l.b16 %v4346
        %v5243 = vunpack.c.l.b16 %v4347
        %v5244 = vunpack.c.l.b16 %v4348
        %v5245 = vunpack.c.l.b16 %v4349
        %v5246 = vunpack.c.l.b16 %v4350
        %v5247 = vunpack.c.l.b16 %v4351
        %v5248 = vunpack.c.l.b16 %v4352
        %v5249 = vunpack.c.l.b16 %v4353
        %v5250 = vunpack.c.l.b16 %v4354
        %v5251 = vunpack.c.l.b16 %v4355
        %v5252 = vunpack.c.l.b16 %v4356
        %v5253 = vunpack.c.l.b16 %v4357
        %v5254 = vunpack.c.l.b16 %v4358
        %v5255 = vunpack.c.l.b16 %v4359
        %v5256 = vunpack.c.l.b16 %v4360
        %v5257 = vunpack.c.l.b16 %v4361
        %v5258 = vunpack.c.l.b16 %v4362
        %v5259 = vunpack.c.l.b16 %v4363
        %v5260 = vunpack.c.l.b16 %v4364
        %v5261 = vunpack.c.l.b16 %v4365
        %v5262 = vunpack.c.l.b16 %v4366
        %v5263 = vunpack.c.l.b16 %v4367
        %v5264 = vunpack.c.l.b16 %v4368
        %v5265 = vunpack.c.l.b16 %v4369
        %v5266 = vunpack.c.l.b16 %v4370
        %v5267 = vunpack.c.l.b16 %v4371
        %v5268 = vpack.c.b16 %v5237, %v5236
        %v5269 = vpack.c.b16 %v5239, %v5238
        %v5270 = vpack.c.b16 %v5241, %v5240
        %v5271 = vpack.c.b16 %v5243, %v5242
        %v5272 = vpack.c.b16 %v5245, %v5244
        %v5273 = vpack.c.b16 %v5247, %v5246
        %v5274 = vpack.c.b16 %v5249, %v5248
        %v5275 = vpack.c.b16 %v5251, %v5250
        %v5276 = vpack.c.b16 %v5253, %v5252
        %v5277 = vpack.c.b16 %v5255, %v5254
        %v5278 = vpack.c.b16 %v5257, %v5256
        %v5279 = vpack.c.b16 %v5259, %v5258
        %v5280 = vpack.c.b16 %v5261, %v5260
        %v5281 = vpack.c.b16 %v5263, %v5262
        %v5282 = vpack.c.b16 %v5265, %v5264
        %v5283 = vpack.c.b16 %v5267, %v5266
        %5284 = vrot.lane.b32.xlu0 %v5268, 18
        %v5285 = vpop.permute.xlu0 %5284
        %5286 = vrot.lane.b32.xlu0 %v5269, 18
        %v5287 = vpop.permute.xlu0 %5286
        %5288 = vrot.lane.b32.xlu0 %v5270, 18
        %v5289 = vpop.permute.xlu0 %5288
        %5290 = vrot.lane.b32.xlu0 %v5271, 18
        %v5291 = vpop.permute.xlu0 %5290
        %5292 = vrot.lane.b32.xlu0 %v5272, 18
        %v5293 = vpop.permute.xlu0 %5292
        %5294 = vrot.lane.b32.xlu0 %v5273, 18
        %v5295 = vpop.permute.xlu0 %5294
        %5296 = vrot.lane.b32.xlu0 %v5274, 18
        %v5297 = vpop.permute.xlu0 %5296
        %5298 = vrot.lane.b32.xlu0 %v5275, 18
        %v5299 = vpop.permute.xlu0 %5298
        %5300 = vrot.lane.b32.xlu0 %v5276, 18
        %v5301 = vpop.permute.xlu0 %5300
        %5302 = vrot.lane.b32.xlu0 %v5277, 18
        %v5303 = vpop.permute.xlu0 %5302
        %5304 = vrot.lane.b32.xlu0 %v5278, 18
        %v5305 = vpop.permute.xlu0 %5304
        %5306 = vrot.lane.b32.xlu0 %v5279, 18
        %v5307 = vpop.permute.xlu0 %5306
        %5308 = vrot.lane.b32.xlu0 %v5280, 18
        %v5309 = vpop.permute.xlu0 %5308
        %5310 = vrot.lane.b32.xlu0 %v5281, 18
        %v5311 = vpop.permute.xlu0 %5310
        %5312 = vrot.lane.b32.xlu0 %v5282, 18
        %v5313 = vpop.permute.xlu0 %5312
        %5314 = vrot.lane.b32.xlu0 %v5283, 18
        %v5315 = vpop.permute.xlu0 %5314
        %v5324 = vunpack.c.l.b16 %v4372
        %v5325 = vunpack.c.l.b16 %v4373
        %v5326 = vunpack.c.l.b16 %v4374
        %v5327 = vunpack.c.l.b16 %v4375
        %v5328 = vunpack.c.l.b16 %v4376
        %v5329 = vunpack.c.l.b16 %v4377
        %v5330 = vunpack.c.l.b16 %v4378
        %v5331 = vunpack.c.l.b16 %v4379
        %v5332 = vpack.c.b16 %v5324, %v5324
        %v5333 = vpack.c.b16 %v5325, %v5325
        %v5334 = vpack.c.b16 %v5326, %v5326
        %v5335 = vpack.c.b16 %v5327, %v5327
        %v5336 = vpack.c.b16 %v5328, %v5328
        %v5337 = vpack.c.b16 %v5329, %v5329
        %v5338 = vpack.c.b16 %v5330, %v5330
        %v5339 = vpack.c.b16 %v5331, %v5331
        %v5341 = vshrl.u32 %v5268, 16
        %v5343 = vshll.u32 %v5268, 16
        %v5345 = vrot.slane %v5343, 1
        %v5346 = vor.u32 %v5341, %v5345
        %v5348 = vshll.u32 %v5269, 16
        %v5350 = vrot.slane %v5348, 1
        %v5351 = vsel %vm2352, %v5346, %v5350
        %v5352 = vshrl.u32 %v5269, 16
        %v5354 = vor.u32 %v5352, %v5350
        %v5356 = vshll.u32 %v5332, 16
        %v5358 = vrot.slane %v5356, 1
        %v5359 = vsel %vm2352, %v5354, %v5358
        %v5361 = vshrl.u32 %v5270, 16
        %v5363 = vshll.u32 %v5270, 16
        %v5365 = vrot.slane %v5363, 1
        %v5366 = vor.u32 %v5361, %v5365
        %v5368 = vshll.u32 %v5271, 16
        %v5370 = vrot.slane %v5368, 1
        %v5371 = vsel %vm2352, %v5366, %v5370
        %v5372 = vshrl.u32 %v5271, 16
        %v5374 = vor.u32 %v5372, %v5370
        %v5376 = vshll.u32 %v5333, 16
        %v5378 = vrot.slane %v5376, 1
        %v5379 = vsel %vm2352, %v5374, %v5378
        %v5381 = vshrl.u32 %v5272, 16
        %v5383 = vshll.u32 %v5272, 16
        %v5385 = vrot.slane %v5383, 1
        %v5386 = vor.u32 %v5381, %v5385
        %v5388 = vshll.u32 %v5273, 16
        %v5390 = vrot.slane %v5388, 1
        %v5391 = vsel %vm2352, %v5386, %v5390
        %v5392 = vshrl.u32 %v5273, 16
        %v5394 = vor.u32 %v5392, %v5390
        %v5396 = vshll.u32 %v5334, 16
        %v5398 = vrot.slane %v5396, 1
        %v5399 = vsel %vm2352, %v5394, %v5398
        %v5401 = vshrl.u32 %v5274, 16
        %v5403 = vshll.u32 %v5274, 16
        %v5405 = vrot.slane %v5403, 1
        %v5406 = vor.u32 %v5401, %v5405
        %v5408 = vshll.u32 %v5275, 16
        %v5410 = vrot.slane %v5408, 1
        %v5411 = vsel %vm2352, %v5406, %v5410
        %v5412 = vshrl.u32 %v5275, 16
        %v5414 = vor.u32 %v5412, %v5410
        %v5416 = vshll.u32 %v5335, 16
        %v5418 = vrot.slane %v5416, 1
        %v5419 = vsel %vm2352, %v5414, %v5418
        %v5421 = vshrl.u32 %v5276, 16
        %v5423 = vshll.u32 %v5276, 16
        %v5425 = vrot.slane %v5423, 1
        %v5426 = vor.u32 %v5421, %v5425
        %v5428 = vshll.u32 %v5277, 16
        %v5430 = vrot.slane %v5428, 1
        %v5431 = vsel %vm2352, %v5426, %v5430
        %v5432 = vshrl.u32 %v5277, 16
        %v5434 = vor.u32 %v5432, %v5430
        %v5436 = vshll.u32 %v5336, 16
        %v5438 = vrot.slane %v5436, 1
        %v5439 = vsel %vm2352, %v5434, %v5438
        %v5441 = vshrl.u32 %v5278, 16
        %v5443 = vshll.u32 %v5278, 16
        %v5445 = vrot.slane %v5443, 1
        %v5446 = vor.u32 %v5441, %v5445
        %v5448 = vshll.u32 %v5279, 16
        %v5450 = vrot.slane %v5448, 1
        %v5451 = vsel %vm2352, %v5446, %v5450
        %v5452 = vshrl.u32 %v5279, 16
        %v5454 = vor.u32 %v5452, %v5450
        %v5456 = vshll.u32 %v5337, 16
        %v5458 = vrot.slane %v5456, 1
        %v5459 = vsel %vm2352, %v5454, %v5458
        %v5461 = vshrl.u32 %v5280, 16
        %v5463 = vshll.u32 %v5280, 16
        %v5465 = vrot.slane %v5463, 1
        %v5466 = vor.u32 %v5461, %v5465
        %v5468 = vshll.u32 %v5281, 16
        %v5470 = vrot.slane %v5468, 1
        %v5471 = vsel %vm2352, %v5466, %v5470
        %v5472 = vshrl.u32 %v5281, 16
        %v5474 = vor.u32 %v5472, %v5470
        %v5476 = vshll.u32 %v5338, 16
        %v5478 = vrot.slane %v5476, 1
        %v5479 = vsel %vm2352, %v5474, %v5478
        %v5481 = vshrl.u32 %v5282, 16
        %v5483 = vshll.u32 %v5282, 16
        %v5485 = vrot.slane %v5483, 1
        %v5486 = vor.u32 %v5481, %v5485
        %v5488 = vshll.u32 %v5283, 16
        %v5490 = vrot.slane %v5488, 1
        %v5491 = vsel %vm2352, %v5486, %v5490
        %v5492 = vshrl.u32 %v5283, 16
        %v5494 = vor.u32 %v5492, %v5490
        %v5496 = vshll.u32 %v5339, 16
        %v5498 = vrot.slane %v5496, 1
        %v5499 = vsel %vm2352, %v5494, %v5498
        %5500 = vrot.lane.b32.xlu0 %v5351, 21
        %v5501 = vpop.permute.xlu0 %5500
        %5502 = vrot.lane.b32.xlu0 %v5359, 21
        %v5503 = vpop.permute.xlu0 %5502
        %5504 = vrot.lane.b32.xlu0 %v5371, 21
        %v5505 = vpop.permute.xlu0 %5504
        %5506 = vrot.lane.b32.xlu0 %v5379, 21
        %v5507 = vpop.permute.xlu0 %5506
        %5508 = vrot.lane.b32.xlu0 %v5391, 21
        %v5509 = vpop.permute.xlu0 %5508
        %5510 = vrot.lane.b32.xlu0 %v5399, 21
        %v5511 = vpop.permute.xlu0 %5510
        %5512 = vrot.lane.b32.xlu0 %v5411, 21
        %v5513 = vpop.permute.xlu0 %5512
        %5514 = vrot.lane.b32.xlu0 %v5419, 21
        %v5515 = vpop.permute.xlu0 %5514
        %5516 = vrot.lane.b32.xlu0 %v5431, 21
        %v5517 = vpop.permute.xlu0 %5516
        %5518 = vrot.lane.b32.xlu0 %v5439, 21
        %v5519 = vpop.permute.xlu0 %5518
        %5520 = vrot.lane.b32.xlu0 %v5451, 21
        %v5521 = vpop.permute.xlu0 %5520
        %5522 = vrot.lane.b32.xlu0 %v5459, 21
        %v5523 = vpop.permute.xlu0 %5522
        %5524 = vrot.lane.b32.xlu0 %v5471, 21
        %v5525 = vpop.permute.xlu0 %5524
        %5526 = vrot.lane.b32.xlu0 %v5479, 21
        %v5527 = vpop.permute.xlu0 %5526
        %5528 = vrot.lane.b32.xlu0 %v5491, 21
        %v5529 = vpop.permute.xlu0 %5528
        %5530 = vrot.lane.b32.xlu0 %v5499, 21
        %v5531 = vpop.permute.xlu0 %5530
        %v5540 = vunpack.c.l.b16 %v4380
        %v5541 = vunpack.c.l.b16 %v4381
        %v5542 = vunpack.c.l.b16 %v4382
        %v5543 = vunpack.c.l.b16 %v4383
        %v5544 = vunpack.c.l.b16 %v4384
        %v5545 = vunpack.c.l.b16 %v4385
        %v5546 = vunpack.c.l.b16 %v4386
        %v5547 = vunpack.c.l.b16 %v4387
        %v5548 = vpack.c.b16 %v5237, %v5540
        %v5549 = vpack.c.b16 %v5241, %v5541
        %v5550 = vpack.c.b16 %v5245, %v5542
        %v5551 = vpack.c.b16 %v5249, %v5543
        %v5552 = vpack.c.b16 %v5253, %v5544
        %v5553 = vpack.c.b16 %v5257, %v5545
        %v5554 = vpack.c.b16 %v5261, %v5546
        %v5555 = vpack.c.b16 %v5265, %v5547
        %v5556 = vrot.slane %v5548, 1
        %v5557 = vrot.slane %v5269, 1
        %v5558 = vsel %vm2569, %v5556, %v5557
        %v5559 = vrot.slane %v5332, 1
        %v5560 = vsel %vm2569, %v5557, %v5559
        %v5561 = vrot.slane %v5549, 1
        %v5562 = vrot.slane %v5271, 1
        %v5563 = vsel %vm2569, %v5561, %v5562
        %v5564 = vrot.slane %v5333, 1
        %v5565 = vsel %vm2569, %v5562, %v5564
        %v5566 = vrot.slane %v5550, 1
        %v5567 = vrot.slane %v5273, 1
        %v5568 = vsel %vm2569, %v5566, %v5567
        %v5569 = vrot.slane %v5334, 1
        %v5570 = vsel %vm2569, %v5567, %v5569
        %v5571 = vrot.slane %v5551, 1
        %v5572 = vrot.slane %v5275, 1
        %v5573 = vsel %vm2569, %v5571, %v5572
        %v5574 = vrot.slane %v5335, 1
        %v5575 = vsel %vm2569, %v5572, %v5574
        %v5576 = vrot.slane %v5552, 1
        %v5577 = vrot.slane %v5277, 1
        %v5578 = vsel %vm2569, %v5576, %v5577
        %v5579 = vrot.slane %v5336, 1
        %v5580 = vsel %vm2569, %v5577, %v5579
        %v5581 = vrot.slane %v5553, 1
        %v5582 = vrot.slane %v5279, 1
        %v5583 = vsel %vm2569, %v5581, %v5582
        %v5584 = vrot.slane %v5337, 1
        %v5585 = vsel %vm2569, %v5582, %v5584
        %v5586 = vrot.slane %v5554, 1
        %v5587 = vrot.slane %v5281, 1
        %v5588 = vsel %vm2569, %v5586, %v5587
        %v5589 = vrot.slane %v5338, 1
        %v5590 = vsel %vm2569, %v5587, %v5589
        %v5591 = vrot.slane %v5555, 1
        %v5592 = vrot.slane %v5283, 1
        %v5593 = vsel %vm2569, %v5591, %v5592
        %v5594 = vrot.slane %v5339, 1
        %v5595 = vsel %vm2569, %v5592, %v5594
        %5596 = vrot.lane.b32.xlu0 %v5558, 24
        %v5597 = vpop.permute.xlu0 %5596
        %5598 = vrot.lane.b32.xlu0 %v5560, 24
        %v5599 = vpop.permute.xlu0 %5598
        %5600 = vrot.lane.b32.xlu0 %v5563, 24
        %v5601 = vpop.permute.xlu0 %5600
        %5602 = vrot.lane.b32.xlu0 %v5565, 24
        %v5603 = vpop.permute.xlu0 %5602
        %5604 = vrot.lane.b32.xlu0 %v5568, 24
        %v5605 = vpop.permute.xlu0 %5604
        %5606 = vrot.lane.b32.xlu0 %v5570, 24
        %v5607 = vpop.permute.xlu0 %5606
        %5608 = vrot.lane.b32.xlu0 %v5573, 24
        %v5609 = vpop.permute.xlu0 %5608
        %5610 = vrot.lane.b32.xlu0 %v5575, 24
        %v5611 = vpop.permute.xlu0 %5610
        %5612 = vrot.lane.b32.xlu0 %v5578, 24
        %v5613 = vpop.permute.xlu0 %5612
        %5614 = vrot.lane.b32.xlu0 %v5580, 24
        %v5615 = vpop.permute.xlu0 %5614
        %5616 = vrot.lane.b32.xlu0 %v5583, 24
        %v5617 = vpop.permute.xlu0 %5616
        %5618 = vrot.lane.b32.xlu0 %v5585, 24
        %v5619 = vpop.permute.xlu0 %5618
        %5620 = vrot.lane.b32.xlu0 %v5588, 24
        %v5621 = vpop.permute.xlu0 %5620
        %5622 = vrot.lane.b32.xlu0 %v5590, 24
        %v5623 = vpop.permute.xlu0 %5622
        %5624 = vrot.lane.b32.xlu0 %v5593, 24
        %v5625 = vpop.permute.xlu0 %5624
        %5626 = vrot.lane.b32.xlu0 %v5595, 24
        %v5627 = vpop.permute.xlu0 %5626
        %v5629 = vsel %vm3490, %v4452, %v4653
        %v5631 = vsel %vm3490, %v4453, %v4655
        %v5633 = vsel %vm3490, %v4454, %v4657
        %v5635 = vsel %vm3490, %v4455, %v4659
        %v5637 = vsel %vm3490, %v4456, %v4661
        %v5639 = vsel %vm3490, %v4457, %v4663
        %v5641 = vsel %vm3490, %v4458, %v4665
        %v5643 = vsel %vm3490, %v4459, %v4667
        %v5645 = vsel %vm3490, %v4460, %v4669
        %v5647 = vsel %vm3490, %v4461, %v4671
        %v5649 = vsel %vm3490, %v4462, %v4673
        %v5651 = vsel %vm3490, %v4463, %v4675
        %v5653 = vsel %vm3490, %v4464, %v4677
        %v5655 = vsel %vm3490, %v4465, %v4679
        %v5657 = vsel %vm3490, %v4466, %v4681
        %v5659 = vsel %vm3490, %v4467, %v4683
        %v5661 = vsel %vm3523, %v5629, %v4749
        %v5663 = vsel %vm3523, %v5631, %v4751
        %v5665 = vsel %vm3523, %v5633, %v4753
        %v5667 = vsel %vm3523, %v5635, %v4755
        %v5669 = vsel %vm3523, %v5637, %v4757
        %v5671 = vsel %vm3523, %v5639, %v4759
        %v5673 = vsel %vm3523, %v5641, %v4761
        %v5675 = vsel %vm3523, %v5643, %v4763
        %v5677 = vsel %vm3523, %v5645, %v4765
        %v5679 = vsel %vm3523, %v5647, %v4767
        %v5681 = vsel %vm3523, %v5649, %v4769
        %v5683 = vsel %vm3523, %v5651, %v4771
        %v5685 = vsel %vm3523, %v5653, %v4773
        %v5687 = vsel %vm3523, %v5655, %v4775
        %v5689 = vsel %vm3523, %v5657, %v4777
        %v5691 = vsel %vm3523, %v5659, %v4779
        %v5693 = vsel %vm3556, %v5661, %v4861
        %v5695 = vsel %vm3556, %v5663, %v4863
        %v5697 = vsel %vm3556, %v5665, %v4865
        %v5699 = vsel %vm3556, %v5667, %v4867
        %v5701 = vsel %vm3556, %v5669, %v4869
        %v5703 = vsel %vm3556, %v5671, %v4871
        %v5705 = vsel %vm3556, %v5673, %v4873
        %v5707 = vsel %vm3556, %v5675, %v4875
        %v5709 = vsel %vm3556, %v5677, %v4877
        %v5711 = vsel %vm3556, %v5679, %v4879
        %v5713 = vsel %vm3556, %v5681, %v4881
        %v5715 = vsel %vm3556, %v5683, %v4883
        %v5717 = vsel %vm3556, %v5685, %v4885
        %v5719 = vsel %vm3556, %v5687, %v4887
        %v5721 = vsel %vm3556, %v5689, %v4889
        %v5723 = vsel %vm3556, %v5691, %v4891
        %v5725 = vsel %vm3589, %v5693, %v5077
        %v5727 = vsel %vm3589, %v5695, %v5079
        %v5729 = vsel %vm3589, %v5697, %v5081
        %v5731 = vsel %vm3589, %v5699, %v5083
        %v5733 = vsel %vm3589, %v5701, %v5085
        %v5735 = vsel %vm3589, %v5703, %v5087
        %v5737 = vsel %vm3589, %v5705, %v5089
        %v5739 = vsel %vm3589, %v5707, %v5091
        %v5741 = vsel %vm3589, %v5709, %v5093
        %v5743 = vsel %vm3589, %v5711, %v5095
        %v5745 = vsel %vm3589, %v5713, %v5097
        %v5747 = vsel %vm3589, %v5715, %v5099
        %v5749 = vsel %vm3589, %v5717, %v5101
        %v5751 = vsel %vm3589, %v5719, %v5103
        %v5753 = vsel %vm3589, %v5721, %v5105
        %v5755 = vsel %vm3589, %v5723, %v5107
        %v5757 = vsel %vm3622, %v5725, %v5173
        %v5759 = vsel %vm3622, %v5727, %v5175
        %v5761 = vsel %vm3622, %v5729, %v5177
        %v5763 = vsel %vm3622, %v5731, %v5179
        %v5765 = vsel %vm3622, %v5733, %v5181
        %v5767 = vsel %vm3622, %v5735, %v5183
        %v5769 = vsel %vm3622, %v5737, %v5185
        %v5771 = vsel %vm3622, %v5739, %v5187
        %v5773 = vsel %vm3622, %v5741, %v5189
        %v5775 = vsel %vm3622, %v5743, %v5191
        %v5777 = vsel %vm3622, %v5745, %v5193
        %v5779 = vsel %vm3622, %v5747, %v5195
        %v5781 = vsel %vm3622, %v5749, %v5197
        %v5783 = vsel %vm3622, %v5751, %v5199
        %v5785 = vsel %vm3622, %v5753, %v5201
        %v5787 = vsel %vm3622, %v5755, %v5203
        %v5789 = vsel %vm3655, %v5757, %v5285
        %v5791 = vsel %vm3655, %v5759, %v5287
        %v5793 = vsel %vm3655, %v5761, %v5289
        %v5795 = vsel %vm3655, %v5763, %v5291
        %v5797 = vsel %vm3655, %v5765, %v5293
        %v5799 = vsel %vm3655, %v5767, %v5295
        %v5801 = vsel %vm3655, %v5769, %v5297
        %v5803 = vsel %vm3655, %v5771, %v5299
        %v5805 = vsel %vm3655, %v5773, %v5301
        %v5807 = vsel %vm3655, %v5775, %v5303
        %v5809 = vsel %vm3655, %v5777, %v5305
        %v5811 = vsel %vm3655, %v5779, %v5307
        %v5813 = vsel %vm3655, %v5781, %v5309
        %v5815 = vsel %vm3655, %v5783, %v5311
        %v5817 = vsel %vm3655, %v5785, %v5313
        %v5819 = vsel %vm3655, %v5787, %v5315
        %v5821 = vsel %vm3688, %v5789, %v5501
        %v5823 = vsel %vm3688, %v5791, %v5503
        %v5825 = vsel %vm3688, %v5793, %v5505
        %v5827 = vsel %vm3688, %v5795, %v5507
        %v5829 = vsel %vm3688, %v5797, %v5509
        %v5831 = vsel %vm3688, %v5799, %v5511
        %v5833 = vsel %vm3688, %v5801, %v5513
        %v5835 = vsel %vm3688, %v5803, %v5515
        %v5837 = vsel %vm3688, %v5805, %v5517
        %v5839 = vsel %vm3688, %v5807, %v5519
        %v5841 = vsel %vm3688, %v5809, %v5521
        %v5843 = vsel %vm3688, %v5811, %v5523
        %v5845 = vsel %vm3688, %v5813, %v5525
        %v5847 = vsel %vm3688, %v5815, %v5527
        %v5849 = vsel %vm3688, %v5817, %v5529
        %v5851 = vsel %vm3688, %v5819, %v5531
        %v5853 = vsel %vm3721, %v5821, %v5597
        %v5855 = vsel %vm3721, %v5823, %v5599
        %v5857 = vsel %vm3721, %v5825, %v5601
        %v5859 = vsel %vm3721, %v5827, %v5603
        %v5861 = vsel %vm3721, %v5829, %v5605
        %v5863 = vsel %vm3721, %v5831, %v5607
        %v5865 = vsel %vm3721, %v5833, %v5609
        %v5867 = vsel %vm3721, %v5835, %v5611
        %v5869 = vsel %vm3721, %v5837, %v5613
        %v5871 = vsel %vm3721, %v5839, %v5615
        %v5873 = vsel %vm3721, %v5841, %v5617
        %v5875 = vsel %vm3721, %v5843, %v5619
        %v5877 = vsel %vm3721, %v5845, %v5621
        %v5879 = vsel %vm3721, %v5847, %v5623
        %v5881 = vsel %vm3721, %v5849, %v5625
        %v5883 = vsel %vm3721, %v5851, %v5627
        %v5884 = vld [vmem:[%s1] sm:$0x3]
        %v5885 = vld [vmem:[%s1 + $0x2] sm:$0x3]
        %v5886 = vld [vmem:[%s1 + $0x4] sm:$0x3]
        %v5887 = vld [vmem:[%s1 + $0x6] sm:$0x3]
        %v5888 = vld [vmem:[%s1 + $0x8] sm:$0x3]
        %v5889 = vld [vmem:[%s1 + $0xa] sm:$0x3]
        %v5890 = vld [vmem:[%s1 + $0xc] sm:$0x3]
        %v5891 = vld [vmem:[%s1 + $0xe] sm:$0x3]
        %v5892 = vld [vmem:[%s1 + $0x10] sm:$0x3]
        %v5902 = vrot.slane %v5884, 1
        %v5903 = vrot.slane %v5884, 2
        %v5904 = vrot.slane %v5884, 3
        %v5905 = vrot.slane %v5885, 1
        %v5906 = vrot.slane %v5885, 2
        %v5907 = vrot.slane %v5885, 3
        %v5908 = vrot.slane %v5886, 1
        %v5909 = vrot.slane %v5886, 2
        %v5910 = vrot.slane %v5886, 3
        %v5911 = vrot.slane %v5887, 1
        %v5912 = vrot.slane %v5887, 2
        %v5913 = vrot.slane %v5887, 3
        %v5914 = vrot.slane %v5888, 1
        %v5915 = vrot.slane %v5888, 2
        %v5916 = vrot.slane %v5888, 3
        %v5917 = vrot.slane %v5889, 1
        %v5918 = vrot.slane %v5889, 2
        %v5919 = vrot.slane %v5889, 3
        %v5920 = vrot.slane %v5890, 1
        %v5921 = vrot.slane %v5890, 2
        %v5922 = vrot.slane %v5890, 3
        %v5923 = vrot.slane %v5891, 1
        %v5924 = vrot.slane %v5891, 2
        %v5925 = vrot.slane %v5891, 3
        %v5926 = vrot.slane %v5892, 1
        %v5927 = vrot.slane %v5892, 2
        %v5928 = vrot.slane %v5892, 3
        %v5931 = vsel %vm3799, %v5884, %v5902
        %v5934 = vsel %vm3803, %v5903, %v5904
        %v5935 = vsel %vm3807, %v5931, %v5934
        %v5937 = vsel %vm3810, %v5884, %v5902
        %v5938 = vsel %vm3812, %v5903, %v5904
        %v5939 = vsel %vm3814, %v5937, %v5938
        %v5941 = vrot.slane %v5939, 1
        %v5944 = vsel %vm3799, %v5885, %v5905
        %v5947 = vsel %vm3803, %v5906, %v5907
        %v5948 = vsel %vm3807, %v5944, %v5947
        %v5950 = vsel %vm3810, %v5885, %v5905
        %v5951 = vsel %vm3812, %v5906, %v5907
        %v5952 = vsel %vm3814, %v5950, %v5951
        %v5954 = vrot.slane %v5952, 1
        %v5957 = vsel %vm3799, %v5886, %v5908
        %v5960 = vsel %vm3803, %v5909, %v5910
        %v5961 = vsel %vm3807, %v5957, %v5960
        %v5963 = vsel %vm3810, %v5886, %v5908
        %v5964 = vsel %vm3812, %v5909, %v5910
        %v5965 = vsel %vm3814, %v5963, %v5964
        %v5967 = vrot.slane %v5965, 1
        %v5970 = vsel %vm3799, %v5887, %v5911
        %v5973 = vsel %vm3803, %v5912, %v5913
        %v5974 = vsel %vm3807, %v5970, %v5973
        %v5976 = vsel %vm3810, %v5887, %v5911
        %v5977 = vsel %vm3812, %v5912, %v5913
        %v5978 = vsel %vm3814, %v5976, %v5977
        %v5980 = vrot.slane %v5978, 1
        %v5983 = vsel %vm3799, %v5888, %v5914
        %v5986 = vsel %vm3803, %v5915, %v5916
        %v5987 = vsel %vm3807, %v5983, %v5986
        %v5989 = vsel %vm3810, %v5888, %v5914
        %v5990 = vsel %vm3812, %v5915, %v5916
        %v5991 = vsel %vm3814, %v5989, %v5990
        %v5993 = vrot.slane %v5991, 1
        %v5996 = vsel %vm3799, %v5889, %v5917
        %v5999 = vsel %vm3803, %v5918, %v5919
        %v6000 = vsel %vm3807, %v5996, %v5999
        %v6002 = vsel %vm3810, %v5889, %v5917
        %v6003 = vsel %vm3812, %v5918, %v5919
        %v6004 = vsel %vm3814, %v6002, %v6003
        %v6006 = vrot.slane %v6004, 1
        %v6009 = vsel %vm3799, %v5890, %v5920
        %v6012 = vsel %vm3803, %v5921, %v5922
        %v6013 = vsel %vm3807, %v6009, %v6012
        %v6015 = vsel %vm3810, %v5890, %v5920
        %v6016 = vsel %vm3812, %v5921, %v5922
        %v6017 = vsel %vm3814, %v6015, %v6016
        %v6019 = vrot.slane %v6017, 1
        %v6022 = vsel %vm3799, %v5891, %v5923
        %v6025 = vsel %vm3803, %v5924, %v5925
        %v6026 = vsel %vm3807, %v6022, %v6025
        %v6028 = vsel %vm3810, %v5891, %v5923
        %v6029 = vsel %vm3812, %v5924, %v5925
        %v6030 = vsel %vm3814, %v6028, %v6029
        %v6032 = vrot.slane %v6030, 1
        %v6035 = vsel %vm3799, %v5892, %v5926
        %v6038 = vsel %vm3803, %v5927, %v5928
        %v6039 = vsel %vm3807, %v6035, %v6038
        %v6041 = vsel %vm3810, %v5892, %v5926
        %v6042 = vsel %vm3812, %v5927, %v5928
        %v6043 = vsel %vm3814, %v6041, %v6042
        %v6045 = vrot.slane %v6043, 1
        %v6046 = vunpack.i.l.s16 %v5935
        %v6047 = vunpack.i.h.s16 %v5935
        %v6048 = vunpack.i.l.s16 %v5941
        %v6049 = vunpack.i.l.s16 %v5948
        %v6050 = vunpack.i.h.s16 %v5948
        %v6051 = vunpack.i.l.s16 %v5954
        %v6052 = vunpack.i.l.s16 %v5961
        %v6053 = vunpack.i.h.s16 %v5961
        %v6054 = vunpack.i.l.s16 %v5967
        %v6055 = vunpack.i.l.s16 %v5974
        %v6056 = vunpack.i.h.s16 %v5974
        %v6057 = vunpack.i.l.s16 %v5980
        %v6058 = vunpack.i.l.s16 %v5987
        %v6059 = vunpack.i.h.s16 %v5987
        %v6060 = vunpack.i.l.s16 %v5993
        %v6061 = vunpack.i.l.s16 %v6000
        %v6062 = vunpack.i.h.s16 %v6000
        %v6063 = vunpack.i.l.s16 %v6006
        %v6064 = vunpack.i.l.s16 %v6013
        %v6065 = vunpack.i.h.s16 %v6013
        %v6066 = vunpack.i.l.s16 %v6019
        %v6067 = vunpack.i.l.s16 %v6026
        %v6068 = vunpack.i.h.s16 %v6026
        %v6069 = vunpack.i.l.s16 %v6032
        %v6070 = vunpack.i.l.s16 %v6039
        %v6071 = vunpack.i.h.s16 %v6039
        %v6072 = vunpack.i.l.s16 %v6045
        %v6073 = vld [vmem:[%s2] sm:$0x1]
        %v6075 = vperm.slane %v6073, 0
        %v6077 = vpack.i.b16 %v6047, %v6046
        %v6078 = vpack.i.b16 %v6049, %v6048
        %v6079 = vpack.i.b16 %v6051, %v6050
        %v6080 = vpack.i.b16 %v6053, %v6052
        %v6081 = vpack.i.b16 %v6055, %v6054
        %v6082 = vpack.i.b16 %v6057, %v6056
        %v6083 = vpack.i.b16 %v6059, %v6058
        %v6084 = vpack.i.b16 %v6061, %v6060
        %v6085 = vpack.i.b16 %v6063, %v6062
        %v6086 = vpack.i.b16 %v6065, %v6064
        %v6087 = vpack.i.b16 %v6067, %v6066
        %v6088 = vpack.i.b16 %v6069, %v6068
        %v6089 = vpack.i.b16 %v6071, %v6070
        %6092 = vst [vmem:[#allocation1] ss:$9 sm:$0xff] %v6077
        %s6094 = scalar_lea.vmem [#allocation1], 1
        %6095 = vst [vmem:[%s6094] ss:$9 sm:$0xff] %v6078
        %s6097 = scalar_lea.vmem [#allocation1], 2
        %6098 = vst [vmem:[%s6097] ss:$9 sm:$0xff] %v6079
        %s6100 = scalar_lea.vmem [#allocation1], 3
        %6101 = vst [vmem:[%s6100] ss:$9 sm:$0xff] %v6080
        %s6103 = scalar_lea.vmem [#allocation1], 4
        %6104 = vst [vmem:[%s6103] ss:$9 sm:$0xff] %v6081
        %s6106 = scalar_lea.vmem [#allocation1], 5
        %6107 = vst [vmem:[%s6106] ss:$9 sm:$0xff] %v6082
        %s6109 = scalar_lea.vmem [#allocation1], 6
        %6110 = vst [vmem:[%s6109] ss:$9 sm:$0xff] %v6083
        %s6112 = scalar_lea.vmem [#allocation1], 7
        %6113 = vst [vmem:[%s6112] ss:$9 sm:$0xff] %v6084
        %v6114 = vld [vmem:[#allocation1] sm:$0xff]
        %6116 = vst [vmem:[#allocation1] ss:$9 sm:$0xff] %v6085
        %6118 = vst [vmem:[%s6094] ss:$9 sm:$0xff] %v6086
        %6120 = vst [vmem:[%s6097] ss:$9 sm:$0xff] %v6087
        %6122 = vst [vmem:[%s6100] ss:$9 sm:$0xff] %v6088
        %6124 = vst [vmem:[%s6103] ss:$9 sm:$0xff] %v6089
        %6126 = vst [vmem:[%s6106] ss:$9 sm:$0xff] %v6072
        %v6127 = vld [vmem:[#allocation1] sm:$0xff]
        %v6129 = vsel %vm4005, %v5853, 0
        %v6131 = vsel %vm4005, %v5855, 0
        %v6133 = vsel %vm4005, %v5857, 0
        %v6135 = vsel %vm4005, %v5859, 0
        %v6137 = vsel %vm4005, %v5861, 0
        %v6139 = vsel %vm4005, %v5863, 0
        %v6141 = vsel %vm4005, %v5865, 0
        %v6143 = vsel %vm4005, %v5867, 0
        %v6145 = vsel %vm4005, %v5869, 0
        %v6147 = vsel %vm4005, %v5871, 0
        %v6149 = vsel %vm4005, %v5873, 0
        %v6151 = vsel %vm4005, %v5875, 0
        %v6153 = vsel %vm4005, %v5877, 0
        %v6155 = vsel %vm4005, %v5879, 0
        %v6157 = vsel %vm4005, %v5881, 0
        %v6159 = vsel %vm4005, %v5883, 0
        %v6161 = vand.u32 %v6127, %v4041
        %6163 = vmatpush.bf16.msra.mxu0 0
        %6164 = vmatpush.bf16.msra.mxu0 0
        %6165 = vmatpush.bf16.msra.mxu0 0
        %6166 = vmatpush.bf16.msra.mxu0 0
        %6167 = vmatpush.bf16.msra.mxu0 0
        %6168 = vmatpush.bf16.msra.mxu0 0
        %6169 = vmatpush.bf16.msra.mxu0 %v6161
        %6170 = vmatpush.bf16.msra.mxu0 %v6114
        %6171 = vmatmul.bf16.gmra.mxu0 %v6129
        %v6172 = vpop.f32.mrf.mxu0
        %v6173 = vadd.f32 %v6075, %v6172
        %v6174 = vpop.f32.mrf.mxu0
        %v6175 = vadd.f32 %v6075, %v6174
        %6176 = vmatmul.bf16.gmra.mxu0 %v6131
        %v6177 = vpop.f32.mrf.mxu0
        %v6178 = vadd.f32 %v6075, %v6177
        %v6179 = vpop.f32.mrf.mxu0
        %v6180 = vadd.f32 %v6075, %v6179
        %6181 = vmatmul.bf16.gmra.mxu0 %v6133
        %v6182 = vpop.f32.mrf.mxu0
        %v6183 = vadd.f32 %v6075, %v6182
        %v6184 = vpop.f32.mrf.mxu0
        %v6185 = vadd.f32 %v6075, %v6184
        %6186 = vmatmul.bf16.gmra.mxu0 %v6135
        %v6187 = vpop.f32.mrf.mxu0
        %v6188 = vadd.f32 %v6075, %v6187
        %v6189 = vpop.f32.mrf.mxu0
        %v6190 = vadd.f32 %v6075, %v6189
        %6191 = vmatmul.bf16.gmra.mxu0 %v6137
        %v6192 = vpop.f32.mrf.mxu0
        %v6193 = vadd.f32 %v6075, %v6192
        %v6194 = vpop.f32.mrf.mxu0
        %v6195 = vadd.f32 %v6075, %v6194
        %6196 = vmatmul.bf16.gmra.mxu0 %v6139
        %v6197 = vpop.f32.mrf.mxu0
        %v6198 = vadd.f32 %v6075, %v6197
        %v6199 = vpop.f32.mrf.mxu0
        %v6200 = vadd.f32 %v6075, %v6199
        %6201 = vmatmul.bf16.gmra.mxu0 %v6141
        %v6202 = vpop.f32.mrf.mxu0
        %v6203 = vadd.f32 %v6075, %v6202
        %v6204 = vpop.f32.mrf.mxu0
        %v6205 = vadd.f32 %v6075, %v6204
        %6206 = vmatmul.bf16.gmra.mxu0 %v6143
        %v6207 = vpop.f32.mrf.mxu0
        %v6208 = vadd.f32 %v6075, %v6207
        %v6209 = vpop.f32.mrf.mxu0
        %v6210 = vadd.f32 %v6075, %v6209
        %6211 = vmatmul.bf16.gmra.mxu0 %v6145
        %v6212 = vpop.f32.mrf.mxu0
        %v6213 = vadd.f32 %v6075, %v6212
        %v6214 = vpop.f32.mrf.mxu0
        %v6215 = vadd.f32 %v6075, %v6214
        %6216 = vmatmul.bf16.gmra.mxu0 %v6147
        %v6217 = vpop.f32.mrf.mxu0
        %v6218 = vadd.f32 %v6075, %v6217
        %v6219 = vpop.f32.mrf.mxu0
        %v6220 = vadd.f32 %v6075, %v6219
        %6221 = vmatmul.bf16.gmra.mxu0 %v6149
        %v6222 = vpop.f32.mrf.mxu0
        %v6223 = vadd.f32 %v6075, %v6222
        %v6224 = vpop.f32.mrf.mxu0
        %v6225 = vadd.f32 %v6075, %v6224
        %6226 = vmatmul.bf16.gmra.mxu0 %v6151
        %v6227 = vpop.f32.mrf.mxu0
        %v6228 = vadd.f32 %v6075, %v6227
        %v6229 = vpop.f32.mrf.mxu0
        %v6230 = vadd.f32 %v6075, %v6229
        %6231 = vmatmul.bf16.gmra.mxu0 %v6153
        %v6232 = vpop.f32.mrf.mxu0
        %v6233 = vadd.f32 %v6075, %v6232
        %v6234 = vpop.f32.mrf.mxu0
        %v6235 = vadd.f32 %v6075, %v6234
        %6236 = vmatmul.bf16.gmra.mxu0 %v6155
        %v6237 = vpop.f32.mrf.mxu0
        %v6238 = vadd.f32 %v6075, %v6237
        %v6239 = vpop.f32.mrf.mxu0
        %v6240 = vadd.f32 %v6075, %v6239
        %6241 = vmatmul.bf16.gmra.mxu0 %v6157
        %v6242 = vpop.f32.mrf.mxu0
        %v6243 = vadd.f32 %v6075, %v6242
        %v6244 = vpop.f32.mrf.mxu0
        %v6245 = vadd.f32 %v6075, %v6244
        %6246 = vmatmul.bf16.gmra.mxu0 %v6159
        %v6247 = vpop.f32.mrf.mxu0
        %v6248 = vadd.f32 %v6075, %v6247
        %v6249 = vpop.f32.mrf.mxu0
        %v6250 = vadd.f32 %v6075, %v6249
        %6251 = vdwg.mxu0
        %v6252 = vmax.f32 %v6173, 0.0
        %v6253 = vmax.f32 %v6175, 0.0
        %v6254 = vmax.f32 %v6178, 0.0
        %v6255 = vmax.f32 %v6180, 0.0
        %v6256 = vmax.f32 %v6183, 0.0
        %v6257 = vmax.f32 %v6185, 0.0
        %v6258 = vmax.f32 %v6188, 0.0
        %v6259 = vmax.f32 %v6190, 0.0
        %v6260 = vmax.f32 %v6193, 0.0
        %v6261 = vmax.f32 %v6195, 0.0
        %v6262 = vmax.f32 %v6198, 0.0
        %v6263 = vmax.f32 %v6200, 0.0
        %v6264 = vmax.f32 %v6203, 0.0
        %v6265 = vmax.f32 %v6205, 0.0
        %v6266 = vmax.f32 %v6208, 0.0
        %v6267 = vmax.f32 %v6210, 0.0
        %v6268 = vmax.f32 %v6213, 0.0
        %v6269 = vmax.f32 %v6215, 0.0
        %v6270 = vmax.f32 %v6218, 0.0
        %v6271 = vmax.f32 %v6220, 0.0
        %v6272 = vmax.f32 %v6223, 0.0
        %v6273 = vmax.f32 %v6225, 0.0
        %v6274 = vmax.f32 %v6228, 0.0
        %v6275 = vmax.f32 %v6230, 0.0
        %v6276 = vmax.f32 %v6233, 0.0
        %v6277 = vmax.f32 %v6235, 0.0
        %v6278 = vmax.f32 %v6238, 0.0
        %v6279 = vmax.f32 %v6240, 0.0
        %v6280 = vmax.f32 %v6243, 0.0
        %v6281 = vmax.f32 %v6245, 0.0
        %v6282 = vmax.f32 %v6248, 0.0
        %v6283 = vmax.f32 %v6250, 0.0
        %v6284 = vpack.c.bf16 %v6252, %v6252
        %v6285 = vpack.c.bf16 %v6253, %v6253
        %v6286 = vpack.c.bf16 %v6254, %v6254
        %v6287 = vpack.c.bf16 %v6255, %v6255
        %v6288 = vpack.c.bf16 %v6256, %v6256
        %v6289 = vpack.c.bf16 %v6257, %v6257
        %v6290 = vpack.c.bf16 %v6258, %v6258
        %v6291 = vpack.c.bf16 %v6259, %v6259
        %v6292 = vpack.c.bf16 %v6260, %v6260
        %v6293 = vpack.c.bf16 %v6261, %v6261
        %v6294 = vpack.c.bf16 %v6262, %v6262
        %v6295 = vpack.c.bf16 %v6263, %v6263
        %v6296 = vpack.c.bf16 %v6264, %v6264
        %v6297 = vpack.c.bf16 %v6265, %v6265
        %v6298 = vpack.c.bf16 %v6266, %v6266
        %v6299 = vpack.c.bf16 %v6267, %v6267
        %v6300 = vpack.c.bf16 %v6268, %v6268
        %v6301 = vpack.c.bf16 %v6269, %v6269
        %v6302 = vpack.c.bf16 %v6270, %v6270
        %v6303 = vpack.c.bf16 %v6271, %v6271
        %v6304 = vpack.c.bf16 %v6272, %v6272
        %v6305 = vpack.c.bf16 %v6273, %v6273
        %v6306 = vpack.c.bf16 %v6274, %v6274
        %v6307 = vpack.c.bf16 %v6275, %v6275
        %v6308 = vpack.c.bf16 %v6276, %v6276
        %v6309 = vpack.c.bf16 %v6277, %v6277
        %v6310 = vpack.c.bf16 %v6278, %v6278
        %v6311 = vpack.c.bf16 %v6279, %v6279
        %v6312 = vpack.c.bf16 %v6280, %v6280
        %v6313 = vpack.c.bf16 %v6281, %v6281
        %v6314 = vpack.c.bf16 %v6282, %v6282
        %v6315 = vpack.c.bf16 %v6283, %v6283
        %s6316 = smul.u32 8, 4
        %s6317 = smul.addr %s6316, 4
        %s6318 = scalar_lea.vmem %s163, %s6317 [#allocation3]
        %6319 = vst.msk [vmem:[%s6318] sm:$0xf] %vm4200, %v6284
        %6320 = vst.msk [vmem:[%s6318 + $0x4] sm:$0xf] %vm4200, %v6285
        %6321 = vst.msk [vmem:[%s6318 + $0x8] sm:$0xf] %vm4200, %v6286
        %6322 = vst.msk [vmem:[%s6318 + $0xc] sm:$0xf] %vm4200, %v6287
        %6323 = vst.msk [vmem:[%s6318 + $0x10] sm:$0xf] %vm4200, %v6288
        %6324 = vst.msk [vmem:[%s6318 + $0x14] sm:$0xf] %vm4200, %v6289
        %6325 = vst.msk [vmem:[%s6318 + $0x18] sm:$0xf] %vm4200, %v6290
        %6326 = vst.msk [vmem:[%s6318 + $0x1c] sm:$0xf] %vm4200, %v6291
        %6327 = vst.msk [vmem:[%s6318 + $0x20] sm:$0xf] %vm4200, %v6292
        %6328 = vst.msk [vmem:[%s6318 + $0x24] sm:$0xf] %vm4200, %v6293
        %6329 = vst.msk [vmem:[%s6318 + $0x28] sm:$0xf] %vm4200, %v6294
        %6330 = vst.msk [vmem:[%s6318 + $0x2c] sm:$0xf] %vm4200, %v6295
        %6331 = vst.msk [vmem:[%s6318 + $0x30] sm:$0xf] %vm4200, %v6296
        %6332 = vst.msk [vmem:[%s6318 + $0x34] sm:$0xf] %vm4200, %v6297
        %6333 = vst.msk [vmem:[%s6318 + $0x38] sm:$0xf] %vm4200, %v6298
        %6334 = vst.msk [vmem:[%s6318 + $0x3c] sm:$0xf] %vm4200, %v6299
        %6335 = vst.msk [vmem:[%s6318 + $0x40] sm:$0xf] %vm4200, %v6300
        %6336 = vst.msk [vmem:[%s6318 + $0x44] sm:$0xf] %vm4200, %v6301
        %6337 = vst.msk [vmem:[%s6318 + $0x48] sm:$0xf] %vm4200, %v6302
        %6338 = vst.msk [vmem:[%s6318 + $0x4c] sm:$0xf] %vm4200, %v6303
        %6339 = vst.msk [vmem:[%s6318 + $0x50] sm:$0xf] %vm4200, %v6304
        %6340 = vst.msk [vmem:[%s6318 + $0x54] sm:$0xf] %vm4200, %v6305
        %6341 = vst.msk [vmem:[%s6318 + $0x58] sm:$0xf] %vm4200, %v6306
        %6342 = vst.msk [vmem:[%s6318 + $0x5c] sm:$0xf] %vm4200, %v6307
        %6343 = vst.msk [vmem:[%s6318 + $0x60] sm:$0xf] %vm4200, %v6308
        %6344 = vst.msk [vmem:[%s6318 + $0x64] sm:$0xf] %vm4200, %v6309
        %6345 = vst.msk [vmem:[%s6318 + $0x68] sm:$0xf] %vm4200, %v6310
        %6346 = vst.msk [vmem:[%s6318 + $0x6c] sm:$0xf] %vm4200, %v6311
        %6347 = vst.msk [vmem:[%s6318 + $0x70] sm:$0xf] %vm4200, %v6312
        %6348 = vst.msk [vmem:[%s6318 + $0x74] sm:$0xf] %vm4200, %v6313
        %6349 = vst.msk [vmem:[%s6318 + $0x78] sm:$0xf] %vm4200, %v6314
        %6350 = vst.msk [vmem:[%s6318 + $0x7c] sm:$0xf] %vm4200, %v6315
        %s6351 = smul.u32 16, 5
        %s6352 = smul.addr %s6351, 4
        %s6353 = scalar_lea.vmem [#allocation2], %s6352
        %v6354 = vld [vmem:[%s6353] sm:$0xf]
        %v6355 = vld [vmem:[%s6353 + $0x4] sm:$0xf]
        %v6356 = vld [vmem:[%s6353 + $0x8] sm:$0xf]
        %v6357 = vld [vmem:[%s6353 + $0xc] sm:$0xf]
        %v6358 = vld [vmem:[%s6353 + $0x14] sm:$0xf]
        %v6359 = vld [vmem:[%s6353 + $0x18] sm:$0xf]
        %v6360 = vld [vmem:[%s6353 + $0x1c] sm:$0xf]
        %v6361 = vld [vmem:[%s6353 + $0x20] sm:$0xf]
        %v6362 = vld [vmem:[%s6353 + $0x28] sm:$0xf]
        %v6363 = vld [vmem:[%s6353 + $0x2c] sm:$0xf]
        %v6364 = vld [vmem:[%s6353 + $0x30] sm:$0xf]
        %v6365 = vld [vmem:[%s6353 + $0x34] sm:$0xf]
        %v6366 = vld [vmem:[%s6353 + $0x3c] sm:$0xf]
        %v6367 = vld [vmem:[%s6353 + $0x40] sm:$0xf]
        %v6368 = vld [vmem:[%s6353 + $0x44] sm:$0xf]
        %v6369 = vld [vmem:[%s6353 + $0x48] sm:$0xf]
        %v6370 = vld [vmem:[%s6353 + $0x50] sm:$0xf]
        %v6371 = vld [vmem:[%s6353 + $0x54] sm:$0xf]
        %v6372 = vld [vmem:[%s6353 + $0x58] sm:$0xf]
        %v6373 = vld [vmem:[%s6353 + $0x5c] sm:$0xf]
        %v6374 = vld [vmem:[%s6353 + $0x64] sm:$0xf]
        %v6375 = vld [vmem:[%s6353 + $0x68] sm:$0xf]
        %v6376 = vld [vmem:[%s6353 + $0x6c] sm:$0xf]
        %v6377 = vld [vmem:[%s6353 + $0x70] sm:$0xf]
        %v6378 = vld [vmem:[%s6353 + $0x78] sm:$0xf]
        %v6379 = vld [vmem:[%s6353 + $0x7c] sm:$0xf]
        %v6380 = vld [vmem:[%s6353 + $0x80] sm:$0xf]
        %v6381 = vld [vmem:[%s6353 + $0x84] sm:$0xf]
        %v6382 = vld [vmem:[%s6353 + $0x8c] sm:$0xf]
        %v6383 = vld [vmem:[%s6353 + $0x90] sm:$0xf]
        %v6384 = vld [vmem:[%s6353 + $0x94] sm:$0xf]
        %v6385 = vld [vmem:[%s6353 + $0x98] sm:$0xf]
        %v6386 = vld [vmem:[%s6353 + $0x10] sm:$0x1]
        %v6387 = vld [vmem:[%s6353 + $0x24] sm:$0x1]
        %v6388 = vld [vmem:[%s6353 + $0x38] sm:$0x1]
        %v6389 = vld [vmem:[%s6353 + $0x4c] sm:$0x1]
        %v6390 = vld [vmem:[%s6353 + $0x60] sm:$0x1]
        %v6391 = vld [vmem:[%s6353 + $0x74] sm:$0x1]
        %v6392 = vld [vmem:[%s6353 + $0x88] sm:$0x1]
        %v6393 = vld [vmem:[%s6353 + $0x9c] sm:$0x1]
        %v6394 = vld [vmem:[%s6353] sm:$0xe]
        %v6395 = vld [vmem:[%s6353 + $0x14] sm:$0xe]
        %v6396 = vld [vmem:[%s6353 + $0x28] sm:$0xe]
        %v6397 = vld [vmem:[%s6353 + $0x3c] sm:$0xe]
        %v6398 = vld [vmem:[%s6353 + $0x50] sm:$0xe]
        %v6399 = vld [vmem:[%s6353 + $0x64] sm:$0xe]
        %v6400 = vld [vmem:[%s6353 + $0x78] sm:$0xe]
        %v6401 = vld [vmem:[%s6353 + $0x8c] sm:$0xe]
        %s6402 = sadd.s32 16, 1
        %s6403 = smul.u32 %s6402, 5
        %s6404 = smul.addr %s6403, 4
        %s6405 = scalar_lea.vmem [#allocation2], %s6404
        %v6406 = vld [vmem:[%s6405] sm:$0xf]
        %v6407 = vld [vmem:[%s6405 + $0x4] sm:$0xf]
        %v6408 = vld [vmem:[%s6405 + $0x8] sm:$0xf]
        %v6409 = vld [vmem:[%s6405 + $0xc] sm:$0xf]
        %v6410 = vld [vmem:[%s6405 + $0x14] sm:$0xf]
        %v6411 = vld [vmem:[%s6405 + $0x18] sm:$0xf]
        %v6412 = vld [vmem:[%s6405 + $0x1c] sm:$0xf]
        %v6413 = vld [vmem:[%s6405 + $0x20] sm:$0xf]
        %v6414 = vld [vmem:[%s6405 + $0x28] sm:$0xf]
        %v6415 = vld [vmem:[%s6405 + $0x2c] sm:$0xf]
        %v6416 = vld [vmem:[%s6405 + $0x30] sm:$0xf]
        %v6417 = vld [vmem:[%s6405 + $0x34] sm:$0xf]
        %v6418 = vld [vmem:[%s6405 + $0x3c] sm:$0xf]
        %v6419 = vld [vmem:[%s6405 + $0x40] sm:$0xf]
        %v6420 = vld [vmem:[%s6405 + $0x44] sm:$0xf]
        %v6421 = vld [vmem:[%s6405 + $0x48] sm:$0xf]
        %v6422 = vld [vmem:[%s6405 + $0x50] sm:$0xf]
        %v6423 = vld [vmem:[%s6405 + $0x54] sm:$0xf]
        %v6424 = vld [vmem:[%s6405 + $0x58] sm:$0xf]
        %v6425 = vld [vmem:[%s6405 + $0x5c] sm:$0xf]
        %v6426 = vld [vmem:[%s6405 + $0x64] sm:$0xf]
        %v6427 = vld [vmem:[%s6405 + $0x68] sm:$0xf]
        %v6428 = vld [vmem:[%s6405 + $0x6c] sm:$0xf]
        %v6429 = vld [vmem:[%s6405 + $0x70] sm:$0xf]
        %v6430 = vld [vmem:[%s6405 + $0x78] sm:$0xf]
        %v6431 = vld [vmem:[%s6405 + $0x7c] sm:$0xf]
        %v6432 = vld [vmem:[%s6405 + $0x80] sm:$0xf]
        %v6433 = vld [vmem:[%s6405 + $0x84] sm:$0xf]
        %v6434 = vld [vmem:[%s6405 + $0x8c] sm:$0xf]
        %v6435 = vld [vmem:[%s6405 + $0x90] sm:$0xf]
        %v6436 = vld [vmem:[%s6405 + $0x94] sm:$0xf]
        %v6437 = vld [vmem:[%s6405 + $0x98] sm:$0xf]
        %v6438 = vld [vmem:[%s6405 + $0x10] sm:$0x1]
        %v6439 = vld [vmem:[%s6405 + $0x24] sm:$0x1]
        %v6440 = vld [vmem:[%s6405 + $0x38] sm:$0x1]
        %v6441 = vld [vmem:[%s6405 + $0x4c] sm:$0x1]
        %v6442 = vld [vmem:[%s6405 + $0x60] sm:$0x1]
        %v6443 = vld [vmem:[%s6405 + $0x74] sm:$0x1]
        %v6444 = vld [vmem:[%s6405 + $0x88] sm:$0x1]
        %v6445 = vld [vmem:[%s6405 + $0x9c] sm:$0x1]
        %v6446 = vld [vmem:[%s6405] sm:$0xe]
        %v6447 = vld [vmem:[%s6405 + $0x14] sm:$0xe]
        %v6448 = vld [vmem:[%s6405 + $0x28] sm:$0xe]
        %v6449 = vld [vmem:[%s6405 + $0x3c] sm:$0xe]
        %v6450 = vld [vmem:[%s6405 + $0x50] sm:$0xe]
        %v6451 = vld [vmem:[%s6405 + $0x64] sm:$0xe]
        %v6452 = vld [vmem:[%s6405 + $0x78] sm:$0xe]
        %v6453 = vld [vmem:[%s6405 + $0x8c] sm:$0xe]
        %s6454 = sadd.s32 16, 2
        %s6455 = smul.u32 %s6454, 5
        %s6456 = smul.addr %s6455, 4
        %s6457 = scalar_lea.vmem [#allocation2], %s6456
        %v6458 = vld [vmem:[%s6457] sm:$0xf]
        %v6459 = vld [vmem:[%s6457 + $0x4] sm:$0xf]
        %v6460 = vld [vmem:[%s6457 + $0x8] sm:$0xf]
        %v6461 = vld [vmem:[%s6457 + $0xc] sm:$0xf]
        %v6462 = vld [vmem:[%s6457 + $0x14] sm:$0xf]
        %v6463 = vld [vmem:[%s6457 + $0x18] sm:$0xf]
        %v6464 = vld [vmem:[%s6457 + $0x1c] sm:$0xf]
        %v6465 = vld [vmem:[%s6457 + $0x20] sm:$0xf]
        %v6466 = vld [vmem:[%s6457 + $0x28] sm:$0xf]
        %v6467 = vld [vmem:[%s6457 + $0x2c] sm:$0xf]
        %v6468 = vld [vmem:[%s6457 + $0x30] sm:$0xf]
        %v6469 = vld [vmem:[%s6457 + $0x34] sm:$0xf]
        %v6470 = vld [vmem:[%s6457 + $0x3c] sm:$0xf]
        %v6471 = vld [vmem:[%s6457 + $0x40] sm:$0xf]
        %v6472 = vld [vmem:[%s6457 + $0x44] sm:$0xf]
        %v6473 = vld [vmem:[%s6457 + $0x48] sm:$0xf]
        %v6474 = vld [vmem:[%s6457 + $0x50] sm:$0xf]
        %v6475 = vld [vmem:[%s6457 + $0x54] sm:$0xf]
        %v6476 = vld [vmem:[%s6457 + $0x58] sm:$0xf]
        %v6477 = vld [vmem:[%s6457 + $0x5c] sm:$0xf]
        %v6478 = vld [vmem:[%s6457 + $0x64] sm:$0xf]
        %v6479 = vld [vmem:[%s6457 + $0x68] sm:$0xf]
        %v6480 = vld [vmem:[%s6457 + $0x6c] sm:$0xf]
        %v6481 = vld [vmem:[%s6457 + $0x70] sm:$0xf]
        %v6482 = vld [vmem:[%s6457 + $0x78] sm:$0xf]
        %v6483 = vld [vmem:[%s6457 + $0x7c] sm:$0xf]
        %v6484 = vld [vmem:[%s6457 + $0x80] sm:$0xf]
        %v6485 = vld [vmem:[%s6457 + $0x84] sm:$0xf]
        %v6486 = vld [vmem:[%s6457 + $0x8c] sm:$0xf]
        %v6487 = vld [vmem:[%s6457 + $0x90] sm:$0xf]
        %v6488 = vld [vmem:[%s6457 + $0x94] sm:$0xf]
        %v6489 = vld [vmem:[%s6457 + $0x98] sm:$0xf]
        %v6490 = vld [vmem:[%s6457 + $0x10] sm:$0x1]
        %v6491 = vld [vmem:[%s6457 + $0x24] sm:$0x1]
        %v6492 = vld [vmem:[%s6457 + $0x38] sm:$0x1]
        %v6493 = vld [vmem:[%s6457 + $0x4c] sm:$0x1]
        %v6494 = vld [vmem:[%s6457 + $0x60] sm:$0x1]
        %v6495 = vld [vmem:[%s6457 + $0x74] sm:$0x1]
        %v6496 = vld [vmem:[%s6457 + $0x88] sm:$0x1]
        %v6497 = vld [vmem:[%s6457 + $0x9c] sm:$0x1]
        %v6498 = vld [vmem:[%s6457] sm:$0xe]
        %v6499 = vld [vmem:[%s6457 + $0x14] sm:$0xe]
        %v6500 = vld [vmem:[%s6457 + $0x28] sm:$0xe]
        %v6501 = vld [vmem:[%s6457 + $0x3c] sm:$0xe]
        %v6502 = vld [vmem:[%s6457 + $0x50] sm:$0xe]
        %v6503 = vld [vmem:[%s6457 + $0x64] sm:$0xe]
        %v6504 = vld [vmem:[%s6457 + $0x78] sm:$0xe]
        %v6505 = vld [vmem:[%s6457 + $0x8c] sm:$0xe]
        %v6538 = vunpack.c.l.b16 %v6354
        %v6539 = vunpack.c.l.b16 %v6355
        %v6540 = vunpack.c.l.b16 %v6356
        %v6541 = vunpack.c.l.b16 %v6357
        %v6542 = vunpack.c.l.b16 %v6358
        %v6543 = vunpack.c.l.b16 %v6359
        %v6544 = vunpack.c.l.b16 %v6360
        %v6545 = vunpack.c.l.b16 %v6361
        %v6546 = vunpack.c.l.b16 %v6362
        %v6547 = vunpack.c.l.b16 %v6363
        %v6548 = vunpack.c.l.b16 %v6364
        %v6549 = vunpack.c.l.b16 %v6365
        %v6550 = vunpack.c.l.b16 %v6366
        %v6551 = vunpack.c.l.b16 %v6367
        %v6552 = vunpack.c.l.b16 %v6368
        %v6553 = vunpack.c.l.b16 %v6369
        %v6554 = vunpack.c.l.b16 %v6370
        %v6555 = vunpack.c.l.b16 %v6371
        %v6556 = vunpack.c.l.b16 %v6372
        %v6557 = vunpack.c.l.b16 %v6373
        %v6558 = vunpack.c.l.b16 %v6374
        %v6559 = vunpack.c.l.b16 %v6375
        %v6560 = vunpack.c.l.b16 %v6376
        %v6561 = vunpack.c.l.b16 %v6377
        %v6562 = vunpack.c.l.b16 %v6378
        %v6563 = vunpack.c.l.b16 %v6379
        %v6564 = vunpack.c.l.b16 %v6380
        %v6565 = vunpack.c.l.b16 %v6381
        %v6566 = vunpack.c.l.b16 %v6382
        %v6567 = vunpack.c.l.b16 %v6383
        %v6568 = vunpack.c.l.b16 %v6384
        %v6569 = vunpack.c.l.b16 %v6385
        %v6570 = vpack.c.b16 %v6539, %v6538
        %v6571 = vpack.c.b16 %v6541, %v6540
        %v6572 = vpack.c.b16 %v6543, %v6542
        %v6573 = vpack.c.b16 %v6545, %v6544
        %v6574 = vpack.c.b16 %v6547, %v6546
        %v6575 = vpack.c.b16 %v6549, %v6548
        %v6576 = vpack.c.b16 %v6551, %v6550
        %v6577 = vpack.c.b16 %v6553, %v6552
        %v6578 = vpack.c.b16 %v6555, %v6554
        %v6579 = vpack.c.b16 %v6557, %v6556
        %v6580 = vpack.c.b16 %v6559, %v6558
        %v6581 = vpack.c.b16 %v6561, %v6560
        %v6582 = vpack.c.b16 %v6563, %v6562
        %v6583 = vpack.c.b16 %v6565, %v6564
        %v6584 = vpack.c.b16 %v6567, %v6566
        %v6585 = vpack.c.b16 %v6569, %v6568
        %v6594 = vunpack.c.l.b16 %v6386
        %v6595 = vunpack.c.l.b16 %v6387
        %v6596 = vunpack.c.l.b16 %v6388
        %v6597 = vunpack.c.l.b16 %v6389
        %v6598 = vunpack.c.l.b16 %v6390
        %v6599 = vunpack.c.l.b16 %v6391
        %v6600 = vunpack.c.l.b16 %v6392
        %v6601 = vunpack.c.l.b16 %v6393
        %v6602 = vpack.c.b16 %v6594, %v6594
        %v6603 = vpack.c.b16 %v6595, %v6595
        %v6604 = vpack.c.b16 %v6596, %v6596
        %v6605 = vpack.c.b16 %v6597, %v6597
        %v6606 = vpack.c.b16 %v6598, %v6598
        %v6607 = vpack.c.b16 %v6599, %v6599
        %v6608 = vpack.c.b16 %v6600, %v6600
        %v6609 = vpack.c.b16 %v6601, %v6601
        %v6611 = vshrl.u32 %v6570, 16
        %v6613 = vshll.u32 %v6570, 16
        %v6615 = vrot.slane %v6613, 1
        %v6616 = vor.u32 %v6611, %v6615
        %v6618 = vshll.u32 %v6571, 16
        %v6620 = vrot.slane %v6618, 1
        %v6621 = vsel %vm2352, %v6616, %v6620
        %v6622 = vshrl.u32 %v6571, 16
        %v6624 = vor.u32 %v6622, %v6620
        %v6626 = vshll.u32 %v6602, 16
        %v6628 = vrot.slane %v6626, 1
        %v6629 = vsel %vm2352, %v6624, %v6628
        %v6631 = vshrl.u32 %v6572, 16
        %v6633 = vshll.u32 %v6572, 16
        %v6635 = vrot.slane %v6633, 1
        %v6636 = vor.u32 %v6631, %v6635
        %v6638 = vshll.u32 %v6573, 16
        %v6640 = vrot.slane %v6638, 1
        %v6641 = vsel %vm2352, %v6636, %v6640
        %v6642 = vshrl.u32 %v6573, 16
        %v6644 = vor.u32 %v6642, %v6640
        %v6646 = vshll.u32 %v6603, 16
        %v6648 = vrot.slane %v6646, 1
        %v6649 = vsel %vm2352, %v6644, %v6648
        %v6651 = vshrl.u32 %v6574, 16
        %v6653 = vshll.u32 %v6574, 16
        %v6655 = vrot.slane %v6653, 1
        %v6656 = vor.u32 %v6651, %v6655
        %v6658 = vshll.u32 %v6575, 16
        %v6660 = vrot.slane %v6658, 1
        %v6661 = vsel %vm2352, %v6656, %v6660
        %v6662 = vshrl.u32 %v6575, 16
        %v6664 = vor.u32 %v6662, %v6660
        %v6666 = vshll.u32 %v6604, 16
        %v6668 = vrot.slane %v6666, 1
        %v6669 = vsel %vm2352, %v6664, %v6668
        %v6671 = vshrl.u32 %v6576, 16
        %v6673 = vshll.u32 %v6576, 16
        %v6675 = vrot.slane %v6673, 1
        %v6676 = vor.u32 %v6671, %v6675
        %v6678 = vshll.u32 %v6577, 16
        %v6680 = vrot.slane %v6678, 1
        %v6681 = vsel %vm2352, %v6676, %v6680
        %v6682 = vshrl.u32 %v6577, 16
        %v6684 = vor.u32 %v6682, %v6680
        %v6686 = vshll.u32 %v6605, 16
        %v6688 = vrot.slane %v6686, 1
        %v6689 = vsel %vm2352, %v6684, %v6688
        %v6691 = vshrl.u32 %v6578, 16
        %v6693 = vshll.u32 %v6578, 16
        %v6695 = vrot.slane %v6693, 1
        %v6696 = vor.u32 %v6691, %v6695
        %v6698 = vshll.u32 %v6579, 16
        %v6700 = vrot.slane %v6698, 1
        %v6701 = vsel %vm2352, %v6696, %v6700
        %v6702 = vshrl.u32 %v6579, 16
        %v6704 = vor.u32 %v6702, %v6700
        %v6706 = vshll.u32 %v6606, 16
        %v6708 = vrot.slane %v6706, 1
        %v6709 = vsel %vm2352, %v6704, %v6708
        %v6711 = vshrl.u32 %v6580, 16
        %v6713 = vshll.u32 %v6580, 16
        %v6715 = vrot.slane %v6713, 1
        %v6716 = vor.u32 %v6711, %v6715
        %v6718 = vshll.u32 %v6581, 16
        %v6720 = vrot.slane %v6718, 1
        %v6721 = vsel %vm2352, %v6716, %v6720
        %v6722 = vshrl.u32 %v6581, 16
        %v6724 = vor.u32 %v6722, %v6720
        %v6726 = vshll.u32 %v6607, 16
        %v6728 = vrot.slane %v6726, 1
        %v6729 = vsel %vm2352, %v6724, %v6728
        %v6731 = vshrl.u32 %v6582, 16
        %v6733 = vshll.u32 %v6582, 16
        %v6735 = vrot.slane %v6733, 1
        %v6736 = vor.u32 %v6731, %v6735
        %v6738 = vshll.u32 %v6583, 16
        %v6740 = vrot.slane %v6738, 1
        %v6741 = vsel %vm2352, %v6736, %v6740
        %v6742 = vshrl.u32 %v6583, 16
        %v6744 = vor.u32 %v6742, %v6740
        %v6746 = vshll.u32 %v6608, 16
        %v6748 = vrot.slane %v6746, 1
        %v6749 = vsel %vm2352, %v6744, %v6748
        %v6751 = vshrl.u32 %v6584, 16
        %v6753 = vshll.u32 %v6584, 16
        %v6755 = vrot.slane %v6753, 1
        %v6756 = vor.u32 %v6751, %v6755
        %v6758 = vshll.u32 %v6585, 16
        %v6760 = vrot.slane %v6758, 1
        %v6761 = vsel %vm2352, %v6756, %v6760
        %v6762 = vshrl.u32 %v6585, 16
        %v6764 = vor.u32 %v6762, %v6760
        %v6766 = vshll.u32 %v6609, 16
        %v6768 = vrot.slane %v6766, 1
        %v6769 = vsel %vm2352, %v6764, %v6768
        %6770 = vrot.lane.b32.xlu0 %v6621, 3
        %v6771 = vpop.permute.xlu0 %6770
        %6772 = vrot.lane.b32.xlu0 %v6629, 3
        %v6773 = vpop.permute.xlu0 %6772
        %6774 = vrot.lane.b32.xlu0 %v6641, 3
        %v6775 = vpop.permute.xlu0 %6774
        %6776 = vrot.lane.b32.xlu0 %v6649, 3
        %v6777 = vpop.permute.xlu0 %6776
        %6778 = vrot.lane.b32.xlu0 %v6661, 3
        %v6779 = vpop.permute.xlu0 %6778
        %6780 = vrot.lane.b32.xlu0 %v6669, 3
        %v6781 = vpop.permute.xlu0 %6780
        %6782 = vrot.lane.b32.xlu0 %v6681, 3
        %v6783 = vpop.permute.xlu0 %6782
        %6784 = vrot.lane.b32.xlu0 %v6689, 3
        %v6785 = vpop.permute.xlu0 %6784
        %6786 = vrot.lane.b32.xlu0 %v6701, 3
        %v6787 = vpop.permute.xlu0 %6786
        %6788 = vrot.lane.b32.xlu0 %v6709, 3
        %v6789 = vpop.permute.xlu0 %6788
        %6790 = vrot.lane.b32.xlu0 %v6721, 3
        %v6791 = vpop.permute.xlu0 %6790
        %6792 = vrot.lane.b32.xlu0 %v6729, 3
        %v6793 = vpop.permute.xlu0 %6792
        %6794 = vrot.lane.b32.xlu0 %v6741, 3
        %v6795 = vpop.permute.xlu0 %6794
        %6796 = vrot.lane.b32.xlu0 %v6749, 3
        %v6797 = vpop.permute.xlu0 %6796
        %6798 = vrot.lane.b32.xlu0 %v6761, 3
        %v6799 = vpop.permute.xlu0 %6798
        %6800 = vrot.lane.b32.xlu0 %v6769, 3
        %v6801 = vpop.permute.xlu0 %6800
        %v6810 = vunpack.c.l.b16 %v6394
        %v6811 = vunpack.c.l.b16 %v6395
        %v6812 = vunpack.c.l.b16 %v6396
        %v6813 = vunpack.c.l.b16 %v6397
        %v6814 = vunpack.c.l.b16 %v6398
        %v6815 = vunpack.c.l.b16 %v6399
        %v6816 = vunpack.c.l.b16 %v6400
        %v6817 = vunpack.c.l.b16 %v6401
        %v6818 = vpack.c.b16 %v6539, %v6810
        %v6819 = vpack.c.b16 %v6543, %v6811
        %v6820 = vpack.c.b16 %v6547, %v6812
        %v6821 = vpack.c.b16 %v6551, %v6813
        %v6822 = vpack.c.b16 %v6555, %v6814
        %v6823 = vpack.c.b16 %v6559, %v6815
        %v6824 = vpack.c.b16 %v6563, %v6816
        %v6825 = vpack.c.b16 %v6567, %v6817
        %v6826 = vrot.slane %v6818, 1
        %v6827 = vrot.slane %v6571, 1
        %v6828 = vsel %vm2569, %v6826, %v6827
        %v6829 = vrot.slane %v6602, 1
        %v6830 = vsel %vm2569, %v6827, %v6829
        %v6831 = vrot.slane %v6819, 1
        %v6832 = vrot.slane %v6573, 1
        %v6833 = vsel %vm2569, %v6831, %v6832
        %v6834 = vrot.slane %v6603, 1
        %v6835 = vsel %vm2569, %v6832, %v6834
        %v6836 = vrot.slane %v6820, 1
        %v6837 = vrot.slane %v6575, 1
        %v6838 = vsel %vm2569, %v6836, %v6837
        %v6839 = vrot.slane %v6604, 1
        %v6840 = vsel %vm2569, %v6837, %v6839
        %v6841 = vrot.slane %v6821, 1
        %v6842 = vrot.slane %v6577, 1
        %v6843 = vsel %vm2569, %v6841, %v6842
        %v6844 = vrot.slane %v6605, 1
        %v6845 = vsel %vm2569, %v6842, %v6844
        %v6846 = vrot.slane %v6822, 1
        %v6847 = vrot.slane %v6579, 1
        %v6848 = vsel %vm2569, %v6846, %v6847
        %v6849 = vrot.slane %v6606, 1
        %v6850 = vsel %vm2569, %v6847, %v6849
        %v6851 = vrot.slane %v6823, 1
        %v6852 = vrot.slane %v6581, 1
        %v6853 = vsel %vm2569, %v6851, %v6852
        %v6854 = vrot.slane %v6607, 1
        %v6855 = vsel %vm2569, %v6852, %v6854
        %v6856 = vrot.slane %v6824, 1
        %v6857 = vrot.slane %v6583, 1
        %v6858 = vsel %vm2569, %v6856, %v6857
        %v6859 = vrot.slane %v6608, 1
        %v6860 = vsel %vm2569, %v6857, %v6859
        %v6861 = vrot.slane %v6825, 1
        %v6862 = vrot.slane %v6585, 1
        %v6863 = vsel %vm2569, %v6861, %v6862
        %v6864 = vrot.slane %v6609, 1
        %v6865 = vsel %vm2569, %v6862, %v6864
        %6866 = vrot.lane.b32.xlu0 %v6828, 6
        %v6867 = vpop.permute.xlu0 %6866
        %6868 = vrot.lane.b32.xlu0 %v6830, 6
        %v6869 = vpop.permute.xlu0 %6868
        %6870 = vrot.lane.b32.xlu0 %v6833, 6
        %v6871 = vpop.permute.xlu0 %6870
        %6872 = vrot.lane.b32.xlu0 %v6835, 6
        %v6873 = vpop.permute.xlu0 %6872
        %6874 = vrot.lane.b32.xlu0 %v6838, 6
        %v6875 = vpop.permute.xlu0 %6874
        %6876 = vrot.lane.b32.xlu0 %v6840, 6
        %v6877 = vpop.permute.xlu0 %6876
        %6878 = vrot.lane.b32.xlu0 %v6843, 6
        %v6879 = vpop.permute.xlu0 %6878
        %6880 = vrot.lane.b32.xlu0 %v6845, 6
        %v6881 = vpop.permute.xlu0 %6880
        %6882 = vrot.lane.b32.xlu0 %v6848, 6
        %v6883 = vpop.permute.xlu0 %6882
        %6884 = vrot.lane.b32.xlu0 %v6850, 6
        %v6885 = vpop.permute.xlu0 %6884
        %6886 = vrot.lane.b32.xlu0 %v6853, 6
        %v6887 = vpop.permute.xlu0 %6886
        %6888 = vrot.lane.b32.xlu0 %v6855, 6
        %v6889 = vpop.permute.xlu0 %6888
        %6890 = vrot.lane.b32.xlu0 %v6858, 6
        %v6891 = vpop.permute.xlu0 %6890
        %6892 = vrot.lane.b32.xlu0 %v6860, 6
        %v6893 = vpop.permute.xlu0 %6892
        %6894 = vrot.lane.b32.xlu0 %v6863, 6
        %v6895 = vpop.permute.xlu0 %6894
        %6896 = vrot.lane.b32.xlu0 %v6865, 6
        %v6897 = vpop.permute.xlu0 %6896
        %v6930 = vunpack.c.l.b16 %v6406
        %v6931 = vunpack.c.l.b16 %v6407
        %v6932 = vunpack.c.l.b16 %v6408
        %v6933 = vunpack.c.l.b16 %v6409
        %v6934 = vunpack.c.l.b16 %v6410
        %v6935 = vunpack.c.l.b16 %v6411
        %v6936 = vunpack.c.l.b16 %v6412
        %v6937 = vunpack.c.l.b16 %v6413
        %v6938 = vunpack.c.l.b16 %v6414
        %v6939 = vunpack.c.l.b16 %v6415
        %v6940 = vunpack.c.l.b16 %v6416
        %v6941 = vunpack.c.l.b16 %v6417
        %v6942 = vunpack.c.l.b16 %v6418
        %v6943 = vunpack.c.l.b16 %v6419
        %v6944 = vunpack.c.l.b16 %v6420
        %v6945 = vunpack.c.l.b16 %v6421
        %v6946 = vunpack.c.l.b16 %v6422
        %v6947 = vunpack.c.l.b16 %v6423
        %v6948 = vunpack.c.l.b16 %v6424
        %v6949 = vunpack.c.l.b16 %v6425
        %v6950 = vunpack.c.l.b16 %v6426
        %v6951 = vunpack.c.l.b16 %v6427
        %v6952 = vunpack.c.l.b16 %v6428
        %v6953 = vunpack.c.l.b16 %v6429
        %v6954 = vunpack.c.l.b16 %v6430
        %v6955 = vunpack.c.l.b16 %v6431
        %v6956 = vunpack.c.l.b16 %v6432
        %v6957 = vunpack.c.l.b16 %v6433
        %v6958 = vunpack.c.l.b16 %v6434
        %v6959 = vunpack.c.l.b16 %v6435
        %v6960 = vunpack.c.l.b16 %v6436
        %v6961 = vunpack.c.l.b16 %v6437
        %v6962 = vpack.c.b16 %v6931, %v6930
        %v6963 = vpack.c.b16 %v6933, %v6932
        %v6964 = vpack.c.b16 %v6935, %v6934
        %v6965 = vpack.c.b16 %v6937, %v6936
        %v6966 = vpack.c.b16 %v6939, %v6938
        %v6967 = vpack.c.b16 %v6941, %v6940
        %v6968 = vpack.c.b16 %v6943, %v6942
        %v6969 = vpack.c.b16 %v6945, %v6944
        %v6970 = vpack.c.b16 %v6947, %v6946
        %v6971 = vpack.c.b16 %v6949, %v6948
        %v6972 = vpack.c.b16 %v6951, %v6950
        %v6973 = vpack.c.b16 %v6953, %v6952
        %v6974 = vpack.c.b16 %v6955, %v6954
        %v6975 = vpack.c.b16 %v6957, %v6956
        %v6976 = vpack.c.b16 %v6959, %v6958
        %v6977 = vpack.c.b16 %v6961, %v6960
        %6978 = vrot.lane.b32.xlu0 %v6962, 9
        %v6979 = vpop.permute.xlu0 %6978
        %6980 = vrot.lane.b32.xlu0 %v6963, 9
        %v6981 = vpop.permute.xlu0 %6980
        %6982 = vrot.lane.b32.xlu0 %v6964, 9
        %v6983 = vpop.permute.xlu0 %6982
        %6984 = vrot.lane.b32.xlu0 %v6965, 9
        %v6985 = vpop.permute.xlu0 %6984
        %6986 = vrot.lane.b32.xlu0 %v6966, 9
        %v6987 = vpop.permute.xlu0 %6986
        %6988 = vrot.lane.b32.xlu0 %v6967, 9
        %v6989 = vpop.permute.xlu0 %6988
        %6990 = vrot.lane.b32.xlu0 %v6968, 9
        %v6991 = vpop.permute.xlu0 %6990
        %6992 = vrot.lane.b32.xlu0 %v6969, 9
        %v6993 = vpop.permute.xlu0 %6992
        %6994 = vrot.lane.b32.xlu0 %v6970, 9
        %v6995 = vpop.permute.xlu0 %6994
        %6996 = vrot.lane.b32.xlu0 %v6971, 9
        %v6997 = vpop.permute.xlu0 %6996
        %6998 = vrot.lane.b32.xlu0 %v6972, 9
        %v6999 = vpop.permute.xlu0 %6998
        %7000 = vrot.lane.b32.xlu0 %v6973, 9
        %v7001 = vpop.permute.xlu0 %7000
        %7002 = vrot.lane.b32.xlu0 %v6974, 9
        %v7003 = vpop.permute.xlu0 %7002
        %7004 = vrot.lane.b32.xlu0 %v6975, 9
        %v7005 = vpop.permute.xlu0 %7004
        %7006 = vrot.lane.b32.xlu0 %v6976, 9
        %v7007 = vpop.permute.xlu0 %7006
        %7008 = vrot.lane.b32.xlu0 %v6977, 9
        %v7009 = vpop.permute.xlu0 %7008
        %v7018 = vunpack.c.l.b16 %v6438
        %v7019 = vunpack.c.l.b16 %v6439
        %v7020 = vunpack.c.l.b16 %v6440
        %v7021 = vunpack.c.l.b16 %v6441
        %v7022 = vunpack.c.l.b16 %v6442
        %v7023 = vunpack.c.l.b16 %v6443
        %v7024 = vunpack.c.l.b16 %v6444
        %v7025 = vunpack.c.l.b16 %v6445
        %v7026 = vpack.c.b16 %v7018, %v7018
        %v7027 = vpack.c.b16 %v7019, %v7019
        %v7028 = vpack.c.b16 %v7020, %v7020
        %v7029 = vpack.c.b16 %v7021, %v7021
        %v7030 = vpack.c.b16 %v7022, %v7022
        %v7031 = vpack.c.b16 %v7023, %v7023
        %v7032 = vpack.c.b16 %v7024, %v7024
        %v7033 = vpack.c.b16 %v7025, %v7025
        %v7035 = vshrl.u32 %v6962, 16
        %v7037 = vshll.u32 %v6962, 16
        %v7039 = vrot.slane %v7037, 1
        %v7040 = vor.u32 %v7035, %v7039
        %v7042 = vshll.u32 %v6963, 16
        %v7044 = vrot.slane %v7042, 1
        %v7045 = vsel %vm2352, %v7040, %v7044
        %v7046 = vshrl.u32 %v6963, 16
        %v7048 = vor.u32 %v7046, %v7044
        %v7050 = vshll.u32 %v7026, 16
        %v7052 = vrot.slane %v7050, 1
        %v7053 = vsel %vm2352, %v7048, %v7052
        %v7055 = vshrl.u32 %v6964, 16
        %v7057 = vshll.u32 %v6964, 16
        %v7059 = vrot.slane %v7057, 1
        %v7060 = vor.u32 %v7055, %v7059
        %v7062 = vshll.u32 %v6965, 16
        %v7064 = vrot.slane %v7062, 1
        %v7065 = vsel %vm2352, %v7060, %v7064
        %v7066 = vshrl.u32 %v6965, 16
        %v7068 = vor.u32 %v7066, %v7064
        %v7070 = vshll.u32 %v7027, 16
        %v7072 = vrot.slane %v7070, 1
        %v7073 = vsel %vm2352, %v7068, %v7072
        %v7075 = vshrl.u32 %v6966, 16
        %v7077 = vshll.u32 %v6966, 16
        %v7079 = vrot.slane %v7077, 1
        %v7080 = vor.u32 %v7075, %v7079
        %v7082 = vshll.u32 %v6967, 16
        %v7084 = vrot.slane %v7082, 1
        %v7085 = vsel %vm2352, %v7080, %v7084
        %v7086 = vshrl.u32 %v6967, 16
        %v7088 = vor.u32 %v7086, %v7084
        %v7090 = vshll.u32 %v7028, 16
        %v7092 = vrot.slane %v7090, 1
        %v7093 = vsel %vm2352, %v7088, %v7092
        %v7095 = vshrl.u32 %v6968, 16
        %v7097 = vshll.u32 %v6968, 16
        %v7099 = vrot.slane %v7097, 1
        %v7100 = vor.u32 %v7095, %v7099
        %v7102 = vshll.u32 %v6969, 16
        %v7104 = vrot.slane %v7102, 1
        %v7105 = vsel %vm2352, %v7100, %v7104
        %v7106 = vshrl.u32 %v6969, 16
        %v7108 = vor.u32 %v7106, %v7104
        %v7110 = vshll.u32 %v7029, 16
        %v7112 = vrot.slane %v7110, 1
        %v7113 = vsel %vm2352, %v7108, %v7112
        %v7115 = vshrl.u32 %v6970, 16
        %v7117 = vshll.u32 %v6970, 16
        %v7119 = vrot.slane %v7117, 1
        %v7120 = vor.u32 %v7115, %v7119
        %v7122 = vshll.u32 %v6971, 16
        %v7124 = vrot.slane %v7122, 1
        %v7125 = vsel %vm2352, %v7120, %v7124
        %v7126 = vshrl.u32 %v6971, 16
        %v7128 = vor.u32 %v7126, %v7124
        %v7130 = vshll.u32 %v7030, 16
        %v7132 = vrot.slane %v7130, 1
        %v7133 = vsel %vm2352, %v7128, %v7132
        %v7135 = vshrl.u32 %v6972, 16
        %v7137 = vshll.u32 %v6972, 16
        %v7139 = vrot.slane %v7137, 1
        %v7140 = vor.u32 %v7135, %v7139
        %v7142 = vshll.u32 %v6973, 16
        %v7144 = vrot.slane %v7142, 1
        %v7145 = vsel %vm2352, %v7140, %v7144
        %v7146 = vshrl.u32 %v6973, 16
        %v7148 = vor.u32 %v7146, %v7144
        %v7150 = vshll.u32 %v7031, 16
        %v7152 = vrot.slane %v7150, 1
        %v7153 = vsel %vm2352, %v7148, %v7152
        %v7155 = vshrl.u32 %v6974, 16
        %v7157 = vshll.u32 %v6974, 16
        %v7159 = vrot.slane %v7157, 1
        %v7160 = vor.u32 %v7155, %v7159
        %v7162 = vshll.u32 %v6975, 16
        %v7164 = vrot.slane %v7162, 1
        %v7165 = vsel %vm2352, %v7160, %v7164
        %v7166 = vshrl.u32 %v6975, 16
        %v7168 = vor.u32 %v7166, %v7164
        %v7170 = vshll.u32 %v7032, 16
        %v7172 = vrot.slane %v7170, 1
        %v7173 = vsel %vm2352, %v7168, %v7172
        %v7175 = vshrl.u32 %v6976, 16
        %v7177 = vshll.u32 %v6976, 16
        %v7179 = vrot.slane %v7177, 1
        %v7180 = vor.u32 %v7175, %v7179
        %v7182 = vshll.u32 %v6977, 16
        %v7184 = vrot.slane %v7182, 1
        %v7185 = vsel %vm2352, %v7180, %v7184
        %v7186 = vshrl.u32 %v6977, 16
        %v7188 = vor.u32 %v7186, %v7184
        %v7190 = vshll.u32 %v7033, 16
        %v7192 = vrot.slane %v7190, 1
        %v7193 = vsel %vm2352, %v7188, %v7192
        %7194 = vrot.lane.b32.xlu0 %v7045, 12
        %v7195 = vpop.permute.xlu0 %7194
        %7196 = vrot.lane.b32.xlu0 %v7053, 12
        %v7197 = vpop.permute.xlu0 %7196
        %7198 = vrot.lane.b32.xlu0 %v7065, 12
        %v7199 = vpop.permute.xlu0 %7198
        %7200 = vrot.lane.b32.xlu0 %v7073, 12
        %v7201 = vpop.permute.xlu0 %7200
        %7202 = vrot.lane.b32.xlu0 %v7085, 12
        %v7203 = vpop.permute.xlu0 %7202
        %7204 = vrot.lane.b32.xlu0 %v7093, 12
        %v7205 = vpop.permute.xlu0 %7204
        %7206 = vrot.lane.b32.xlu0 %v7105, 12
        %v7207 = vpop.permute.xlu0 %7206
        %7208 = vrot.lane.b32.xlu0 %v7113, 12
        %v7209 = vpop.permute.xlu0 %7208
        %7210 = vrot.lane.b32.xlu0 %v7125, 12
        %v7211 = vpop.permute.xlu0 %7210
        %7212 = vrot.lane.b32.xlu0 %v7133, 12
        %v7213 = vpop.permute.xlu0 %7212
        %7214 = vrot.lane.b32.xlu0 %v7145, 12
        %v7215 = vpop.permute.xlu0 %7214
        %7216 = vrot.lane.b32.xlu0 %v7153, 12
        %v7217 = vpop.permute.xlu0 %7216
        %7218 = vrot.lane.b32.xlu0 %v7165, 12
        %v7219 = vpop.permute.xlu0 %7218
        %7220 = vrot.lane.b32.xlu0 %v7173, 12
        %v7221 = vpop.permute.xlu0 %7220
        %7222 = vrot.lane.b32.xlu0 %v7185, 12
        %v7223 = vpop.permute.xlu0 %7222
        %7224 = vrot.lane.b32.xlu0 %v7193, 12
        %v7225 = vpop.permute.xlu0 %7224
        %v7234 = vunpack.c.l.b16 %v6446
        %v7235 = vunpack.c.l.b16 %v6447
        %v7236 = vunpack.c.l.b16 %v6448
        %v7237 = vunpack.c.l.b16 %v6449
        %v7238 = vunpack.c.l.b16 %v6450
        %v7239 = vunpack.c.l.b16 %v6451
        %v7240 = vunpack.c.l.b16 %v6452
        %v7241 = vunpack.c.l.b16 %v6453
        %v7242 = vpack.c.b16 %v6931, %v7234
        %v7243 = vpack.c.b16 %v6935, %v7235
        %v7244 = vpack.c.b16 %v6939, %v7236
        %v7245 = vpack.c.b16 %v6943, %v7237
        %v7246 = vpack.c.b16 %v6947, %v7238
        %v7247 = vpack.c.b16 %v6951, %v7239
        %v7248 = vpack.c.b16 %v6955, %v7240
        %v7249 = vpack.c.b16 %v6959, %v7241
        %v7250 = vrot.slane %v7242, 1
        %v7251 = vrot.slane %v6963, 1
        %v7252 = vsel %vm2569, %v7250, %v7251
        %v7253 = vrot.slane %v7026, 1
        %v7254 = vsel %vm2569, %v7251, %v7253
        %v7255 = vrot.slane %v7243, 1
        %v7256 = vrot.slane %v6965, 1
        %v7257 = vsel %vm2569, %v7255, %v7256
        %v7258 = vrot.slane %v7027, 1
        %v7259 = vsel %vm2569, %v7256, %v7258
        %v7260 = vrot.slane %v7244, 1
        %v7261 = vrot.slane %v6967, 1
        %v7262 = vsel %vm2569, %v7260, %v7261
        %v7263 = vrot.slane %v7028, 1
        %v7264 = vsel %vm2569, %v7261, %v7263
        %v7265 = vrot.slane %v7245, 1
        %v7266 = vrot.slane %v6969, 1
        %v7267 = vsel %vm2569, %v7265, %v7266
        %v7268 = vrot.slane %v7029, 1
        %v7269 = vsel %vm2569, %v7266, %v7268
        %v7270 = vrot.slane %v7246, 1
        %v7271 = vrot.slane %v6971, 1
        %v7272 = vsel %vm2569, %v7270, %v7271
        %v7273 = vrot.slane %v7030, 1
        %v7274 = vsel %vm2569, %v7271, %v7273
        %v7275 = vrot.slane %v7247, 1
        %v7276 = vrot.slane %v6973, 1
        %v7277 = vsel %vm2569, %v7275, %v7276
        %v7278 = vrot.slane %v7031, 1
        %v7279 = vsel %vm2569, %v7276, %v7278
        %v7280 = vrot.slane %v7248, 1
        %v7281 = vrot.slane %v6975, 1
        %v7282 = vsel %vm2569, %v7280, %v7281
        %v7283 = vrot.slane %v7032, 1
        %v7284 = vsel %vm2569, %v7281, %v7283
        %v7285 = vrot.slane %v7249, 1
        %v7286 = vrot.slane %v6977, 1
        %v7287 = vsel %vm2569, %v7285, %v7286
        %v7288 = vrot.slane %v7033, 1
        %v7289 = vsel %vm2569, %v7286, %v7288
        %7290 = vrot.lane.b32.xlu0 %v7252, 15
        %v7291 = vpop.permute.xlu0 %7290
        %7292 = vrot.lane.b32.xlu0 %v7254, 15
        %v7293 = vpop.permute.xlu0 %7292
        %7294 = vrot.lane.b32.xlu0 %v7257, 15
        %v7295 = vpop.permute.xlu0 %7294
        %7296 = vrot.lane.b32.xlu0 %v7259, 15
        %v7297 = vpop.permute.xlu0 %7296
        %7298 = vrot.lane.b32.xlu0 %v7262, 15
        %v7299 = vpop.permute.xlu0 %7298
        %7300 = vrot.lane.b32.xlu0 %v7264, 15
        %v7301 = vpop.permute.xlu0 %7300
        %7302 = vrot.lane.b32.xlu0 %v7267, 15
        %v7303 = vpop.permute.xlu0 %7302
        %7304 = vrot.lane.b32.xlu0 %v7269, 15
        %v7305 = vpop.permute.xlu0 %7304
        %7306 = vrot.lane.b32.xlu0 %v7272, 15
        %v7307 = vpop.permute.xlu0 %7306
        %7308 = vrot.lane.b32.xlu0 %v7274, 15
        %v7309 = vpop.permute.xlu0 %7308
        %7310 = vrot.lane.b32.xlu0 %v7277, 15
        %v7311 = vpop.permute.xlu0 %7310
        %7312 = vrot.lane.b32.xlu0 %v7279, 15
        %v7313 = vpop.permute.xlu0 %7312
        %7314 = vrot.lane.b32.xlu0 %v7282, 15
        %v7315 = vpop.permute.xlu0 %7314
        %7316 = vrot.lane.b32.xlu0 %v7284, 15
        %v7317 = vpop.permute.xlu0 %7316
        %7318 = vrot.lane.b32.xlu0 %v7287, 15
        %v7319 = vpop.permute.xlu0 %7318
        %7320 = vrot.lane.b32.xlu0 %v7289, 15
        %v7321 = vpop.permute.xlu0 %7320
        %v7354 = vunpack.c.l.b16 %v6458
        %v7355 = vunpack.c.l.b16 %v6459
        %v7356 = vunpack.c.l.b16 %v6460
        %v7357 = vunpack.c.l.b16 %v6461
        %v7358 = vunpack.c.l.b16 %v6462
        %v7359 = vunpack.c.l.b16 %v6463
        %v7360 = vunpack.c.l.b16 %v6464
        %v7361 = vunpack.c.l.b16 %v6465
        %v7362 = vunpack.c.l.b16 %v6466
        %v7363 = vunpack.c.l.b16 %v6467
        %v7364 = vunpack.c.l.b16 %v6468
        %v7365 = vunpack.c.l.b16 %v6469
        %v7366 = vunpack.c.l.b16 %v6470
        %v7367 = vunpack.c.l.b16 %v6471
        %v7368 = vunpack.c.l.b16 %v6472
        %v7369 = vunpack.c.l.b16 %v6473
        %v7370 = vunpack.c.l.b16 %v6474
        %v7371 = vunpack.c.l.b16 %v6475
        %v7372 = vunpack.c.l.b16 %v6476
        %v7373 = vunpack.c.l.b16 %v6477
        %v7374 = vunpack.c.l.b16 %v6478
        %v7375 = vunpack.c.l.b16 %v6479
        %v7376 = vunpack.c.l.b16 %v6480
        %v7377 = vunpack.c.l.b16 %v6481
        %v7378 = vunpack.c.l.b16 %v6482
        %v7379 = vunpack.c.l.b16 %v6483
        %v7380 = vunpack.c.l.b16 %v6484
        %v7381 = vunpack.c.l.b16 %v6485
        %v7382 = vunpack.c.l.b16 %v6486
        %v7383 = vunpack.c.l.b16 %v6487
        %v7384 = vunpack.c.l.b16 %v6488
        %v7385 = vunpack.c.l.b16 %v6489
        %v7386 = vpack.c.b16 %v7355, %v7354
        %v7387 = vpack.c.b16 %v7357, %v7356
        %v7388 = vpack.c.b16 %v7359, %v7358
        %v7389 = vpack.c.b16 %v7361, %v7360
        %v7390 = vpack.c.b16 %v7363, %v7362
        %v7391 = vpack.c.b16 %v7365, %v7364
        %v7392 = vpack.c.b16 %v7367, %v7366
        %v7393 = vpack.c.b16 %v7369, %v7368
        %v7394 = vpack.c.b16 %v7371, %v7370
        %v7395 = vpack.c.b16 %v7373, %v7372
        %v7396 = vpack.c.b16 %v7375, %v7374
        %v7397 = vpack.c.b16 %v7377, %v7376
        %v7398 = vpack.c.b16 %v7379, %v7378
        %v7399 = vpack.c.b16 %v7381, %v7380
        %v7400 = vpack.c.b16 %v7383, %v7382
        %v7401 = vpack.c.b16 %v7385, %v7384
        %7402 = vrot.lane.b32.xlu0 %v7386, 18
        %v7403 = vpop.permute.xlu0 %7402
        %7404 = vrot.lane.b32.xlu0 %v7387, 18
        %v7405 = vpop.permute.xlu0 %7404
        %7406 = vrot.lane.b32.xlu0 %v7388, 18
        %v7407 = vpop.permute.xlu0 %7406
        %7408 = vrot.lane.b32.xlu0 %v7389, 18
        %v7409 = vpop.permute.xlu0 %7408
        %7410 = vrot.lane.b32.xlu0 %v7390, 18
        %v7411 = vpop.permute.xlu0 %7410
        %7412 = vrot.lane.b32.xlu0 %v7391, 18
        %v7413 = vpop.permute.xlu0 %7412
        %7414 = vrot.lane.b32.xlu0 %v7392, 18
        %v7415 = vpop.permute.xlu0 %7414
        %7416 = vrot.lane.b32.xlu0 %v7393, 18
        %v7417 = vpop.permute.xlu0 %7416
        %7418 = vrot.lane.b32.xlu0 %v7394, 18
        %v7419 = vpop.permute.xlu0 %7418
        %7420 = vrot.lane.b32.xlu0 %v7395, 18
        %v7421 = vpop.permute.xlu0 %7420
        %7422 = vrot.lane.b32.xlu0 %v7396, 18
        %v7423 = vpop.permute.xlu0 %7422
        %7424 = vrot.lane.b32.xlu0 %v7397, 18
        %v7425 = vpop.permute.xlu0 %7424
        %7426 = vrot.lane.b32.xlu0 %v7398, 18
        %v7427 = vpop.permute.xlu0 %7426
        %7428 = vrot.lane.b32.xlu0 %v7399, 18
        %v7429 = vpop.permute.xlu0 %7428
        %7430 = vrot.lane.b32.xlu0 %v7400, 18
        %v7431 = vpop.permute.xlu0 %7430
        %7432 = vrot.lane.b32.xlu0 %v7401, 18
        %v7433 = vpop.permute.xlu0 %7432
        %v7442 = vunpack.c.l.b16 %v6490
        %v7443 = vunpack.c.l.b16 %v6491
        %v7444 = vunpack.c.l.b16 %v6492
        %v7445 = vunpack.c.l.b16 %v6493
        %v7446 = vunpack.c.l.b16 %v6494
        %v7447 = vunpack.c.l.b16 %v6495
        %v7448 = vunpack.c.l.b16 %v6496
        %v7449 = vunpack.c.l.b16 %v6497
        %v7450 = vpack.c.b16 %v7442, %v7442
        %v7451 = vpack.c.b16 %v7443, %v7443
        %v7452 = vpack.c.b16 %v7444, %v7444
        %v7453 = vpack.c.b16 %v7445, %v7445
        %v7454 = vpack.c.b16 %v7446, %v7446
        %v7455 = vpack.c.b16 %v7447, %v7447
        %v7456 = vpack.c.b16 %v7448, %v7448
        %v7457 = vpack.c.b16 %v7449, %v7449
        %v7459 = vshrl.u32 %v7386, 16
        %v7461 = vshll.u32 %v7386, 16
        %v7463 = vrot.slane %v7461, 1
        %v7464 = vor.u32 %v7459, %v7463
        %v7466 = vshll.u32 %v7387, 16
        %v7468 = vrot.slane %v7466, 1
        %v7469 = vsel %vm2352, %v7464, %v7468
        %v7470 = vshrl.u32 %v7387, 16
        %v7472 = vor.u32 %v7470, %v7468
        %v7474 = vshll.u32 %v7450, 16
        %v7476 = vrot.slane %v7474, 1
        %v7477 = vsel %vm2352, %v7472, %v7476
        %v7479 = vshrl.u32 %v7388, 16
        %v7481 = vshll.u32 %v7388, 16
        %v7483 = vrot.slane %v7481, 1
        %v7484 = vor.u32 %v7479, %v7483
        %v7486 = vshll.u32 %v7389, 16
        %v7488 = vrot.slane %v7486, 1
        %v7489 = vsel %vm2352, %v7484, %v7488
        %v7490 = vshrl.u32 %v7389, 16
        %v7492 = vor.u32 %v7490, %v7488
        %v7494 = vshll.u32 %v7451, 16
        %v7496 = vrot.slane %v7494, 1
        %v7497 = vsel %vm2352, %v7492, %v7496
        %v7499 = vshrl.u32 %v7390, 16
        %v7501 = vshll.u32 %v7390, 16
        %v7503 = vrot.slane %v7501, 1
        %v7504 = vor.u32 %v7499, %v7503
        %v7506 = vshll.u32 %v7391, 16
        %v7508 = vrot.slane %v7506, 1
        %v7509 = vsel %vm2352, %v7504, %v7508
        %v7510 = vshrl.u32 %v7391, 16
        %v7512 = vor.u32 %v7510, %v7508
        %v7514 = vshll.u32 %v7452, 16
        %v7516 = vrot.slane %v7514, 1
        %v7517 = vsel %vm2352, %v7512, %v7516
        %v7519 = vshrl.u32 %v7392, 16
        %v7521 = vshll.u32 %v7392, 16
        %v7523 = vrot.slane %v7521, 1
        %v7524 = vor.u32 %v7519, %v7523
        %v7526 = vshll.u32 %v7393, 16
        %v7528 = vrot.slane %v7526, 1
        %v7529 = vsel %vm2352, %v7524, %v7528
        %v7530 = vshrl.u32 %v7393, 16
        %v7532 = vor.u32 %v7530, %v7528
        %v7534 = vshll.u32 %v7453, 16
        %v7536 = vrot.slane %v7534, 1
        %v7537 = vsel %vm2352, %v7532, %v7536
        %v7539 = vshrl.u32 %v7394, 16
        %v7541 = vshll.u32 %v7394, 16
        %v7543 = vrot.slane %v7541, 1
        %v7544 = vor.u32 %v7539, %v7543
        %v7546 = vshll.u32 %v7395, 16
        %v7548 = vrot.slane %v7546, 1
        %v7549 = vsel %vm2352, %v7544, %v7548
        %v7550 = vshrl.u32 %v7395, 16
        %v7552 = vor.u32 %v7550, %v7548
        %v7554 = vshll.u32 %v7454, 16
        %v7556 = vrot.slane %v7554, 1
        %v7557 = vsel %vm2352, %v7552, %v7556
        %v7559 = vshrl.u32 %v7396, 16
        %v7561 = vshll.u32 %v7396, 16
        %v7563 = vrot.slane %v7561, 1
        %v7564 = vor.u32 %v7559, %v7563
        %v7566 = vshll.u32 %v7397, 16
        %v7568 = vrot.slane %v7566, 1
        %v7569 = vsel %vm2352, %v7564, %v7568
        %v7570 = vshrl.u32 %v7397, 16
        %v7572 = vor.u32 %v7570, %v7568
        %v7574 = vshll.u32 %v7455, 16
        %v7576 = vrot.slane %v7574, 1
        %v7577 = vsel %vm2352, %v7572, %v7576
        %v7579 = vshrl.u32 %v7398, 16
        %v7581 = vshll.u32 %v7398, 16
        %v7583 = vrot.slane %v7581, 1
        %v7584 = vor.u32 %v7579, %v7583
        %v7586 = vshll.u32 %v7399, 16
        %v7588 = vrot.slane %v7586, 1
        %v7589 = vsel %vm2352, %v7584, %v7588
        %v7590 = vshrl.u32 %v7399, 16
        %v7592 = vor.u32 %v7590, %v7588
        %v7594 = vshll.u32 %v7456, 16
        %v7596 = vrot.slane %v7594, 1
        %v7597 = vsel %vm2352, %v7592, %v7596
        %v7599 = vshrl.u32 %v7400, 16
        %v7601 = vshll.u32 %v7400, 16
        %v7603 = vrot.slane %v7601, 1
        %v7604 = vor.u32 %v7599, %v7603
        %v7606 = vshll.u32 %v7401, 16
        %v7608 = vrot.slane %v7606, 1
        %v7609 = vsel %vm2352, %v7604, %v7608
        %v7610 = vshrl.u32 %v7401, 16
        %v7612 = vor.u32 %v7610, %v7608
        %v7614 = vshll.u32 %v7457, 16
        %v7616 = vrot.slane %v7614, 1
        %v7617 = vsel %vm2352, %v7612, %v7616
        %7618 = vrot.lane.b32.xlu0 %v7469, 21
        %v7619 = vpop.permute.xlu0 %7618
        %7620 = vrot.lane.b32.xlu0 %v7477, 21
        %v7621 = vpop.permute.xlu0 %7620
        %7622 = vrot.lane.b32.xlu0 %v7489, 21
        %v7623 = vpop.permute.xlu0 %7622
        %7624 = vrot.lane.b32.xlu0 %v7497, 21
        %v7625 = vpop.permute.xlu0 %7624
        %7626 = vrot.lane.b32.xlu0 %v7509, 21
        %v7627 = vpop.permute.xlu0 %7626
        %7628 = vrot.lane.b32.xlu0 %v7517, 21
        %v7629 = vpop.permute.xlu0 %7628
        %7630 = vrot.lane.b32.xlu0 %v7529, 21
        %v7631 = vpop.permute.xlu0 %7630
        %7632 = vrot.lane.b32.xlu0 %v7537, 21
        %v7633 = vpop.permute.xlu0 %7632
        %7634 = vrot.lane.b32.xlu0 %v7549, 21
        %v7635 = vpop.permute.xlu0 %7634
        %7636 = vrot.lane.b32.xlu0 %v7557, 21
        %v7637 = vpop.permute.xlu0 %7636
        %7638 = vrot.lane.b32.xlu0 %v7569, 21
        %v7639 = vpop.permute.xlu0 %7638
        %7640 = vrot.lane.b32.xlu0 %v7577, 21
        %v7641 = vpop.permute.xlu0 %7640
        %7642 = vrot.lane.b32.xlu0 %v7589, 21
        %v7643 = vpop.permute.xlu0 %7642
        %7644 = vrot.lane.b32.xlu0 %v7597, 21
        %v7645 = vpop.permute.xlu0 %7644
        %7646 = vrot.lane.b32.xlu0 %v7609, 21
        %v7647 = vpop.permute.xlu0 %7646
        %7648 = vrot.lane.b32.xlu0 %v7617, 21
        %v7649 = vpop.permute.xlu0 %7648
        %v7658 = vunpack.c.l.b16 %v6498
        %v7659 = vunpack.c.l.b16 %v6499
        %v7660 = vunpack.c.l.b16 %v6500
        %v7661 = vunpack.c.l.b16 %v6501
        %v7662 = vunpack.c.l.b16 %v6502
        %v7663 = vunpack.c.l.b16 %v6503
        %v7664 = vunpack.c.l.b16 %v6504
        %v7665 = vunpack.c.l.b16 %v6505
        %v7666 = vpack.c.b16 %v7355, %v7658
        %v7667 = vpack.c.b16 %v7359, %v7659
        %v7668 = vpack.c.b16 %v7363, %v7660
        %v7669 = vpack.c.b16 %v7367, %v7661
        %v7670 = vpack.c.b16 %v7371, %v7662
        %v7671 = vpack.c.b16 %v7375, %v7663
        %v7672 = vpack.c.b16 %v7379, %v7664
        %v7673 = vpack.c.b16 %v7383, %v7665
        %v7674 = vrot.slane %v7666, 1
        %v7675 = vrot.slane %v7387, 1
        %v7676 = vsel %vm2569, %v7674, %v7675
        %v7677 = vrot.slane %v7450, 1
        %v7678 = vsel %vm2569, %v7675, %v7677
        %v7679 = vrot.slane %v7667, 1
        %v7680 = vrot.slane %v7389, 1
        %v7681 = vsel %vm2569, %v7679, %v7680
        %v7682 = vrot.slane %v7451, 1
        %v7683 = vsel %vm2569, %v7680, %v7682
        %v7684 = vrot.slane %v7668, 1
        %v7685 = vrot.slane %v7391, 1
        %v7686 = vsel %vm2569, %v7684, %v7685
        %v7687 = vrot.slane %v7452, 1
        %v7688 = vsel %vm2569, %v7685, %v7687
        %v7689 = vrot.slane %v7669, 1
        %v7690 = vrot.slane %v7393, 1
        %v7691 = vsel %vm2569, %v7689, %v7690
        %v7692 = vrot.slane %v7453, 1
        %v7693 = vsel %vm2569, %v7690, %v7692
        %v7694 = vrot.slane %v7670, 1
        %v7695 = vrot.slane %v7395, 1
        %v7696 = vsel %vm2569, %v7694, %v7695
        %v7697 = vrot.slane %v7454, 1
        %v7698 = vsel %vm2569, %v7695, %v7697
        %v7699 = vrot.slane %v7671, 1
        %v7700 = vrot.slane %v7397, 1
        %v7701 = vsel %vm2569, %v7699, %v7700
        %v7702 = vrot.slane %v7455, 1
        %v7703 = vsel %vm2569, %v7700, %v7702
        %v7704 = vrot.slane %v7672, 1
        %v7705 = vrot.slane %v7399, 1
        %v7706 = vsel %vm2569, %v7704, %v7705
        %v7707 = vrot.slane %v7456, 1
        %v7708 = vsel %vm2569, %v7705, %v7707
        %v7709 = vrot.slane %v7673, 1
        %v7710 = vrot.slane %v7401, 1
        %v7711 = vsel %vm2569, %v7709, %v7710
        %v7712 = vrot.slane %v7457, 1
        %v7713 = vsel %vm2569, %v7710, %v7712
        %7714 = vrot.lane.b32.xlu0 %v7676, 24
        %v7715 = vpop.permute.xlu0 %7714
        %7716 = vrot.lane.b32.xlu0 %v7678, 24
        %v7717 = vpop.permute.xlu0 %7716
        %7718 = vrot.lane.b32.xlu0 %v7681, 24
        %v7719 = vpop.permute.xlu0 %7718
        %7720 = vrot.lane.b32.xlu0 %v7683, 24
        %v7721 = vpop.permute.xlu0 %7720
        %7722 = vrot.lane.b32.xlu0 %v7686, 24
        %v7723 = vpop.permute.xlu0 %7722
        %7724 = vrot.lane.b32.xlu0 %v7688, 24
        %v7725 = vpop.permute.xlu0 %7724
        %7726 = vrot.lane.b32.xlu0 %v7691, 24
        %v7727 = vpop.permute.xlu0 %7726
        %7728 = vrot.lane.b32.xlu0 %v7693, 24
        %v7729 = vpop.permute.xlu0 %7728
        %7730 = vrot.lane.b32.xlu0 %v7696, 24
        %v7731 = vpop.permute.xlu0 %7730
        %7732 = vrot.lane.b32.xlu0 %v7698, 24
        %v7733 = vpop.permute.xlu0 %7732
        %7734 = vrot.lane.b32.xlu0 %v7701, 24
        %v7735 = vpop.permute.xlu0 %7734
        %7736 = vrot.lane.b32.xlu0 %v7703, 24
        %v7737 = vpop.permute.xlu0 %7736
        %7738 = vrot.lane.b32.xlu0 %v7706, 24
        %v7739 = vpop.permute.xlu0 %7738
        %7740 = vrot.lane.b32.xlu0 %v7708, 24
        %v7741 = vpop.permute.xlu0 %7740
        %7742 = vrot.lane.b32.xlu0 %v7711, 24
        %v7743 = vpop.permute.xlu0 %7742
        %7744 = vrot.lane.b32.xlu0 %v7713, 24
        %v7745 = vpop.permute.xlu0 %7744
        %v7747 = vsel %vm3490, %v6570, %v6771
        %v7749 = vsel %vm3490, %v6571, %v6773
        %v7751 = vsel %vm3490, %v6572, %v6775
        %v7753 = vsel %vm3490, %v6573, %v6777
        %v7755 = vsel %vm3490, %v6574, %v6779
        %v7757 = vsel %vm3490, %v6575, %v6781
        %v7759 = vsel %vm3490, %v6576, %v6783
        %v7761 = vsel %vm3490, %v6577, %v6785
        %v7763 = vsel %vm3490, %v6578, %v6787
        %v7765 = vsel %vm3490, %v6579, %v6789
        %v7767 = vsel %vm3490, %v6580, %v6791
        %v7769 = vsel %vm3490, %v6581, %v6793
        %v7771 = vsel %vm3490, %v6582, %v6795
        %v7773 = vsel %vm3490, %v6583, %v6797
        %v7775 = vsel %vm3490, %v6584, %v6799
        %v7777 = vsel %vm3490, %v6585, %v6801
        %v7779 = vsel %vm3523, %v7747, %v6867
        %v7781 = vsel %vm3523, %v7749, %v6869
        %v7783 = vsel %vm3523, %v7751, %v6871
        %v7785 = vsel %vm3523, %v7753, %v6873
        %v7787 = vsel %vm3523, %v7755, %v6875
        %v7789 = vsel %vm3523, %v7757, %v6877
        %v7791 = vsel %vm3523, %v7759, %v6879
        %v7793 = vsel %vm3523, %v7761, %v6881
        %v7795 = vsel %vm3523, %v7763, %v6883
        %v7797 = vsel %vm3523, %v7765, %v6885
        %v7799 = vsel %vm3523, %v7767, %v6887
        %v7801 = vsel %vm3523, %v7769, %v6889
        %v7803 = vsel %vm3523, %v7771, %v6891
        %v7805 = vsel %vm3523, %v7773, %v6893
        %v7807 = vsel %vm3523, %v7775, %v6895
        %v7809 = vsel %vm3523, %v7777, %v6897
        %v7811 = vsel %vm3556, %v7779, %v6979
        %v7813 = vsel %vm3556, %v7781, %v6981
        %v7815 = vsel %vm3556, %v7783, %v6983
        %v7817 = vsel %vm3556, %v7785, %v6985
        %v7819 = vsel %vm3556, %v7787, %v6987
        %v7821 = vsel %vm3556, %v7789, %v6989
        %v7823 = vsel %vm3556, %v7791, %v6991
        %v7825 = vsel %vm3556, %v7793, %v6993
        %v7827 = vsel %vm3556, %v7795, %v6995
        %v7829 = vsel %vm3556, %v7797, %v6997
        %v7831 = vsel %vm3556, %v7799, %v6999
        %v7833 = vsel %vm3556, %v7801, %v7001
        %v7835 = vsel %vm3556, %v7803, %v7003
        %v7837 = vsel %vm3556, %v7805, %v7005
        %v7839 = vsel %vm3556, %v7807, %v7007
        %v7841 = vsel %vm3556, %v7809, %v7009
        %v7843 = vsel %vm3589, %v7811, %v7195
        %v7845 = vsel %vm3589, %v7813, %v7197
        %v7847 = vsel %vm3589, %v7815, %v7199
        %v7849 = vsel %vm3589, %v7817, %v7201
        %v7851 = vsel %vm3589, %v7819, %v7203
        %v7853 = vsel %vm3589, %v7821, %v7205
        %v7855 = vsel %vm3589, %v7823, %v7207
        %v7857 = vsel %vm3589, %v7825, %v7209
        %v7859 = vsel %vm3589, %v7827, %v7211
        %v7861 = vsel %vm3589, %v7829, %v7213
        %v7863 = vsel %vm3589, %v7831, %v7215
        %v7865 = vsel %vm3589, %v7833, %v7217
        %v7867 = vsel %vm3589, %v7835, %v7219
        %v7869 = vsel %vm3589, %v7837, %v7221
        %v7871 = vsel %vm3589, %v7839, %v7223
        %v7873 = vsel %vm3589, %v7841, %v7225
        %v7875 = vsel %vm3622, %v7843, %v7291
        %v7877 = vsel %vm3622, %v7845, %v7293
        %v7879 = vsel %vm3622, %v7847, %v7295
        %v7881 = vsel %vm3622, %v7849, %v7297
        %v7883 = vsel %vm3622, %v7851, %v7299
        %v7885 = vsel %vm3622, %v7853, %v7301
        %v7887 = vsel %vm3622, %v7855, %v7303
        %v7889 = vsel %vm3622, %v7857, %v7305
        %v7891 = vsel %vm3622, %v7859, %v7307
        %v7893 = vsel %vm3622, %v7861, %v7309
        %v7895 = vsel %vm3622, %v7863, %v7311
        %v7897 = vsel %vm3622, %v7865, %v7313
        %v7899 = vsel %vm3622, %v7867, %v7315
        %v7901 = vsel %vm3622, %v7869, %v7317
        %v7903 = vsel %vm3622, %v7871, %v7319
        %v7905 = vsel %vm3622, %v7873, %v7321
        %v7907 = vsel %vm3655, %v7875, %v7403
        %v7909 = vsel %vm3655, %v7877, %v7405
        %v7911 = vsel %vm3655, %v7879, %v7407
        %v7913 = vsel %vm3655, %v7881, %v7409
        %v7915 = vsel %vm3655, %v7883, %v7411
        %v7917 = vsel %vm3655, %v7885, %v7413
        %v7919 = vsel %vm3655, %v7887, %v7415
        %v7921 = vsel %vm3655, %v7889, %v7417
        %v7923 = vsel %vm3655, %v7891, %v7419
        %v7925 = vsel %vm3655, %v7893, %v7421
        %v7927 = vsel %vm3655, %v7895, %v7423
        %v7929 = vsel %vm3655, %v7897, %v7425
        %v7931 = vsel %vm3655, %v7899, %v7427
        %v7933 = vsel %vm3655, %v7901, %v7429
        %v7935 = vsel %vm3655, %v7903, %v7431
        %v7937 = vsel %vm3655, %v7905, %v7433
        %v7939 = vsel %vm3688, %v7907, %v7619
        %v7941 = vsel %vm3688, %v7909, %v7621
        %v7943 = vsel %vm3688, %v7911, %v7623
        %v7945 = vsel %vm3688, %v7913, %v7625
        %v7947 = vsel %vm3688, %v7915, %v7627
        %v7949 = vsel %vm3688, %v7917, %v7629
        %v7951 = vsel %vm3688, %v7919, %v7631
        %v7953 = vsel %vm3688, %v7921, %v7633
        %v7955 = vsel %vm3688, %v7923, %v7635
        %v7957 = vsel %vm3688, %v7925, %v7637
        %v7959 = vsel %vm3688, %v7927, %v7639
        %v7961 = vsel %vm3688, %v7929, %v7641
        %v7963 = vsel %vm3688, %v7931, %v7643
        %v7965 = vsel %vm3688, %v7933, %v7645
        %v7967 = vsel %vm3688, %v7935, %v7647
        %v7969 = vsel %vm3688, %v7937, %v7649
        %v7971 = vsel %vm3721, %v7939, %v7715
        %v7973 = vsel %vm3721, %v7941, %v7717
        %v7975 = vsel %vm3721, %v7943, %v7719
        %v7977 = vsel %vm3721, %v7945, %v7721
        %v7979 = vsel %vm3721, %v7947, %v7723
        %v7981 = vsel %vm3721, %v7949, %v7725
        %v7983 = vsel %vm3721, %v7951, %v7727
        %v7985 = vsel %vm3721, %v7953, %v7729
        %v7987 = vsel %vm3721, %v7955, %v7731
        %v7989 = vsel %vm3721, %v7957, %v7733
        %v7991 = vsel %vm3721, %v7959, %v7735
        %v7993 = vsel %vm3721, %v7961, %v7737
        %v7995 = vsel %vm3721, %v7963, %v7739
        %v7997 = vsel %vm3721, %v7965, %v7741
        %v7999 = vsel %vm3721, %v7967, %v7743
        %v8001 = vsel %vm3721, %v7969, %v7745
        %v8002 = vld [vmem:[%s1] sm:$0x3]
        %v8003 = vld [vmem:[%s1 + $0x2] sm:$0x3]
        %v8004 = vld [vmem:[%s1 + $0x4] sm:$0x3]
        %v8005 = vld [vmem:[%s1 + $0x6] sm:$0x3]
        %v8006 = vld [vmem:[%s1 + $0x8] sm:$0x3]
        %v8007 = vld [vmem:[%s1 + $0xa] sm:$0x3]
        %v8008 = vld [vmem:[%s1 + $0xc] sm:$0x3]
        %v8009 = vld [vmem:[%s1 + $0xe] sm:$0x3]
        %v8010 = vld [vmem:[%s1 + $0x10] sm:$0x3]
        %v8020 = vrot.slane %v8002, 1
        %v8021 = vrot.slane %v8002, 2
        %v8022 = vrot.slane %v8002, 3
        %v8023 = vrot.slane %v8003, 1
        %v8024 = vrot.slane %v8003, 2
        %v8025 = vrot.slane %v8003, 3
        %v8026 = vrot.slane %v8004, 1
        %v8027 = vrot.slane %v8004, 2
        %v8028 = vrot.slane %v8004, 3
        %v8029 = vrot.slane %v8005, 1
        %v8030 = vrot.slane %v8005, 2
        %v8031 = vrot.slane %v8005, 3
        %v8032 = vrot.slane %v8006, 1
        %v8033 = vrot.slane %v8006, 2
        %v8034 = vrot.slane %v8006, 3
        %v8035 = vrot.slane %v8007, 1
        %v8036 = vrot.slane %v8007, 2
        %v8037 = vrot.slane %v8007, 3
        %v8038 = vrot.slane %v8008, 1
        %v8039 = vrot.slane %v8008, 2
        %v8040 = vrot.slane %v8008, 3
        %v8041 = vrot.slane %v8009, 1
        %v8042 = vrot.slane %v8009, 2
        %v8043 = vrot.slane %v8009, 3
        %v8044 = vrot.slane %v8010, 1
        %v8045 = vrot.slane %v8010, 2
        %v8046 = vrot.slane %v8010, 3
        %v8049 = vsel %vm3799, %v8002, %v8020
        %v8052 = vsel %vm3803, %v8021, %v8022
        %v8053 = vsel %vm3807, %v8049, %v8052
        %v8055 = vsel %vm3810, %v8002, %v8020
        %v8056 = vsel %vm3812, %v8021, %v8022
        %v8057 = vsel %vm3814, %v8055, %v8056
        %v8059 = vrot.slane %v8057, 1
        %v8062 = vsel %vm3799, %v8003, %v8023
        %v8065 = vsel %vm3803, %v8024, %v8025
        %v8066 = vsel %vm3807, %v8062, %v8065
        %v8068 = vsel %vm3810, %v8003, %v8023
        %v8069 = vsel %vm3812, %v8024, %v8025
        %v8070 = vsel %vm3814, %v8068, %v8069
        %v8072 = vrot.slane %v8070, 1
        %v8075 = vsel %vm3799, %v8004, %v8026
        %v8078 = vsel %vm3803, %v8027, %v8028
        %v8079 = vsel %vm3807, %v8075, %v8078
        %v8081 = vsel %vm3810, %v8004, %v8026
        %v8082 = vsel %vm3812, %v8027, %v8028
        %v8083 = vsel %vm3814, %v8081, %v8082
        %v8085 = vrot.slane %v8083, 1
        %v8088 = vsel %vm3799, %v8005, %v8029
        %v8091 = vsel %vm3803, %v8030, %v8031
        %v8092 = vsel %vm3807, %v8088, %v8091
        %v8094 = vsel %vm3810, %v8005, %v8029
        %v8095 = vsel %vm3812, %v8030, %v8031
        %v8096 = vsel %vm3814, %v8094, %v8095
        %v8098 = vrot.slane %v8096, 1
        %v8101 = vsel %vm3799, %v8006, %v8032
        %v8104 = vsel %vm3803, %v8033, %v8034
        %v8105 = vsel %vm3807, %v8101, %v8104
        %v8107 = vsel %vm3810, %v8006, %v8032
        %v8108 = vsel %vm3812, %v8033, %v8034
        %v8109 = vsel %vm3814, %v8107, %v8108
        %v8111 = vrot.slane %v8109, 1
        %v8114 = vsel %vm3799, %v8007, %v8035
        %v8117 = vsel %vm3803, %v8036, %v8037
        %v8118 = vsel %vm3807, %v8114, %v8117
        %v8120 = vsel %vm3810, %v8007, %v8035
        %v8121 = vsel %vm3812, %v8036, %v8037
        %v8122 = vsel %vm3814, %v8120, %v8121
        %v8124 = vrot.slane %v8122, 1
        %v8127 = vsel %vm3799, %v8008, %v8038
        %v8130 = vsel %vm3803, %v8039, %v8040
        %v8131 = vsel %vm3807, %v8127, %v8130
        %v8133 = vsel %vm3810, %v8008, %v8038
        %v8134 = vsel %vm3812, %v8039, %v8040
        %v8135 = vsel %vm3814, %v8133, %v8134
        %v8137 = vrot.slane %v8135, 1
        %v8140 = vsel %vm3799, %v8009, %v8041
        %v8143 = vsel %vm3803, %v8042, %v8043
        %v8144 = vsel %vm3807, %v8140, %v8143
        %v8146 = vsel %vm3810, %v8009, %v8041
        %v8147 = vsel %vm3812, %v8042, %v8043
        %v8148 = vsel %vm3814, %v8146, %v8147
        %v8150 = vrot.slane %v8148, 1
        %v8153 = vsel %vm3799, %v8010, %v8044
        %v8156 = vsel %vm3803, %v8045, %v8046
        %v8157 = vsel %vm3807, %v8153, %v8156
        %v8159 = vsel %vm3810, %v8010, %v8044
        %v8160 = vsel %vm3812, %v8045, %v8046
        %v8161 = vsel %vm3814, %v8159, %v8160
        %v8163 = vrot.slane %v8161, 1
        %v8164 = vunpack.i.l.s16 %v8053
        %v8165 = vunpack.i.h.s16 %v8053
        %v8166 = vunpack.i.l.s16 %v8059
        %v8167 = vunpack.i.l.s16 %v8066
        %v8168 = vunpack.i.h.s16 %v8066
        %v8169 = vunpack.i.l.s16 %v8072
        %v8170 = vunpack.i.l.s16 %v8079
        %v8171 = vunpack.i.h.s16 %v8079
        %v8172 = vunpack.i.l.s16 %v8085
        %v8173 = vunpack.i.l.s16 %v8092
        %v8174 = vunpack.i.h.s16 %v8092
        %v8175 = vunpack.i.l.s16 %v8098
        %v8176 = vunpack.i.l.s16 %v8105
        %v8177 = vunpack.i.h.s16 %v8105
        %v8178 = vunpack.i.l.s16 %v8111
        %v8179 = vunpack.i.l.s16 %v8118
        %v8180 = vunpack.i.h.s16 %v8118
        %v8181 = vunpack.i.l.s16 %v8124
        %v8182 = vunpack.i.l.s16 %v8131
        %v8183 = vunpack.i.h.s16 %v8131
        %v8184 = vunpack.i.l.s16 %v8137
        %v8185 = vunpack.i.l.s16 %v8144
        %v8186 = vunpack.i.h.s16 %v8144
        %v8187 = vunpack.i.l.s16 %v8150
        %v8188 = vunpack.i.l.s16 %v8157
        %v8189 = vunpack.i.h.s16 %v8157
        %v8190 = vunpack.i.l.s16 %v8163
        %v8191 = vld [vmem:[%s2] sm:$0x1]
        %v8193 = vperm.slane %v8191, 0
        %v8195 = vpack.i.b16 %v8165, %v8164
        %v8196 = vpack.i.b16 %v8167, %v8166
        %v8197 = vpack.i.b16 %v8169, %v8168
        %v8198 = vpack.i.b16 %v8171, %v8170
        %v8199 = vpack.i.b16 %v8173, %v8172
        %v8200 = vpack.i.b16 %v8175, %v8174
        %v8201 = vpack.i.b16 %v8177, %v8176
        %v8202 = vpack.i.b16 %v8179, %v8178
        %v8203 = vpack.i.b16 %v8181, %v8180
        %v8204 = vpack.i.b16 %v8183, %v8182
        %v8205 = vpack.i.b16 %v8185, %v8184
        %v8206 = vpack.i.b16 %v8187, %v8186
        %v8207 = vpack.i.b16 %v8189, %v8188
        %8210 = vst [vmem:[#allocation1] ss:$9 sm:$0xff] %v8195
        %s8212 = scalar_lea.vmem [#allocation1], 1
        %8213 = vst [vmem:[%s8212] ss:$9 sm:$0xff] %v8196
        %s8215 = scalar_lea.vmem [#allocation1], 2
        %8216 = vst [vmem:[%s8215] ss:$9 sm:$0xff] %v8197
        %s8218 = scalar_lea.vmem [#allocation1], 3
        %8219 = vst [vmem:[%s8218] ss:$9 sm:$0xff] %v8198
        %s8221 = scalar_lea.vmem [#allocation1], 4
        %8222 = vst [vmem:[%s8221] ss:$9 sm:$0xff] %v8199
        %s8224 = scalar_lea.vmem [#allocation1], 5
        %8225 = vst [vmem:[%s8224] ss:$9 sm:$0xff] %v8200
        %s8227 = scalar_lea.vmem [#allocation1], 6
        %8228 = vst [vmem:[%s8227] ss:$9 sm:$0xff] %v8201
        %s8230 = scalar_lea.vmem [#allocation1], 7
        %8231 = vst [vmem:[%s8230] ss:$9 sm:$0xff] %v8202
        %v8232 = vld [vmem:[#allocation1] sm:$0xff]
        %8234 = vst [vmem:[#allocation1] ss:$9 sm:$0xff] %v8203
        %8236 = vst [vmem:[%s8212] ss:$9 sm:$0xff] %v8204
        %8238 = vst [vmem:[%s8215] ss:$9 sm:$0xff] %v8205
        %8240 = vst [vmem:[%s8218] ss:$9 sm:$0xff] %v8206
        %8242 = vst [vmem:[%s8221] ss:$9 sm:$0xff] %v8207
        %8244 = vst [vmem:[%s8224] ss:$9 sm:$0xff] %v8190
        %v8245 = vld [vmem:[#allocation1] sm:$0xff]
        %v8247 = vsel %vm4005, %v7971, 0
        %v8249 = vsel %vm4005, %v7973, 0
        %v8251 = vsel %vm4005, %v7975, 0
        %v8253 = vsel %vm4005, %v7977, 0
        %v8255 = vsel %vm4005, %v7979, 0
        %v8257 = vsel %vm4005, %v7981, 0
        %v8259 = vsel %vm4005, %v7983, 0
        %v8261 = vsel %vm4005, %v7985, 0
        %v8263 = vsel %vm4005, %v7987, 0
        %v8265 = vsel %vm4005, %v7989, 0
        %v8267 = vsel %vm4005, %v7991, 0
        %v8269 = vsel %vm4005, %v7993, 0
        %v8271 = vsel %vm4005, %v7995, 0
        %v8273 = vsel %vm4005, %v7997, 0
        %v8275 = vsel %vm4005, %v7999, 0
        %v8277 = vsel %vm4005, %v8001, 0
        %v8279 = vand.u32 %v8245, %v4041
        %8281 = vmatpush.bf16.msra.mxu0 0
        %8282 = vmatpush.bf16.msra.mxu0 0
        %8283 = vmatpush.bf16.msra.mxu0 0
        %8284 = vmatpush.bf16.msra.mxu0 0
        %8285 = vmatpush.bf16.msra.mxu0 0
        %8286 = vmatpush.bf16.msra.mxu0 0
        %8287 = vmatpush.bf16.msra.mxu0 %v8279
        %8288 = vmatpush.bf16.msra.mxu0 %v8232
        %8289 = vmatmul.bf16.gmra.mxu0 %v8247
        %v8290 = vpop.f32.mrf.mxu0
        %v8291 = vadd.f32 %v8193, %v8290
        %v8292 = vpop.f32.mrf.mxu0
        %v8293 = vadd.f32 %v8193, %v8292
        %8294 = vmatmul.bf16.gmra.mxu0 %v8249
        %v8295 = vpop.f32.mrf.mxu0
        %v8296 = vadd.f32 %v8193, %v8295
        %v8297 = vpop.f32.mrf.mxu0
        %v8298 = vadd.f32 %v8193, %v8297
        %8299 = vmatmul.bf16.gmra.mxu0 %v8251
        %v8300 = vpop.f32.mrf.mxu0
        %v8301 = vadd.f32 %v8193, %v8300
        %v8302 = vpop.f32.mrf.mxu0
        %v8303 = vadd.f32 %v8193, %v8302
        %8304 = vmatmul.bf16.gmra.mxu0 %v8253
        %v8305 = vpop.f32.mrf.mxu0
        %v8306 = vadd.f32 %v8193, %v8305
        %v8307 = vpop.f32.mrf.mxu0
        %v8308 = vadd.f32 %v8193, %v8307
        %8309 = vmatmul.bf16.gmra.mxu0 %v8255
        %v8310 = vpop.f32.mrf.mxu0
        %v8311 = vadd.f32 %v8193, %v8310
        %v8312 = vpop.f32.mrf.mxu0
        %v8313 = vadd.f32 %v8193, %v8312
        %8314 = vmatmul.bf16.gmra.mxu0 %v8257
        %v8315 = vpop.f32.mrf.mxu0
        %v8316 = vadd.f32 %v8193, %v8315
        %v8317 = vpop.f32.mrf.mxu0
        %v8318 = vadd.f32 %v8193, %v8317
        %8319 = vmatmul.bf16.gmra.mxu0 %v8259
        %v8320 = vpop.f32.mrf.mxu0
        %v8321 = vadd.f32 %v8193, %v8320
        %v8322 = vpop.f32.mrf.mxu0
        %v8323 = vadd.f32 %v8193, %v8322
        %8324 = vmatmul.bf16.gmra.mxu0 %v8261
        %v8325 = vpop.f32.mrf.mxu0
        %v8326 = vadd.f32 %v8193, %v8325
        %v8327 = vpop.f32.mrf.mxu0
        %v8328 = vadd.f32 %v8193, %v8327
        %8329 = vmatmul.bf16.gmra.mxu0 %v8263
        %v8330 = vpop.f32.mrf.mxu0
        %v8331 = vadd.f32 %v8193, %v8330
        %v8332 = vpop.f32.mrf.mxu0
        %v8333 = vadd.f32 %v8193, %v8332
        %8334 = vmatmul.bf16.gmra.mxu0 %v8265
        %v8335 = vpop.f32.mrf.mxu0
        %v8336 = vadd.f32 %v8193, %v8335
        %v8337 = vpop.f32.mrf.mxu0
        %v8338 = vadd.f32 %v8193, %v8337
        %8339 = vmatmul.bf16.gmra.mxu0 %v8267
        %v8340 = vpop.f32.mrf.mxu0
        %v8341 = vadd.f32 %v8193, %v8340
        %v8342 = vpop.f32.mrf.mxu0
        %v8343 = vadd.f32 %v8193, %v8342
        %8344 = vmatmul.bf16.gmra.mxu0 %v8269
        %v8345 = vpop.f32.mrf.mxu0
        %v8346 = vadd.f32 %v8193, %v8345
        %v8347 = vpop.f32.mrf.mxu0
        %v8348 = vadd.f32 %v8193, %v8347
        %8349 = vmatmul.bf16.gmra.mxu0 %v8271
        %v8350 = vpop.f32.mrf.mxu0
        %v8351 = vadd.f32 %v8193, %v8350
        %v8352 = vpop.f32.mrf.mxu0
        %v8353 = vadd.f32 %v8193, %v8352
        %8354 = vmatmul.bf16.gmra.mxu0 %v8273
        %v8355 = vpop.f32.mrf.mxu0
        %v8356 = vadd.f32 %v8193, %v8355
        %v8357 = vpop.f32.mrf.mxu0
        %v8358 = vadd.f32 %v8193, %v8357
        %8359 = vmatmul.bf16.gmra.mxu0 %v8275
        %v8360 = vpop.f32.mrf.mxu0
        %v8361 = vadd.f32 %v8193, %v8360
        %v8362 = vpop.f32.mrf.mxu0
        %v8363 = vadd.f32 %v8193, %v8362
        %8364 = vmatmul.bf16.gmra.mxu0 %v8277
        %v8365 = vpop.f32.mrf.mxu0
        %v8366 = vadd.f32 %v8193, %v8365
        %v8367 = vpop.f32.mrf.mxu0
        %v8368 = vadd.f32 %v8193, %v8367
        %8369 = vdwg.mxu0
        %v8370 = vmax.f32 %v8291, 0.0
        %v8371 = vmax.f32 %v8293, 0.0
        %v8372 = vmax.f32 %v8296, 0.0
        %v8373 = vmax.f32 %v8298, 0.0
        %v8374 = vmax.f32 %v8301, 0.0
        %v8375 = vmax.f32 %v8303, 0.0
        %v8376 = vmax.f32 %v8306, 0.0
        %v8377 = vmax.f32 %v8308, 0.0
        %v8378 = vmax.f32 %v8311, 0.0
        %v8379 = vmax.f32 %v8313, 0.0
        %v8380 = vmax.f32 %v8316, 0.0
        %v8381 = vmax.f32 %v8318, 0.0
        %v8382 = vmax.f32 %v8321, 0.0
        %v8383 = vmax.f32 %v8323, 0.0
        %v8384 = vmax.f32 %v8326, 0.0
        %v8385 = vmax.f32 %v8328, 0.0
        %v8386 = vmax.f32 %v8331, 0.0
        %v8387 = vmax.f32 %v8333, 0.0
        %v8388 = vmax.f32 %v8336, 0.0
        %v8389 = vmax.f32 %v8338, 0.0
        %v8390 = vmax.f32 %v8341, 0.0
        %v8391 = vmax.f32 %v8343, 0.0
        %v8392 = vmax.f32 %v8346, 0.0
        %v8393 = vmax.f32 %v8348, 0.0
        %v8394 = vmax.f32 %v8351, 0.0
        %v8395 = vmax.f32 %v8353, 0.0
        %v8396 = vmax.f32 %v8356, 0.0
        %v8397 = vmax.f32 %v8358, 0.0
        %v8398 = vmax.f32 %v8361, 0.0
        %v8399 = vmax.f32 %v8363, 0.0
        %v8400 = vmax.f32 %v8366, 0.0
        %v8401 = vmax.f32 %v8368, 0.0
        %v8402 = vpack.c.bf16 %v8370, %v8370
        %v8403 = vpack.c.bf16 %v8371, %v8371
        %v8404 = vpack.c.bf16 %v8372, %v8372
        %v8405 = vpack.c.bf16 %v8373, %v8373
        %v8406 = vpack.c.bf16 %v8374, %v8374
        %v8407 = vpack.c.bf16 %v8375, %v8375
        %v8408 = vpack.c.bf16 %v8376, %v8376
        %v8409 = vpack.c.bf16 %v8377, %v8377
        %v8410 = vpack.c.bf16 %v8378, %v8378
        %v8411 = vpack.c.bf16 %v8379, %v8379
        %v8412 = vpack.c.bf16 %v8380, %v8380
        %v8413 = vpack.c.bf16 %v8381, %v8381
        %v8414 = vpack.c.bf16 %v8382, %v8382
        %v8415 = vpack.c.bf16 %v8383, %v8383
        %v8416 = vpack.c.bf16 %v8384, %v8384
        %v8417 = vpack.c.bf16 %v8385, %v8385
        %v8418 = vpack.c.bf16 %v8386, %v8386
        %v8419 = vpack.c.bf16 %v8387, %v8387
        %v8420 = vpack.c.bf16 %v8388, %v8388
        %v8421 = vpack.c.bf16 %v8389, %v8389
        %v8422 = vpack.c.bf16 %v8390, %v8390
        %v8423 = vpack.c.bf16 %v8391, %v8391
        %v8424 = vpack.c.bf16 %v8392, %v8392
        %v8425 = vpack.c.bf16 %v8393, %v8393
        %v8426 = vpack.c.bf16 %v8394, %v8394
        %v8427 = vpack.c.bf16 %v8395, %v8395
        %v8428 = vpack.c.bf16 %v8396, %v8396
        %v8429 = vpack.c.bf16 %v8397, %v8397
        %v8430 = vpack.c.bf16 %v8398, %v8398
        %v8431 = vpack.c.bf16 %v8399, %v8399
        %v8432 = vpack.c.bf16 %v8400, %v8400
        %v8433 = vpack.c.bf16 %v8401, %v8401
        %s8434 = smul.u32 16, 4
        %s8435 = smul.addr %s8434, 4
        %s8436 = scalar_lea.vmem %s163, %s8435 [#allocation3]
        %8437 = vst.msk [vmem:[%s8436] sm:$0xf] %vm4200, %v8402
        %8438 = vst.msk [vmem:[%s8436 + $0x4] sm:$0xf] %vm4200, %v8403
        %8439 = vst.msk [vmem:[%s8436 + $0x8] sm:$0xf] %vm4200, %v8404
        %8440 = vst.msk [vmem:[%s8436 + $0xc] sm:$0xf] %vm4200, %v8405
        %8441 = vst.msk [vmem:[%s8436 + $0x10] sm:$0xf] %vm4200, %v8406
        %8442 = vst.msk [vmem:[%s8436 + $0x14] sm:$0xf] %vm4200, %v8407
        %8443 = vst.msk [vmem:[%s8436 + $0x18] sm:$0xf] %vm4200, %v8408
        %8444 = vst.msk [vmem:[%s8436 + $0x1c] sm:$0xf] %vm4200, %v8409
        %8445 = vst.msk [vmem:[%s8436 + $0x20] sm:$0xf] %vm4200, %v8410
        %8446 = vst.msk [vmem:[%s8436 + $0x24] sm:$0xf] %vm4200, %v8411
        %8447 = vst.msk [vmem:[%s8436 + $0x28] sm:$0xf] %vm4200, %v8412
        %8448 = vst.msk [vmem:[%s8436 + $0x2c] sm:$0xf] %vm4200, %v8413
        %8449 = vst.msk [vmem:[%s8436 + $0x30] sm:$0xf] %vm4200, %v8414
        %8450 = vst.msk [vmem:[%s8436 + $0x34] sm:$0xf] %vm4200, %v8415
        %8451 = vst.msk [vmem:[%s8436 + $0x38] sm:$0xf] %vm4200, %v8416
        %8452 = vst.msk [vmem:[%s8436 + $0x3c] sm:$0xf] %vm4200, %v8417
        %8453 = vst.msk [vmem:[%s8436 + $0x40] sm:$0xf] %vm4200, %v8418
        %8454 = vst.msk [vmem:[%s8436 + $0x44] sm:$0xf] %vm4200, %v8419
        %8455 = vst.msk [vmem:[%s8436 + $0x48] sm:$0xf] %vm4200, %v8420
        %8456 = vst.msk [vmem:[%s8436 + $0x4c] sm:$0xf] %vm4200, %v8421
        %8457 = vst.msk [vmem:[%s8436 + $0x50] sm:$0xf] %vm4200, %v8422
        %8458 = vst.msk [vmem:[%s8436 + $0x54] sm:$0xf] %vm4200, %v8423
        %8459 = vst.msk [vmem:[%s8436 + $0x58] sm:$0xf] %vm4200, %v8424
        %8460 = vst.msk [vmem:[%s8436 + $0x5c] sm:$0xf] %vm4200, %v8425
        %8461 = vst.msk [vmem:[%s8436 + $0x60] sm:$0xf] %vm4200, %v8426
        %8462 = vst.msk [vmem:[%s8436 + $0x64] sm:$0xf] %vm4200, %v8427
        %8463 = vst.msk [vmem:[%s8436 + $0x68] sm:$0xf] %vm4200, %v8428
        %8464 = vst.msk [vmem:[%s8436 + $0x6c] sm:$0xf] %vm4200, %v8429
        %8465 = vst.msk [vmem:[%s8436 + $0x70] sm:$0xf] %vm4200, %v8430
        %8466 = vst.msk [vmem:[%s8436 + $0x74] sm:$0xf] %vm4200, %v8431
        %8467 = vst.msk [vmem:[%s8436 + $0x78] sm:$0xf] %vm4200, %v8432
        %8468 = vst.msk [vmem:[%s8436 + $0x7c] sm:$0xf] %vm4200, %v8433
        %s8469 = smul.u32 24, 5
        %s8470 = smul.addr %s8469, 4
        %s8471 = scalar_lea.vmem [#allocation2], %s8470
        %v8472 = vld [vmem:[%s8471] sm:$0xf]
        %v8473 = vld [vmem:[%s8471 + $0x4] sm:$0xf]
        %v8474 = vld [vmem:[%s8471 + $0x8] sm:$0xf]
        %v8475 = vld [vmem:[%s8471 + $0xc] sm:$0xf]
        %v8476 = vld [vmem:[%s8471 + $0x14] sm:$0xf]
        %v8477 = vld [vmem:[%s8471 + $0x18] sm:$0xf]
        %v8478 = vld [vmem:[%s8471 + $0x1c] sm:$0xf]
        %v8479 = vld [vmem:[%s8471 + $0x20] sm:$0xf]
        %v8480 = vld [vmem:[%s8471 + $0x28] sm:$0xf]
        %v8481 = vld [vmem:[%s8471 + $0x2c] sm:$0xf]
        %v8482 = vld [vmem:[%s8471 + $0x30] sm:$0xf]
        %v8483 = vld [vmem:[%s8471 + $0x34] sm:$0xf]
        %v8484 = vld [vmem:[%s8471 + $0x3c] sm:$0xf]
        %v8485 = vld [vmem:[%s8471 + $0x40] sm:$0xf]
        %v8486 = vld [vmem:[%s8471 + $0x44] sm:$0xf]
        %v8487 = vld [vmem:[%s8471 + $0x48] sm:$0xf]
        %v8488 = vld [vmem:[%s8471 + $0x50] sm:$0xf]
        %v8489 = vld [vmem:[%s8471 + $0x54] sm:$0xf]
        %v8490 = vld [vmem:[%s8471 + $0x58] sm:$0xf]
        %v8491 = vld [vmem:[%s8471 + $0x5c] sm:$0xf]
        %v8492 = vld [vmem:[%s8471 + $0x64] sm:$0xf]
        %v8493 = vld [vmem:[%s8471 + $0x68] sm:$0xf]
        %v8494 = vld [vmem:[%s8471 + $0x6c] sm:$0xf]
        %v8495 = vld [vmem:[%s8471 + $0x70] sm:$0xf]
        %v8496 = vld [vmem:[%s8471 + $0x78] sm:$0xf]
        %v8497 = vld [vmem:[%s8471 + $0x7c] sm:$0xf]
        %v8498 = vld [vmem:[%s8471 + $0x80] sm:$0xf]
        %v8499 = vld [vmem:[%s8471 + $0x84] sm:$0xf]
        %v8500 = vld [vmem:[%s8471 + $0x8c] sm:$0xf]
        %v8501 = vld [vmem:[%s8471 + $0x90] sm:$0xf]
        %v8502 = vld [vmem:[%s8471 + $0x94] sm:$0xf]
        %v8503 = vld [vmem:[%s8471 + $0x98] sm:$0xf]
        %v8504 = vld [vmem:[%s8471 + $0x10] sm:$0x1]
        %v8505 = vld [vmem:[%s8471 + $0x24] sm:$0x1]
        %v8506 = vld [vmem:[%s8471 + $0x38] sm:$0x1]
        %v8507 = vld [vmem:[%s8471 + $0x4c] sm:$0x1]
        %v8508 = vld [vmem:[%s8471 + $0x60] sm:$0x1]
        %v8509 = vld [vmem:[%s8471 + $0x74] sm:$0x1]
        %v8510 = vld [vmem:[%s8471 + $0x88] sm:$0x1]
        %v8511 = vld [vmem:[%s8471 + $0x9c] sm:$0x1]
        %v8512 = vld [vmem:[%s8471] sm:$0xe]
        %v8513 = vld [vmem:[%s8471 + $0x14] sm:$0xe]
        %v8514 = vld [vmem:[%s8471 + $0x28] sm:$0xe]
        %v8515 = vld [vmem:[%s8471 + $0x3c] sm:$0xe]
        %v8516 = vld [vmem:[%s8471 + $0x50] sm:$0xe]
        %v8517 = vld [vmem:[%s8471 + $0x64] sm:$0xe]
        %v8518 = vld [vmem:[%s8471 + $0x78] sm:$0xe]
        %v8519 = vld [vmem:[%s8471 + $0x8c] sm:$0xe]
        %s8520 = sadd.s32 24, 1
        %s8521 = smul.u32 %s8520, 5
        %s8522 = smul.addr %s8521, 4
        %s8523 = scalar_lea.vmem [#allocation2], %s8522
        %v8524 = vld [vmem:[%s8523] sm:$0xf]
        %v8525 = vld [vmem:[%s8523 + $0x4] sm:$0xf]
        %v8526 = vld [vmem:[%s8523 + $0x8] sm:$0xf]
        %v8527 = vld [vmem:[%s8523 + $0xc] sm:$0xf]
        %v8528 = vld [vmem:[%s8523 + $0x14] sm:$0xf]
        %v8529 = vld [vmem:[%s8523 + $0x18] sm:$0xf]
        %v8530 = vld [vmem:[%s8523 + $0x1c] sm:$0xf]
        %v8531 = vld [vmem:[%s8523 + $0x20] sm:$0xf]
        %v8532 = vld [vmem:[%s8523 + $0x28] sm:$0xf]
        %v8533 = vld [vmem:[%s8523 + $0x2c] sm:$0xf]
        %v8534 = vld [vmem:[%s8523 + $0x30] sm:$0xf]
        %v8535 = vld [vmem:[%s8523 + $0x34] sm:$0xf]
        %v8536 = vld [vmem:[%s8523 + $0x3c] sm:$0xf]
        %v8537 = vld [vmem:[%s8523 + $0x40] sm:$0xf]
        %v8538 = vld [vmem:[%s8523 + $0x44] sm:$0xf]
        %v8539 = vld [vmem:[%s8523 + $0x48] sm:$0xf]
        %v8540 = vld [vmem:[%s8523 + $0x50] sm:$0xf]
        %v8541 = vld [vmem:[%s8523 + $0x54] sm:$0xf]
        %v8542 = vld [vmem:[%s8523 + $0x58] sm:$0xf]
        %v8543 = vld [vmem:[%s8523 + $0x5c] sm:$0xf]
        %v8544 = vld [vmem:[%s8523 + $0x64] sm:$0xf]
        %v8545 = vld [vmem:[%s8523 + $0x68] sm:$0xf]
        %v8546 = vld [vmem:[%s8523 + $0x6c] sm:$0xf]
        %v8547 = vld [vmem:[%s8523 + $0x70] sm:$0xf]
        %v8548 = vld [vmem:[%s8523 + $0x78] sm:$0xf]
        %v8549 = vld [vmem:[%s8523 + $0x7c] sm:$0xf]
        %v8550 = vld [vmem:[%s8523 + $0x80] sm:$0xf]
        %v8551 = vld [vmem:[%s8523 + $0x84] sm:$0xf]
        %v8552 = vld [vmem:[%s8523 + $0x8c] sm:$0xf]
        %v8553 = vld [vmem:[%s8523 + $0x90] sm:$0xf]
        %v8554 = vld [vmem:[%s8523 + $0x94] sm:$0xf]
        %v8555 = vld [vmem:[%s8523 + $0x98] sm:$0xf]
        %v8556 = vld [vmem:[%s8523 + $0x10] sm:$0x1]
        %v8557 = vld [vmem:[%s8523 + $0x24] sm:$0x1]
        %v8558 = vld [vmem:[%s8523 + $0x38] sm:$0x1]
        %v8559 = vld [vmem:[%s8523 + $0x4c] sm:$0x1]
        %v8560 = vld [vmem:[%s8523 + $0x60] sm:$0x1]
        %v8561 = vld [vmem:[%s8523 + $0x74] sm:$0x1]
        %v8562 = vld [vmem:[%s8523 + $0x88] sm:$0x1]
        %v8563 = vld [vmem:[%s8523 + $0x9c] sm:$0x1]
        %v8564 = vld [vmem:[%s8523] sm:$0xe]
        %v8565 = vld [vmem:[%s8523 + $0x14] sm:$0xe]
        %v8566 = vld [vmem:[%s8523 + $0x28] sm:$0xe]
        %v8567 = vld [vmem:[%s8523 + $0x3c] sm:$0xe]
        %v8568 = vld [vmem:[%s8523 + $0x50] sm:$0xe]
        %v8569 = vld [vmem:[%s8523 + $0x64] sm:$0xe]
        %v8570 = vld [vmem:[%s8523 + $0x78] sm:$0xe]
        %v8571 = vld [vmem:[%s8523 + $0x8c] sm:$0xe]
        %s8572 = sadd.s32 24, 2
        %s8573 = smul.u32 %s8572, 5
        %s8574 = smul.addr %s8573, 4
        %s8575 = scalar_lea.vmem [#allocation2], %s8574
        %v8576 = vld [vmem:[%s8575] sm:$0xf]
        %v8577 = vld [vmem:[%s8575 + $0x4] sm:$0xf]
        %v8578 = vld [vmem:[%s8575 + $0x8] sm:$0xf]
        %v8579 = vld [vmem:[%s8575 + $0xc] sm:$0xf]
        %v8580 = vld [vmem:[%s8575 + $0x14] sm:$0xf]
        %v8581 = vld [vmem:[%s8575 + $0x18] sm:$0xf]
        %v8582 = vld [vmem:[%s8575 + $0x1c] sm:$0xf]
        %v8583 = vld [vmem:[%s8575 + $0x20] sm:$0xf]
        %v8584 = vld [vmem:[%s8575 + $0x28] sm:$0xf]
        %v8585 = vld [vmem:[%s8575 + $0x2c] sm:$0xf]
        %v8586 = vld [vmem:[%s8575 + $0x30] sm:$0xf]
        %v8587 = vld [vmem:[%s8575 + $0x34] sm:$0xf]
        %v8588 = vld [vmem:[%s8575 + $0x3c] sm:$0xf]
        %v8589 = vld [vmem:[%s8575 + $0x40] sm:$0xf]
        %v8590 = vld [vmem:[%s8575 + $0x44] sm:$0xf]
        %v8591 = vld [vmem:[%s8575 + $0x48] sm:$0xf]
        %v8592 = vld [vmem:[%s8575 + $0x50] sm:$0xf]
        %v8593 = vld [vmem:[%s8575 + $0x54] sm:$0xf]
        %v8594 = vld [vmem:[%s8575 + $0x58] sm:$0xf]
        %v8595 = vld [vmem:[%s8575 + $0x5c] sm:$0xf]
        %v8596 = vld [vmem:[%s8575 + $0x64] sm:$0xf]
        %v8597 = vld [vmem:[%s8575 + $0x68] sm:$0xf]
        %v8598 = vld [vmem:[%s8575 + $0x6c] sm:$0xf]
        %v8599 = vld [vmem:[%s8575 + $0x70] sm:$0xf]
        %v8600 = vld [vmem:[%s8575 + $0x78] sm:$0xf]
        %v8601 = vld [vmem:[%s8575 + $0x7c] sm:$0xf]
        %v8602 = vld [vmem:[%s8575 + $0x80] sm:$0xf]
        %v8603 = vld [vmem:[%s8575 + $0x84] sm:$0xf]
        %v8604 = vld [vmem:[%s8575 + $0x8c] sm:$0xf]
        %v8605 = vld [vmem:[%s8575 + $0x90] sm:$0xf]
        %v8606 = vld [vmem:[%s8575 + $0x94] sm:$0xf]
        %v8607 = vld [vmem:[%s8575 + $0x98] sm:$0xf]
        %v8608 = vld [vmem:[%s8575 + $0x10] sm:$0x1]
        %v8609 = vld [vmem:[%s8575 + $0x24] sm:$0x1]
        %v8610 = vld [vmem:[%s8575 + $0x38] sm:$0x1]
        %v8611 = vld [vmem:[%s8575 + $0x4c] sm:$0x1]
        %v8612 = vld [vmem:[%s8575 + $0x60] sm:$0x1]
        %v8613 = vld [vmem:[%s8575 + $0x74] sm:$0x1]
        %v8614 = vld [vmem:[%s8575 + $0x88] sm:$0x1]
        %v8615 = vld [vmem:[%s8575 + $0x9c] sm:$0x1]
        %v8616 = vld [vmem:[%s8575] sm:$0xe]
        %v8617 = vld [vmem:[%s8575 + $0x14] sm:$0xe]
        %v8618 = vld [vmem:[%s8575 + $0x28] sm:$0xe]
        %v8619 = vld [vmem:[%s8575 + $0x3c] sm:$0xe]
        %v8620 = vld [vmem:[%s8575 + $0x50] sm:$0xe]
        %v8621 = vld [vmem:[%s8575 + $0x64] sm:$0xe]
        %v8622 = vld [vmem:[%s8575 + $0x78] sm:$0xe]
        %v8623 = vld [vmem:[%s8575 + $0x8c] sm:$0xe]
        %v8656 = vunpack.c.l.b16 %v8472
        %v8657 = vunpack.c.l.b16 %v8473
        %v8658 = vunpack.c.l.b16 %v8474
        %v8659 = vunpack.c.l.b16 %v8475
        %v8660 = vunpack.c.l.b16 %v8476
        %v8661 = vunpack.c.l.b16 %v8477
        %v8662 = vunpack.c.l.b16 %v8478
        %v8663 = vunpack.c.l.b16 %v8479
        %v8664 = vunpack.c.l.b16 %v8480
        %v8665 = vunpack.c.l.b16 %v8481
        %v8666 = vunpack.c.l.b16 %v8482
        %v8667 = vunpack.c.l.b16 %v8483
        %v8668 = vunpack.c.l.b16 %v8484
        %v8669 = vunpack.c.l.b16 %v8485
        %v8670 = vunpack.c.l.b16 %v8486
        %v8671 = vunpack.c.l.b16 %v8487
        %v8672 = vunpack.c.l.b16 %v8488
        %v8673 = vunpack.c.l.b16 %v8489
        %v8674 = vunpack.c.l.b16 %v8490
        %v8675 = vunpack.c.l.b16 %v8491
        %v8676 = vunpack.c.l.b16 %v8492
        %v8677 = vunpack.c.l.b16 %v8493
        %v8678 = vunpack.c.l.b16 %v8494
        %v8679 = vunpack.c.l.b16 %v8495
        %v8680 = vunpack.c.l.b16 %v8496
        %v8681 = vunpack.c.l.b16 %v8497
        %v8682 = vunpack.c.l.b16 %v8498
        %v8683 = vunpack.c.l.b16 %v8499
        %v8684 = vunpack.c.l.b16 %v8500
        %v8685 = vunpack.c.l.b16 %v8501
        %v8686 = vunpack.c.l.b16 %v8502
        %v8687 = vunpack.c.l.b16 %v8503
        %v8688 = vpack.c.b16 %v8657, %v8656
        %v8689 = vpack.c.b16 %v8659, %v8658
        %v8690 = vpack.c.b16 %v8661, %v8660
        %v8691 = vpack.c.b16 %v8663, %v8662
        %v8692 = vpack.c.b16 %v8665, %v8664
        %v8693 = vpack.c.b16 %v8667, %v8666
        %v8694 = vpack.c.b16 %v8669, %v8668
        %v8695 = vpack.c.b16 %v8671, %v8670
        %v8696 = vpack.c.b16 %v8673, %v8672
        %v8697 = vpack.c.b16 %v8675, %v8674
        %v8698 = vpack.c.b16 %v8677, %v8676
        %v8699 = vpack.c.b16 %v8679, %v8678
        %v8700 = vpack.c.b16 %v8681, %v8680
        %v8701 = vpack.c.b16 %v8683, %v8682
        %v8702 = vpack.c.b16 %v8685, %v8684
        %v8703 = vpack.c.b16 %v8687, %v8686
        %v8712 = vunpack.c.l.b16 %v8504
        %v8713 = vunpack.c.l.b16 %v8505
        %v8714 = vunpack.c.l.b16 %v8506
        %v8715 = vunpack.c.l.b16 %v8507
        %v8716 = vunpack.c.l.b16 %v8508
        %v8717 = vunpack.c.l.b16 %v8509
        %v8718 = vunpack.c.l.b16 %v8510
        %v8719 = vunpack.c.l.b16 %v8511
        %v8720 = vpack.c.b16 %v8712, %v8712
        %v8721 = vpack.c.b16 %v8713, %v8713
        %v8722 = vpack.c.b16 %v8714, %v8714
        %v8723 = vpack.c.b16 %v8715, %v8715
        %v8724 = vpack.c.b16 %v8716, %v8716
        %v8725 = vpack.c.b16 %v8717, %v8717
        %v8726 = vpack.c.b16 %v8718, %v8718
        %v8727 = vpack.c.b16 %v8719, %v8719
        %v8729 = vshrl.u32 %v8688, 16
        %v8731 = vshll.u32 %v8688, 16
        %v8733 = vrot.slane %v8731, 1
        %v8734 = vor.u32 %v8729, %v8733
        %v8736 = vshll.u32 %v8689, 16
        %v8738 = vrot.slane %v8736, 1
        %v8739 = vsel %vm2352, %v8734, %v8738
        %v8740 = vshrl.u32 %v8689, 16
        %v8742 = vor.u32 %v8740, %v8738
        %v8744 = vshll.u32 %v8720, 16
        %v8746 = vrot.slane %v8744, 1
        %v8747 = vsel %vm2352, %v8742, %v8746
        %v8749 = vshrl.u32 %v8690, 16
        %v8751 = vshll.u32 %v8690, 16
        %v8753 = vrot.slane %v8751, 1
        %v8754 = vor.u32 %v8749, %v8753
        %v8756 = vshll.u32 %v8691, 16
        %v8758 = vrot.slane %v8756, 1
        %v8759 = vsel %vm2352, %v8754, %v8758
        %v8760 = vshrl.u32 %v8691, 16
        %v8762 = vor.u32 %v8760, %v8758
        %v8764 = vshll.u32 %v8721, 16
        %v8766 = vrot.slane %v8764, 1
        %v8767 = vsel %vm2352, %v8762, %v8766
        %v8769 = vshrl.u32 %v8692, 16
        %v8771 = vshll.u32 %v8692, 16
        %v8773 = vrot.slane %v8771, 1
        %v8774 = vor.u32 %v8769, %v8773
        %v8776 = vshll.u32 %v8693, 16
        %v8778 = vrot.slane %v8776, 1
        %v8779 = vsel %vm2352, %v8774, %v8778
        %v8780 = vshrl.u32 %v8693, 16
        %v8782 = vor.u32 %v8780, %v8778
        %v8784 = vshll.u32 %v8722, 16
        %v8786 = vrot.slane %v8784, 1
        %v8787 = vsel %vm2352, %v8782, %v8786
        %v8789 = vshrl.u32 %v8694, 16
        %v8791 = vshll.u32 %v8694, 16
        %v8793 = vrot.slane %v8791, 1
        %v8794 = vor.u32 %v8789, %v8793
        %v8796 = vshll.u32 %v8695, 16
        %v8798 = vrot.slane %v8796, 1
        %v8799 = vsel %vm2352, %v8794, %v8798
        %v8800 = vshrl.u32 %v8695, 16
        %v8802 = vor.u32 %v8800, %v8798
        %v8804 = vshll.u32 %v8723, 16
        %v8806 = vrot.slane %v8804, 1
        %v8807 = vsel %vm2352, %v8802, %v8806
        %v8809 = vshrl.u32 %v8696, 16
        %v8811 = vshll.u32 %v8696, 16
        %v8813 = vrot.slane %v8811, 1
        %v8814 = vor.u32 %v8809, %v8813
        %v8816 = vshll.u32 %v8697, 16
        %v8818 = vrot.slane %v8816, 1
        %v8819 = vsel %vm2352, %v8814, %v8818
        %v8820 = vshrl.u32 %v8697, 16
        %v8822 = vor.u32 %v8820, %v8818
        %v8824 = vshll.u32 %v8724, 16
        %v8826 = vrot.slane %v8824, 1
        %v8827 = vsel %vm2352, %v8822, %v8826
        %v8829 = vshrl.u32 %v8698, 16
        %v8831 = vshll.u32 %v8698, 16
        %v8833 = vrot.slane %v8831, 1
        %v8834 = vor.u32 %v8829, %v8833
        %v8836 = vshll.u32 %v8699, 16
        %v8838 = vrot.slane %v8836, 1
        %v8839 = vsel %vm2352, %v8834, %v8838
        %v8840 = vshrl.u32 %v8699, 16
        %v8842 = vor.u32 %v8840, %v8838
        %v8844 = vshll.u32 %v8725, 16
        %v8846 = vrot.slane %v8844, 1
        %v8847 = vsel %vm2352, %v8842, %v8846
        %v8849 = vshrl.u32 %v8700, 16
        %v8851 = vshll.u32 %v8700, 16
        %v8853 = vrot.slane %v8851, 1
        %v8854 = vor.u32 %v8849, %v8853
        %v8856 = vshll.u32 %v8701, 16
        %v8858 = vrot.slane %v8856, 1
        %v8859 = vsel %vm2352, %v8854, %v8858
        %v8860 = vshrl.u32 %v8701, 16
        %v8862 = vor.u32 %v8860, %v8858
        %v8864 = vshll.u32 %v8726, 16
        %v8866 = vrot.slane %v8864, 1
        %v8867 = vsel %vm2352, %v8862, %v8866
        %v8869 = vshrl.u32 %v8702, 16
        %v8871 = vshll.u32 %v8702, 16
        %v8873 = vrot.slane %v8871, 1
        %v8874 = vor.u32 %v8869, %v8873
        %v8876 = vshll.u32 %v8703, 16
        %v8878 = vrot.slane %v8876, 1
        %v8879 = vsel %vm2352, %v8874, %v8878
        %v8880 = vshrl.u32 %v8703, 16
        %v8882 = vor.u32 %v8880, %v8878
        %v8884 = vshll.u32 %v8727, 16
        %v8886 = vrot.slane %v8884, 1
        %v8887 = vsel %vm2352, %v8882, %v8886
        %8888 = vrot.lane.b32.xlu0 %v8739, 3
        %v8889 = vpop.permute.xlu0 %8888
        %8890 = vrot.lane.b32.xlu0 %v8747, 3
        %v8891 = vpop.permute.xlu0 %8890
        %8892 = vrot.lane.b32.xlu0 %v8759, 3
        %v8893 = vpop.permute.xlu0 %8892
        %8894 = vrot.lane.b32.xlu0 %v8767, 3
        %v8895 = vpop.permute.xlu0 %8894
        %8896 = vrot.lane.b32.xlu0 %v8779, 3
        %v8897 = vpop.permute.xlu0 %8896
        %8898 = vrot.lane.b32.xlu0 %v8787, 3
        %v8899 = vpop.permute.xlu0 %8898
        %8900 = vrot.lane.b32.xlu0 %v8799, 3
        %v8901 = vpop.permute.xlu0 %8900
        %8902 = vrot.lane.b32.xlu0 %v8807, 3
        %v8903 = vpop.permute.xlu0 %8902
        %8904 = vrot.lane.b32.xlu0 %v8819, 3
        %v8905 = vpop.permute.xlu0 %8904
        %8906 = vrot.lane.b32.xlu0 %v8827, 3
        %v8907 = vpop.permute.xlu0 %8906
        %8908 = vrot.lane.b32.xlu0 %v8839, 3
        %v8909 = vpop.permute.xlu0 %8908
        %8910 = vrot.lane.b32.xlu0 %v8847, 3
        %v8911 = vpop.permute.xlu0 %8910
        %8912 = vrot.lane.b32.xlu0 %v8859, 3
        %v8913 = vpop.permute.xlu0 %8912
        %8914 = vrot.lane.b32.xlu0 %v8867, 3
        %v8915 = vpop.permute.xlu0 %8914
        %8916 = vrot.lane.b32.xlu0 %v8879, 3
        %v8917 = vpop.permute.xlu0 %8916
        %8918 = vrot.lane.b32.xlu0 %v8887, 3
        %v8919 = vpop.permute.xlu0 %8918
        %v8928 = vunpack.c.l.b16 %v8512
        %v8929 = vunpack.c.l.b16 %v8513
        %v8930 = vunpack.c.l.b16 %v8514
        %v8931 = vunpack.c.l.b16 %v8515
        %v8932 = vunpack.c.l.b16 %v8516
        %v8933 = vunpack.c.l.b16 %v8517
        %v8934 = vunpack.c.l.b16 %v8518
        %v8935 = vunpack.c.l.b16 %v8519
        %v8936 = vpack.c.b16 %v8657, %v8928
        %v8937 = vpack.c.b16 %v8661, %v8929
        %v8938 = vpack.c.b16 %v8665, %v8930
        %v8939 = vpack.c.b16 %v8669, %v8931
        %v8940 = vpack.c.b16 %v8673, %v8932
        %v8941 = vpack.c.b16 %v8677, %v8933
        %v8942 = vpack.c.b16 %v8681, %v8934
        %v8943 = vpack.c.b16 %v8685, %v8935
        %v8944 = vrot.slane %v8936, 1
        %v8945 = vrot.slane %v8689, 1
        %v8946 = vsel %vm2569, %v8944, %v8945
        %v8947 = vrot.slane %v8720, 1
        %v8948 = vsel %vm2569, %v8945, %v8947
        %v8949 = vrot.slane %v8937, 1
        %v8950 = vrot.slane %v8691, 1
        %v8951 = vsel %vm2569, %v8949, %v8950
        %v8952 = vrot.slane %v8721, 1
        %v8953 = vsel %vm2569, %v8950, %v8952
        %v8954 = vrot.slane %v8938, 1
        %v8955 = vrot.slane %v8693, 1
        %v8956 = vsel %vm2569, %v8954, %v8955
        %v8957 = vrot.slane %v8722, 1
        %v8958 = vsel %vm2569, %v8955, %v8957
        %v8959 = vrot.slane %v8939, 1
        %v8960 = vrot.slane %v8695, 1
        %v8961 = vsel %vm2569, %v8959, %v8960
        %v8962 = vrot.slane %v8723, 1
        %v8963 = vsel %vm2569, %v8960, %v8962
        %v8964 = vrot.slane %v8940, 1
        %v8965 = vrot.slane %v8697, 1
        %v8966 = vsel %vm2569, %v8964, %v8965
        %v8967 = vrot.slane %v8724, 1
        %v8968 = vsel %vm2569, %v8965, %v8967
        %v8969 = vrot.slane %v8941, 1
        %v8970 = vrot.slane %v8699, 1
        %v8971 = vsel %vm2569, %v8969, %v8970
        %v8972 = vrot.slane %v8725, 1
        %v8973 = vsel %vm2569, %v8970, %v8972
        %v8974 = vrot.slane %v8942, 1
        %v8975 = vrot.slane %v8701, 1
        %v8976 = vsel %vm2569, %v8974, %v8975
        %v8977 = vrot.slane %v8726, 1
        %v8978 = vsel %vm2569, %v8975, %v8977
        %v8979 = vrot.slane %v8943, 1
        %v8980 = vrot.slane %v8703, 1
        %v8981 = vsel %vm2569, %v8979, %v8980
        %v8982 = vrot.slane %v8727, 1
        %v8983 = vsel %vm2569, %v8980, %v8982
        %8984 = vrot.lane.b32.xlu0 %v8946, 6
        %v8985 = vpop.permute.xlu0 %8984
        %8986 = vrot.lane.b32.xlu0 %v8948, 6
        %v8987 = vpop.permute.xlu0 %8986
        %8988 = vrot.lane.b32.xlu0 %v8951, 6
        %v8989 = vpop.permute.xlu0 %8988
        %8990 = vrot.lane.b32.xlu0 %v8953, 6
        %v8991 = vpop.permute.xlu0 %8990
        %8992 = vrot.lane.b32.xlu0 %v8956, 6
        %v8993 = vpop.permute.xlu0 %8992
        %8994 = vrot.lane.b32.xlu0 %v8958, 6
        %v8995 = vpop.permute.xlu0 %8994
        %8996 = vrot.lane.b32.xlu0 %v8961, 6
        %v8997 = vpop.permute.xlu0 %8996
        %8998 = vrot.lane.b32.xlu0 %v8963, 6
        %v8999 = vpop.permute.xlu0 %8998
        %9000 = vrot.lane.b32.xlu0 %v8966, 6
        %v9001 = vpop.permute.xlu0 %9000
        %9002 = vrot.lane.b32.xlu0 %v8968, 6
        %v9003 = vpop.permute.xlu0 %9002
        %9004 = vrot.lane.b32.xlu0 %v8971, 6
        %v9005 = vpop.permute.xlu0 %9004
        %9006 = vrot.lane.b32.xlu0 %v8973, 6
        %v9007 = vpop.permute.xlu0 %9006
        %9008 = vrot.lane.b32.xlu0 %v8976, 6
        %v9009 = vpop.permute.xlu0 %9008
        %9010 = vrot.lane.b32.xlu0 %v8978, 6
        %v9011 = vpop.permute.xlu0 %9010
        %9012 = vrot.lane.b32.xlu0 %v8981, 6
        %v9013 = vpop.permute.xlu0 %9012
        %9014 = vrot.lane.b32.xlu0 %v8983, 6
        %v9015 = vpop.permute.xlu0 %9014
        %v9048 = vunpack.c.l.b16 %v8524
        %v9049 = vunpack.c.l.b16 %v8525
        %v9050 = vunpack.c.l.b16 %v8526
        %v9051 = vunpack.c.l.b16 %v8527
        %v9052 = vunpack.c.l.b16 %v8528
        %v9053 = vunpack.c.l.b16 %v8529
        %v9054 = vunpack.c.l.b16 %v8530
        %v9055 = vunpack.c.l.b16 %v8531
        %v9056 = vunpack.c.l.b16 %v8532
        %v9057 = vunpack.c.l.b16 %v8533
        %v9058 = vunpack.c.l.b16 %v8534
        %v9059 = vunpack.c.l.b16 %v8535
        %v9060 = vunpack.c.l.b16 %v8536
        %v9061 = vunpack.c.l.b16 %v8537
        %v9062 = vunpack.c.l.b16 %v8538
        %v9063 = vunpack.c.l.b16 %v8539
        %v9064 = vunpack.c.l.b16 %v8540
        %v9065 = vunpack.c.l.b16 %v8541
        %v9066 = vunpack.c.l.b16 %v8542
        %v9067 = vunpack.c.l.b16 %v8543
        %v9068 = vunpack.c.l.b16 %v8544
        %v9069 = vunpack.c.l.b16 %v8545
        %v9070 = vunpack.c.l.b16 %v8546
        %v9071 = vunpack.c.l.b16 %v8547
        %v9072 = vunpack.c.l.b16 %v8548
        %v9073 = vunpack.c.l.b16 %v8549
        %v9074 = vunpack.c.l.b16 %v8550
        %v9075 = vunpack.c.l.b16 %v8551
        %v9076 = vunpack.c.l.b16 %v8552
        %v9077 = vunpack.c.l.b16 %v8553
        %v9078 = vunpack.c.l.b16 %v8554
        %v9079 = vunpack.c.l.b16 %v8555
        %v9080 = vpack.c.b16 %v9049, %v9048
        %v9081 = vpack.c.b16 %v9051, %v9050
        %v9082 = vpack.c.b16 %v9053, %v9052
        %v9083 = vpack.c.b16 %v9055, %v9054
        %v9084 = vpack.c.b16 %v9057, %v9056
        %v9085 = vpack.c.b16 %v9059, %v9058
        %v9086 = vpack.c.b16 %v9061, %v9060
        %v9087 = vpack.c.b16 %v9063, %v9062
        %v9088 = vpack.c.b16 %v9065, %v9064
        %v9089 = vpack.c.b16 %v9067, %v9066
        %v9090 = vpack.c.b16 %v9069, %v9068
        %v9091 = vpack.c.b16 %v9071, %v9070
        %v9092 = vpack.c.b16 %v9073, %v9072
        %v9093 = vpack.c.b16 %v9075, %v9074
        %v9094 = vpack.c.b16 %v9077, %v9076
        %v9095 = vpack.c.b16 %v9079, %v9078
        %9096 = vrot.lane.b32.xlu0 %v9080, 9
        %v9097 = vpop.permute.xlu0 %9096
        %9098 = vrot.lane.b32.xlu0 %v9081, 9
        %v9099 = vpop.permute.xlu0 %9098
        %9100 = vrot.lane.b32.xlu0 %v9082, 9
        %v9101 = vpop.permute.xlu0 %9100
        %9102 = vrot.lane.b32.xlu0 %v9083, 9
        %v9103 = vpop.permute.xlu0 %9102
        %9104 = vrot.lane.b32.xlu0 %v9084, 9
        %v9105 = vpop.permute.xlu0 %9104
        %9106 = vrot.lane.b32.xlu0 %v9085, 9
        %v9107 = vpop.permute.xlu0 %9106
        %9108 = vrot.lane.b32.xlu0 %v9086, 9
        %v9109 = vpop.permute.xlu0 %9108
        %9110 = vrot.lane.b32.xlu0 %v9087, 9
        %v9111 = vpop.permute.xlu0 %9110
        %9112 = vrot.lane.b32.xlu0 %v9088, 9
        %v9113 = vpop.permute.xlu0 %9112
        %9114 = vrot.lane.b32.xlu0 %v9089, 9
        %v9115 = vpop.permute.xlu0 %9114
        %9116 = vrot.lane.b32.xlu0 %v9090, 9
        %v9117 = vpop.permute.xlu0 %9116
        %9118 = vrot.lane.b32.xlu0 %v9091, 9
        %v9119 = vpop.permute.xlu0 %9118
        %9120 = vrot.lane.b32.xlu0 %v9092, 9
        %v9121 = vpop.permute.xlu0 %9120
        %9122 = vrot.lane.b32.xlu0 %v9093, 9
        %v9123 = vpop.permute.xlu0 %9122
        %9124 = vrot.lane.b32.xlu0 %v9094, 9
        %v9125 = vpop.permute.xlu0 %9124
        %9126 = vrot.lane.b32.xlu0 %v9095, 9
        %v9127 = vpop.permute.xlu0 %9126
        %v9136 = vunpack.c.l.b16 %v8556
        %v9137 = vunpack.c.l.b16 %v8557
        %v9138 = vunpack.c.l.b16 %v8558
        %v9139 = vunpack.c.l.b16 %v8559
        %v9140 = vunpack.c.l.b16 %v8560
        %v9141 = vunpack.c.l.b16 %v8561
        %v9142 = vunpack.c.l.b16 %v8562
        %v9143 = vunpack.c.l.b16 %v8563
        %v9144 = vpack.c.b16 %v9136, %v9136
        %v9145 = vpack.c.b16 %v9137, %v9137
        %v9146 = vpack.c.b16 %v9138, %v9138
        %v9147 = vpack.c.b16 %v9139, %v9139
        %v9148 = vpack.c.b16 %v9140, %v9140
        %v9149 = vpack.c.b16 %v9141, %v9141
        %v9150 = vpack.c.b16 %v9142, %v9142
        %v9151 = vpack.c.b16 %v9143, %v9143
        %v9153 = vshrl.u32 %v9080, 16
        %v9155 = vshll.u32 %v9080, 16
        %v9157 = vrot.slane %v9155, 1
        %v9158 = vor.u32 %v9153, %v9157
        %v9160 = vshll.u32 %v9081, 16
        %v9162 = vrot.slane %v9160, 1
        %v9163 = vsel %vm2352, %v9158, %v9162
        %v9164 = vshrl.u32 %v9081, 16
        %v9166 = vor.u32 %v9164, %v9162
        %v9168 = vshll.u32 %v9144, 16
        %v9170 = vrot.slane %v9168, 1
        %v9171 = vsel %vm2352, %v9166, %v9170
        %v9173 = vshrl.u32 %v9082, 16
        %v9175 = vshll.u32 %v9082, 16
        %v9177 = vrot.slane %v9175, 1
        %v9178 = vor.u32 %v9173, %v9177
        %v9180 = vshll.u32 %v9083, 16
        %v9182 = vrot.slane %v9180, 1
        %v9183 = vsel %vm2352, %v9178, %v9182
        %v9184 = vshrl.u32 %v9083, 16
        %v9186 = vor.u32 %v9184, %v9182
        %v9188 = vshll.u32 %v9145, 16
        %v9190 = vrot.slane %v9188, 1
        %v9191 = vsel %vm2352, %v9186, %v9190
        %v9193 = vshrl.u32 %v9084, 16
        %v9195 = vshll.u32 %v9084, 16
        %v9197 = vrot.slane %v9195, 1
        %v9198 = vor.u32 %v9193, %v9197
        %v9200 = vshll.u32 %v9085, 16
        %v9202 = vrot.slane %v9200, 1
        %v9203 = vsel %vm2352, %v9198, %v9202
        %v9204 = vshrl.u32 %v9085, 16
        %v9206 = vor.u32 %v9204, %v9202
        %v9208 = vshll.u32 %v9146, 16
        %v9210 = vrot.slane %v9208, 1
        %v9211 = vsel %vm2352, %v9206, %v9210
        %v9213 = vshrl.u32 %v9086, 16
        %v9215 = vshll.u32 %v9086, 16
        %v9217 = vrot.slane %v9215, 1
        %v9218 = vor.u32 %v9213, %v9217
        %v9220 = vshll.u32 %v9087, 16
        %v9222 = vrot.slane %v9220, 1
        %v9223 = vsel %vm2352, %v9218, %v9222
        %v9224 = vshrl.u32 %v9087, 16
        %v9226 = vor.u32 %v9224, %v9222
        %v9228 = vshll.u32 %v9147, 16
        %v9230 = vrot.slane %v9228, 1
        %v9231 = vsel %vm2352, %v9226, %v9230
        %v9233 = vshrl.u32 %v9088, 16
        %v9235 = vshll.u32 %v9088, 16
        %v9237 = vrot.slane %v9235, 1
        %v9238 = vor.u32 %v9233, %v9237
        %v9240 = vshll.u32 %v9089, 16
        %v9242 = vrot.slane %v9240, 1
        %v9243 = vsel %vm2352, %v9238, %v9242
        %v9244 = vshrl.u32 %v9089, 16
        %v9246 = vor.u32 %v9244, %v9242
        %v9248 = vshll.u32 %v9148, 16
        %v9250 = vrot.slane %v9248, 1
        %v9251 = vsel %vm2352, %v9246, %v9250
        %v9253 = vshrl.u32 %v9090, 16
        %v9255 = vshll.u32 %v9090, 16
        %v9257 = vrot.slane %v9255, 1
        %v9258 = vor.u32 %v9253, %v9257
        %v9260 = vshll.u32 %v9091, 16
        %v9262 = vrot.slane %v9260, 1
        %v9263 = vsel %vm2352, %v9258, %v9262
        %v9264 = vshrl.u32 %v9091, 16
        %v9266 = vor.u32 %v9264, %v9262
        %v9268 = vshll.u32 %v9149, 16
        %v9270 = vrot.slane %v9268, 1
        %v9271 = vsel %vm2352, %v9266, %v9270
        %v9273 = vshrl.u32 %v9092, 16
        %v9275 = vshll.u32 %v9092, 16
        %v9277 = vrot.slane %v9275, 1
        %v9278 = vor.u32 %v9273, %v9277
        %v9280 = vshll.u32 %v9093, 16
        %v9282 = vrot.slane %v9280, 1
        %v9283 = vsel %vm2352, %v9278, %v9282
        %v9284 = vshrl.u32 %v9093, 16
        %v9286 = vor.u32 %v9284, %v9282
        %v9288 = vshll.u32 %v9150, 16
        %v9290 = vrot.slane %v9288, 1
        %v9291 = vsel %vm2352, %v9286, %v9290
        %v9293 = vshrl.u32 %v9094, 16
        %v9295 = vshll.u32 %v9094, 16
        %v9297 = vrot.slane %v9295, 1
        %v9298 = vor.u32 %v9293, %v9297
        %v9300 = vshll.u32 %v9095, 16
        %v9302 = vrot.slane %v9300, 1
        %v9303 = vsel %vm2352, %v9298, %v9302
        %v9304 = vshrl.u32 %v9095, 16
        %v9306 = vor.u32 %v9304, %v9302
        %v9308 = vshll.u32 %v9151, 16
        %v9310 = vrot.slane %v9308, 1
        %v9311 = vsel %vm2352, %v9306, %v9310
        %9312 = vrot.lane.b32.xlu0 %v9163, 12
        %v9313 = vpop.permute.xlu0 %9312
        %9314 = vrot.lane.b32.xlu0 %v9171, 12
        %v9315 = vpop.permute.xlu0 %9314
        %9316 = vrot.lane.b32.xlu0 %v9183, 12
        %v9317 = vpop.permute.xlu0 %9316
        %9318 = vrot.lane.b32.xlu0 %v9191, 12
        %v9319 = vpop.permute.xlu0 %9318
        %9320 = vrot.lane.b32.xlu0 %v9203, 12
        %v9321 = vpop.permute.xlu0 %9320
        %9322 = vrot.lane.b32.xlu0 %v9211, 12
        %v9323 = vpop.permute.xlu0 %9322
        %9324 = vrot.lane.b32.xlu0 %v9223, 12
        %v9325 = vpop.permute.xlu0 %9324
        %9326 = vrot.lane.b32.xlu0 %v9231, 12
        %v9327 = vpop.permute.xlu0 %9326
        %9328 = vrot.lane.b32.xlu0 %v9243, 12
        %v9329 = vpop.permute.xlu0 %9328
        %9330 = vrot.lane.b32.xlu0 %v9251, 12
        %v9331 = vpop.permute.xlu0 %9330
        %9332 = vrot.lane.b32.xlu0 %v9263, 12
        %v9333 = vpop.permute.xlu0 %9332
        %9334 = vrot.lane.b32.xlu0 %v9271, 12
        %v9335 = vpop.permute.xlu0 %9334
        %9336 = vrot.lane.b32.xlu0 %v9283, 12
        %v9337 = vpop.permute.xlu0 %9336
        %9338 = vrot.lane.b32.xlu0 %v9291, 12
        %v9339 = vpop.permute.xlu0 %9338
        %9340 = vrot.lane.b32.xlu0 %v9303, 12
        %v9341 = vpop.permute.xlu0 %9340
        %9342 = vrot.lane.b32.xlu0 %v9311, 12
        %v9343 = vpop.permute.xlu0 %9342
        %v9352 = vunpack.c.l.b16 %v8564
        %v9353 = vunpack.c.l.b16 %v8565
        %v9354 = vunpack.c.l.b16 %v8566
        %v9355 = vunpack.c.l.b16 %v8567
        %v9356 = vunpack.c.l.b16 %v8568
        %v9357 = vunpack.c.l.b16 %v8569
        %v9358 = vunpack.c.l.b16 %v8570
        %v9359 = vunpack.c.l.b16 %v8571
        %v9360 = vpack.c.b16 %v9049, %v9352
        %v9361 = vpack.c.b16 %v9053, %v9353
        %v9362 = vpack.c.b16 %v9057, %v9354
        %v9363 = vpack.c.b16 %v9061, %v9355
        %v9364 = vpack.c.b16 %v9065, %v9356
        %v9365 = vpack.c.b16 %v9069, %v9357
        %v9366 = vpack.c.b16 %v9073, %v9358
        %v9367 = vpack.c.b16 %v9077, %v9359
        %v9368 = vrot.slane %v9360, 1
        %v9369 = vrot.slane %v9081, 1
        %v9370 = vsel %vm2569, %v9368, %v9369
        %v9371 = vrot.slane %v9144, 1
        %v9372 = vsel %vm2569, %v9369, %v9371
        %v9373 = vrot.slane %v9361, 1
        %v9374 = vrot.slane %v9083, 1
        %v9375 = vsel %vm2569, %v9373, %v9374
        %v9376 = vrot.slane %v9145, 1
        %v9377 = vsel %vm2569, %v9374, %v9376
        %v9378 = vrot.slane %v9362, 1
        %v9379 = vrot.slane %v9085, 1
        %v9380 = vsel %vm2569, %v9378, %v9379
        %v9381 = vrot.slane %v9146, 1
        %v9382 = vsel %vm2569, %v9379, %v9381
        %v9383 = vrot.slane %v9363, 1
        %v9384 = vrot.slane %v9087, 1
        %v9385 = vsel %vm2569, %v9383, %v9384
        %v9386 = vrot.slane %v9147, 1
        %v9387 = vsel %vm2569, %v9384, %v9386
        %v9388 = vrot.slane %v9364, 1
        %v9389 = vrot.slane %v9089, 1
        %v9390 = vsel %vm2569, %v9388, %v9389
        %v9391 = vrot.slane %v9148, 1
        %v9392 = vsel %vm2569, %v9389, %v9391
        %v9393 = vrot.slane %v9365, 1
        %v9394 = vrot.slane %v9091, 1
        %v9395 = vsel %vm2569, %v9393, %v9394
        %v9396 = vrot.slane %v9149, 1
        %v9397 = vsel %vm2569, %v9394, %v9396
        %v9398 = vrot.slane %v9366, 1
        %v9399 = vrot.slane %v9093, 1
        %v9400 = vsel %vm2569, %v9398, %v9399
        %v9401 = vrot.slane %v9150, 1
        %v9402 = vsel %vm2569, %v9399, %v9401
        %v9403 = vrot.slane %v9367, 1
        %v9404 = vrot.slane %v9095, 1
        %v9405 = vsel %vm2569, %v9403, %v9404
        %v9406 = vrot.slane %v9151, 1
        %v9407 = vsel %vm2569, %v9404, %v9406
        %9408 = vrot.lane.b32.xlu0 %v9370, 15
        %v9409 = vpop.permute.xlu0 %9408
        %9410 = vrot.lane.b32.xlu0 %v9372, 15
        %v9411 = vpop.permute.xlu0 %9410
        %9412 = vrot.lane.b32.xlu0 %v9375, 15
        %v9413 = vpop.permute.xlu0 %9412
        %9414 = vrot.lane.b32.xlu0 %v9377, 15
        %v9415 = vpop.permute.xlu0 %9414
        %9416 = vrot.lane.b32.xlu0 %v9380, 15
        %v9417 = vpop.permute.xlu0 %9416
        %9418 = vrot.lane.b32.xlu0 %v9382, 15
        %v9419 = vpop.permute.xlu0 %9418
        %9420 = vrot.lane.b32.xlu0 %v9385, 15
        %v9421 = vpop.permute.xlu0 %9420
        %9422 = vrot.lane.b32.xlu0 %v9387, 15
        %v9423 = vpop.permute.xlu0 %9422
        %9424 = vrot.lane.b32.xlu0 %v9390, 15
        %v9425 = vpop.permute.xlu0 %9424
        %9426 = vrot.lane.b32.xlu0 %v9392, 15
        %v9427 = vpop.permute.xlu0 %9426
        %9428 = vrot.lane.b32.xlu0 %v9395, 15
        %v9429 = vpop.permute.xlu0 %9428
        %9430 = vrot.lane.b32.xlu0 %v9397, 15
        %v9431 = vpop.permute.xlu0 %9430
        %9432 = vrot.lane.b32.xlu0 %v9400, 15
        %v9433 = vpop.permute.xlu0 %9432
        %9434 = vrot.lane.b32.xlu0 %v9402, 15
        %v9435 = vpop.permute.xlu0 %9434
        %9436 = vrot.lane.b32.xlu0 %v9405, 15
        %v9437 = vpop.permute.xlu0 %9436
        %9438 = vrot.lane.b32.xlu0 %v9407, 15
        %v9439 = vpop.permute.xlu0 %9438
        %v9472 = vunpack.c.l.b16 %v8576
        %v9473 = vunpack.c.l.b16 %v8577
        %v9474 = vunpack.c.l.b16 %v8578
        %v9475 = vunpack.c.l.b16 %v8579
        %v9476 = vunpack.c.l.b16 %v8580
        %v9477 = vunpack.c.l.b16 %v8581
        %v9478 = vunpack.c.l.b16 %v8582
        %v9479 = vunpack.c.l.b16 %v8583
        %v9480 = vunpack.c.l.b16 %v8584
        %v9481 = vunpack.c.l.b16 %v8585
        %v9482 = vunpack.c.l.b16 %v8586
        %v9483 = vunpack.c.l.b16 %v8587
        %v9484 = vunpack.c.l.b16 %v8588
        %v9485 = vunpack.c.l.b16 %v8589
        %v9486 = vunpack.c.l.b16 %v8590
        %v9487 = vunpack.c.l.b16 %v8591
        %v9488 = vunpack.c.l.b16 %v8592
        %v9489 = vunpack.c.l.b16 %v8593
        %v9490 = vunpack.c.l.b16 %v8594
        %v9491 = vunpack.c.l.b16 %v8595
        %v9492 = vunpack.c.l.b16 %v8596
        %v9493 = vunpack.c.l.b16 %v8597
        %v9494 = vunpack.c.l.b16 %v8598
        %v9495 = vunpack.c.l.b16 %v8599
        %v9496 = vunpack.c.l.b16 %v8600
        %v9497 = vunpack.c.l.b16 %v8601
        %v9498 = vunpack.c.l.b16 %v8602
        %v9499 = vunpack.c.l.b16 %v8603
        %v9500 = vunpack.c.l.b16 %v8604
        %v9501 = vunpack.c.l.b16 %v8605
        %v9502 = vunpack.c.l.b16 %v8606
        %v9503 = vunpack.c.l.b16 %v8607
        %v9504 = vpack.c.b16 %v9473, %v9472
        %v9505 = vpack.c.b16 %v9475, %v9474
        %v9506 = vpack.c.b16 %v9477, %v9476
        %v9507 = vpack.c.b16 %v9479, %v9478
        %v9508 = vpack.c.b16 %v9481, %v9480
        %v9509 = vpack.c.b16 %v9483, %v9482
        %v9510 = vpack.c.b16 %v9485, %v9484
        %v9511 = vpack.c.b16 %v9487, %v9486
        %v9512 = vpack.c.b16 %v9489, %v9488
        %v9513 = vpack.c.b16 %v9491, %v9490
        %v9514 = vpack.c.b16 %v9493, %v9492
        %v9515 = vpack.c.b16 %v9495, %v9494
        %v9516 = vpack.c.b16 %v9497, %v9496
        %v9517 = vpack.c.b16 %v9499, %v9498
        %v9518 = vpack.c.b16 %v9501, %v9500
        %v9519 = vpack.c.b16 %v9503, %v9502
        %9520 = vrot.lane.b32.xlu0 %v9504, 18
        %v9521 = vpop.permute.xlu0 %9520
        %9522 = vrot.lane.b32.xlu0 %v9505, 18
        %v9523 = vpop.permute.xlu0 %9522
        %9524 = vrot.lane.b32.xlu0 %v9506, 18
        %v9525 = vpop.permute.xlu0 %9524
        %9526 = vrot.lane.b32.xlu0 %v9507, 18
        %v9527 = vpop.permute.xlu0 %9526
        %9528 = vrot.lane.b32.xlu0 %v9508, 18
        %v9529 = vpop.permute.xlu0 %9528
        %9530 = vrot.lane.b32.xlu0 %v9509, 18
        %v9531 = vpop.permute.xlu0 %9530
        %9532 = vrot.lane.b32.xlu0 %v9510, 18
        %v9533 = vpop.permute.xlu0 %9532
        %9534 = vrot.lane.b32.xlu0 %v9511, 18
        %v9535 = vpop.permute.xlu0 %9534
        %9536 = vrot.lane.b32.xlu0 %v9512, 18
        %v9537 = vpop.permute.xlu0 %9536
        %9538 = vrot.lane.b32.xlu0 %v9513, 18
        %v9539 = vpop.permute.xlu0 %9538
        %9540 = vrot.lane.b32.xlu0 %v9514, 18
        %v9541 = vpop.permute.xlu0 %9540
        %9542 = vrot.lane.b32.xlu0 %v9515, 18
        %v9543 = vpop.permute.xlu0 %9542
        %9544 = vrot.lane.b32.xlu0 %v9516, 18
        %v9545 = vpop.permute.xlu0 %9544
        %9546 = vrot.lane.b32.xlu0 %v9517, 18
        %v9547 = vpop.permute.xlu0 %9546
        %9548 = vrot.lane.b32.xlu0 %v9518, 18
        %v9549 = vpop.permute.xlu0 %9548
        %9550 = vrot.lane.b32.xlu0 %v9519, 18
        %v9551 = vpop.permute.xlu0 %9550
        %v9560 = vunpack.c.l.b16 %v8608
        %v9561 = vunpack.c.l.b16 %v8609
        %v9562 = vunpack.c.l.b16 %v8610
        %v9563 = vunpack.c.l.b16 %v8611
        %v9564 = vunpack.c.l.b16 %v8612
        %v9565 = vunpack.c.l.b16 %v8613
        %v9566 = vunpack.c.l.b16 %v8614
        %v9567 = vunpack.c.l.b16 %v8615
        %v9568 = vpack.c.b16 %v9560, %v9560
        %v9569 = vpack.c.b16 %v9561, %v9561
        %v9570 = vpack.c.b16 %v9562, %v9562
        %v9571 = vpack.c.b16 %v9563, %v9563
        %v9572 = vpack.c.b16 %v9564, %v9564
        %v9573 = vpack.c.b16 %v9565, %v9565
        %v9574 = vpack.c.b16 %v9566, %v9566
        %v9575 = vpack.c.b16 %v9567, %v9567
        %v9577 = vshrl.u32 %v9504, 16
        %v9579 = vshll.u32 %v9504, 16
        %v9581 = vrot.slane %v9579, 1
        %v9582 = vor.u32 %v9577, %v9581
        %v9584 = vshll.u32 %v9505, 16
        %v9586 = vrot.slane %v9584, 1
        %v9587 = vsel %vm2352, %v9582, %v9586
        %v9588 = vshrl.u32 %v9505, 16
        %v9590 = vor.u32 %v9588, %v9586
        %v9592 = vshll.u32 %v9568, 16
        %v9594 = vrot.slane %v9592, 1
        %v9595 = vsel %vm2352, %v9590, %v9594
        %v9597 = vshrl.u32 %v9506, 16
        %v9599 = vshll.u32 %v9506, 16
        %v9601 = vrot.slane %v9599, 1
        %v9602 = vor.u32 %v9597, %v9601
        %v9604 = vshll.u32 %v9507, 16
        %v9606 = vrot.slane %v9604, 1
        %v9607 = vsel %vm2352, %v9602, %v9606
        %v9608 = vshrl.u32 %v9507, 16
        %v9610 = vor.u32 %v9608, %v9606
        %v9612 = vshll.u32 %v9569, 16
        %v9614 = vrot.slane %v9612, 1
        %v9615 = vsel %vm2352, %v9610, %v9614
        %v9617 = vshrl.u32 %v9508, 16
        %v9619 = vshll.u32 %v9508, 16
        %v9621 = vrot.slane %v9619, 1
        %v9622 = vor.u32 %v9617, %v9621
        %v9624 = vshll.u32 %v9509, 16
        %v9626 = vrot.slane %v9624, 1
        %v9627 = vsel %vm2352, %v9622, %v9626
        %v9628 = vshrl.u32 %v9509, 16
        %v9630 = vor.u32 %v9628, %v9626
        %v9632 = vshll.u32 %v9570, 16
        %v9634 = vrot.slane %v9632, 1
        %v9635 = vsel %vm2352, %v9630, %v9634
        %v9637 = vshrl.u32 %v9510, 16
        %v9639 = vshll.u32 %v9510, 16
        %v9641 = vrot.slane %v9639, 1
        %v9642 = vor.u32 %v9637, %v9641
        %v9644 = vshll.u32 %v9511, 16
        %v9646 = vrot.slane %v9644, 1
        %v9647 = vsel %vm2352, %v9642, %v9646
        %v9648 = vshrl.u32 %v9511, 16
        %v9650 = vor.u32 %v9648, %v9646
        %v9652 = vshll.u32 %v9571, 16
        %v9654 = vrot.slane %v9652, 1
        %v9655 = vsel %vm2352, %v9650, %v9654
        %v9657 = vshrl.u32 %v9512, 16
        %v9659 = vshll.u32 %v9512, 16
        %v9661 = vrot.slane %v9659, 1
        %v9662 = vor.u32 %v9657, %v9661
        %v9664 = vshll.u32 %v9513, 16
        %v9666 = vrot.slane %v9664, 1
        %v9667 = vsel %vm2352, %v9662, %v9666
        %v9668 = vshrl.u32 %v9513, 16
        %v9670 = vor.u32 %v9668, %v9666
        %v9672 = vshll.u32 %v9572, 16
        %v9674 = vrot.slane %v9672, 1
        %v9675 = vsel %vm2352, %v9670, %v9674
        %v9677 = vshrl.u32 %v9514, 16
        %v9679 = vshll.u32 %v9514, 16
        %v9681 = vrot.slane %v9679, 1
        %v9682 = vor.u32 %v9677, %v9681
        %v9684 = vshll.u32 %v9515, 16
        %v9686 = vrot.slane %v9684, 1
        %v9687 = vsel %vm2352, %v9682, %v9686
        %v9688 = vshrl.u32 %v9515, 16
        %v9690 = vor.u32 %v9688, %v9686
        %v9692 = vshll.u32 %v9573, 16
        %v9694 = vrot.slane %v9692, 1
        %v9695 = vsel %vm2352, %v9690, %v9694
        %v9697 = vshrl.u32 %v9516, 16
        %v9699 = vshll.u32 %v9516, 16
        %v9701 = vrot.slane %v9699, 1
        %v9702 = vor.u32 %v9697, %v9701
        %v9704 = vshll.u32 %v9517, 16
        %v9706 = vrot.slane %v9704, 1
        %v9707 = vsel %vm2352, %v9702, %v9706
        %v9708 = vshrl.u32 %v9517, 16
        %v9710 = vor.u32 %v9708, %v9706
        %v9712 = vshll.u32 %v9574, 16
        %v9714 = vrot.slane %v9712, 1
        %v9715 = vsel %vm2352, %v9710, %v9714
        %v9717 = vshrl.u32 %v9518, 16
        %v9719 = vshll.u32 %v9518, 16
        %v9721 = vrot.slane %v9719, 1
        %v9722 = vor.u32 %v9717, %v9721
        %v9724 = vshll.u32 %v9519, 16
        %v9726 = vrot.slane %v9724, 1
        %v9727 = vsel %vm2352, %v9722, %v9726
        %v9728 = vshrl.u32 %v9519, 16
        %v9730 = vor.u32 %v9728, %v9726
        %v9732 = vshll.u32 %v9575, 16
        %v9734 = vrot.slane %v9732, 1
        %v9735 = vsel %vm2352, %v9730, %v9734
        %9736 = vrot.lane.b32.xlu0 %v9587, 21
        %v9737 = vpop.permute.xlu0 %9736
        %9738 = vrot.lane.b32.xlu0 %v9595, 21
        %v9739 = vpop.permute.xlu0 %9738
        %9740 = vrot.lane.b32.xlu0 %v9607, 21
        %v9741 = vpop.permute.xlu0 %9740
        %9742 = vrot.lane.b32.xlu0 %v9615, 21
        %v9743 = vpop.permute.xlu0 %9742
        %9744 = vrot.lane.b32.xlu0 %v9627, 21
        %v9745 = vpop.permute.xlu0 %9744
        %9746 = vrot.lane.b32.xlu0 %v9635, 21
        %v9747 = vpop.permute.xlu0 %9746
        %9748 = vrot.lane.b32.xlu0 %v9647, 21
        %v9749 = vpop.permute.xlu0 %9748
        %9750 = vrot.lane.b32.xlu0 %v9655, 21
        %v9751 = vpop.permute.xlu0 %9750
        %9752 = vrot.lane.b32.xlu0 %v9667, 21
        %v9753 = vpop.permute.xlu0 %9752
        %9754 = vrot.lane.b32.xlu0 %v9675, 21
        %v9755 = vpop.permute.xlu0 %9754
        %9756 = vrot.lane.b32.xlu0 %v9687, 21
        %v9757 = vpop.permute.xlu0 %9756
        %9758 = vrot.lane.b32.xlu0 %v9695, 21
        %v9759 = vpop.permute.xlu0 %9758
        %9760 = vrot.lane.b32.xlu0 %v9707, 21
        %v9761 = vpop.permute.xlu0 %9760
        %9762 = vrot.lane.b32.xlu0 %v9715, 21
        %v9763 = vpop.permute.xlu0 %9762
        %9764 = vrot.lane.b32.xlu0 %v9727, 21
        %v9765 = vpop.permute.xlu0 %9764
        %9766 = vrot.lane.b32.xlu0 %v9735, 21
        %v9767 = vpop.permute.xlu0 %9766
        %v9776 = vunpack.c.l.b16 %v8616
        %v9777 = vunpack.c.l.b16 %v8617
        %v9778 = vunpack.c.l.b16 %v8618
        %v9779 = vunpack.c.l.b16 %v8619
        %v9780 = vunpack.c.l.b16 %v8620
        %v9781 = vunpack.c.l.b16 %v8621
        %v9782 = vunpack.c.l.b16 %v8622
        %v9783 = vunpack.c.l.b16 %v8623
        %v9784 = vpack.c.b16 %v9473, %v9776
        %v9785 = vpack.c.b16 %v9477, %v9777
        %v9786 = vpack.c.b16 %v9481, %v9778
        %v9787 = vpack.c.b16 %v9485, %v9779
        %v9788 = vpack.c.b16 %v9489, %v9780
        %v9789 = vpack.c.b16 %v9493, %v9781
        %v9790 = vpack.c.b16 %v9497, %v9782
        %v9791 = vpack.c.b16 %v9501, %v9783
        %v9792 = vrot.slane %v9784, 1
        %v9793 = vrot.slane %v9505, 1
        %v9794 = vsel %vm2569, %v9792, %v9793
        %v9795 = vrot.slane %v9568, 1
        %v9796 = vsel %vm2569, %v9793, %v9795
        %v9797 = vrot.slane %v9785, 1
        %v9798 = vrot.slane %v9507, 1
        %v9799 = vsel %vm2569, %v9797, %v9798
        %v9800 = vrot.slane %v9569, 1
        %v9801 = vsel %vm2569, %v9798, %v9800
        %v9802 = vrot.slane %v9786, 1
        %v9803 = vrot.slane %v9509, 1
        %v9804 = vsel %vm2569, %v9802, %v9803
        %v9805 = vrot.slane %v9570, 1
        %v9806 = vsel %vm2569, %v9803, %v9805
        %v9807 = vrot.slane %v9787, 1
        %v9808 = vrot.slane %v9511, 1
        %v9809 = vsel %vm2569, %v9807, %v9808
        %v9810 = vrot.slane %v9571, 1
        %v9811 = vsel %vm2569, %v9808, %v9810
        %v9812 = vrot.slane %v9788, 1
        %v9813 = vrot.slane %v9513, 1
        %v9814 = vsel %vm2569, %v9812, %v9813
        %v9815 = vrot.slane %v9572, 1
        %v9816 = vsel %vm2569, %v9813, %v9815
        %v9817 = vrot.slane %v9789, 1
        %v9818 = vrot.slane %v9515, 1
        %v9819 = vsel %vm2569, %v9817, %v9818
        %v9820 = vrot.slane %v9573, 1
        %v9821 = vsel %vm2569, %v9818, %v9820
        %v9822 = vrot.slane %v9790, 1
        %v9823 = vrot.slane %v9517, 1
        %v9824 = vsel %vm2569, %v9822, %v9823
        %v9825 = vrot.slane %v9574, 1
        %v9826 = vsel %vm2569, %v9823, %v9825
        %v9827 = vrot.slane %v9791, 1
        %v9828 = vrot.slane %v9519, 1
        %v9829 = vsel %vm2569, %v9827, %v9828
        %v9830 = vrot.slane %v9575, 1
        %v9831 = vsel %vm2569, %v9828, %v9830
        %9832 = vrot.lane.b32.xlu0 %v9794, 24
        %v9833 = vpop.permute.xlu0 %9832
        %9834 = vrot.lane.b32.xlu0 %v9796, 24
        %v9835 = vpop.permute.xlu0 %9834
        %9836 = vrot.lane.b32.xlu0 %v9799, 24
        %v9837 = vpop.permute.xlu0 %9836
        %9838 = vrot.lane.b32.xlu0 %v9801, 24
        %v9839 = vpop.permute.xlu0 %9838
        %9840 = vrot.lane.b32.xlu0 %v9804, 24
        %v9841 = vpop.permute.xlu0 %9840
        %9842 = vrot.lane.b32.xlu0 %v9806, 24
        %v9843 = vpop.permute.xlu0 %9842
        %9844 = vrot.lane.b32.xlu0 %v9809, 24
        %v9845 = vpop.permute.xlu0 %9844
        %9846 = vrot.lane.b32.xlu0 %v9811, 24
        %v9847 = vpop.permute.xlu0 %9846
        %9848 = vrot.lane.b32.xlu0 %v9814, 24
        %v9849 = vpop.permute.xlu0 %9848
        %9850 = vrot.lane.b32.xlu0 %v9816, 24
        %v9851 = vpop.permute.xlu0 %9850
        %9852 = vrot.lane.b32.xlu0 %v9819, 24
        %v9853 = vpop.permute.xlu0 %9852
        %9854 = vrot.lane.b32.xlu0 %v9821, 24
        %v9855 = vpop.permute.xlu0 %9854
        %9856 = vrot.lane.b32.xlu0 %v9824, 24
        %v9857 = vpop.permute.xlu0 %9856
        %9858 = vrot.lane.b32.xlu0 %v9826, 24
        %v9859 = vpop.permute.xlu0 %9858
        %9860 = vrot.lane.b32.xlu0 %v9829, 24
        %v9861 = vpop.permute.xlu0 %9860
        %9862 = vrot.lane.b32.xlu0 %v9831, 24
        %v9863 = vpop.permute.xlu0 %9862
        %v9865 = vsel %vm3490, %v8688, %v8889
        %v9867 = vsel %vm3490, %v8689, %v8891
        %v9869 = vsel %vm3490, %v8690, %v8893
        %v9871 = vsel %vm3490, %v8691, %v8895
        %v9873 = vsel %vm3490, %v8692, %v8897
        %v9875 = vsel %vm3490, %v8693, %v8899
        %v9877 = vsel %vm3490, %v8694, %v8901
        %v9879 = vsel %vm3490, %v8695, %v8903
        %v9881 = vsel %vm3490, %v8696, %v8905
        %v9883 = vsel %vm3490, %v8697, %v8907
        %v9885 = vsel %vm3490, %v8698, %v8909
        %v9887 = vsel %vm3490, %v8699, %v8911
        %v9889 = vsel %vm3490, %v8700, %v8913
        %v9891 = vsel %vm3490, %v8701, %v8915
        %v9893 = vsel %vm3490, %v8702, %v8917
        %v9895 = vsel %vm3490, %v8703, %v8919
        %v9897 = vsel %vm3523, %v9865, %v8985
        %v9899 = vsel %vm3523, %v9867, %v8987
        %v9901 = vsel %vm3523, %v9869, %v8989
        %v9903 = vsel %vm3523, %v9871, %v8991
        %v9905 = vsel %vm3523, %v9873, %v8993
        %v9907 = vsel %vm3523, %v9875, %v8995
        %v9909 = vsel %vm3523, %v9877, %v8997
        %v9911 = vsel %vm3523, %v9879, %v8999
        %v9913 = vsel %vm3523, %v9881, %v9001
        %v9915 = vsel %vm3523, %v9883, %v9003
        %v9917 = vsel %vm3523, %v9885, %v9005
        %v9919 = vsel %vm3523, %v9887, %v9007
        %v9921 = vsel %vm3523, %v9889, %v9009
        %v9923 = vsel %vm3523, %v9891, %v9011
        %v9925 = vsel %vm3523, %v9893, %v9013
        %v9927 = vsel %vm3523, %v9895, %v9015
        %v9929 = vsel %vm3556, %v9897, %v9097
        %v9931 = vsel %vm3556, %v9899, %v9099
        %v9933 = vsel %vm3556, %v9901, %v9101
        %v9935 = vsel %vm3556, %v9903, %v9103
        %v9937 = vsel %vm3556, %v9905, %v9105
        %v9939 = vsel %vm3556, %v9907, %v9107
        %v9941 = vsel %vm3556, %v9909, %v9109
        %v9943 = vsel %vm3556, %v9911, %v9111
        %v9945 = vsel %vm3556, %v9913, %v9113
        %v9947 = vsel %vm3556, %v9915, %v9115
        %v9949 = vsel %vm3556, %v9917, %v9117
        %v9951 = vsel %vm3556, %v9919, %v9119
        %v9953 = vsel %vm3556, %v9921, %v9121
        %v9955 = vsel %vm3556, %v9923, %v9123
        %v9957 = vsel %vm3556, %v9925, %v9125
        %v9959 = vsel %vm3556, %v9927, %v9127
        %v9961 = vsel %vm3589, %v9929, %v9313
        %v9963 = vsel %vm3589, %v9931, %v9315
        %v9965 = vsel %vm3589, %v9933, %v9317
        %v9967 = vsel %vm3589, %v9935, %v9319
        %v9969 = vsel %vm3589, %v9937, %v9321
        %v9971 = vsel %vm3589, %v9939, %v9323
        %v9973 = vsel %vm3589, %v9941, %v9325
        %v9975 = vsel %vm3589, %v9943, %v9327
        %v9977 = vsel %vm3589, %v9945, %v9329
        %v9979 = vsel %vm3589, %v9947, %v9331
        %v9981 = vsel %vm3589, %v9949, %v9333
        %v9983 = vsel %vm3589, %v9951, %v9335
        %v9985 = vsel %vm3589, %v9953, %v9337
        %v9987 = vsel %vm3589, %v9955, %v9339
        %v9989 = vsel %vm3589, %v9957, %v9341
        %v9991 = vsel %vm3589, %v9959, %v9343
        %v9993 = vsel %vm3622, %v9961, %v9409
        %v9995 = vsel %vm3622, %v9963, %v9411
        %v9997 = vsel %vm3622, %v9965, %v9413
        %v9999 = vsel %vm3622, %v9967, %v9415
        %v10001 = vsel %vm3622, %v9969, %v9417
        %v10003 = vsel %vm3622, %v9971, %v9419
        %v10005 = vsel %vm3622, %v9973, %v9421
        %v10007 = vsel %vm3622, %v9975, %v9423
        %v10009 = vsel %vm3622, %v9977, %v9425
        %v10011 = vsel %vm3622, %v9979, %v9427
        %v10013 = vsel %vm3622, %v9981, %v9429
        %v10015 = vsel %vm3622, %v9983, %v9431
        %v10017 = vsel %vm3622, %v9985, %v9433
        %v10019 = vsel %vm3622, %v9987, %v9435
        %v10021 = vsel %vm3622, %v9989, %v9437
        %v10023 = vsel %vm3622, %v9991, %v9439
        %v10025 = vsel %vm3655, %v9993, %v9521
        %v10027 = vsel %vm3655, %v9995, %v9523
        %v10029 = vsel %vm3655, %v9997, %v9525
        %v10031 = vsel %vm3655, %v9999, %v9527
        %v10033 = vsel %vm3655, %v10001, %v9529
        %v10035 = vsel %vm3655, %v10003, %v9531
        %v10037 = vsel %vm3655, %v10005, %v9533
        %v10039 = vsel %vm3655, %v10007, %v9535
        %v10041 = vsel %vm3655, %v10009, %v9537
        %v10043 = vsel %vm3655, %v10011, %v9539
        %v10045 = vsel %vm3655, %v10013, %v9541
        %v10047 = vsel %vm3655, %v10015, %v9543
        %v10049 = vsel %vm3655, %v10017, %v9545
        %v10051 = vsel %vm3655, %v10019, %v9547
        %v10053 = vsel %vm3655, %v10021, %v9549
        %v10055 = vsel %vm3655, %v10023, %v9551
        %v10057 = vsel %vm3688, %v10025, %v9737
        %v10059 = vsel %vm3688, %v10027, %v9739
        %v10061 = vsel %vm3688, %v10029, %v9741
        %v10063 = vsel %vm3688, %v10031, %v9743
        %v10065 = vsel %vm3688, %v10033, %v9745
        %v10067 = vsel %vm3688, %v10035, %v9747
        %v10069 = vsel %vm3688, %v10037, %v9749
        %v10071 = vsel %vm3688, %v10039, %v9751
        %v10073 = vsel %vm3688, %v10041, %v9753
        %v10075 = vsel %vm3688, %v10043, %v9755
        %v10077 = vsel %vm3688, %v10045, %v9757
        %v10079 = vsel %vm3688, %v10047, %v9759
        %v10081 = vsel %vm3688, %v10049, %v9761
        %v10083 = vsel %vm3688, %v10051, %v9763
        %v10085 = vsel %vm3688, %v10053, %v9765
        %v10087 = vsel %vm3688, %v10055, %v9767
        %v10089 = vsel %vm3721, %v10057, %v9833
        %v10091 = vsel %vm3721, %v10059, %v9835
        %v10093 = vsel %vm3721, %v10061, %v9837
        %v10095 = vsel %vm3721, %v10063, %v9839
        %v10097 = vsel %vm3721, %v10065, %v9841
        %v10099 = vsel %vm3721, %v10067, %v9843
        %v10101 = vsel %vm3721, %v10069, %v9845
        %v10103 = vsel %vm3721, %v10071, %v9847
        %v10105 = vsel %vm3721, %v10073, %v9849
        %v10107 = vsel %vm3721, %v10075, %v9851
        %v10109 = vsel %vm3721, %v10077, %v9853
        %v10111 = vsel %vm3721, %v10079, %v9855
        %v10113 = vsel %vm3721, %v10081, %v9857
        %v10115 = vsel %vm3721, %v10083, %v9859
        %v10117 = vsel %vm3721, %v10085, %v9861
        %v10119 = vsel %vm3721, %v10087, %v9863
        %v10120 = vld [vmem:[%s1] sm:$0x3]
        %v10121 = vld [vmem:[%s1 + $0x2] sm:$0x3]
        %v10122 = vld [vmem:[%s1 + $0x4] sm:$0x3]
        %v10123 = vld [vmem:[%s1 + $0x6] sm:$0x3]
        %v10124 = vld [vmem:[%s1 + $0x8] sm:$0x3]
        %v10125 = vld [vmem:[%s1 + $0xa] sm:$0x3]
        %v10126 = vld [vmem:[%s1 + $0xc] sm:$0x3]
        %v10127 = vld [vmem:[%s1 + $0xe] sm:$0x3]
        %v10128 = vld [vmem:[%s1 + $0x10] sm:$0x3]
        %v10138 = vrot.slane %v10120, 1
        %v10139 = vrot.slane %v10120, 2
        %v10140 = vrot.slane %v10120, 3
        %v10141 = vrot.slane %v10121, 1
        %v10142 = vrot.slane %v10121, 2
        %v10143 = vrot.slane %v10121, 3
        %v10144 = vrot.slane %v10122, 1
        %v10145 = vrot.slane %v10122, 2
        %v10146 = vrot.slane %v10122, 3
        %v10147 = vrot.slane %v10123, 1
        %v10148 = vrot.slane %v10123, 2
        %v10149 = vrot.slane %v10123, 3
        %v10150 = vrot.slane %v10124, 1
        %v10151 = vrot.slane %v10124, 2
        %v10152 = vrot.slane %v10124, 3
        %v10153 = vrot.slane %v10125, 1
        %v10154 = vrot.slane %v10125, 2
        %v10155 = vrot.slane %v10125, 3
        %v10156 = vrot.slane %v10126, 1
        %v10157 = vrot.slane %v10126, 2
        %v10158 = vrot.slane %v10126, 3
        %v10159 = vrot.slane %v10127, 1
        %v10160 = vrot.slane %v10127, 2
        %v10161 = vrot.slane %v10127, 3
        %v10162 = vrot.slane %v10128, 1
        %v10163 = vrot.slane %v10128, 2
        %v10164 = vrot.slane %v10128, 3
        %v10167 = vsel %vm3799, %v10120, %v10138
        %v10170 = vsel %vm3803, %v10139, %v10140
        %v10171 = vsel %vm3807, %v10167, %v10170
        %v10173 = vsel %vm3810, %v10120, %v10138
        %v10174 = vsel %vm3812, %v10139, %v10140
        %v10175 = vsel %vm3814, %v10173, %v10174
        %v10177 = vrot.slane %v10175, 1
        %v10180 = vsel %vm3799, %v10121, %v10141
        %v10183 = vsel %vm3803, %v10142, %v10143
        %v10184 = vsel %vm3807, %v10180, %v10183
        %v10186 = vsel %vm3810, %v10121, %v10141
        %v10187 = vsel %vm3812, %v10142, %v10143
        %v10188 = vsel %vm3814, %v10186, %v10187
        %v10190 = vrot.slane %v10188, 1
        %v10193 = vsel %vm3799, %v10122, %v10144
        %v10196 = vsel %vm3803, %v10145, %v10146
        %v10197 = vsel %vm3807, %v10193, %v10196
        %v10199 = vsel %vm3810, %v10122, %v10144
        %v10200 = vsel %vm3812, %v10145, %v10146
        %v10201 = vsel %vm3814, %v10199, %v10200
        %v10203 = vrot.slane %v10201, 1
        %v10206 = vsel %vm3799, %v10123, %v10147
        %v10209 = vsel %vm3803, %v10148, %v10149
        %v10210 = vsel %vm3807, %v10206, %v10209
        %v10212 = vsel %vm3810, %v10123, %v10147
        %v10213 = vsel %vm3812, %v10148, %v10149
        %v10214 = vsel %vm3814, %v10212, %v10213
        %v10216 = vrot.slane %v10214, 1
        %v10219 = vsel %vm3799, %v10124, %v10150
        %v10222 = vsel %vm3803, %v10151, %v10152
        %v10223 = vsel %vm3807, %v10219, %v10222
        %v10225 = vsel %vm3810, %v10124, %v10150
        %v10226 = vsel %vm3812, %v10151, %v10152
        %v10227 = vsel %vm3814, %v10225, %v10226
        %v10229 = vrot.slane %v10227, 1
        %v10232 = vsel %vm3799, %v10125, %v10153
        %v10235 = vsel %vm3803, %v10154, %v10155
        %v10236 = vsel %vm3807, %v10232, %v10235
        %v10238 = vsel %vm3810, %v10125, %v10153
        %v10239 = vsel %vm3812, %v10154, %v10155
        %v10240 = vsel %vm3814, %v10238, %v10239
        %v10242 = vrot.slane %v10240, 1
        %v10245 = vsel %vm3799, %v10126, %v10156
        %v10248 = vsel %vm3803, %v10157, %v10158
        %v10249 = vsel %vm3807, %v10245, %v10248
        %v10251 = vsel %vm3810, %v10126, %v10156
        %v10252 = vsel %vm3812, %v10157, %v10158
        %v10253 = vsel %vm3814, %v10251, %v10252
        %v10255 = vrot.slane %v10253, 1
        %v10258 = vsel %vm3799, %v10127, %v10159
        %v10261 = vsel %vm3803, %v10160, %v10161
        %v10262 = vsel %vm3807, %v10258, %v10261
        %v10264 = vsel %vm3810, %v10127, %v10159
        %v10265 = vsel %vm3812, %v10160, %v10161
        %v10266 = vsel %vm3814, %v10264, %v10265
        %v10268 = vrot.slane %v10266, 1
        %v10271 = vsel %vm3799, %v10128, %v10162
        %v10274 = vsel %vm3803, %v10163, %v10164
        %v10275 = vsel %vm3807, %v10271, %v10274
        %v10277 = vsel %vm3810, %v10128, %v10162
        %v10278 = vsel %vm3812, %v10163, %v10164
        %v10279 = vsel %vm3814, %v10277, %v10278
        %v10281 = vrot.slane %v10279, 1
        %v10282 = vunpack.i.l.s16 %v10171
        %v10283 = vunpack.i.h.s16 %v10171
        %v10284 = vunpack.i.l.s16 %v10177
        %v10285 = vunpack.i.l.s16 %v10184
        %v10286 = vunpack.i.h.s16 %v10184
        %v10287 = vunpack.i.l.s16 %v10190
        %v10288 = vunpack.i.l.s16 %v10197
        %v10289 = vunpack.i.h.s16 %v10197
        %v10290 = vunpack.i.l.s16 %v10203
        %v10291 = vunpack.i.l.s16 %v10210
        %v10292 = vunpack.i.h.s16 %v10210
        %v10293 = vunpack.i.l.s16 %v10216
        %v10294 = vunpack.i.l.s16 %v10223
        %v10295 = vunpack.i.h.s16 %v10223
        %v10296 = vunpack.i.l.s16 %v10229
        %v10297 = vunpack.i.l.s16 %v10236
        %v10298 = vunpack.i.h.s16 %v10236
        %v10299 = vunpack.i.l.s16 %v10242
        %v10300 = vunpack.i.l.s16 %v10249
        %v10301 = vunpack.i.h.s16 %v10249
        %v10302 = vunpack.i.l.s16 %v10255
        %v10303 = vunpack.i.l.s16 %v10262
        %v10304 = vunpack.i.h.s16 %v10262
        %v10305 = vunpack.i.l.s16 %v10268
        %v10306 = vunpack.i.l.s16 %v10275
        %v10307 = vunpack.i.h.s16 %v10275
        %v10308 = vunpack.i.l.s16 %v10281
        %v10309 = vld [vmem:[%s2] sm:$0x1]
        %v10311 = vperm.slane %v10309, 0
        %v10313 = vpack.i.b16 %v10283, %v10282
        %v10314 = vpack.i.b16 %v10285, %v10284
        %v10315 = vpack.i.b16 %v10287, %v10286
        %v10316 = vpack.i.b16 %v10289, %v10288
        %v10317 = vpack.i.b16 %v10291, %v10290
        %v10318 = vpack.i.b16 %v10293, %v10292
        %v10319 = vpack.i.b16 %v10295, %v10294
        %v10320 = vpack.i.b16 %v10297, %v10296
        %v10321 = vpack.i.b16 %v10299, %v10298
        %v10322 = vpack.i.b16 %v10301, %v10300
        %v10323 = vpack.i.b16 %v10303, %v10302
        %v10324 = vpack.i.b16 %v10305, %v10304
        %v10325 = vpack.i.b16 %v10307, %v10306
        %10328 = vst [vmem:[#allocation1] ss:$9 sm:$0xff] %v10313
        %s10330 = scalar_lea.vmem [#allocation1], 1
        %10331 = vst [vmem:[%s10330] ss:$9 sm:$0xff] %v10314
        %s10333 = scalar_lea.vmem [#allocation1], 2
        %10334 = vst [vmem:[%s10333] ss:$9 sm:$0xff] %v10315
        %s10336 = scalar_lea.vmem [#allocation1], 3
        %10337 = vst [vmem:[%s10336] ss:$9 sm:$0xff] %v10316
        %s10339 = scalar_lea.vmem [#allocation1], 4
        %10340 = vst [vmem:[%s10339] ss:$9 sm:$0xff] %v10317
        %s10342 = scalar_lea.vmem [#allocation1], 5
        %10343 = vst [vmem:[%s10342] ss:$9 sm:$0xff] %v10318
        %s10345 = scalar_lea.vmem [#allocation1], 6
        %10346 = vst [vmem:[%s10345] ss:$9 sm:$0xff] %v10319
        %s10348 = scalar_lea.vmem [#allocation1], 7
        %10349 = vst [vmem:[%s10348] ss:$9 sm:$0xff] %v10320
        %v10350 = vld [vmem:[#allocation1] sm:$0xff]
        %10352 = vst [vmem:[#allocation1] ss:$9 sm:$0xff] %v10321
        %10354 = vst [vmem:[%s10330] ss:$9 sm:$0xff] %v10322
        %10356 = vst [vmem:[%s10333] ss:$9 sm:$0xff] %v10323
        %10358 = vst [vmem:[%s10336] ss:$9 sm:$0xff] %v10324
        %10360 = vst [vmem:[%s10339] ss:$9 sm:$0xff] %v10325
        %10362 = vst [vmem:[%s10342] ss:$9 sm:$0xff] %v10308
        %v10363 = vld [vmem:[#allocation1] sm:$0xff]
        %v10365 = vsel %vm4005, %v10089, 0
        %v10367 = vsel %vm4005, %v10091, 0
        %v10369 = vsel %vm4005, %v10093, 0
        %v10371 = vsel %vm4005, %v10095, 0
        %v10373 = vsel %vm4005, %v10097, 0
        %v10375 = vsel %vm4005, %v10099, 0
        %v10377 = vsel %vm4005, %v10101, 0
        %v10379 = vsel %vm4005, %v10103, 0
        %v10381 = vsel %vm4005, %v10105, 0
        %v10383 = vsel %vm4005, %v10107, 0
        %v10385 = vsel %vm4005, %v10109, 0
        %v10387 = vsel %vm4005, %v10111, 0
        %v10389 = vsel %vm4005, %v10113, 0
        %v10391 = vsel %vm4005, %v10115, 0
        %v10393 = vsel %vm4005, %v10117, 0
        %v10395 = vsel %vm4005, %v10119, 0
        %v10397 = vand.u32 %v10363, %v4041
        %10399 = vmatpush.bf16.msra.mxu0 0
        %10400 = vmatpush.bf16.msra.mxu0 0
        %10401 = vmatpush.bf16.msra.mxu0 0
        %10402 = vmatpush.bf16.msra.mxu0 0
        %10403 = vmatpush.bf16.msra.mxu0 0
        %10404 = vmatpush.bf16.msra.mxu0 0
        %10405 = vmatpush.bf16.msra.mxu0 %v10397
        %10406 = vmatpush.bf16.msra.mxu0 %v10350
        %10407 = vmatmul.bf16.gmra.mxu0 %v10365
        %v10408 = vpop.f32.mrf.mxu0
        %v10409 = vadd.f32 %v10311, %v10408
        %v10410 = vpop.f32.mrf.mxu0
        %v10411 = vadd.f32 %v10311, %v10410
        %10412 = vmatmul.bf16.gmra.mxu0 %v10367
        %v10413 = vpop.f32.mrf.mxu0
        %v10414 = vadd.f32 %v10311, %v10413
        %v10415 = vpop.f32.mrf.mxu0
        %v10416 = vadd.f32 %v10311, %v10415
        %10417 = vmatmul.bf16.gmra.mxu0 %v10369
        %v10418 = vpop.f32.mrf.mxu0
        %v10419 = vadd.f32 %v10311, %v10418
        %v10420 = vpop.f32.mrf.mxu0
        %v10421 = vadd.f32 %v10311, %v10420
        %10422 = vmatmul.bf16.gmra.mxu0 %v10371
        %v10423 = vpop.f32.mrf.mxu0
        %v10424 = vadd.f32 %v10311, %v10423
        %v10425 = vpop.f32.mrf.mxu0
        %v10426 = vadd.f32 %v10311, %v10425
        %10427 = vmatmul.bf16.gmra.mxu0 %v10373
        %v10428 = vpop.f32.mrf.mxu0
        %v10429 = vadd.f32 %v10311, %v10428
        %v10430 = vpop.f32.mrf.mxu0
        %v10431 = vadd.f32 %v10311, %v10430
        %10432 = vmatmul.bf16.gmra.mxu0 %v10375
        %v10433 = vpop.f32.mrf.mxu0
        %v10434 = vadd.f32 %v10311, %v10433
        %v10435 = vpop.f32.mrf.mxu0
        %v10436 = vadd.f32 %v10311, %v10435
        %10437 = vmatmul.bf16.gmra.mxu0 %v10377
        %v10438 = vpop.f32.mrf.mxu0
        %v10439 = vadd.f32 %v10311, %v10438
        %v10440 = vpop.f32.mrf.mxu0
        %v10441 = vadd.f32 %v10311, %v10440
        %10442 = vmatmul.bf16.gmra.mxu0 %v10379
        %v10443 = vpop.f32.mrf.mxu0
        %v10444 = vadd.f32 %v10311, %v10443
        %v10445 = vpop.f32.mrf.mxu0
        %v10446 = vadd.f32 %v10311, %v10445
        %10447 = vmatmul.bf16.gmra.mxu0 %v10381
        %v10448 = vpop.f32.mrf.mxu0
        %v10449 = vadd.f32 %v10311, %v10448
        %v10450 = vpop.f32.mrf.mxu0
        %v10451 = vadd.f32 %v10311, %v10450
        %10452 = vmatmul.bf16.gmra.mxu0 %v10383
        %v10453 = vpop.f32.mrf.mxu0
        %v10454 = vadd.f32 %v10311, %v10453
        %v10455 = vpop.f32.mrf.mxu0
        %v10456 = vadd.f32 %v10311, %v10455
        %10457 = vmatmul.bf16.gmra.mxu0 %v10385
        %v10458 = vpop.f32.mrf.mxu0
        %v10459 = vadd.f32 %v10311, %v10458
        %v10460 = vpop.f32.mrf.mxu0
        %v10461 = vadd.f32 %v10311, %v10460
        %10462 = vmatmul.bf16.gmra.mxu0 %v10387
        %v10463 = vpop.f32.mrf.mxu0
        %v10464 = vadd.f32 %v10311, %v10463
        %v10465 = vpop.f32.mrf.mxu0
        %v10466 = vadd.f32 %v10311, %v10465
        %10467 = vmatmul.bf16.gmra.mxu0 %v10389
        %v10468 = vpop.f32.mrf.mxu0
        %v10469 = vadd.f32 %v10311, %v10468
        %v10470 = vpop.f32.mrf.mxu0
        %v10471 = vadd.f32 %v10311, %v10470
        %10472 = vmatmul.bf16.gmra.mxu0 %v10391
        %v10473 = vpop.f32.mrf.mxu0
        %v10474 = vadd.f32 %v10311, %v10473
        %v10475 = vpop.f32.mrf.mxu0
        %v10476 = vadd.f32 %v10311, %v10475
        %10477 = vmatmul.bf16.gmra.mxu0 %v10393
        %v10478 = vpop.f32.mrf.mxu0
        %v10479 = vadd.f32 %v10311, %v10478
        %v10480 = vpop.f32.mrf.mxu0
        %v10481 = vadd.f32 %v10311, %v10480
        %10482 = vmatmul.bf16.gmra.mxu0 %v10395
        %v10483 = vpop.f32.mrf.mxu0
        %v10484 = vadd.f32 %v10311, %v10483
        %v10485 = vpop.f32.mrf.mxu0
        %v10486 = vadd.f32 %v10311, %v10485
        %10487 = vdwg.mxu0
        %v10488 = vmax.f32 %v10409, 0.0
        %v10489 = vmax.f32 %v10411, 0.0
        %v10490 = vmax.f32 %v10414, 0.0
        %v10491 = vmax.f32 %v10416, 0.0
        %v10492 = vmax.f32 %v10419, 0.0
        %v10493 = vmax.f32 %v10421, 0.0
        %v10494 = vmax.f32 %v10424, 0.0
        %v10495 = vmax.f32 %v10426, 0.0
        %v10496 = vmax.f32 %v10429, 0.0
        %v10497 = vmax.f32 %v10431, 0.0
        %v10498 = vmax.f32 %v10434, 0.0
        %v10499 = vmax.f32 %v10436, 0.0
        %v10500 = vmax.f32 %v10439, 0.0
        %v10501 = vmax.f32 %v10441, 0.0
        %v10502 = vmax.f32 %v10444, 0.0
        %v10503 = vmax.f32 %v10446, 0.0
        %v10504 = vmax.f32 %v10449, 0.0
        %v10505 = vmax.f32 %v10451, 0.0
        %v10506 = vmax.f32 %v10454, 0.0
        %v10507 = vmax.f32 %v10456, 0.0
        %v10508 = vmax.f32 %v10459, 0.0
        %v10509 = vmax.f32 %v10461, 0.0
        %v10510 = vmax.f32 %v10464, 0.0
        %v10511 = vmax.f32 %v10466, 0.0
        %v10512 = vmax.f32 %v10469, 0.0
        %v10513 = vmax.f32 %v10471, 0.0
        %v10514 = vmax.f32 %v10474, 0.0
        %v10515 = vmax.f32 %v10476, 0.0
        %v10516 = vmax.f32 %v10479, 0.0
        %v10517 = vmax.f32 %v10481, 0.0
        %v10518 = vmax.f32 %v10484, 0.0
        %v10519 = vmax.f32 %v10486, 0.0
        %v10520 = vpack.c.bf16 %v10488, %v10488
        %v10521 = vpack.c.bf16 %v10489, %v10489
        %v10522 = vpack.c.bf16 %v10490, %v10490
        %v10523 = vpack.c.bf16 %v10491, %v10491
        %v10524 = vpack.c.bf16 %v10492, %v10492
        %v10525 = vpack.c.bf16 %v10493, %v10493
        %v10526 = vpack.c.bf16 %v10494, %v10494
        %v10527 = vpack.c.bf16 %v10495, %v10495
        %v10528 = vpack.c.bf16 %v10496, %v10496
        %v10529 = vpack.c.bf16 %v10497, %v10497
        %v10530 = vpack.c.bf16 %v10498, %v10498
        %v10531 = vpack.c.bf16 %v10499, %v10499
        %v10532 = vpack.c.bf16 %v10500, %v10500
        %v10533 = vpack.c.bf16 %v10501, %v10501
        %v10534 = vpack.c.bf16 %v10502, %v10502
        %v10535 = vpack.c.bf16 %v10503, %v10503
        %v10536 = vpack.c.bf16 %v10504, %v10504
        %v10537 = vpack.c.bf16 %v10505, %v10505
        %v10538 = vpack.c.bf16 %v10506, %v10506
        %v10539 = vpack.c.bf16 %v10507, %v10507
        %v10540 = vpack.c.bf16 %v10508, %v10508
        %v10541 = vpack.c.bf16 %v10509, %v10509
        %v10542 = vpack.c.bf16 %v10510, %v10510
        %v10543 = vpack.c.bf16 %v10511, %v10511
        %v10544 = vpack.c.bf16 %v10512, %v10512
        %v10545 = vpack.c.bf16 %v10513, %v10513
        %v10546 = vpack.c.bf16 %v10514, %v10514
        %v10547 = vpack.c.bf16 %v10515, %v10515
        %v10548 = vpack.c.bf16 %v10516, %v10516
        %v10549 = vpack.c.bf16 %v10517, %v10517
        %v10550 = vpack.c.bf16 %v10518, %v10518
        %v10551 = vpack.c.bf16 %v10519, %v10519
        %s10552 = smul.u32 24, 4
        %s10553 = smul.addr %s10552, 4
        %s10554 = scalar_lea.vmem %s163, %s10553 [#allocation3]
        %10555 = vst.msk [vmem:[%s10554] sm:$0xf] %vm4200, %v10520
        %10556 = vst.msk [vmem:[%s10554 + $0x4] sm:$0xf] %vm4200, %v10521
        %10557 = vst.msk [vmem:[%s10554 + $0x8] sm:$0xf] %vm4200, %v10522
        %10558 = vst.msk [vmem:[%s10554 + $0xc] sm:$0xf] %vm4200, %v10523
        %10559 = vst.msk [vmem:[%s10554 + $0x10] sm:$0xf] %vm4200, %v10524
        %10560 = vst.msk [vmem:[%s10554 + $0x14] sm:$0xf] %vm4200, %v10525
        %10561 = vst.msk [vmem:[%s10554 + $0x18] sm:$0xf] %vm4200, %v10526
        %10562 = vst.msk [vmem:[%s10554 + $0x1c] sm:$0xf] %vm4200, %v10527
        %10563 = vst.msk [vmem:[%s10554 + $0x20] sm:$0xf] %vm4200, %v10528
        %10564 = vst.msk [vmem:[%s10554 + $0x24] sm:$0xf] %vm4200, %v10529
        %10565 = vst.msk [vmem:[%s10554 + $0x28] sm:$0xf] %vm4200, %v10530
        %10566 = vst.msk [vmem:[%s10554 + $0x2c] sm:$0xf] %vm4200, %v10531
        %10567 = vst.msk [vmem:[%s10554 + $0x30] sm:$0xf] %vm4200, %v10532
        %10568 = vst.msk [vmem:[%s10554 + $0x34] sm:$0xf] %vm4200, %v10533
        %10569 = vst.msk [vmem:[%s10554 + $0x38] sm:$0xf] %vm4200, %v10534
        %10570 = vst.msk [vmem:[%s10554 + $0x3c] sm:$0xf] %vm4200, %v10535
        %10571 = vst.msk [vmem:[%s10554 + $0x40] sm:$0xf] %vm4200, %v10536
        %10572 = vst.msk [vmem:[%s10554 + $0x44] sm:$0xf] %vm4200, %v10537
        %10573 = vst.msk [vmem:[%s10554 + $0x48] sm:$0xf] %vm4200, %v10538
        %10574 = vst.msk [vmem:[%s10554 + $0x4c] sm:$0xf] %vm4200, %v10539
        %10575 = vst.msk [vmem:[%s10554 + $0x50] sm:$0xf] %vm4200, %v10540
        %10576 = vst.msk [vmem:[%s10554 + $0x54] sm:$0xf] %vm4200, %v10541
        %10577 = vst.msk [vmem:[%s10554 + $0x58] sm:$0xf] %vm4200, %v10542
        %10578 = vst.msk [vmem:[%s10554 + $0x5c] sm:$0xf] %vm4200, %v10543
        %10579 = vst.msk [vmem:[%s10554 + $0x60] sm:$0xf] %vm4200, %v10544
        %10580 = vst.msk [vmem:[%s10554 + $0x64] sm:$0xf] %vm4200, %v10545
        %10581 = vst.msk [vmem:[%s10554 + $0x68] sm:$0xf] %vm4200, %v10546
        %10582 = vst.msk [vmem:[%s10554 + $0x6c] sm:$0xf] %vm4200, %v10547
        %10583 = vst.msk [vmem:[%s10554 + $0x70] sm:$0xf] %vm4200, %v10548
        %10584 = vst.msk [vmem:[%s10554 + $0x74] sm:$0xf] %vm4200, %v10549
        %10585 = vst.msk [vmem:[%s10554 + $0x78] sm:$0xf] %vm4200, %v10550
        %10586 = vst.msk [vmem:[%s10554 + $0x7c] sm:$0xf] %vm4200, %v10551
        %s10587 = sand.u32 %s93, 1
        %s10588 = scalar_lea.sflag [#allocation4], %s10587
        %s10589 = sand.u32 %s93, 1
        %s10590 = smul.addr %s10589, 512
        %s10591 = scalar_lea.vmem [#allocation3], %s10590
        // Predicated region
        $region33: #{tpu_custom_call.1} parent=31 // pred_check
          %p10592 = pneg %p103
        $region34: #{tpu_custom_call.1} parent=31 // pred_check_branch
          %10594 = sbr.rel (%p10592) target = $region36
        $region35: #{tpu_custom_call.1} parent=31 // pred_region
          %10596 = vsyncadd %s10588, 0
          %s10597 = smul.addr %s17, 128
          %s10598 = smul.addr %s10597, 4
          %s10599 = scalar_lea.hbm %s3, %s10598
          %s10600 = sshll.u32 %s10591, 4
          %s10601 = int_to_ptr.vmem [resolvable:$true] %s10600
          %s10602 = sshll.u32 %s10599, 4
          %s10603 = int_to_ptr.hbm [resolvable:$true] %s10602
          %10608 = dma.vmem_to_hbm [thread:$0]  %s10601, 8192, %s10603, %s10588, 64, 64, 4
        $region36: #{tpu_custom_call.1} parent=31 // pred_fallthru
          _
      $region32: #{tpu_custom_call.1} parent=5 // pred_fallthru
        _
      %p10609 = scmp.le.s32.totalorder 2, %s12
      // Predicated region
      $region37: #{tpu_custom_call.1} parent=5 // pred_check
        %p10610 = pneg %p10609
      $region38: #{tpu_custom_call.1} parent=5 // pred_check_branch
        %10612 = sbr.rel (%p10610) target = $region40
      $region39: #{tpu_custom_call.1} parent=5 // pred_region
        %s10613 = ssub.s32 %s12, 2
        // Predicated region
        $region41: #{tpu_custom_call.1} parent=39 // pred_check
          %p10614 = pneg %p109
        $region42: #{tpu_custom_call.1} parent=39 // pred_check_branch
          %10616 = sbr.rel (%p10614) target = $region44
        $region43: #{tpu_custom_call.1} parent=39 // pred_region
          %s10617 = sand.u32 %s94, 1
          %s10618 = scalar_lea.sflag [#allocation4], %s10617
          %s10619 = sand.u32 %s94, 1
          %s10620 = smul.addr %s10619, 512
          %s10621 = scalar_lea.vmem [#allocation3], %s10620
          %10623 = dma.done %s10618, 8192
        $region44: #{tpu_custom_call.1} parent=39 // pred_fallthru
          _
      $region40: #{tpu_custom_call.1} parent=5 // pred_fallthru
        _
    $region6: #{tpu_custom_call.1} parent=1 // loop_footer
      %s16 = sadd.s32 1, %s12
    $region7: #{tpu_custom_call.1} parent=1 // loop_footer_branch
      %11 = sbr.rel target = $region3
    $region8: #{tpu_custom_call.1} parent=1 // loop_exit
      _
    %10624 = vsyncpa [#allocation4], 1
    %s10625 = scalar_lea.sflag [#allocation4], 1
    %10626 = vsyncpa %s10625, 1

</llo_original>
